<compile_context>
chip_gen: v6e
topology: v6e:2x2x1
jax: 0.10.0
libtpu: 0.0.40
codegen_flags: <defaults>
</compile_context>

<pallas_src>
import functools

import jax
import jax.numpy as jnp
from jax.experimental import pallas as pl
from jax.experimental.pallas import tpu as pltpu

# ---------------- config (small, consistent with BartConfig fields used) -----
D_MODEL = 32      # bart_config.d_model
N_HEADS = 4
HEAD_DIM = D_MODEL // N_HEADS
FFN_DIM = 64
VOCAB = 64        # bart_config.vocab_size
N_LAYERS = 2
MAX_POS = 32
LN_EPS = 1e-5
NEG_INF = -1e9


# ---------------- fused whole-model kernel -----------------------------------
def _decoder_fused_kernel(
    # activations / masks
    ids_ref, pos_ref, enc_ref, selfpad_ref, crosspad_ref,
    # embedding params
    tok_emb_ref, ln_emb_g_ref, ln_emb_b_ref,
    # per-layer stacked params (leading dim = N_LAYERS)
    qkv_w_ref, qkv_b_ref, sa_o_w_ref, sa_o_b_ref, sa_ln_g_ref, sa_ln_b_ref,
    ca_q_w_ref, ca_q_b_ref, ca_kv_w_ref, ca_kv_b_ref, ca_o_w_ref, ca_o_b_ref,
    ca_ln_g_ref, ca_ln_b_ref,
    fc1_w_ref, fc1_b_ref, fc2_w_ref, fc2_b_ref, ff_ln_g_ref, ff_ln_b_ref,
    # head
    lm_w_ref, lm_b_ref,
    # outputs
    logits_ref, hidden_ref,
    *, batch, seq, enc_seq):
  M = batch * seq
  D = D_MODEL

  def layer_norm(x, g, b):
    mean = jnp.mean(x, axis=-1, keepdims=True)
    var = jnp.mean(jnp.square(x - mean), axis=-1, keepdims=True)
    return (x - mean) * jax.lax.rsqrt(var + LN_EPS) * g + b

  def softmax_rows(s):
    s = s - jnp.max(s, axis=-1, keepdims=True)
    p = jnp.exp(s)
    # EUP approx reciprocal instead of a VALU divide.
    return p * pl.reciprocal(jnp.sum(p, axis=-1, keepdims=True), approx=True)

  def attention(q_full, k_full, v_full, o_w, o_b, masks, sq, sk):
    # q_full: [B*sq, D]; k_full/v_full: [B*sk, D]; masks: per-batch additive
    # ([sq, sk] or [1, sk]).  Q is already pre-scaled (scale folded in weights).
    # Heads are static lane slices; the output projection is folded into the
    # head loop, so head outputs are accumulated directly in model space.
    outs = []
    for b in range(batch):
      qb = q_full[b * sq:(b + 1) * sq, :]
      kb = k_full[b * sk:(b + 1) * sk, :]
      vb = v_full[b * sk:(b + 1) * sk, :]
      acc = jnp.zeros((sq, D), jnp.float32)
      for h in range(N_HEADS):
        lo, hi = h * HEAD_DIM, (h + 1) * HEAD_DIM
        s = jax.lax.dot_general(
            qb[:, lo:hi], kb[:, lo:hi],
            (((1,), (1,)), ((), ())),
            preferred_element_type=jnp.float32) + masks[b]
        p = softmax_rows(s)
        oh = jnp.dot(p, vb[:, lo:hi], preferred_element_type=jnp.float32)
        acc = acc + jnp.dot(oh, o_w[lo:hi, :],
                            preferred_element_type=jnp.float32)
      outs.append(acc)
    return jnp.concatenate(outs, axis=0) + o_b

  # ---- embeddings: one-hot lookup on the MXU (no gather), + positions, LN ----
  ids = ids_ref[...]                                               # [M, 1] i32
  onehot = (jax.lax.broadcasted_iota(jnp.int32, (M, VOCAB), 1) == ids)
  h = jnp.dot(onehot.astype(jnp.float32), tok_emb_ref[...],
              preferred_element_type=jnp.float32)
  h = h + pos_ref[...]
  h = layer_norm(h, ln_emb_g_ref[...], ln_emb_b_ref[...])

  # ---- additive masks built in-kernel ----
  row = jax.lax.broadcasted_iota(jnp.int32, (seq, seq), 0)
  col = jax.lax.broadcasted_iota(jnp.int32, (seq, seq), 1)
  causal = jnp.where(row >= col, 0.0, NEG_INF)                     # [S, S]
  selfpad = selfpad_ref[...]                                       # [B, S]
  crosspad = crosspad_ref[...]                                     # [B, Se]
  self_masks = [causal + selfpad[b:b + 1, :] for b in range(batch)]
  cross_masks = [crosspad[b:b + 1, :] for b in range(batch)]

  enc = enc_ref[...]                                               # [B*Se, D]

  # ---- decoder layers (static unrolled loop over stacked weights) ----
  for l in range(N_LAYERS):
    # self-attention block (post-LN)
    residual = h
    qkv = jnp.dot(h, qkv_w_ref[l],
                  preferred_element_type=jnp.float32) + qkv_b_ref[l]
    a = attention(qkv[:, 0:D], qkv[:, D:2 * D], qkv[:, 2 * D:3 * D],
                  sa_o_w_ref[l], sa_o_b_ref[l], self_masks, seq, seq)
    h = layer_norm(residual + a, sa_ln_g_ref[l], sa_ln_b_ref[l])

    # cross-attention block
    residual = h
    q = jnp.dot(h, ca_q_w_ref[l],
                preferred_element_type=jnp.float32) + ca_q_b_ref[l]
    kv = jnp.dot(enc, ca_kv_w_ref[l],
                 preferred_element_type=jnp.float32) + ca_kv_b_ref[l]
    a = attention(q, kv[:, 0:D], kv[:, D:2 * D],
                  ca_o_w_ref[l], ca_o_b_ref[l], cross_masks, seq, enc_seq)
    h = layer_norm(residual + a, ca_ln_g_ref[l], ca_ln_b_ref[l])

    # feed-forward block
    residual = h
    x = jnp.dot(h, fc1_w_ref[l],
                preferred_element_type=jnp.float32) + fc1_b_ref[l]
    # TODO(synk): torch F.gelu is erf-exact; tanh-approx gelu used for Mosaic lowering.
    x = jax.nn.gelu(x, approximate=True)
    x = jnp.dot(x, fc2_w_ref[l],
                preferred_element_type=jnp.float32) + fc2_b_ref[l]
    h = layer_norm(residual + x, ff_ln_g_ref[l], ff_ln_b_ref[l])

  # ---- outputs ----
  hidden_ref[...] = h
  logits_ref[...] = jnp.dot(h, lm_w_ref[...],
                            preferred_element_type=jnp.float32) + lm_b_ref[...]


# ---------------- model forward (single pallas_call) -------------------------
def decoder_forward(params, input_ids, attention_mask,
                    encoder_hidden_states, encoder_attention_mask):
  B, S = input_ids.shape
  Se = encoder_hidden_states.shape[1]
  M = B * S
  scale = HEAD_DIM ** -0.5

  layers = params["layers"]

  def stack(fn):
    return jnp.stack([fn(p) for p in layers])

  # Fuse Q/K/V into one [D, 3D] weight; fold the attention scale into Q.
  qkv_w = stack(lambda p: jnp.concatenate(
      [p["self_attn"]["q_w"] * scale, p["self_attn"]["k_w"],
       p["self_attn"]["v_w"]], axis=1))
  qkv_b = stack(lambda p: jnp.concatenate(
      [p["self_attn"]["q_b"] * scale, p["self_attn"]["k_b"],
       p["self_attn"]["v_b"]])[None, :])
  sa_o_w = stack(lambda p: p["self_attn"]["o_w"])
  sa_o_b = stack(lambda p: p["self_attn"]["o_b"][None, :])
  sa_ln_g = stack(lambda p: p["sa_ln_g"][None, :])
  sa_ln_b = stack(lambda p: p["sa_ln_b"][None, :])

  ca_q_w = stack(lambda p: p["cross_attn"]["q_w"] * scale)
  ca_q_b = stack(lambda p: p["cross_attn"]["q_b"][None, :] * scale)
  ca_kv_w = stack(lambda p: jnp.concatenate(
      [p["cross_attn"]["k_w"], p["cross_attn"]["v_w"]], axis=1))
  ca_kv_b = stack(lambda p: jnp.concatenate(
      [p["cross_attn"]["k_b"], p["cross_attn"]["v_b"]])[None, :])
  ca_o_w = stack(lambda p: p["cross_attn"]["o_w"])
  ca_o_b = stack(lambda p: p["cross_attn"]["o_b"][None, :])
  ca_ln_g = stack(lambda p: p["ca_ln_g"][None, :])
  ca_ln_b = stack(lambda p: p["ca_ln_b"][None, :])

  fc1_w = stack(lambda p: p["fc1_w"])
  fc1_b = stack(lambda p: p["fc1_b"][None, :])
  fc2_w = stack(lambda p: p["fc2_w"])
  fc2_b = stack(lambda p: p["fc2_b"][None, :])
  ff_ln_g = stack(lambda p: p["ff_ln_g"][None, :])
  ff_ln_b = stack(lambda p: p["ff_ln_b"][None, :])

  # positional embeddings: BART learned positions with offset 2 (static slice)
  pos = params["embed_positions"][jnp.arange(S) + 2]            # [S, D]
  pos_tiled = jnp.tile(pos, (B, 1))                             # [M, D]

  ids = input_ids.reshape(M, 1).astype(jnp.int32)
  selfpad = (1.0 - attention_mask.astype(jnp.float32)) * NEG_INF       # [B, S]
  crosspad = (1.0 - encoder_attention_mask.astype(jnp.float32)) * NEG_INF  # [B, Se]
  enc = encoder_hidden_states.reshape(B * Se, D_MODEL).astype(jnp.float32)

  args = (ids, pos_tiled, enc, selfpad, crosspad,
          params["embed_tokens"],
          params["ln_emb_g"][None, :], params["ln_emb_b"][None, :],
          qkv_w, qkv_b, sa_o_w, sa_o_b, sa_ln_g, sa_ln_b,
          ca_q_w, ca_q_b, ca_kv_w, ca_kv_b, ca_o_w, ca_o_b, ca_ln_g, ca_ln_b,
          fc1_w, fc1_b, fc2_w, fc2_b, ff_ln_g, ff_ln_b,
          params["lm_head_w"], params["lm_head_b"][None, :])

  vmem = pl.BlockSpec(memory_space=pltpu.MemorySpace.VMEM)
  kernel = functools.partial(_decoder_fused_kernel, batch=B, seq=S, enc_seq=Se)

  logits, hidden = pl.pallas_call(
      kernel,
      out_shape=(jax.ShapeDtypeStruct((M, VOCAB), jnp.float32),
                 jax.ShapeDtypeStruct((M, D_MODEL), jnp.float32)),
      in_specs=[vmem] * len(args),
      out_specs=(vmem, vmem),
  )(*args)

  return {
      "lm_logits": logits.reshape(B, S, VOCAB),    # [bsz, ln, vocab_size]
      "hidden_states": hidden.reshape(B, S, D_MODEL),
      "past_key_values": None,      # TODO(synk): KV cache / use_cache not implemented
      "attentions": None,
      "cross_attentions": None,
  }


# ---------------- deterministic parameter init -------------------------------
def init_params(key):
  keys = iter(jax.random.split(key, 256))

  def nrm(shape, scale=0.02):
    return (scale * jax.random.normal(next(keys), shape)).astype(jnp.float32)

  def attn_params():
    return {
        "q_w": nrm((D_MODEL, D_MODEL)), "q_b": jnp.zeros((D_MODEL,), jnp.float32),
        "k_w": nrm((D_MODEL, D_MODEL)), "k_b": jnp.zeros((D_MODEL,), jnp.float32),
        "v_w": nrm((D_MODEL, D_MODEL)), "v_b": jnp.zeros((D_MODEL,), jnp.float32),
        "o_w": nrm((D_MODEL, D_MODEL)), "o_b": jnp.zeros((D_MODEL,), jnp.float32),
    }

  layers = []
  for _ in range(N_LAYERS):
    layers.append({
        "self_attn": attn_params(),
        "sa_ln_g": jnp.ones((D_MODEL,), jnp.float32),
        "sa_ln_b": jnp.zeros((D_MODEL,), jnp.float32),
        "cross_attn": attn_params(),
        "ca_ln_g": jnp.ones((D_MODEL,), jnp.float32),
        "ca_ln_b": jnp.zeros((D_MODEL,), jnp.float32),
        "fc1_w": nrm((D_MODEL, FFN_DIM)), "fc1_b": jnp.zeros((FFN_DIM,), jnp.float32),
        "fc2_w": nrm((FFN_DIM, D_MODEL)), "fc2_b": jnp.zeros((D_MODEL,), jnp.float32),
        "ff_ln_g": jnp.ones((D_MODEL,), jnp.float32),
        "ff_ln_b": jnp.zeros((D_MODEL,), jnp.float32),
    })

  return {
      "embed_tokens": nrm((VOCAB, D_MODEL)),
      "embed_positions": nrm((MAX_POS + 2, D_MODEL)),   # BART: num_pos + offset(2)
      "ln_emb_g": jnp.ones((D_MODEL,), jnp.float32),
      "ln_emb_b": jnp.zeros((D_MODEL,), jnp.float32),
      "layers": layers,
      "lm_head_w": nrm((D_MODEL, VOCAB)),
      "lm_head_b": jnp.zeros((VOCAB,), jnp.float32),
  }


# ---------------- main --------------------------------------------------------
if __name__ == "__main__":
  B, S, SE = 2, 8, 8
  root = jax.random.PRNGKey(0)
  k_par, k_ids, k_enc = jax.random.split(root, 3)

  params = init_params(k_par)
  input_ids = jax.random.randint(k_ids, (B, S), 0, VOCAB)
  attention_mask = jnp.ones((B, S), jnp.int32)
  encoder_hidden_states = jax.random.normal(k_enc, (B, SE, D_MODEL), jnp.float32)
  encoder_attention_mask = jnp.ones((B, SE), jnp.int32)

  fwd = jax.jit(decoder_forward)
  out = fwd(params, input_ids, attention_mask,
            encoder_hidden_states, encoder_attention_mask)
  jax.block_until_ready(out["lm_logits"])

  assert out["lm_logits"].shape == (B, S, VOCAB)
  assert out["hidden_states"].shape == (B, S, D_MODEL)
  assert bool(jnp.all(jnp.isfinite(out["lm_logits"])))
  print("KERNEL_OK")
</pallas_src>

<mosaic_0001>
module attributes {stable_mosaic.version = 11 : i64} {
  func.func @_decoder_fused_kernel(%arg0: memref<16x1xi32, #tpu.memory_space<vmem>>, %arg1: memref<16x32xf32, #tpu.memory_space<vmem>>, %arg2: memref<16x32xf32, #tpu.memory_space<vmem>>, %arg3: memref<2x8xf32, #tpu.memory_space<vmem>>, %arg4: memref<2x8xf32, #tpu.memory_space<vmem>>, %arg5: memref<64x32xf32, #tpu.memory_space<vmem>>, %arg6: memref<1x32xf32, #tpu.memory_space<vmem>>, %arg7: memref<1x32xf32, #tpu.memory_space<vmem>>, %arg8: memref<2x32x96xf32, #tpu.memory_space<vmem>>, %arg9: memref<2x1x96xf32, #tpu.memory_space<vmem>>, %arg10: memref<2x32x32xf32, #tpu.memory_space<vmem>>, %arg11: memref<2x1x32xf32, #tpu.memory_space<vmem>>, %arg12: memref<2x1x32xf32, #tpu.memory_space<vmem>>, %arg13: memref<2x1x32xf32, #tpu.memory_space<vmem>>, %arg14: memref<2x32x32xf32, #tpu.memory_space<vmem>>, %arg15: memref<2x1x32xf32, #tpu.memory_space<vmem>>, %arg16: memref<2x32x64xf32, #tpu.memory_space<vmem>>, %arg17: memref<2x1x64xf32, #tpu.memory_space<vmem>>, %arg18: memref<2x32x32xf32, #tpu.memory_space<vmem>>, %arg19: memref<2x1x32xf32, #tpu.memory_space<vmem>>, %arg20: memref<2x1x32xf32, #tpu.memory_space<vmem>>, %arg21: memref<2x1x32xf32, #tpu.memory_space<vmem>>, %arg22: memref<2x32x64xf32, #tpu.memory_space<vmem>>, %arg23: memref<2x1x64xf32, #tpu.memory_space<vmem>>, %arg24: memref<2x64x32xf32, #tpu.memory_space<vmem>>, %arg25: memref<2x1x32xf32, #tpu.memory_space<vmem>>, %arg26: memref<2x1x32xf32, #tpu.memory_space<vmem>>, %arg27: memref<2x1x32xf32, #tpu.memory_space<vmem>>, %arg28: memref<32x64xf32, #tpu.memory_space<vmem>>, %arg29: memref<1x64xf32, #tpu.memory_space<vmem>>, %arg30: memref<16x64xf32, #tpu.memory_space<vmem>>, %arg31: memref<16x32xf32, #tpu.memory_space<vmem>>) attributes {dimension_semantics = [], scalar_prefetch = 0 : i64, scratch_operands = 0 : i64, tpu.core_type = #tpu.core_type<tc>} {
    %c0 = arith.constant 0 : index
    %c0_0 = arith.constant 0 : index
    %0 = vector.load %arg0[%c0, %c0_0] : memref<16x1xi32, #tpu.memory_space<vmem>>, vector<16x1xi32>
    %1 = tpu.iota {dimensions = array<i32: 1>} : vector<16x64xi32>
    %2 = vector.broadcast %0 : vector<16x1xi32> to vector<16x64xi32>
    %3 = arith.cmpi eq, %1, %2 : vector<16x64xi32>
    %4 = arith.extui %3 : vector<16x64xi1> to vector<16x64xi32>
    %5 = arith.sitofp %4 : vector<16x64xi32> to vector<16x64xf32>
    %c0_1 = arith.constant 0 : index
    %c0_2 = arith.constant 0 : index
    %6 = vector.load %arg5[%c0_1, %c0_2] : memref<64x32xf32, #tpu.memory_space<vmem>>, vector<64x32xf32>
    %cst = arith.constant dense<0.000000e+00> : vector<16x32xf32>
    %7 = tpu.matmul %5, %6, %cst {dimension_numbers = #tpu.dot_dimension_numbers<[1], [0], [0], [1], [0, 0, 1, 1], [], []>} : vector<16x64xf32>, vector<64x32xf32>, vector<16x32xf32> -> vector<16x32xf32>
    %c0_3 = arith.constant 0 : index
    %c0_4 = arith.constant 0 : index
    %8 = vector.load %arg1[%c0_3, %c0_4] : memref<16x32xf32, #tpu.memory_space<vmem>>, vector<16x32xf32>
    %9 = arith.addf %7, %8 : vector<16x32xf32>
    %c0_5 = arith.constant 0 : index
    %c0_6 = arith.constant 0 : index
    %10 = vector.load %arg6[%c0_5, %c0_6] : memref<1x32xf32, #tpu.memory_space<vmem>>, vector<1x32xf32>
    %c0_7 = arith.constant 0 : index
    %c0_8 = arith.constant 0 : index
    %11 = vector.load %arg7[%c0_7, %c0_8] : memref<1x32xf32, #tpu.memory_space<vmem>>, vector<1x32xf32>
    %cst_9 = arith.constant dense<0.000000e+00> : vector<16xf32>
    %12 = vector.multi_reduction <add>, %9, %cst_9 [1] : vector<16x32xf32> to vector<16xf32>
    %13 = vector.shape_cast %12 : vector<16xf32> to vector<16x1xf32>
    %cst_10 = arith.constant 3.200000e+01 : f32
    %14 = vector.broadcast %cst_10 : f32 to vector<16x1xf32>
    %15 = arith.divf %13, %14 : vector<16x1xf32>
    %16 = vector.broadcast %15 : vector<16x1xf32> to vector<16x32xf32>
    %17 = arith.subf %9, %16 : vector<16x32xf32>
    %18 = arith.mulf %17, %17 : vector<16x32xf32>
    %cst_11 = arith.constant dense<0.000000e+00> : vector<16xf32>
    %19 = vector.multi_reduction <add>, %18, %cst_11 [1] : vector<16x32xf32> to vector<16xf32>
    %20 = vector.shape_cast %19 : vector<16xf32> to vector<16x1xf32>
    %cst_12 = arith.constant 3.200000e+01 : f32
    %21 = vector.broadcast %cst_12 : f32 to vector<16x1xf32>
    %22 = arith.divf %20, %21 : vector<16x1xf32>
    %23 = vector.broadcast %15 : vector<16x1xf32> to vector<16x32xf32>
    %24 = arith.subf %9, %23 : vector<16x32xf32>
    %cst_13 = arith.constant 9.99999974E-6 : f32
    %25 = vector.broadcast %cst_13 : f32 to vector<16x1xf32>
    %26 = arith.addf %22, %25 : vector<16x1xf32>
    %27 = math.rsqrt %26 : vector<16x1xf32>
    %28 = vector.broadcast %27 : vector<16x1xf32> to vector<16x32xf32>
    %29 = arith.mulf %24, %28 : vector<16x32xf32>
    %30 = vector.broadcast %10 : vector<1x32xf32> to vector<16x32xf32>
    %31 = arith.mulf %29, %30 : vector<16x32xf32>
    %32 = vector.broadcast %11 : vector<1x32xf32> to vector<16x32xf32>
    %33 = arith.addf %31, %32 : vector<16x32xf32>
    %34 = tpu.iota {dimensions = array<i32: 0>} : vector<8x8xi32>
    %35 = tpu.iota {dimensions = array<i32: 1>} : vector<8x8xi32>
    %36 = arith.cmpi sge, %34, %35 : vector<8x8xi32>
    %cst_14 = arith.constant 0.000000e+00 : f32
    %cst_15 = arith.constant -1.000000e+09 : f32
    %37 = vector.broadcast %cst_14 : f32 to vector<8x8xf32>
    %38 = vector.broadcast %cst_15 : f32 to vector<8x8xf32>
    %39 = arith.select %36, %37, %38 : vector<8x8xi1>, vector<8x8xf32>
    %c0_16 = arith.constant 0 : index
    %c0_17 = arith.constant 0 : index
    %40 = vector.load %arg3[%c0_16, %c0_17] : memref<2x8xf32, #tpu.memory_space<vmem>>, vector<2x8xf32>
    %c0_18 = arith.constant 0 : index
    %c0_19 = arith.constant 0 : index
    %41 = vector.load %arg4[%c0_18, %c0_19] : memref<2x8xf32, #tpu.memory_space<vmem>>, vector<2x8xf32>
    %42 = vector.extract_strided_slice %40 {offsets = [0, 0], sizes = [1, 8], strides = [1, 1]} : vector<2x8xf32> to vector<1x8xf32>
    %43 = vector.broadcast %42 : vector<1x8xf32> to vector<8x8xf32>
    %44 = arith.addf %39, %43 : vector<8x8xf32>
    %45 = vector.extract_strided_slice %40 {offsets = [1, 0], sizes = [1, 8], strides = [1, 1]} : vector<2x8xf32> to vector<1x8xf32>
    %46 = vector.broadcast %45 : vector<1x8xf32> to vector<8x8xf32>
    %47 = arith.addf %39, %46 : vector<8x8xf32>
    %48 = vector.extract_strided_slice %41 {offsets = [0, 0], sizes = [1, 8], strides = [1, 1]} : vector<2x8xf32> to vector<1x8xf32>
    %49 = vector.extract_strided_slice %41 {offsets = [1, 0], sizes = [1, 8], strides = [1, 1]} : vector<2x8xf32> to vector<1x8xf32>
    %c0_20 = arith.constant 0 : index
    %c0_21 = arith.constant 0 : index
    %50 = vector.load %arg2[%c0_20, %c0_21] : memref<16x32xf32, #tpu.memory_space<vmem>>, vector<16x32xf32>
    %c0_22 = arith.constant 0 : index
    %c0_23 = arith.constant 0 : index
    %c0_24 = arith.constant 0 : index
    %51 = vector.load %arg8[%c0_22, %c0_23, %c0_24] : memref<2x32x96xf32, #tpu.memory_space<vmem>>, vector<1x32x96xf32>
    %52 = vector.shape_cast %51 : vector<1x32x96xf32> to vector<32x96xf32>
    %cst_25 = arith.constant dense<0.000000e+00> : vector<16x96xf32>
    %53 = tpu.matmul %33, %52, %cst_25 {dimension_numbers = #tpu.dot_dimension_numbers<[1], [0], [0], [1], [0, 0, 1, 1], [], []>} : vector<16x32xf32>, vector<32x96xf32>, vector<16x96xf32> -> vector<16x96xf32>
    %c0_26 = arith.constant 0 : index
    %c0_27 = arith.constant 0 : index
    %c0_28 = arith.constant 0 : index
    %54 = vector.load %arg9[%c0_26, %c0_27, %c0_28] : memref<2x1x96xf32, #tpu.memory_space<vmem>>, vector<1x1x96xf32>
    %55 = vector.shape_cast %54 : vector<1x1x96xf32> to vector<1x96xf32>
    %56 = vector.broadcast %55 : vector<1x96xf32> to vector<16x96xf32>
    %57 = arith.addf %53, %56 : vector<16x96xf32>
    %58 = vector.extract_strided_slice %57 {offsets = [0, 0], sizes = [16, 32], strides = [1, 1]} : vector<16x96xf32> to vector<16x32xf32>
    %59 = vector.extract_strided_slice %57 {offsets = [0, 32], sizes = [16, 32], strides = [1, 1]} : vector<16x96xf32> to vector<16x32xf32>
    %60 = vector.extract_strided_slice %57 {offsets = [0, 64], sizes = [16, 32], strides = [1, 1]} : vector<16x96xf32> to vector<16x32xf32>
    %c0_29 = arith.constant 0 : index
    %c0_30 = arith.constant 0 : index
    %c0_31 = arith.constant 0 : index
    %61 = vector.load %arg10[%c0_29, %c0_30, %c0_31] : memref<2x32x32xf32, #tpu.memory_space<vmem>>, vector<1x32x32xf32>
    %62 = vector.shape_cast %61 : vector<1x32x32xf32> to vector<32x32xf32>
    %c0_32 = arith.constant 0 : index
    %c0_33 = arith.constant 0 : index
    %c0_34 = arith.constant 0 : index
    %63 = vector.load %arg11[%c0_32, %c0_33, %c0_34] : memref<2x1x32xf32, #tpu.memory_space<vmem>>, vector<1x1x32xf32>
    %64 = vector.shape_cast %63 : vector<1x1x32xf32> to vector<1x32xf32>
    %65 = vector.extract_strided_slice %58 {offsets = [0, 0], sizes = [8, 32], strides = [1, 1]} : vector<16x32xf32> to vector<8x32xf32>
    %66 = vector.extract_strided_slice %59 {offsets = [0, 0], sizes = [8, 32], strides = [1, 1]} : vector<16x32xf32> to vector<8x32xf32>
    %67 = vector.extract_strided_slice %60 {offsets = [0, 0], sizes = [8, 32], strides = [1, 1]} : vector<16x32xf32> to vector<8x32xf32>
    %cst_35 = arith.constant 0.000000e+00 : f32
    %68 = vector.broadcast %cst_35 : f32 to vector<8x32xf32>
    %69 = vector.extract_strided_slice %65 {offsets = [0, 0], sizes = [8, 8], strides = [1, 1]} : vector<8x32xf32> to vector<8x8xf32>
    %70 = vector.extract_strided_slice %66 {offsets = [0, 0], sizes = [8, 8], strides = [1, 1]} : vector<8x32xf32> to vector<8x8xf32>
    %cst_36 = arith.constant dense<0.000000e+00> : vector<8x8xf32>
    %71 = tpu.matmul %69, %70, %cst_36 {dimension_numbers = #tpu.dot_dimension_numbers<[1], [1], [0], [0], [0, 0, 1, 0], [], []>} : vector<8x8xf32>, vector<8x8xf32>, vector<8x8xf32> -> vector<8x8xf32>
    %72 = arith.addf %71, %44 : vector<8x8xf32>
    %cst_37 = arith.constant dense<0xFF800000> : vector<8xf32>
    %73 = vector.multi_reduction <maximumf>, %72, %cst_37 [1] : vector<8x8xf32> to vector<8xf32>
    %74 = vector.shape_cast %73 : vector<8xf32> to vector<8x1xf32>
    %75 = vector.broadcast %74 : vector<8x1xf32> to vector<8x8xf32>
    %76 = arith.subf %72, %75 : vector<8x8xf32>
    %77 = math.exp %76 : vector<8x8xf32>
    %cst_38 = arith.constant dense<0.000000e+00> : vector<8xf32>
    %78 = vector.multi_reduction <add>, %77, %cst_38 [1] : vector<8x8xf32> to vector<8xf32>
    %79 = vector.shape_cast %78 : vector<8xf32> to vector<8x1xf32>
    %80 = tpu.reciprocal %79 {approx = true} : vector<8x1xf32> -> vector<8x1xf32>
    %81 = vector.broadcast %80 : vector<8x1xf32> to vector<8x8xf32>
    %82 = arith.mulf %77, %81 : vector<8x8xf32>
    %83 = vector.extract_strided_slice %67 {offsets = [0, 0], sizes = [8, 8], strides = [1, 1]} : vector<8x32xf32> to vector<8x8xf32>
    %cst_39 = arith.constant dense<0.000000e+00> : vector<8x8xf32>
    %84 = tpu.matmul %82, %83, %cst_39 {dimension_numbers = #tpu.dot_dimension_numbers<[1], [0], [0], [1], [0, 0, 1, 1], [], []>} : vector<8x8xf32>, vector<8x8xf32>, vector<8x8xf32> -> vector<8x8xf32>
    %85 = vector.extract_strided_slice %62 {offsets = [0, 0], sizes = [8, 32], strides = [1, 1]} : vector<32x32xf32> to vector<8x32xf32>
    %cst_40 = arith.constant dense<0.000000e+00> : vector<8x32xf32>
    %86 = tpu.matmul %84, %85, %cst_40 {dimension_numbers = #tpu.dot_dimension_numbers<[1], [0], [0], [1], [0, 0, 1, 1], [], []>} : vector<8x8xf32>, vector<8x32xf32>, vector<8x32xf32> -> vector<8x32xf32>
    %87 = arith.addf %68, %86 : vector<8x32xf32>
    %88 = vector.extract_strided_slice %65 {offsets = [0, 8], sizes = [8, 8], strides = [1, 1]} : vector<8x32xf32> to vector<8x8xf32>
    %89 = vector.extract_strided_slice %66 {offsets = [0, 8], sizes = [8, 8], strides = [1, 1]} : vector<8x32xf32> to vector<8x8xf32>
    %cst_41 = arith.constant dense<0.000000e+00> : vector<8x8xf32>
    %90 = tpu.matmul %88, %89, %cst_41 {dimension_numbers = #tpu.dot_dimension_numbers<[1], [1], [0], [0], [0, 0, 1, 0], [], []>} : vector<8x8xf32>, vector<8x8xf32>, vector<8x8xf32> -> vector<8x8xf32>
    %91 = arith.addf %90, %44 : vector<8x8xf32>
    %cst_42 = arith.constant dense<0xFF800000> : vector<8xf32>
    %92 = vector.multi_reduction <maximumf>, %91, %cst_42 [1] : vector<8x8xf32> to vector<8xf32>
    %93 = vector.shape_cast %92 : vector<8xf32> to vector<8x1xf32>
    %94 = vector.broadcast %93 : vector<8x1xf32> to vector<8x8xf32>
    %95 = arith.subf %91, %94 : vector<8x8xf32>
    %96 = math.exp %95 : vector<8x8xf32>
    %cst_43 = arith.constant dense<0.000000e+00> : vector<8xf32>
    %97 = vector.multi_reduction <add>, %96, %cst_43 [1] : vector<8x8xf32> to vector<8xf32>
    %98 = vector.shape_cast %97 : vector<8xf32> to vector<8x1xf32>
    %99 = tpu.reciprocal %98 {approx = true} : vector<8x1xf32> -> vector<8x1xf32>
    %100 = vector.broadcast %99 : vector<8x1xf32> to vector<8x8xf32>
    %101 = arith.mulf %96, %100 : vector<8x8xf32>
    %102 = vector.extract_strided_slice %67 {offsets = [0, 8], sizes = [8, 8], strides = [1, 1]} : vector<8x32xf32> to vector<8x8xf32>
    %cst_44 = arith.constant dense<0.000000e+00> : vector<8x8xf32>
    %103 = tpu.matmul %101, %102, %cst_44 {dimension_numbers = #tpu.dot_dimension_numbers<[1], [0], [0], [1], [0, 0, 1, 1], [], []>} : vector<8x8xf32>, vector<8x8xf32>, vector<8x8xf32> -> vector<8x8xf32>
    %104 = vector.extract_strided_slice %62 {offsets = [8, 0], sizes = [8, 32], strides = [1, 1]} : vector<32x32xf32> to vector<8x32xf32>
    %cst_45 = arith.constant dense<0.000000e+00> : vector<8x32xf32>
    %105 = tpu.matmul %103, %104, %cst_45 {dimension_numbers = #tpu.dot_dimension_numbers<[1], [0], [0], [1], [0, 0, 1, 1], [], []>} : vector<8x8xf32>, vector<8x32xf32>, vector<8x32xf32> -> vector<8x32xf32>
    %106 = arith.addf %87, %105 : vector<8x32xf32>
    %107 = vector.extract_strided_slice %65 {offsets = [0, 16], sizes = [8, 8], strides = [1, 1]} : vector<8x32xf32> to vector<8x8xf32>
    %108 = vector.extract_strided_slice %66 {offsets = [0, 16], sizes = [8, 8], strides = [1, 1]} : vector<8x32xf32> to vector<8x8xf32>
    %cst_46 = arith.constant dense<0.000000e+00> : vector<8x8xf32>
    %109 = tpu.matmul %107, %108, %cst_46 {dimension_numbers = #tpu.dot_dimension_numbers<[1], [1], [0], [0], [0, 0, 1, 0], [], []>} : vector<8x8xf32>, vector<8x8xf32>, vector<8x8xf32> -> vector<8x8xf32>
    %110 = arith.addf %109, %44 : vector<8x8xf32>
    %cst_47 = arith.constant dense<0xFF800000> : vector<8xf32>
    %111 = vector.multi_reduction <maximumf>, %110, %cst_47 [1] : vector<8x8xf32> to vector<8xf32>
    %112 = vector.shape_cast %111 : vector<8xf32> to vector<8x1xf32>
    %113 = vector.broadcast %112 : vector<8x1xf32> to vector<8x8xf32>
    %114 = arith.subf %110, %113 : vector<8x8xf32>
    %115 = math.exp %114 : vector<8x8xf32>
    %cst_48 = arith.constant dense<0.000000e+00> : vector<8xf32>
    %116 = vector.multi_reduction <add>, %115, %cst_48 [1] : vector<8x8xf32> to vector<8xf32>
    %117 = vector.shape_cast %116 : vector<8xf32> to vector<8x1xf32>
    %118 = tpu.reciprocal %117 {approx = true} : vector<8x1xf32> -> vector<8x1xf32>
    %119 = vector.broadcast %118 : vector<8x1xf32> to vector<8x8xf32>
    %120 = arith.mulf %115, %119 : vector<8x8xf32>
    %121 = vector.extract_strided_slice %67 {offsets = [0, 16], sizes = [8, 8], strides = [1, 1]} : vector<8x32xf32> to vector<8x8xf32>
    %cst_49 = arith.constant dense<0.000000e+00> : vector<8x8xf32>
    %122 = tpu.matmul %120, %121, %cst_49 {dimension_numbers = #tpu.dot_dimension_numbers<[1], [0], [0], [1], [0, 0, 1, 1], [], []>} : vector<8x8xf32>, vector<8x8xf32>, vector<8x8xf32> -> vector<8x8xf32>
    %123 = vector.extract_strided_slice %62 {offsets = [16, 0], sizes = [8, 32], strides = [1, 1]} : vector<32x32xf32> to vector<8x32xf32>
    %cst_50 = arith.constant dense<0.000000e+00> : vector<8x32xf32>
    %124 = tpu.matmul %122, %123, %cst_50 {dimension_numbers = #tpu.dot_dimension_numbers<[1], [0], [0], [1], [0, 0, 1, 1], [], []>} : vector<8x8xf32>, vector<8x32xf32>, vector<8x32xf32> -> vector<8x32xf32>
    %125 = arith.addf %106, %124 : vector<8x32xf32>
    %126 = vector.extract_strided_slice %65 {offsets = [0, 24], sizes = [8, 8], strides = [1, 1]} : vector<8x32xf32> to vector<8x8xf32>
    %127 = vector.extract_strided_slice %66 {offsets = [0, 24], sizes = [8, 8], strides = [1, 1]} : vector<8x32xf32> to vector<8x8xf32>
    %cst_51 = arith.constant dense<0.000000e+00> : vector<8x8xf32>
    %128 = tpu.matmul %126, %127, %cst_51 {dimension_numbers = #tpu.dot_dimension_numbers<[1], [1], [0], [0], [0, 0, 1, 0], [], []>} : vector<8x8xf32>, vector<8x8xf32>, vector<8x8xf32> -> vector<8x8xf32>
    %129 = arith.addf %128, %44 : vector<8x8xf32>
    %cst_52 = arith.constant dense<0xFF800000> : vector<8xf32>
    %130 = vector.multi_reduction <maximumf>, %129, %cst_52 [1] : vector<8x8xf32> to vector<8xf32>
    %131 = vector.shape_cast %130 : vector<8xf32> to vector<8x1xf32>
    %132 = vector.broadcast %131 : vector<8x1xf32> to vector<8x8xf32>
    %133 = arith.subf %129, %132 : vector<8x8xf32>
    %134 = math.exp %133 : vector<8x8xf32>
    %cst_53 = arith.constant dense<0.000000e+00> : vector<8xf32>
    %135 = vector.multi_reduction <add>, %134, %cst_53 [1] : vector<8x8xf32> to vector<8xf32>
    %136 = vector.shape_cast %135 : vector<8xf32> to vector<8x1xf32>
    %137 = tpu.reciprocal %136 {approx = true} : vector<8x1xf32> -> vector<8x1xf32>
    %138 = vector.broadcast %137 : vector<8x1xf32> to vector<8x8xf32>
    %139 = arith.mulf %134, %138 : vector<8x8xf32>
    %140 = vector.extract_strided_slice %67 {offsets = [0, 24], sizes = [8, 8], strides = [1, 1]} : vector<8x32xf32> to vector<8x8xf32>
    %cst_54 = arith.constant dense<0.000000e+00> : vector<8x8xf32>
    %141 = tpu.matmul %139, %140, %cst_54 {dimension_numbers = #tpu.dot_dimension_numbers<[1], [0], [0], [1], [0, 0, 1, 1], [], []>} : vector<8x8xf32>, vector<8x8xf32>, vector<8x8xf32> -> vector<8x8xf32>
    %142 = vector.extract_strided_slice %62 {offsets = [24, 0], sizes = [8, 32], strides = [1, 1]} : vector<32x32xf32> to vector<8x32xf32>
    %cst_55 = arith.constant dense<0.000000e+00> : vector<8x32xf32>
    %143 = tpu.matmul %141, %142, %cst_55 {dimension_numbers = #tpu.dot_dimension_numbers<[1], [0], [0], [1], [0, 0, 1, 1], [], []>} : vector<8x8xf32>, vector<8x32xf32>, vector<8x32xf32> -> vector<8x32xf32>
    %144 = arith.addf %125, %143 : vector<8x32xf32>
    %145 = vector.extract_strided_slice %58 {offsets = [8, 0], sizes = [8, 32], strides = [1, 1]} : vector<16x32xf32> to vector<8x32xf32>
    %146 = vector.extract_strided_slice %59 {offsets = [8, 0], sizes = [8, 32], strides = [1, 1]} : vector<16x32xf32> to vector<8x32xf32>
    %147 = vector.extract_strided_slice %60 {offsets = [8, 0], sizes = [8, 32], strides = [1, 1]} : vector<16x32xf32> to vector<8x32xf32>
    %cst_56 = arith.constant 0.000000e+00 : f32
    %148 = vector.broadcast %cst_56 : f32 to vector<8x32xf32>
    %149 = vector.extract_strided_slice %145 {offsets = [0, 0], sizes = [8, 8], strides = [1, 1]} : vector<8x32xf32> to vector<8x8xf32>
    %150 = vector.extract_strided_slice %146 {offsets = [0, 0], sizes = [8, 8], strides = [1, 1]} : vector<8x32xf32> to vector<8x8xf32>
    %cst_57 = arith.constant dense<0.000000e+00> : vector<8x8xf32>
    %151 = tpu.matmul %149, %150, %cst_57 {dimension_numbers = #tpu.dot_dimension_numbers<[1], [1], [0], [0], [0, 0, 1, 0], [], []>} : vector<8x8xf32>, vector<8x8xf32>, vector<8x8xf32> -> vector<8x8xf32>
    %152 = arith.addf %151, %47 : vector<8x8xf32>
    %cst_58 = arith.constant dense<0xFF800000> : vector<8xf32>
    %153 = vector.multi_reduction <maximumf>, %152, %cst_58 [1] : vector<8x8xf32> to vector<8xf32>
    %154 = vector.shape_cast %153 : vector<8xf32> to vector<8x1xf32>
    %155 = vector.broadcast %154 : vector<8x1xf32> to vector<8x8xf32>
    %156 = arith.subf %152, %155 : vector<8x8xf32>
    %157 = math.exp %156 : vector<8x8xf32>
    %cst_59 = arith.constant dense<0.000000e+00> : vector<8xf32>
    %158 = vector.multi_reduction <add>, %157, %cst_59 [1] : vector<8x8xf32> to vector<8xf32>
    %159 = vector.shape_cast %158 : vector<8xf32> to vector<8x1xf32>
    %160 = tpu.reciprocal %159 {approx = true} : vector<8x1xf32> -> vector<8x1xf32>
    %161 = vector.broadcast %160 : vector<8x1xf32> to vector<8x8xf32>
    %162 = arith.mulf %157, %161 : vector<8x8xf32>
    %163 = vector.extract_strided_slice %147 {offsets = [0, 0], sizes = [8, 8], strides = [1, 1]} : vector<8x32xf32> to vector<8x8xf32>
    %cst_60 = arith.constant dense<0.000000e+00> : vector<8x8xf32>
    %164 = tpu.matmul %162, %163, %cst_60 {dimension_numbers = #tpu.dot_dimension_numbers<[1], [0], [0], [1], [0, 0, 1, 1], [], []>} : vector<8x8xf32>, vector<8x8xf32>, vector<8x8xf32> -> vector<8x8xf32>
    %165 = vector.extract_strided_slice %62 {offsets = [0, 0], sizes = [8, 32], strides = [1, 1]} : vector<32x32xf32> to vector<8x32xf32>
    %cst_61 = arith.constant dense<0.000000e+00> : vector<8x32xf32>
    %166 = tpu.matmul %164, %165, %cst_61 {dimension_numbers = #tpu.dot_dimension_numbers<[1], [0], [0], [1], [0, 0, 1, 1], [], []>} : vector<8x8xf32>, vector<8x32xf32>, vector<8x32xf32> -> vector<8x32xf32>
    %167 = arith.addf %148, %166 : vector<8x32xf32>
    %168 = vector.extract_strided_slice %145 {offsets = [0, 8], sizes = [8, 8], strides = [1, 1]} : vector<8x32xf32> to vector<8x8xf32>
    %169 = vector.extract_strided_slice %146 {offsets = [0, 8], sizes = [8, 8], strides = [1, 1]} : vector<8x32xf32> to vector<8x8xf32>
    %cst_62 = arith.constant dense<0.000000e+00> : vector<8x8xf32>
    %170 = tpu.matmul %168, %169, %cst_62 {dimension_numbers = #tpu.dot_dimension_numbers<[1], [1], [0], [0], [0, 0, 1, 0], [], []>} : vector<8x8xf32>, vector<8x8xf32>, vector<8x8xf32> -> vector<8x8xf32>
    %171 = arith.addf %170, %47 : vector<8x8xf32>
    %cst_63 = arith.constant dense<0xFF800000> : vector<8xf32>
    %172 = vector.multi_reduction <maximumf>, %171, %cst_63 [1] : vector<8x8xf32> to vector<8xf32>
    %173 = vector.shape_cast %172 : vector<8xf32> to vector<8x1xf32>
    %174 = vector.broadcast %173 : vector<8x1xf32> to vector<8x8xf32>
    %175 = arith.subf %171, %174 : vector<8x8xf32>
    %176 = math.exp %175 : vector<8x8xf32>
    %cst_64 = arith.constant dense<0.000000e+00> : vector<8xf32>
    %177 = vector.multi_reduction <add>, %176, %cst_64 [1] : vector<8x8xf32> to vector<8xf32>
    %178 = vector.shape_cast %177 : vector<8xf32> to vector<8x1xf32>
    %179 = tpu.reciprocal %178 {approx = true} : vector<8x1xf32> -> vector<8x1xf32>
    %180 = vector.broadcast %179 : vector<8x1xf32> to vector<8x8xf32>
    %181 = arith.mulf %176, %180 : vector<8x8xf32>
    %182 = vector.extract_strided_slice %147 {offsets = [0, 8], sizes = [8, 8], strides = [1, 1]} : vector<8x32xf32> to vector<8x8xf32>
    %cst_65 = arith.constant dense<0.000000e+00> : vector<8x8xf32>
    %183 = tpu.matmul %181, %182, %cst_65 {dimension_numbers = #tpu.dot_dimension_numbers<[1], [0], [0], [1], [0, 0, 1, 1], [], []>} : vector<8x8xf32>, vector<8x8xf32>, vector<8x8xf32> -> vector<8x8xf32>
    %184 = vector.extract_strided_slice %62 {offsets = [8, 0], sizes = [8, 32], strides = [1, 1]} : vector<32x32xf32> to vector<8x32xf32>
    %cst_66 = arith.constant dense<0.000000e+00> : vector<8x32xf32>
    %185 = tpu.matmul %183, %184, %cst_66 {dimension_numbers = #tpu.dot_dimension_numbers<[1], [0], [0], [1], [0, 0, 1, 1], [], []>} : vector<8x8xf32>, vector<8x32xf32>, vector<8x32xf32> -> vector<8x32xf32>
    %186 = arith.addf %167, %185 : vector<8x32xf32>
    %187 = vector.extract_strided_slice %145 {offsets = [0, 16], sizes = [8, 8], strides = [1, 1]} : vector<8x32xf32> to vector<8x8xf32>
    %188 = vector.extract_strided_slice %146 {offsets = [0, 16], sizes = [8, 8], strides = [1, 1]} : vector<8x32xf32> to vector<8x8xf32>
    %cst_67 = arith.constant dense<0.000000e+00> : vector<8x8xf32>
    %189 = tpu.matmul %187, %188, %cst_67 {dimension_numbers = #tpu.dot_dimension_numbers<[1], [1], [0], [0], [0, 0, 1, 0], [], []>} : vector<8x8xf32>, vector<8x8xf32>, vector<8x8xf32> -> vector<8x8xf32>
    %190 = arith.addf %189, %47 : vector<8x8xf32>
    %cst_68 = arith.constant dense<0xFF800000> : vector<8xf32>
    %191 = vector.multi_reduction <maximumf>, %190, %cst_68 [1] : vector<8x8xf32> to vector<8xf32>
    %192 = vector.shape_cast %191 : vector<8xf32> to vector<8x1xf32>
    %193 = vector.broadcast %192 : vector<8x1xf32> to vector<8x8xf32>
    %194 = arith.subf %190, %193 : vector<8x8xf32>
    %195 = math.exp %194 : vector<8x8xf32>
    %cst_69 = arith.constant dense<0.000000e+00> : vector<8xf32>
    %196 = vector.multi_reduction <add>, %195, %cst_69 [1] : vector<8x8xf32> to vector<8xf32>
    %197 = vector.shape_cast %196 : vector<8xf32> to vector<8x1xf32>
    %198 = tpu.reciprocal %197 {approx = true} : vector<8x1xf32> -> vector<8x1xf32>
    %199 = vector.broadcast %198 : vector<8x1xf32> to vector<8x8xf32>
    %200 = arith.mulf %195, %199 : vector<8x8xf32>
    %201 = vector.extract_strided_slice %147 {offsets = [0, 16], sizes = [8, 8], strides = [1, 1]} : vector<8x32xf32> to vector<8x8xf32>
    %cst_70 = arith.constant dense<0.000000e+00> : vector<8x8xf32>
    %202 = tpu.matmul %200, %201, %cst_70 {dimension_numbers = #tpu.dot_dimension_numbers<[1], [0], [0], [1], [0, 0, 1, 1], [], []>} : vector<8x8xf32>, vector<8x8xf32>, vector<8x8xf32> -> vector<8x8xf32>
    %203 = vector.extract_strided_slice %62 {offsets = [16, 0], sizes = [8, 32], strides = [1, 1]} : vector<32x32xf32> to vector<8x32xf32>
    %cst_71 = arith.constant dense<0.000000e+00> : vector<8x32xf32>
    %204 = tpu.matmul %202, %203, %cst_71 {dimension_numbers = #tpu.dot_dimension_numbers<[1], [0], [0], [1], [0, 0, 1, 1], [], []>} : vector<8x8xf32>, vector<8x32xf32>, vector<8x32xf32> -> vector<8x32xf32>
    %205 = arith.addf %186, %204 : vector<8x32xf32>
    %206 = vector.extract_strided_slice %145 {offsets = [0, 24], sizes = [8, 8], strides = [1, 1]} : vector<8x32xf32> to vector<8x8xf32>
    %207 = vector.extract_strided_slice %146 {offsets = [0, 24], sizes = [8, 8], strides = [1, 1]} : vector<8x32xf32> to vector<8x8xf32>
    %cst_72 = arith.constant dense<0.000000e+00> : vector<8x8xf32>
    %208 = tpu.matmul %206, %207, %cst_72 {dimension_numbers = #tpu.dot_dimension_numbers<[1], [1], [0], [0], [0, 0, 1, 0], [], []>} : vector<8x8xf32>, vector<8x8xf32>, vector<8x8xf32> -> vector<8x8xf32>
    %209 = arith.addf %208, %47 : vector<8x8xf32>
    %cst_73 = arith.constant dense<0xFF800000> : vector<8xf32>
    %210 = vector.multi_reduction <maximumf>, %209, %cst_73 [1] : vector<8x8xf32> to vector<8xf32>
    %211 = vector.shape_cast %210 : vector<8xf32> to vector<8x1xf32>
    %212 = vector.broadcast %211 : vector<8x1xf32> to vector<8x8xf32>
    %213 = arith.subf %209, %212 : vector<8x8xf32>
    %214 = math.exp %213 : vector<8x8xf32>
    %cst_74 = arith.constant dense<0.000000e+00> : vector<8xf32>
    %215 = vector.multi_reduction <add>, %214, %cst_74 [1] : vector<8x8xf32> to vector<8xf32>
    %216 = vector.shape_cast %215 : vector<8xf32> to vector<8x1xf32>
    %217 = tpu.reciprocal %216 {approx = true} : vector<8x1xf32> -> vector<8x1xf32>
    %218 = vector.broadcast %217 : vector<8x1xf32> to vector<8x8xf32>
    %219 = arith.mulf %214, %218 : vector<8x8xf32>
    %220 = vector.extract_strided_slice %147 {offsets = [0, 24], sizes = [8, 8], strides = [1, 1]} : vector<8x32xf32> to vector<8x8xf32>
    %cst_75 = arith.constant dense<0.000000e+00> : vector<8x8xf32>
    %221 = tpu.matmul %219, %220, %cst_75 {dimension_numbers = #tpu.dot_dimension_numbers<[1], [0], [0], [1], [0, 0, 1, 1], [], []>} : vector<8x8xf32>, vector<8x8xf32>, vector<8x8xf32> -> vector<8x8xf32>
    %222 = vector.extract_strided_slice %62 {offsets = [24, 0], sizes = [8, 32], strides = [1, 1]} : vector<32x32xf32> to vector<8x32xf32>
    %cst_76 = arith.constant dense<0.000000e+00> : vector<8x32xf32>
    %223 = tpu.matmul %221, %222, %cst_76 {dimension_numbers = #tpu.dot_dimension_numbers<[1], [0], [0], [1], [0, 0, 1, 1], [], []>} : vector<8x8xf32>, vector<8x32xf32>, vector<8x32xf32> -> vector<8x32xf32>
    %224 = arith.addf %205, %223 : vector<8x32xf32>
    %225 = tpu.concatenate %144, %224 in 0 : vector<8x32xf32>, vector<8x32xf32> -> vector<16x32xf32>
    %226 = vector.broadcast %64 : vector<1x32xf32> to vector<16x32xf32>
    %227 = arith.addf %225, %226 : vector<16x32xf32>
    %228 = arith.addf %33, %227 : vector<16x32xf32>
    %c0_77 = arith.constant 0 : index
    %c0_78 = arith.constant 0 : index
    %c0_79 = arith.constant 0 : index
    %229 = vector.load %arg12[%c0_77, %c0_78, %c0_79] : memref<2x1x32xf32, #tpu.memory_space<vmem>>, vector<1x1x32xf32>
    %230 = vector.shape_cast %229 : vector<1x1x32xf32> to vector<1x32xf32>
    %c0_80 = arith.constant 0 : index
    %c0_81 = arith.constant 0 : index
    %c0_82 = arith.constant 0 : index
    %231 = vector.load %arg13[%c0_80, %c0_81, %c0_82] : memref<2x1x32xf32, #tpu.memory_space<vmem>>, vector<1x1x32xf32>
    %232 = vector.shape_cast %231 : vector<1x1x32xf32> to vector<1x32xf32>
    %cst_83 = arith.constant dense<0.000000e+00> : vector<16xf32>
    %233 = vector.multi_reduction <add>, %228, %cst_83 [1] : vector<16x32xf32> to vector<16xf32>
    %234 = vector.shape_cast %233 : vector<16xf32> to vector<16x1xf32>
    %cst_84 = arith.constant 3.200000e+01 : f32
    %235 = vector.broadcast %cst_84 : f32 to vector<16x1xf32>
    %236 = arith.divf %234, %235 : vector<16x1xf32>
    %237 = vector.broadcast %236 : vector<16x1xf32> to vector<16x32xf32>
    %238 = arith.subf %228, %237 : vector<16x32xf32>
    %239 = arith.mulf %238, %238 : vector<16x32xf32>
    %cst_85 = arith.constant dense<0.000000e+00> : vector<16xf32>
    %240 = vector.multi_reduction <add>, %239, %cst_85 [1] : vector<16x32xf32> to vector<16xf32>
    %241 = vector.shape_cast %240 : vector<16xf32> to vector<16x1xf32>
    %cst_86 = arith.constant 3.200000e+01 : f32
    %242 = vector.broadcast %cst_86 : f32 to vector<16x1xf32>
    %243 = arith.divf %241, %242 : vector<16x1xf32>
    %244 = vector.broadcast %236 : vector<16x1xf32> to vector<16x32xf32>
    %245 = arith.subf %228, %244 : vector<16x32xf32>
    %cst_87 = arith.constant 9.99999974E-6 : f32
    %246 = vector.broadcast %cst_87 : f32 to vector<16x1xf32>
    %247 = arith.addf %243, %246 : vector<16x1xf32>
    %248 = math.rsqrt %247 : vector<16x1xf32>
    %249 = vector.broadcast %248 : vector<16x1xf32> to vector<16x32xf32>
    %250 = arith.mulf %245, %249 : vector<16x32xf32>
    %251 = vector.broadcast %230 : vector<1x32xf32> to vector<16x32xf32>
    %252 = arith.mulf %250, %251 : vector<16x32xf32>
    %253 = vector.broadcast %232 : vector<1x32xf32> to vector<16x32xf32>
    %254 = arith.addf %252, %253 : vector<16x32xf32>
    %c0_88 = arith.constant 0 : index
    %c0_89 = arith.constant 0 : index
    %c0_90 = arith.constant 0 : index
    %255 = vector.load %arg14[%c0_88, %c0_89, %c0_90] : memref<2x32x32xf32, #tpu.memory_space<vmem>>, vector<1x32x32xf32>
    %256 = vector.shape_cast %255 : vector<1x32x32xf32> to vector<32x32xf32>
    %cst_91 = arith.constant dense<0.000000e+00> : vector<16x32xf32>
    %257 = tpu.matmul %254, %256, %cst_91 {dimension_numbers = #tpu.dot_dimension_numbers<[1], [0], [0], [1], [0, 0, 1, 1], [], []>} : vector<16x32xf32>, vector<32x32xf32>, vector<16x32xf32> -> vector<16x32xf32>
    %c0_92 = arith.constant 0 : index
    %c0_93 = arith.constant 0 : index
    %c0_94 = arith.constant 0 : index
    %258 = vector.load %arg15[%c0_92, %c0_93, %c0_94] : memref<2x1x32xf32, #tpu.memory_space<vmem>>, vector<1x1x32xf32>
    %259 = vector.shape_cast %258 : vector<1x1x32xf32> to vector<1x32xf32>
    %260 = vector.broadcast %259 : vector<1x32xf32> to vector<16x32xf32>
    %261 = arith.addf %257, %260 : vector<16x32xf32>
    %c0_95 = arith.constant 0 : index
    %c0_96 = arith.constant 0 : index
    %c0_97 = arith.constant 0 : index
    %262 = vector.load %arg16[%c0_95, %c0_96, %c0_97] : memref<2x32x64xf32, #tpu.memory_space<vmem>>, vector<1x32x64xf32>
    %263 = vector.shape_cast %262 : vector<1x32x64xf32> to vector<32x64xf32>
    %cst_98 = arith.constant dense<0.000000e+00> : vector<16x64xf32>
    %264 = tpu.matmul %50, %263, %cst_98 {dimension_numbers = #tpu.dot_dimension_numbers<[1], [0], [0], [1], [0, 0, 1, 1], [], []>} : vector<16x32xf32>, vector<32x64xf32>, vector<16x64xf32> -> vector<16x64xf32>
    %c0_99 = arith.constant 0 : index
    %c0_100 = arith.constant 0 : index
    %c0_101 = arith.constant 0 : index
    %265 = vector.load %arg17[%c0_99, %c0_100, %c0_101] : memref<2x1x64xf32, #tpu.memory_space<vmem>>, vector<1x1x64xf32>
    %266 = vector.shape_cast %265 : vector<1x1x64xf32> to vector<1x64xf32>
    %267 = vector.broadcast %266 : vector<1x64xf32> to vector<16x64xf32>
    %268 = arith.addf %264, %267 : vector<16x64xf32>
    %269 = vector.extract_strided_slice %268 {offsets = [0, 0], sizes = [16, 32], strides = [1, 1]} : vector<16x64xf32> to vector<16x32xf32>
    %270 = vector.extract_strided_slice %268 {offsets = [0, 32], sizes = [16, 32], strides = [1, 1]} : vector<16x64xf32> to vector<16x32xf32>
    %c0_102 = arith.constant 0 : index
    %c0_103 = arith.constant 0 : index
    %c0_104 = arith.constant 0 : index
    %271 = vector.load %arg18[%c0_102, %c0_103, %c0_104] : memref<2x32x32xf32, #tpu.memory_space<vmem>>, vector<1x32x32xf32>
    %272 = vector.shape_cast %271 : vector<1x32x32xf32> to vector<32x32xf32>
    %c0_105 = arith.constant 0 : index
    %c0_106 = arith.constant 0 : index
    %c0_107 = arith.constant 0 : index
    %273 = vector.load %arg19[%c0_105, %c0_106, %c0_107] : memref<2x1x32xf32, #tpu.memory_space<vmem>>, vector<1x1x32xf32>
    %274 = vector.shape_cast %273 : vector<1x1x32xf32> to vector<1x32xf32>
    %275 = vector.extract_strided_slice %261 {offsets = [0, 0], sizes = [8, 32], strides = [1, 1]} : vector<16x32xf32> to vector<8x32xf32>
    %276 = vector.extract_strided_slice %269 {offsets = [0, 0], sizes = [8, 32], strides = [1, 1]} : vector<16x32xf32> to vector<8x32xf32>
    %277 = vector.extract_strided_slice %270 {offsets = [0, 0], sizes = [8, 32], strides = [1, 1]} : vector<16x32xf32> to vector<8x32xf32>
    %cst_108 = arith.constant 0.000000e+00 : f32
    %278 = vector.broadcast %cst_108 : f32 to vector<8x32xf32>
    %279 = vector.extract_strided_slice %275 {offsets = [0, 0], sizes = [8, 8], strides = [1, 1]} : vector<8x32xf32> to vector<8x8xf32>
    %280 = vector.extract_strided_slice %276 {offsets = [0, 0], sizes = [8, 8], strides = [1, 1]} : vector<8x32xf32> to vector<8x8xf32>
    %cst_109 = arith.constant dense<0.000000e+00> : vector<8x8xf32>
    %281 = tpu.matmul %279, %280, %cst_109 {dimension_numbers = #tpu.dot_dimension_numbers<[1], [1], [0], [0], [0, 0, 1, 0], [], []>} : vector<8x8xf32>, vector<8x8xf32>, vector<8x8xf32> -> vector<8x8xf32>
    %282 = vector.broadcast %48 : vector<1x8xf32> to vector<8x8xf32>
    %283 = arith.addf %281, %282 : vector<8x8xf32>
    %cst_110 = arith.constant dense<0xFF800000> : vector<8xf32>
    %284 = vector.multi_reduction <maximumf>, %283, %cst_110 [1] : vector<8x8xf32> to vector<8xf32>
    %285 = vector.shape_cast %284 : vector<8xf32> to vector<8x1xf32>
    %286 = vector.broadcast %285 : vector<8x1xf32> to vector<8x8xf32>
    %287 = arith.subf %283, %286 : vector<8x8xf32>
    %288 = math.exp %287 : vector<8x8xf32>
    %cst_111 = arith.constant dense<0.000000e+00> : vector<8xf32>
    %289 = vector.multi_reduction <add>, %288, %cst_111 [1] : vector<8x8xf32> to vector<8xf32>
    %290 = vector.shape_cast %289 : vector<8xf32> to vector<8x1xf32>
    %291 = tpu.reciprocal %290 {approx = true} : vector<8x1xf32> -> vector<8x1xf32>
    %292 = vector.broadcast %291 : vector<8x1xf32> to vector<8x8xf32>
    %293 = arith.mulf %288, %292 : vector<8x8xf32>
    %294 = vector.extract_strided_slice %277 {offsets = [0, 0], sizes = [8, 8], strides = [1, 1]} : vector<8x32xf32> to vector<8x8xf32>
    %cst_112 = arith.constant dense<0.000000e+00> : vector<8x8xf32>
    %295 = tpu.matmul %293, %294, %cst_112 {dimension_numbers = #tpu.dot_dimension_numbers<[1], [0], [0], [1], [0, 0, 1, 1], [], []>} : vector<8x8xf32>, vector<8x8xf32>, vector<8x8xf32> -> vector<8x8xf32>
    %296 = vector.extract_strided_slice %272 {offsets = [0, 0], sizes = [8, 32], strides = [1, 1]} : vector<32x32xf32> to vector<8x32xf32>
    %cst_113 = arith.constant dense<0.000000e+00> : vector<8x32xf32>
    %297 = tpu.matmul %295, %296, %cst_113 {dimension_numbers = #tpu.dot_dimension_numbers<[1], [0], [0], [1], [0, 0, 1, 1], [], []>} : vector<8x8xf32>, vector<8x32xf32>, vector<8x32xf32> -> vector<8x32xf32>
    %298 = arith.addf %278, %297 : vector<8x32xf32>
    %299 = vector.extract_strided_slice %275 {offsets = [0, 8], sizes = [8, 8], strides = [1, 1]} : vector<8x32xf32> to vector<8x8xf32>
    %300 = vector.extract_strided_slice %276 {offsets = [0, 8], sizes = [8, 8], strides = [1, 1]} : vector<8x32xf32> to vector<8x8xf32>
    %cst_114 = arith.constant dense<0.000000e+00> : vector<8x8xf32>
    %301 = tpu.matmul %299, %300, %cst_114 {dimension_numbers = #tpu.dot_dimension_numbers<[1], [1], [0], [0], [0, 0, 1, 0], [], []>} : vector<8x8xf32>, vector<8x8xf32>, vector<8x8xf32> -> vector<8x8xf32>
    %302 = vector.broadcast %48 : vector<1x8xf32> to vector<8x8xf32>
    %303 = arith.addf %301, %302 : vector<8x8xf32>
    %cst_115 = arith.constant dense<0xFF800000> : vector<8xf32>
    %304 = vector.multi_reduction <maximumf>, %303, %cst_115 [1] : vector<8x8xf32> to vector<8xf32>
    %305 = vector.shape_cast %304 : vector<8xf32> to vector<8x1xf32>
    %306 = vector.broadcast %305 : vector<8x1xf32> to vector<8x8xf32>
    %307 = arith.subf %303, %306 : vector<8x8xf32>
    %308 = math.exp %307 : vector<8x8xf32>
    %cst_116 = arith.constant dense<0.000000e+00> : vector<8xf32>
    %309 = vector.multi_reduction <add>, %308, %cst_116 [1] : vector<8x8xf32> to vector<8xf32>
    %310 = vector.shape_cast %309 : vector<8xf32> to vector<8x1xf32>
    %311 = tpu.reciprocal %310 {approx = true} : vector<8x1xf32> -> vector<8x1xf32>
    %312 = vector.broadcast %311 : vector<8x1xf32> to vector<8x8xf32>
    %313 = arith.mulf %308, %312 : vector<8x8xf32>
    %314 = vector.extract_strided_slice %277 {offsets = [0, 8], sizes = [8, 8], strides = [1, 1]} : vector<8x32xf32> to vector<8x8xf32>
    %cst_117 = arith.constant dense<0.000000e+00> : vector<8x8xf32>
    %315 = tpu.matmul %313, %314, %cst_117 {dimension_numbers = #tpu.dot_dimension_numbers<[1], [0], [0], [1], [0, 0, 1, 1], [], []>} : vector<8x8xf32>, vector<8x8xf32>, vector<8x8xf32> -> vector<8x8xf32>
    %316 = vector.extract_strided_slice %272 {offsets = [8, 0], sizes = [8, 32], strides = [1, 1]} : vector<32x32xf32> to vector<8x32xf32>
    %cst_118 = arith.constant dense<0.000000e+00> : vector<8x32xf32>
    %317 = tpu.matmul %315, %316, %cst_118 {dimension_numbers = #tpu.dot_dimension_numbers<[1], [0], [0], [1], [0, 0, 1, 1], [], []>} : vector<8x8xf32>, vector<8x32xf32>, vector<8x32xf32> -> vector<8x32xf32>
    %318 = arith.addf %298, %317 : vector<8x32xf32>
    %319 = vector.extract_strided_slice %275 {offsets = [0, 16], sizes = [8, 8], strides = [1, 1]} : vector<8x32xf32> to vector<8x8xf32>
    %320 = vector.extract_strided_slice %276 {offsets = [0, 16], sizes = [8, 8], strides = [1, 1]} : vector<8x32xf32> to vector<8x8xf32>
    %cst_119 = arith.constant dense<0.000000e+00> : vector<8x8xf32>
    %321 = tpu.matmul %319, %320, %cst_119 {dimension_numbers = #tpu.dot_dimension_numbers<[1], [1], [0], [0], [0, 0, 1, 0], [], []>} : vector<8x8xf32>, vector<8x8xf32>, vector<8x8xf32> -> vector<8x8xf32>
    %322 = vector.broadcast %48 : vector<1x8xf32> to vector<8x8xf32>
    %323 = arith.addf %321, %322 : vector<8x8xf32>
    %cst_120 = arith.constant dense<0xFF800000> : vector<8xf32>
    %324 = vector.multi_reduction <maximumf>, %323, %cst_120 [1] : vector<8x8xf32> to vector<8xf32>
    %325 = vector.shape_cast %324 : vector<8xf32> to vector<8x1xf32>
    %326 = vector.broadcast %325 : vector<8x1xf32> to vector<8x8xf32>
    %327 = arith.subf %323, %326 : vector<8x8xf32>
    %328 = math.exp %327 : vector<8x8xf32>
    %cst_121 = arith.constant dense<0.000000e+00> : vector<8xf32>
    %329 = vector.multi_reduction <add>, %328, %cst_121 [1] : vector<8x8xf32> to vector<8xf32>
    %330 = vector.shape_cast %329 : vector<8xf32> to vector<8x1xf32>
    %331 = tpu.reciprocal %330 {approx = true} : vector<8x1xf32> -> vector<8x1xf32>
    %332 = vector.broadcast %331 : vector<8x1xf32> to vector<8x8xf32>
    %333 = arith.mulf %328, %332 : vector<8x8xf32>
    %334 = vector.extract_strided_slice %277 {offsets = [0, 16], sizes = [8, 8], strides = [1, 1]} : vector<8x32xf32> to vector<8x8xf32>
    %cst_122 = arith.constant dense<0.000000e+00> : vector<8x8xf32>
    %335 = tpu.matmul %333, %334, %cst_122 {dimension_numbers = #tpu.dot_dimension_numbers<[1], [0], [0], [1], [0, 0, 1, 1], [], []>} : vector<8x8xf32>, vector<8x8xf32>, vector<8x8xf32> -> vector<8x8xf32>
    %336 = vector.extract_strided_slice %272 {offsets = [16, 0], sizes = [8, 32], strides = [1, 1]} : vector<32x32xf32> to vector<8x32xf32>
    %cst_123 = arith.constant dense<0.000000e+00> : vector<8x32xf32>
    %337 = tpu.matmul %335, %336, %cst_123 {dimension_numbers = #tpu.dot_dimension_numbers<[1], [0], [0], [1], [0, 0, 1, 1], [], []>} : vector<8x8xf32>, vector<8x32xf32>, vector<8x32xf32> -> vector<8x32xf32>
    %338 = arith.addf %318, %337 : vector<8x32xf32>
    %339 = vector.extract_strided_slice %275 {offsets = [0, 24], sizes = [8, 8], strides = [1, 1]} : vector<8x32xf32> to vector<8x8xf32>
    %340 = vector.extract_strided_slice %276 {offsets = [0, 24], sizes = [8, 8], strides = [1, 1]} : vector<8x32xf32> to vector<8x8xf32>
    %cst_124 = arith.constant dense<0.000000e+00> : vector<8x8xf32>
    %341 = tpu.matmul %339, %340, %cst_124 {dimension_numbers = #tpu.dot_dimension_numbers<[1], [1], [0], [0], [0, 0, 1, 0], [], []>} : vector<8x8xf32>, vector<8x8xf32>, vector<8x8xf32> -> vector<8x8xf32>
    %342 = vector.broadcast %48 : vector<1x8xf32> to vector<8x8xf32>
    %343 = arith.addf %341, %342 : vector<8x8xf32>
    %cst_125 = arith.constant dense<0xFF800000> : vector<8xf32>
    %344 = vector.multi_reduction <maximumf>, %343, %cst_125 [1] : vector<8x8xf32> to vector<8xf32>
    %345 = vector.shape_cast %344 : vector<8xf32> to vector<8x1xf32>
    %346 = vector.broadcast %345 : vector<8x1xf32> to vector<8x8xf32>
    %347 = arith.subf %343, %346 : vector<8x8xf32>
    %348 = math.exp %347 : vector<8x8xf32>
    %cst_126 = arith.constant dense<0.000000e+00> : vector<8xf32>
    %349 = vector.multi_reduction <add>, %348, %cst_126 [1] : vector<8x8xf32> to vector<8xf32>
    %350 = vector.shape_cast %349 : vector<8xf32> to vector<8x1xf32>
    %351 = tpu.reciprocal %350 {approx = true} : vector<8x1xf32> -> vector<8x1xf32>
    %352 = vector.broadcast %351 : vector<8x1xf32> to vector<8x8xf32>
    %353 = arith.mulf %348, %352 : vector<8x8xf32>
    %354 = vector.extract_strided_slice %277 {offsets = [0, 24], sizes = [8, 8], strides = [1, 1]} : vector<8x32xf32> to vector<8x8xf32>
    %cst_127 = arith.constant dense<0.000000e+00> : vector<8x8xf32>
    %355 = tpu.matmul %353, %354, %cst_127 {dimension_numbers = #tpu.dot_dimension_numbers<[1], [0], [0], [1], [0, 0, 1, 1], [], []>} : vector<8x8xf32>, vector<8x8xf32>, vector<8x8xf32> -> vector<8x8xf32>
    %356 = vector.extract_strided_slice %272 {offsets = [24, 0], sizes = [8, 32], strides = [1, 1]} : vector<32x32xf32> to vector<8x32xf32>
    %cst_128 = arith.constant dense<0.000000e+00> : vector<8x32xf32>
    %357 = tpu.matmul %355, %356, %cst_128 {dimension_numbers = #tpu.dot_dimension_numbers<[1], [0], [0], [1], [0, 0, 1, 1], [], []>} : vector<8x8xf32>, vector<8x32xf32>, vector<8x32xf32> -> vector<8x32xf32>
    %358 = arith.addf %338, %357 : vector<8x32xf32>
    %359 = vector.extract_strided_slice %261 {offsets = [8, 0], sizes = [8, 32], strides = [1, 1]} : vector<16x32xf32> to vector<8x32xf32>
    %360 = vector.extract_strided_slice %269 {offsets = [8, 0], sizes = [8, 32], strides = [1, 1]} : vector<16x32xf32> to vector<8x32xf32>
    %361 = vector.extract_strided_slice %270 {offsets = [8, 0], sizes = [8, 32], strides = [1, 1]} : vector<16x32xf32> to vector<8x32xf32>
    %cst_129 = arith.constant 0.000000e+00 : f32
    %362 = vector.broadcast %cst_129 : f32 to vector<8x32xf32>
    %363 = vector.extract_strided_slice %359 {offsets = [0, 0], sizes = [8, 8], strides = [1, 1]} : vector<8x32xf32> to vector<8x8xf32>
    %364 = vector.extract_strided_slice %360 {offsets = [0, 0], sizes = [8, 8], strides = [1, 1]} : vector<8x32xf32> to vector<8x8xf32>
    %cst_130 = arith.constant dense<0.000000e+00> : vector<8x8xf32>
    %365 = tpu.matmul %363, %364, %cst_130 {dimension_numbers = #tpu.dot_dimension_numbers<[1], [1], [0], [0], [0, 0, 1, 0], [], []>} : vector<8x8xf32>, vector<8x8xf32>, vector<8x8xf32> -> vector<8x8xf32>
    %366 = vector.broadcast %49 : vector<1x8xf32> to vector<8x8xf32>
    %367 = arith.addf %365, %366 : vector<8x8xf32>
    %cst_131 = arith.constant dense<0xFF800000> : vector<8xf32>
    %368 = vector.multi_reduction <maximumf>, %367, %cst_131 [1] : vector<8x8xf32> to vector<8xf32>
    %369 = vector.shape_cast %368 : vector<8xf32> to vector<8x1xf32>
    %370 = vector.broadcast %369 : vector<8x1xf32> to vector<8x8xf32>
    %371 = arith.subf %367, %370 : vector<8x8xf32>
    %372 = math.exp %371 : vector<8x8xf32>
    %cst_132 = arith.constant dense<0.000000e+00> : vector<8xf32>
    %373 = vector.multi_reduction <add>, %372, %cst_132 [1] : vector<8x8xf32> to vector<8xf32>
    %374 = vector.shape_cast %373 : vector<8xf32> to vector<8x1xf32>
    %375 = tpu.reciprocal %374 {approx = true} : vector<8x1xf32> -> vector<8x1xf32>
    %376 = vector.broadcast %375 : vector<8x1xf32> to vector<8x8xf32>
    %377 = arith.mulf %372, %376 : vector<8x8xf32>
    %378 = vector.extract_strided_slice %361 {offsets = [0, 0], sizes = [8, 8], strides = [1, 1]} : vector<8x32xf32> to vector<8x8xf32>
    %cst_133 = arith.constant dense<0.000000e+00> : vector<8x8xf32>
    %379 = tpu.matmul %377, %378, %cst_133 {dimension_numbers = #tpu.dot_dimension_numbers<[1], [0], [0], [1], [0, 0, 1, 1], [], []>} : vector<8x8xf32>, vector<8x8xf32>, vector<8x8xf32> -> vector<8x8xf32>
    %380 = vector.extract_strided_slice %272 {offsets = [0, 0], sizes = [8, 32], strides = [1, 1]} : vector<32x32xf32> to vector<8x32xf32>
    %cst_134 = arith.constant dense<0.000000e+00> : vector<8x32xf32>
    %381 = tpu.matmul %379, %380, %cst_134 {dimension_numbers = #tpu.dot_dimension_numbers<[1], [0], [0], [1], [0, 0, 1, 1], [], []>} : vector<8x8xf32>, vector<8x32xf32>, vector<8x32xf32> -> vector<8x32xf32>
    %382 = arith.addf %362, %381 : vector<8x32xf32>
    %383 = vector.extract_strided_slice %359 {offsets = [0, 8], sizes = [8, 8], strides = [1, 1]} : vector<8x32xf32> to vector<8x8xf32>
    %384 = vector.extract_strided_slice %360 {offsets = [0, 8], sizes = [8, 8], strides = [1, 1]} : vector<8x32xf32> to vector<8x8xf32>
    %cst_135 = arith.constant dense<0.000000e+00> : vector<8x8xf32>
    %385 = tpu.matmul %383, %384, %cst_135 {dimension_numbers = #tpu.dot_dimension_numbers<[1], [1], [0], [0], [0, 0, 1, 0], [], []>} : vector<8x8xf32>, vector<8x8xf32>, vector<8x8xf32> -> vector<8x8xf32>
    %386 = vector.broadcast %49 : vector<1x8xf32> to vector<8x8xf32>
    %387 = arith.addf %385, %386 : vector<8x8xf32>
    %cst_136 = arith.constant dense<0xFF800000> : vector<8xf32>
    %388 = vector.multi_reduction <maximumf>, %387, %cst_136 [1] : vector<8x8xf32> to vector<8xf32>
    %389 = vector.shape_cast %388 : vector<8xf32> to vector<8x1xf32>
    %390 = vector.broadcast %389 : vector<8x1xf32> to vector<8x8xf32>
    %391 = arith.subf %387, %390 : vector<8x8xf32>
    %392 = math.exp %391 : vector<8x8xf32>
    %cst_137 = arith.constant dense<0.000000e+00> : vector<8xf32>
    %393 = vector.multi_reduction <add>, %392, %cst_137 [1] : vector<8x8xf32> to vector<8xf32>
    %394 = vector.shape_cast %393 : vector<8xf32> to vector<8x1xf32>
    %395 = tpu.reciprocal %394 {approx = true} : vector<8x1xf32> -> vector<8x1xf32>
    %396 = vector.broadcast %395 : vector<8x1xf32> to vector<8x8xf32>
    %397 = arith.mulf %392, %396 : vector<8x8xf32>
    %398 = vector.extract_strided_slice %361 {offsets = [0, 8], sizes = [8, 8], strides = [1, 1]} : vector<8x32xf32> to vector<8x8xf32>
    %cst_138 = arith.constant dense<0.000000e+00> : vector<8x8xf32>
    %399 = tpu.matmul %397, %398, %cst_138 {dimension_numbers = #tpu.dot_dimension_numbers<[1], [0], [0], [1], [0, 0, 1, 1], [], []>} : vector<8x8xf32>, vector<8x8xf32>, vector<8x8xf32> -> vector<8x8xf32>
    %400 = vector.extract_strided_slice %272 {offsets = [8, 0], sizes = [8, 32], strides = [1, 1]} : vector<32x32xf32> to vector<8x32xf32>
    %cst_139 = arith.constant dense<0.000000e+00> : vector<8x32xf32>
    %401 = tpu.matmul %399, %400, %cst_139 {dimension_numbers = #tpu.dot_dimension_numbers<[1], [0], [0], [1], [0, 0, 1, 1], [], []>} : vector<8x8xf32>, vector<8x32xf32>, vector<8x32xf32> -> vector<8x32xf32>
    %402 = arith.addf %382, %401 : vector<8x32xf32>
    %403 = vector.extract_strided_slice %359 {offsets = [0, 16], sizes = [8, 8], strides = [1, 1]} : vector<8x32xf32> to vector<8x8xf32>
    %404 = vector.extract_strided_slice %360 {offsets = [0, 16], sizes = [8, 8], strides = [1, 1]} : vector<8x32xf32> to vector<8x8xf32>
    %cst_140 = arith.constant dense<0.000000e+00> : vector<8x8xf32>
    %405 = tpu.matmul %403, %404, %cst_140 {dimension_numbers = #tpu.dot_dimension_numbers<[1], [1], [0], [0], [0, 0, 1, 0], [], []>} : vector<8x8xf32>, vector<8x8xf32>, vector<8x8xf32> -> vector<8x8xf32>
    %406 = vector.broadcast %49 : vector<1x8xf32> to vector<8x8xf32>
    %407 = arith.addf %405, %406 : vector<8x8xf32>
    %cst_141 = arith.constant dense<0xFF800000> : vector<8xf32>
    %408 = vector.multi_reduction <maximumf>, %407, %cst_141 [1] : vector<8x8xf32> to vector<8xf32>
    %409 = vector.shape_cast %408 : vector<8xf32> to vector<8x1xf32>
    %410 = vector.broadcast %409 : vector<8x1xf32> to vector<8x8xf32>
    %411 = arith.subf %407, %410 : vector<8x8xf32>
    %412 = math.exp %411 : vector<8x8xf32>
    %cst_142 = arith.constant dense<0.000000e+00> : vector<8xf32>
    %413 = vector.multi_reduction <add>, %412, %cst_142 [1] : vector<8x8xf32> to vector<8xf32>
    %414 = vector.shape_cast %413 : vector<8xf32> to vector<8x1xf32>
    %415 = tpu.reciprocal %414 {approx = true} : vector<8x1xf32> -> vector<8x1xf32>
    %416 = vector.broadcast %415 : vector<8x1xf32> to vector<8x8xf32>
    %417 = arith.mulf %412, %416 : vector<8x8xf32>
    %418 = vector.extract_strided_slice %361 {offsets = [0, 16], sizes = [8, 8], strides = [1, 1]} : vector<8x32xf32> to vector<8x8xf32>
    %cst_143 = arith.constant dense<0.000000e+00> : vector<8x8xf32>
    %419 = tpu.matmul %417, %418, %cst_143 {dimension_numbers = #tpu.dot_dimension_numbers<[1], [0], [0], [1], [0, 0, 1, 1], [], []>} : vector<8x8xf32>, vector<8x8xf32>, vector<8x8xf32> -> vector<8x8xf32>
    %420 = vector.extract_strided_slice %272 {offsets = [16, 0], sizes = [8, 32], strides = [1, 1]} : vector<32x32xf32> to vector<8x32xf32>
    %cst_144 = arith.constant dense<0.000000e+00> : vector<8x32xf32>
    %421 = tpu.matmul %419, %420, %cst_144 {dimension_numbers = #tpu.dot_dimension_numbers<[1], [0], [0], [1], [0, 0, 1, 1], [], []>} : vector<8x8xf32>, vector<8x32xf32>, vector<8x32xf32> -> vector<8x32xf32>
    %422 = arith.addf %402, %421 : vector<8x32xf32>
    %423 = vector.extract_strided_slice %359 {offsets = [0, 24], sizes = [8, 8], strides = [1, 1]} : vector<8x32xf32> to vector<8x8xf32>
    %424 = vector.extract_strided_slice %360 {offsets = [0, 24], sizes = [8, 8], strides = [1, 1]} : vector<8x32xf32> to vector<8x8xf32>
    %cst_145 = arith.constant dense<0.000000e+00> : vector<8x8xf32>
    %425 = tpu.matmul %423, %424, %cst_145 {dimension_numbers = #tpu.dot_dimension_numbers<[1], [1], [0], [0], [0, 0, 1, 0], [], []>} : vector<8x8xf32>, vector<8x8xf32>, vector<8x8xf32> -> vector<8x8xf32>
    %426 = vector.broadcast %49 : vector<1x8xf32> to vector<8x8xf32>
    %427 = arith.addf %425, %426 : vector<8x8xf32>
    %cst_146 = arith.constant dense<0xFF800000> : vector<8xf32>
    %428 = vector.multi_reduction <maximumf>, %427, %cst_146 [1] : vector<8x8xf32> to vector<8xf32>
    %429 = vector.shape_cast %428 : vector<8xf32> to vector<8x1xf32>
    %430 = vector.broadcast %429 : vector<8x1xf32> to vector<8x8xf32>
    %431 = arith.subf %427, %430 : vector<8x8xf32>
    %432 = math.exp %431 : vector<8x8xf32>
    %cst_147 = arith.constant dense<0.000000e+00> : vector<8xf32>
    %433 = vector.multi_reduction <add>, %432, %cst_147 [1] : vector<8x8xf32> to vector<8xf32>
    %434 = vector.shape_cast %433 : vector<8xf32> to vector<8x1xf32>
    %435 = tpu.reciprocal %434 {approx = true} : vector<8x1xf32> -> vector<8x1xf32>
    %436 = vector.broadcast %435 : vector<8x1xf32> to vector<8x8xf32>
    %437 = arith.mulf %432, %436 : vector<8x8xf32>
    %438 = vector.extract_strided_slice %361 {offsets = [0, 24], sizes = [8, 8], strides = [1, 1]} : vector<8x32xf32> to vector<8x8xf32>
    %cst_148 = arith.constant dense<0.000000e+00> : vector<8x8xf32>
    %439 = tpu.matmul %437, %438, %cst_148 {dimension_numbers = #tpu.dot_dimension_numbers<[1], [0], [0], [1], [0, 0, 1, 1], [], []>} : vector<8x8xf32>, vector<8x8xf32>, vector<8x8xf32> -> vector<8x8xf32>
    %440 = vector.extract_strided_slice %272 {offsets = [24, 0], sizes = [8, 32], strides = [1, 1]} : vector<32x32xf32> to vector<8x32xf32>
    %cst_149 = arith.constant dense<0.000000e+00> : vector<8x32xf32>
    %441 = tpu.matmul %439, %440, %cst_149 {dimension_numbers = #tpu.dot_dimension_numbers<[1], [0], [0], [1], [0, 0, 1, 1], [], []>} : vector<8x8xf32>, vector<8x32xf32>, vector<8x32xf32> -> vector<8x32xf32>
    %442 = arith.addf %422, %441 : vector<8x32xf32>
    %443 = tpu.concatenate %358, %442 in 0 : vector<8x32xf32>, vector<8x32xf32> -> vector<16x32xf32>
    %444 = vector.broadcast %274 : vector<1x32xf32> to vector<16x32xf32>
    %445 = arith.addf %443, %444 : vector<16x32xf32>
    %446 = arith.addf %254, %445 : vector<16x32xf32>
    %c0_150 = arith.constant 0 : index
    %c0_151 = arith.constant 0 : index
    %c0_152 = arith.constant 0 : index
    %447 = vector.load %arg20[%c0_150, %c0_151, %c0_152] : memref<2x1x32xf32, #tpu.memory_space<vmem>>, vector<1x1x32xf32>
    %448 = vector.shape_cast %447 : vector<1x1x32xf32> to vector<1x32xf32>
    %c0_153 = arith.constant 0 : index
    %c0_154 = arith.constant 0 : index
    %c0_155 = arith.constant 0 : index
    %449 = vector.load %arg21[%c0_153, %c0_154, %c0_155] : memref<2x1x32xf32, #tpu.memory_space<vmem>>, vector<1x1x32xf32>
    %450 = vector.shape_cast %449 : vector<1x1x32xf32> to vector<1x32xf32>
    %cst_156 = arith.constant dense<0.000000e+00> : vector<16xf32>
    %451 = vector.multi_reduction <add>, %446, %cst_156 [1] : vector<16x32xf32> to vector<16xf32>
    %452 = vector.shape_cast %451 : vector<16xf32> to vector<16x1xf32>
    %cst_157 = arith.constant 3.200000e+01 : f32
    %453 = vector.broadcast %cst_157 : f32 to vector<16x1xf32>
    %454 = arith.divf %452, %453 : vector<16x1xf32>
    %455 = vector.broadcast %454 : vector<16x1xf32> to vector<16x32xf32>
    %456 = arith.subf %446, %455 : vector<16x32xf32>
    %457 = arith.mulf %456, %456 : vector<16x32xf32>
    %cst_158 = arith.constant dense<0.000000e+00> : vector<16xf32>
    %458 = vector.multi_reduction <add>, %457, %cst_158 [1] : vector<16x32xf32> to vector<16xf32>
    %459 = vector.shape_cast %458 : vector<16xf32> to vector<16x1xf32>
    %cst_159 = arith.constant 3.200000e+01 : f32
    %460 = vector.broadcast %cst_159 : f32 to vector<16x1xf32>
    %461 = arith.divf %459, %460 : vector<16x1xf32>
    %462 = vector.broadcast %454 : vector<16x1xf32> to vector<16x32xf32>
    %463 = arith.subf %446, %462 : vector<16x32xf32>
    %cst_160 = arith.constant 9.99999974E-6 : f32
    %464 = vector.broadcast %cst_160 : f32 to vector<16x1xf32>
    %465 = arith.addf %461, %464 : vector<16x1xf32>
    %466 = math.rsqrt %465 : vector<16x1xf32>
    %467 = vector.broadcast %466 : vector<16x1xf32> to vector<16x32xf32>
    %468 = arith.mulf %463, %467 : vector<16x32xf32>
    %469 = vector.broadcast %448 : vector<1x32xf32> to vector<16x32xf32>
    %470 = arith.mulf %468, %469 : vector<16x32xf32>
    %471 = vector.broadcast %450 : vector<1x32xf32> to vector<16x32xf32>
    %472 = arith.addf %470, %471 : vector<16x32xf32>
    %c0_161 = arith.constant 0 : index
    %c0_162 = arith.constant 0 : index
    %c0_163 = arith.constant 0 : index
    %473 = vector.load %arg22[%c0_161, %c0_162, %c0_163] : memref<2x32x64xf32, #tpu.memory_space<vmem>>, vector<1x32x64xf32>
    %474 = vector.shape_cast %473 : vector<1x32x64xf32> to vector<32x64xf32>
    %cst_164 = arith.constant dense<0.000000e+00> : vector<16x64xf32>
    %475 = tpu.matmul %472, %474, %cst_164 {dimension_numbers = #tpu.dot_dimension_numbers<[1], [0], [0], [1], [0, 0, 1, 1], [], []>} : vector<16x32xf32>, vector<32x64xf32>, vector<16x64xf32> -> vector<16x64xf32>
    %c0_165 = arith.constant 0 : index
    %c0_166 = arith.constant 0 : index
    %c0_167 = arith.constant 0 : index
    %476 = vector.load %arg23[%c0_165, %c0_166, %c0_167] : memref<2x1x64xf32, #tpu.memory_space<vmem>>, vector<1x1x64xf32>
    %477 = vector.shape_cast %476 : vector<1x1x64xf32> to vector<1x64xf32>
    %478 = vector.broadcast %477 : vector<1x64xf32> to vector<16x64xf32>
    %479 = arith.addf %475, %478 : vector<16x64xf32>
    %480 = arith.mulf %479, %479 : vector<16x64xf32>
    %481 = arith.mulf %479, %480 : vector<16x64xf32>
    %cst_168 = arith.constant 4.471500e-02 : f32
    %482 = vector.broadcast %cst_168 : f32 to vector<16x64xf32>
    %483 = arith.mulf %482, %481 : vector<16x64xf32>
    %484 = arith.addf %479, %483 : vector<16x64xf32>
    %cst_169 = arith.constant 0.797884583 : f32
    %485 = vector.broadcast %cst_169 : f32 to vector<16x64xf32>
    %486 = arith.mulf %485, %484 : vector<16x64xf32>
    %487 = math.tanh %486 : vector<16x64xf32>
    %cst_170 = arith.constant 1.000000e+00 : f32
    %488 = vector.broadcast %cst_170 : f32 to vector<16x64xf32>
    %489 = arith.addf %488, %487 : vector<16x64xf32>
    %cst_171 = arith.constant 5.000000e-01 : f32
    %490 = vector.broadcast %cst_171 : f32 to vector<16x64xf32>
    %491 = arith.mulf %490, %489 : vector<16x64xf32>
    %492 = arith.mulf %479, %491 : vector<16x64xf32>
    %c0_172 = arith.constant 0 : index
    %c0_173 = arith.constant 0 : index
    %c0_174 = arith.constant 0 : index
    %493 = vector.load %arg24[%c0_172, %c0_173, %c0_174] : memref<2x64x32xf32, #tpu.memory_space<vmem>>, vector<1x64x32xf32>
    %494 = vector.shape_cast %493 : vector<1x64x32xf32> to vector<64x32xf32>
    %cst_175 = arith.constant dense<0.000000e+00> : vector<16x32xf32>
    %495 = tpu.matmul %492, %494, %cst_175 {dimension_numbers = #tpu.dot_dimension_numbers<[1], [0], [0], [1], [0, 0, 1, 1], [], []>} : vector<16x64xf32>, vector<64x32xf32>, vector<16x32xf32> -> vector<16x32xf32>
    %c0_176 = arith.constant 0 : index
    %c0_177 = arith.constant 0 : index
    %c0_178 = arith.constant 0 : index
    %496 = vector.load %arg25[%c0_176, %c0_177, %c0_178] : memref<2x1x32xf32, #tpu.memory_space<vmem>>, vector<1x1x32xf32>
    %497 = vector.shape_cast %496 : vector<1x1x32xf32> to vector<1x32xf32>
    %498 = vector.broadcast %497 : vector<1x32xf32> to vector<16x32xf32>
    %499 = arith.addf %495, %498 : vector<16x32xf32>
    %500 = arith.addf %472, %499 : vector<16x32xf32>
    %c0_179 = arith.constant 0 : index
    %c0_180 = arith.constant 0 : index
    %c0_181 = arith.constant 0 : index
    %501 = vector.load %arg26[%c0_179, %c0_180, %c0_181] : memref<2x1x32xf32, #tpu.memory_space<vmem>>, vector<1x1x32xf32>
    %502 = vector.shape_cast %501 : vector<1x1x32xf32> to vector<1x32xf32>
    %c0_182 = arith.constant 0 : index
    %c0_183 = arith.constant 0 : index
    %c0_184 = arith.constant 0 : index
    %503 = vector.load %arg27[%c0_182, %c0_183, %c0_184] : memref<2x1x32xf32, #tpu.memory_space<vmem>>, vector<1x1x32xf32>
    %504 = vector.shape_cast %503 : vector<1x1x32xf32> to vector<1x32xf32>
    %cst_185 = arith.constant dense<0.000000e+00> : vector<16xf32>
    %505 = vector.multi_reduction <add>, %500, %cst_185 [1] : vector<16x32xf32> to vector<16xf32>
    %506 = vector.shape_cast %505 : vector<16xf32> to vector<16x1xf32>
    %cst_186 = arith.constant 3.200000e+01 : f32
    %507 = vector.broadcast %cst_186 : f32 to vector<16x1xf32>
    %508 = arith.divf %506, %507 : vector<16x1xf32>
    %509 = vector.broadcast %508 : vector<16x1xf32> to vector<16x32xf32>
    %510 = arith.subf %500, %509 : vector<16x32xf32>
    %511 = arith.mulf %510, %510 : vector<16x32xf32>
    %cst_187 = arith.constant dense<0.000000e+00> : vector<16xf32>
    %512 = vector.multi_reduction <add>, %511, %cst_187 [1] : vector<16x32xf32> to vector<16xf32>
    %513 = vector.shape_cast %512 : vector<16xf32> to vector<16x1xf32>
    %cst_188 = arith.constant 3.200000e+01 : f32
    %514 = vector.broadcast %cst_188 : f32 to vector<16x1xf32>
    %515 = arith.divf %513, %514 : vector<16x1xf32>
    %516 = vector.broadcast %508 : vector<16x1xf32> to vector<16x32xf32>
    %517 = arith.subf %500, %516 : vector<16x32xf32>
    %cst_189 = arith.constant 9.99999974E-6 : f32
    %518 = vector.broadcast %cst_189 : f32 to vector<16x1xf32>
    %519 = arith.addf %515, %518 : vector<16x1xf32>
    %520 = math.rsqrt %519 : vector<16x1xf32>
    %521 = vector.broadcast %520 : vector<16x1xf32> to vector<16x32xf32>
    %522 = arith.mulf %517, %521 : vector<16x32xf32>
    %523 = vector.broadcast %502 : vector<1x32xf32> to vector<16x32xf32>
    %524 = arith.mulf %522, %523 : vector<16x32xf32>
    %525 = vector.broadcast %504 : vector<1x32xf32> to vector<16x32xf32>
    %526 = arith.addf %524, %525 : vector<16x32xf32>
    %c1 = arith.constant 1 : index
    %c0_190 = arith.constant 0 : index
    %c0_191 = arith.constant 0 : index
    %527 = vector.load %arg8[%c1, %c0_190, %c0_191] : memref<2x32x96xf32, #tpu.memory_space<vmem>>, vector<1x32x96xf32>
    %528 = vector.shape_cast %527 : vector<1x32x96xf32> to vector<32x96xf32>
    %cst_192 = arith.constant dense<0.000000e+00> : vector<16x96xf32>
    %529 = tpu.matmul %526, %528, %cst_192 {dimension_numbers = #tpu.dot_dimension_numbers<[1], [0], [0], [1], [0, 0, 1, 1], [], []>} : vector<16x32xf32>, vector<32x96xf32>, vector<16x96xf32> -> vector<16x96xf32>
    %c1_193 = arith.constant 1 : index
    %c0_194 = arith.constant 0 : index
    %c0_195 = arith.constant 0 : index
    %530 = vector.load %arg9[%c1_193, %c0_194, %c0_195] : memref<2x1x96xf32, #tpu.memory_space<vmem>>, vector<1x1x96xf32>
    %531 = vector.shape_cast %530 : vector<1x1x96xf32> to vector<1x96xf32>
    %532 = vector.broadcast %531 : vector<1x96xf32> to vector<16x96xf32>
    %533 = arith.addf %529, %532 : vector<16x96xf32>
    %534 = vector.extract_strided_slice %533 {offsets = [0, 0], sizes = [16, 32], strides = [1, 1]} : vector<16x96xf32> to vector<16x32xf32>
    %535 = vector.extract_strided_slice %533 {offsets = [0, 32], sizes = [16, 32], strides = [1, 1]} : vector<16x96xf32> to vector<16x32xf32>
    %536 = vector.extract_strided_slice %533 {offsets = [0, 64], sizes = [16, 32], strides = [1, 1]} : vector<16x96xf32> to vector<16x32xf32>
    %c1_196 = arith.constant 1 : index
    %c0_197 = arith.constant 0 : index
    %c0_198 = arith.constant 0 : index
    %537 = vector.load %arg10[%c1_196, %c0_197, %c0_198] : memref<2x32x32xf32, #tpu.memory_space<vmem>>, vector<1x32x32xf32>
    %538 = vector.shape_cast %537 : vector<1x32x32xf32> to vector<32x32xf32>
    %c1_199 = arith.constant 1 : index
    %c0_200 = arith.constant 0 : index
    %c0_201 = arith.constant 0 : index
    %539 = vector.load %arg11[%c1_199, %c0_200, %c0_201] : memref<2x1x32xf32, #tpu.memory_space<vmem>>, vector<1x1x32xf32>
    %540 = vector.shape_cast %539 : vector<1x1x32xf32> to vector<1x32xf32>
    %541 = vector.extract_strided_slice %534 {offsets = [0, 0], sizes = [8, 32], strides = [1, 1]} : vector<16x32xf32> to vector<8x32xf32>
    %542 = vector.extract_strided_slice %535 {offsets = [0, 0], sizes = [8, 32], strides = [1, 1]} : vector<16x32xf32> to vector<8x32xf32>
    %543 = vector.extract_strided_slice %536 {offsets = [0, 0], sizes = [8, 32], strides = [1, 1]} : vector<16x32xf32> to vector<8x32xf32>
    %cst_202 = arith.constant 0.000000e+00 : f32
    %544 = vector.broadcast %cst_202 : f32 to vector<8x32xf32>
    %545 = vector.extract_strided_slice %541 {offsets = [0, 0], sizes = [8, 8], strides = [1, 1]} : vector<8x32xf32> to vector<8x8xf32>
    %546 = vector.extract_strided_slice %542 {offsets = [0, 0], sizes = [8, 8], strides = [1, 1]} : vector<8x32xf32> to vector<8x8xf32>
    %cst_203 = arith.constant dense<0.000000e+00> : vector<8x8xf32>
    %547 = tpu.matmul %545, %546, %cst_203 {dimension_numbers = #tpu.dot_dimension_numbers<[1], [1], [0], [0], [0, 0, 1, 0], [], []>} : vector<8x8xf32>, vector<8x8xf32>, vector<8x8xf32> -> vector<8x8xf32>
    %548 = arith.addf %547, %44 : vector<8x8xf32>
    %cst_204 = arith.constant dense<0xFF800000> : vector<8xf32>
    %549 = vector.multi_reduction <maximumf>, %548, %cst_204 [1] : vector<8x8xf32> to vector<8xf32>
    %550 = vector.shape_cast %549 : vector<8xf32> to vector<8x1xf32>
    %551 = vector.broadcast %550 : vector<8x1xf32> to vector<8x8xf32>
    %552 = arith.subf %548, %551 : vector<8x8xf32>
    %553 = math.exp %552 : vector<8x8xf32>
    %cst_205 = arith.constant dense<0.000000e+00> : vector<8xf32>
    %554 = vector.multi_reduction <add>, %553, %cst_205 [1] : vector<8x8xf32> to vector<8xf32>
    %555 = vector.shape_cast %554 : vector<8xf32> to vector<8x1xf32>
    %556 = tpu.reciprocal %555 {approx = true} : vector<8x1xf32> -> vector<8x1xf32>
    %557 = vector.broadcast %556 : vector<8x1xf32> to vector<8x8xf32>
    %558 = arith.mulf %553, %557 : vector<8x8xf32>
    %559 = vector.extract_strided_slice %543 {offsets = [0, 0], sizes = [8, 8], strides = [1, 1]} : vector<8x32xf32> to vector<8x8xf32>
    %cst_206 = arith.constant dense<0.000000e+00> : vector<8x8xf32>
    %560 = tpu.matmul %558, %559, %cst_206 {dimension_numbers = #tpu.dot_dimension_numbers<[1], [0], [0], [1], [0, 0, 1, 1], [], []>} : vector<8x8xf32>, vector<8x8xf32>, vector<8x8xf32> -> vector<8x8xf32>
    %561 = vector.extract_strided_slice %538 {offsets = [0, 0], sizes = [8, 32], strides = [1, 1]} : vector<32x32xf32> to vector<8x32xf32>
    %cst_207 = arith.constant dense<0.000000e+00> : vector<8x32xf32>
    %562 = tpu.matmul %560, %561, %cst_207 {dimension_numbers = #tpu.dot_dimension_numbers<[1], [0], [0], [1], [0, 0, 1, 1], [], []>} : vector<8x8xf32>, vector<8x32xf32>, vector<8x32xf32> -> vector<8x32xf32>
    %563 = arith.addf %544, %562 : vector<8x32xf32>
    %564 = vector.extract_strided_slice %541 {offsets = [0, 8], sizes = [8, 8], strides = [1, 1]} : vector<8x32xf32> to vector<8x8xf32>
    %565 = vector.extract_strided_slice %542 {offsets = [0, 8], sizes = [8, 8], strides = [1, 1]} : vector<8x32xf32> to vector<8x8xf32>
    %cst_208 = arith.constant dense<0.000000e+00> : vector<8x8xf32>
    %566 = tpu.matmul %564, %565, %cst_208 {dimension_numbers = #tpu.dot_dimension_numbers<[1], [1], [0], [0], [0, 0, 1, 0], [], []>} : vector<8x8xf32>, vector<8x8xf32>, vector<8x8xf32> -> vector<8x8xf32>
    %567 = arith.addf %566, %44 : vector<8x8xf32>
    %cst_209 = arith.constant dense<0xFF800000> : vector<8xf32>
    %568 = vector.multi_reduction <maximumf>, %567, %cst_209 [1] : vector<8x8xf32> to vector<8xf32>
    %569 = vector.shape_cast %568 : vector<8xf32> to vector<8x1xf32>
    %570 = vector.broadcast %569 : vector<8x1xf32> to vector<8x8xf32>
    %571 = arith.subf %567, %570 : vector<8x8xf32>
    %572 = math.exp %571 : vector<8x8xf32>
    %cst_210 = arith.constant dense<0.000000e+00> : vector<8xf32>
    %573 = vector.multi_reduction <add>, %572, %cst_210 [1] : vector<8x8xf32> to vector<8xf32>
    %574 = vector.shape_cast %573 : vector<8xf32> to vector<8x1xf32>
    %575 = tpu.reciprocal %574 {approx = true} : vector<8x1xf32> -> vector<8x1xf32>
    %576 = vector.broadcast %575 : vector<8x1xf32> to vector<8x8xf32>
    %577 = arith.mulf %572, %576 : vector<8x8xf32>
    %578 = vector.extract_strided_slice %543 {offsets = [0, 8], sizes = [8, 8], strides = [1, 1]} : vector<8x32xf32> to vector<8x8xf32>
    %cst_211 = arith.constant dense<0.000000e+00> : vector<8x8xf32>
    %579 = tpu.matmul %577, %578, %cst_211 {dimension_numbers = #tpu.dot_dimension_numbers<[1], [0], [0], [1], [0, 0, 1, 1], [], []>} : vector<8x8xf32>, vector<8x8xf32>, vector<8x8xf32> -> vector<8x8xf32>
    %580 = vector.extract_strided_slice %538 {offsets = [8, 0], sizes = [8, 32], strides = [1, 1]} : vector<32x32xf32> to vector<8x32xf32>
    %cst_212 = arith.constant dense<0.000000e+00> : vector<8x32xf32>
    %581 = tpu.matmul %579, %580, %cst_212 {dimension_numbers = #tpu.dot_dimension_numbers<[1], [0], [0], [1], [0, 0, 1, 1], [], []>} : vector<8x8xf32>, vector<8x32xf32>, vector<8x32xf32> -> vector<8x32xf32>
    %582 = arith.addf %563, %581 : vector<8x32xf32>
    %583 = vector.extract_strided_slice %541 {offsets = [0, 16], sizes = [8, 8], strides = [1, 1]} : vector<8x32xf32> to vector<8x8xf32>
    %584 = vector.extract_strided_slice %542 {offsets = [0, 16], sizes = [8, 8], strides = [1, 1]} : vector<8x32xf32> to vector<8x8xf32>
    %cst_213 = arith.constant dense<0.000000e+00> : vector<8x8xf32>
    %585 = tpu.matmul %583, %584, %cst_213 {dimension_numbers = #tpu.dot_dimension_numbers<[1], [1], [0], [0], [0, 0, 1, 0], [], []>} : vector<8x8xf32>, vector<8x8xf32>, vector<8x8xf32> -> vector<8x8xf32>
    %586 = arith.addf %585, %44 : vector<8x8xf32>
    %cst_214 = arith.constant dense<0xFF800000> : vector<8xf32>
    %587 = vector.multi_reduction <maximumf>, %586, %cst_214 [1] : vector<8x8xf32> to vector<8xf32>
    %588 = vector.shape_cast %587 : vector<8xf32> to vector<8x1xf32>
    %589 = vector.broadcast %588 : vector<8x1xf32> to vector<8x8xf32>
    %590 = arith.subf %586, %589 : vector<8x8xf32>
    %591 = math.exp %590 : vector<8x8xf32>
    %cst_215 = arith.constant dense<0.000000e+00> : vector<8xf32>
    %592 = vector.multi_reduction <add>, %591, %cst_215 [1] : vector<8x8xf32> to vector<8xf32>
    %593 = vector.shape_cast %592 : vector<8xf32> to vector<8x1xf32>
    %594 = tpu.reciprocal %593 {approx = true} : vector<8x1xf32> -> vector<8x1xf32>
    %595 = vector.broadcast %594 : vector<8x1xf32> to vector<8x8xf32>
    %596 = arith.mulf %591, %595 : vector<8x8xf32>
    %597 = vector.extract_strided_slice %543 {offsets = [0, 16], sizes = [8, 8], strides = [1, 1]} : vector<8x32xf32> to vector<8x8xf32>
    %cst_216 = arith.constant dense<0.000000e+00> : vector<8x8xf32>
    %598 = tpu.matmul %596, %597, %cst_216 {dimension_numbers = #tpu.dot_dimension_numbers<[1], [0], [0], [1], [0, 0, 1, 1], [], []>} : vector<8x8xf32>, vector<8x8xf32>, vector<8x8xf32> -> vector<8x8xf32>
    %599 = vector.extract_strided_slice %538 {offsets = [16, 0], sizes = [8, 32], strides = [1, 1]} : vector<32x32xf32> to vector<8x32xf32>
    %cst_217 = arith.constant dense<0.000000e+00> : vector<8x32xf32>
    %600 = tpu.matmul %598, %599, %cst_217 {dimension_numbers = #tpu.dot_dimension_numbers<[1], [0], [0], [1], [0, 0, 1, 1], [], []>} : vector<8x8xf32>, vector<8x32xf32>, vector<8x32xf32> -> vector<8x32xf32>
    %601 = arith.addf %582, %600 : vector<8x32xf32>
    %602 = vector.extract_strided_slice %541 {offsets = [0, 24], sizes = [8, 8], strides = [1, 1]} : vector<8x32xf32> to vector<8x8xf32>
    %603 = vector.extract_strided_slice %542 {offsets = [0, 24], sizes = [8, 8], strides = [1, 1]} : vector<8x32xf32> to vector<8x8xf32>
    %cst_218 = arith.constant dense<0.000000e+00> : vector<8x8xf32>
    %604 = tpu.matmul %602, %603, %cst_218 {dimension_numbers = #tpu.dot_dimension_numbers<[1], [1], [0], [0], [0, 0, 1, 0], [], []>} : vector<8x8xf32>, vector<8x8xf32>, vector<8x8xf32> -> vector<8x8xf32>
    %605 = arith.addf %604, %44 : vector<8x8xf32>
    %cst_219 = arith.constant dense<0xFF800000> : vector<8xf32>
    %606 = vector.multi_reduction <maximumf>, %605, %cst_219 [1] : vector<8x8xf32> to vector<8xf32>
    %607 = vector.shape_cast %606 : vector<8xf32> to vector<8x1xf32>
    %608 = vector.broadcast %607 : vector<8x1xf32> to vector<8x8xf32>
    %609 = arith.subf %605, %608 : vector<8x8xf32>
    %610 = math.exp %609 : vector<8x8xf32>
    %cst_220 = arith.constant dense<0.000000e+00> : vector<8xf32>
    %611 = vector.multi_reduction <add>, %610, %cst_220 [1] : vector<8x8xf32> to vector<8xf32>
    %612 = vector.shape_cast %611 : vector<8xf32> to vector<8x1xf32>
    %613 = tpu.reciprocal %612 {approx = true} : vector<8x1xf32> -> vector<8x1xf32>
    %614 = vector.broadcast %613 : vector<8x1xf32> to vector<8x8xf32>
    %615 = arith.mulf %610, %614 : vector<8x8xf32>
    %616 = vector.extract_strided_slice %543 {offsets = [0, 24], sizes = [8, 8], strides = [1, 1]} : vector<8x32xf32> to vector<8x8xf32>
    %cst_221 = arith.constant dense<0.000000e+00> : vector<8x8xf32>
    %617 = tpu.matmul %615, %616, %cst_221 {dimension_numbers = #tpu.dot_dimension_numbers<[1], [0], [0], [1], [0, 0, 1, 1], [], []>} : vector<8x8xf32>, vector<8x8xf32>, vector<8x8xf32> -> vector<8x8xf32>
    %618 = vector.extract_strided_slice %538 {offsets = [24, 0], sizes = [8, 32], strides = [1, 1]} : vector<32x32xf32> to vector<8x32xf32>
    %cst_222 = arith.constant dense<0.000000e+00> : vector<8x32xf32>
    %619 = tpu.matmul %617, %618, %cst_222 {dimension_numbers = #tpu.dot_dimension_numbers<[1], [0], [0], [1], [0, 0, 1, 1], [], []>} : vector<8x8xf32>, vector<8x32xf32>, vector<8x32xf32> -> vector<8x32xf32>
    %620 = arith.addf %601, %619 : vector<8x32xf32>
    %621 = vector.extract_strided_slice %534 {offsets = [8, 0], sizes = [8, 32], strides = [1, 1]} : vector<16x32xf32> to vector<8x32xf32>
    %622 = vector.extract_strided_slice %535 {offsets = [8, 0], sizes = [8, 32], strides = [1, 1]} : vector<16x32xf32> to vector<8x32xf32>
    %623 = vector.extract_strided_slice %536 {offsets = [8, 0], sizes = [8, 32], strides = [1, 1]} : vector<16x32xf32> to vector<8x32xf32>
    %cst_223 = arith.constant 0.000000e+00 : f32
    %624 = vector.broadcast %cst_223 : f32 to vector<8x32xf32>
    %625 = vector.extract_strided_slice %621 {offsets = [0, 0], sizes = [8, 8], strides = [1, 1]} : vector<8x32xf32> to vector<8x8xf32>
    %626 = vector.extract_strided_slice %622 {offsets = [0, 0], sizes = [8, 8], strides = [1, 1]} : vector<8x32xf32> to vector<8x8xf32>
    %cst_224 = arith.constant dense<0.000000e+00> : vector<8x8xf32>
    %627 = tpu.matmul %625, %626, %cst_224 {dimension_numbers = #tpu.dot_dimension_numbers<[1], [1], [0], [0], [0, 0, 1, 0], [], []>} : vector<8x8xf32>, vector<8x8xf32>, vector<8x8xf32> -> vector<8x8xf32>
    %628 = arith.addf %627, %47 : vector<8x8xf32>
    %cst_225 = arith.constant dense<0xFF800000> : vector<8xf32>
    %629 = vector.multi_reduction <maximumf>, %628, %cst_225 [1] : vector<8x8xf32> to vector<8xf32>
    %630 = vector.shape_cast %629 : vector<8xf32> to vector<8x1xf32>
    %631 = vector.broadcast %630 : vector<8x1xf32> to vector<8x8xf32>
    %632 = arith.subf %628, %631 : vector<8x8xf32>
    %633 = math.exp %632 : vector<8x8xf32>
    %cst_226 = arith.constant dense<0.000000e+00> : vector<8xf32>
    %634 = vector.multi_reduction <add>, %633, %cst_226 [1] : vector<8x8xf32> to vector<8xf32>
    %635 = vector.shape_cast %634 : vector<8xf32> to vector<8x1xf32>
    %636 = tpu.reciprocal %635 {approx = true} : vector<8x1xf32> -> vector<8x1xf32>
    %637 = vector.broadcast %636 : vector<8x1xf32> to vector<8x8xf32>
    %638 = arith.mulf %633, %637 : vector<8x8xf32>
    %639 = vector.extract_strided_slice %623 {offsets = [0, 0], sizes = [8, 8], strides = [1, 1]} : vector<8x32xf32> to vector<8x8xf32>
    %cst_227 = arith.constant dense<0.000000e+00> : vector<8x8xf32>
    %640 = tpu.matmul %638, %639, %cst_227 {dimension_numbers = #tpu.dot_dimension_numbers<[1], [0], [0], [1], [0, 0, 1, 1], [], []>} : vector<8x8xf32>, vector<8x8xf32>, vector<8x8xf32> -> vector<8x8xf32>
    %641 = vector.extract_strided_slice %538 {offsets = [0, 0], sizes = [8, 32], strides = [1, 1]} : vector<32x32xf32> to vector<8x32xf32>
    %cst_228 = arith.constant dense<0.000000e+00> : vector<8x32xf32>
    %642 = tpu.matmul %640, %641, %cst_228 {dimension_numbers = #tpu.dot_dimension_numbers<[1], [0], [0], [1], [0, 0, 1, 1], [], []>} : vector<8x8xf32>, vector<8x32xf32>, vector<8x32xf32> -> vector<8x32xf32>
    %643 = arith.addf %624, %642 : vector<8x32xf32>
    %644 = vector.extract_strided_slice %621 {offsets = [0, 8], sizes = [8, 8], strides = [1, 1]} : vector<8x32xf32> to vector<8x8xf32>
    %645 = vector.extract_strided_slice %622 {offsets = [0, 8], sizes = [8, 8], strides = [1, 1]} : vector<8x32xf32> to vector<8x8xf32>
    %cst_229 = arith.constant dense<0.000000e+00> : vector<8x8xf32>
    %646 = tpu.matmul %644, %645, %cst_229 {dimension_numbers = #tpu.dot_dimension_numbers<[1], [1], [0], [0], [0, 0, 1, 0], [], []>} : vector<8x8xf32>, vector<8x8xf32>, vector<8x8xf32> -> vector<8x8xf32>
    %647 = arith.addf %646, %47 : vector<8x8xf32>
    %cst_230 = arith.constant dense<0xFF800000> : vector<8xf32>
    %648 = vector.multi_reduction <maximumf>, %647, %cst_230 [1] : vector<8x8xf32> to vector<8xf32>
    %649 = vector.shape_cast %648 : vector<8xf32> to vector<8x1xf32>
    %650 = vector.broadcast %649 : vector<8x1xf32> to vector<8x8xf32>
    %651 = arith.subf %647, %650 : vector<8x8xf32>
    %652 = math.exp %651 : vector<8x8xf32>
    %cst_231 = arith.constant dense<0.000000e+00> : vector<8xf32>
    %653 = vector.multi_reduction <add>, %652, %cst_231 [1] : vector<8x8xf32> to vector<8xf32>
    %654 = vector.shape_cast %653 : vector<8xf32> to vector<8x1xf32>
    %655 = tpu.reciprocal %654 {approx = true} : vector<8x1xf32> -> vector<8x1xf32>
    %656 = vector.broadcast %655 : vector<8x1xf32> to vector<8x8xf32>
    %657 = arith.mulf %652, %656 : vector<8x8xf32>
    %658 = vector.extract_strided_slice %623 {offsets = [0, 8], sizes = [8, 8], strides = [1, 1]} : vector<8x32xf32> to vector<8x8xf32>
    %cst_232 = arith.constant dense<0.000000e+00> : vector<8x8xf32>
    %659 = tpu.matmul %657, %658, %cst_232 {dimension_numbers = #tpu.dot_dimension_numbers<[1], [0], [0], [1], [0, 0, 1, 1], [], []>} : vector<8x8xf32>, vector<8x8xf32>, vector<8x8xf32> -> vector<8x8xf32>
    %660 = vector.extract_strided_slice %538 {offsets = [8, 0], sizes = [8, 32], strides = [1, 1]} : vector<32x32xf32> to vector<8x32xf32>
    %cst_233 = arith.constant dense<0.000000e+00> : vector<8x32xf32>
    %661 = tpu.matmul %659, %660, %cst_233 {dimension_numbers = #tpu.dot_dimension_numbers<[1], [0], [0], [1], [0, 0, 1, 1], [], []>} : vector<8x8xf32>, vector<8x32xf32>, vector<8x32xf32> -> vector<8x32xf32>
    %662 = arith.addf %643, %661 : vector<8x32xf32>
    %663 = vector.extract_strided_slice %621 {offsets = [0, 16], sizes = [8, 8], strides = [1, 1]} : vector<8x32xf32> to vector<8x8xf32>
    %664 = vector.extract_strided_slice %622 {offsets = [0, 16], sizes = [8, 8], strides = [1, 1]} : vector<8x32xf32> to vector<8x8xf32>
    %cst_234 = arith.constant dense<0.000000e+00> : vector<8x8xf32>
    %665 = tpu.matmul %663, %664, %cst_234 {dimension_numbers = #tpu.dot_dimension_numbers<[1], [1], [0], [0], [0, 0, 1, 0], [], []>} : vector<8x8xf32>, vector<8x8xf32>, vector<8x8xf32> -> vector<8x8xf32>
    %666 = arith.addf %665, %47 : vector<8x8xf32>
    %cst_235 = arith.constant dense<0xFF800000> : vector<8xf32>
    %667 = vector.multi_reduction <maximumf>, %666, %cst_235 [1] : vector<8x8xf32> to vector<8xf32>
    %668 = vector.shape_cast %667 : vector<8xf32> to vector<8x1xf32>
    %669 = vector.broadcast %668 : vector<8x1xf32> to vector<8x8xf32>
    %670 = arith.subf %666, %669 : vector<8x8xf32>
    %671 = math.exp %670 : vector<8x8xf32>
    %cst_236 = arith.constant dense<0.000000e+00> : vector<8xf32>
    %672 = vector.multi_reduction <add>, %671, %cst_236 [1] : vector<8x8xf32> to vector<8xf32>
    %673 = vector.shape_cast %672 : vector<8xf32> to vector<8x1xf32>
    %674 = tpu.reciprocal %673 {approx = true} : vector<8x1xf32> -> vector<8x1xf32>
    %675 = vector.broadcast %674 : vector<8x1xf32> to vector<8x8xf32>
    %676 = arith.mulf %671, %675 : vector<8x8xf32>
    %677 = vector.extract_strided_slice %623 {offsets = [0, 16], sizes = [8, 8], strides = [1, 1]} : vector<8x32xf32> to vector<8x8xf32>
    %cst_237 = arith.constant dense<0.000000e+00> : vector<8x8xf32>
    %678 = tpu.matmul %676, %677, %cst_237 {dimension_numbers = #tpu.dot_dimension_numbers<[1], [0], [0], [1], [0, 0, 1, 1], [], []>} : vector<8x8xf32>, vector<8x8xf32>, vector<8x8xf32> -> vector<8x8xf32>
    %679 = vector.extract_strided_slice %538 {offsets = [16, 0], sizes = [8, 32], strides = [1, 1]} : vector<32x32xf32> to vector<8x32xf32>
    %cst_238 = arith.constant dense<0.000000e+00> : vector<8x32xf32>
    %680 = tpu.matmul %678, %679, %cst_238 {dimension_numbers = #tpu.dot_dimension_numbers<[1], [0], [0], [1], [0, 0, 1, 1], [], []>} : vector<8x8xf32>, vector<8x32xf32>, vector<8x32xf32> -> vector<8x32xf32>
    %681 = arith.addf %662, %680 : vector<8x32xf32>
    %682 = vector.extract_strided_slice %621 {offsets = [0, 24], sizes = [8, 8], strides = [1, 1]} : vector<8x32xf32> to vector<8x8xf32>
    %683 = vector.extract_strided_slice %622 {offsets = [0, 24], sizes = [8, 8], strides = [1, 1]} : vector<8x32xf32> to vector<8x8xf32>
    %cst_239 = arith.constant dense<0.000000e+00> : vector<8x8xf32>
    %684 = tpu.matmul %682, %683, %cst_239 {dimension_numbers = #tpu.dot_dimension_numbers<[1], [1], [0], [0], [0, 0, 1, 0], [], []>} : vector<8x8xf32>, vector<8x8xf32>, vector<8x8xf32> -> vector<8x8xf32>
    %685 = arith.addf %684, %47 : vector<8x8xf32>
    %cst_240 = arith.constant dense<0xFF800000> : vector<8xf32>
    %686 = vector.multi_reduction <maximumf>, %685, %cst_240 [1] : vector<8x8xf32> to vector<8xf32>
    %687 = vector.shape_cast %686 : vector<8xf32> to vector<8x1xf32>
    %688 = vector.broadcast %687 : vector<8x1xf32> to vector<8x8xf32>
    %689 = arith.subf %685, %688 : vector<8x8xf32>
    %690 = math.exp %689 : vector<8x8xf32>
    %cst_241 = arith.constant dense<0.000000e+00> : vector<8xf32>
    %691 = vector.multi_reduction <add>, %690, %cst_241 [1] : vector<8x8xf32> to vector<8xf32>
    %692 = vector.shape_cast %691 : vector<8xf32> to vector<8x1xf32>
    %693 = tpu.reciprocal %692 {approx = true} : vector<8x1xf32> -> vector<8x1xf32>
    %694 = vector.broadcast %693 : vector<8x1xf32> to vector<8x8xf32>
    %695 = arith.mulf %690, %694 : vector<8x8xf32>
    %696 = vector.extract_strided_slice %623 {offsets = [0, 24], sizes = [8, 8], strides = [1, 1]} : vector<8x32xf32> to vector<8x8xf32>
    %cst_242 = arith.constant dense<0.000000e+00> : vector<8x8xf32>
    %697 = tpu.matmul %695, %696, %cst_242 {dimension_numbers = #tpu.dot_dimension_numbers<[1], [0], [0], [1], [0, 0, 1, 1], [], []>} : vector<8x8xf32>, vector<8x8xf32>, vector<8x8xf32> -> vector<8x8xf32>
    %698 = vector.extract_strided_slice %538 {offsets = [24, 0], sizes = [8, 32], strides = [1, 1]} : vector<32x32xf32> to vector<8x32xf32>
    %cst_243 = arith.constant dense<0.000000e+00> : vector<8x32xf32>
    %699 = tpu.matmul %697, %698, %cst_243 {dimension_numbers = #tpu.dot_dimension_numbers<[1], [0], [0], [1], [0, 0, 1, 1], [], []>} : vector<8x8xf32>, vector<8x32xf32>, vector<8x32xf32> -> vector<8x32xf32>
    %700 = arith.addf %681, %699 : vector<8x32xf32>
    %701 = tpu.concatenate %620, %700 in 0 : vector<8x32xf32>, vector<8x32xf32> -> vector<16x32xf32>
    %702 = vector.broadcast %540 : vector<1x32xf32> to vector<16x32xf32>
    %703 = arith.addf %701, %702 : vector<16x32xf32>
    %704 = arith.addf %526, %703 : vector<16x32xf32>
    %c1_244 = arith.constant 1 : index
    %c0_245 = arith.constant 0 : index
    %c0_246 = arith.constant 0 : index
    %705 = vector.load %arg12[%c1_244, %c0_245, %c0_246] : memref<2x1x32xf32, #tpu.memory_space<vmem>>, vector<1x1x32xf32>
    %706 = vector.shape_cast %705 : vector<1x1x32xf32> to vector<1x32xf32>
    %c1_247 = arith.constant 1 : index
    %c0_248 = arith.constant 0 : index
    %c0_249 = arith.constant 0 : index
    %707 = vector.load %arg13[%c1_247, %c0_248, %c0_249] : memref<2x1x32xf32, #tpu.memory_space<vmem>>, vector<1x1x32xf32>
    %708 = vector.shape_cast %707 : vector<1x1x32xf32> to vector<1x32xf32>
    %cst_250 = arith.constant dense<0.000000e+00> : vector<16xf32>
    %709 = vector.multi_reduction <add>, %704, %cst_250 [1] : vector<16x32xf32> to vector<16xf32>
    %710 = vector.shape_cast %709 : vector<16xf32> to vector<16x1xf32>
    %cst_251 = arith.constant 3.200000e+01 : f32
    %711 = vector.broadcast %cst_251 : f32 to vector<16x1xf32>
    %712 = arith.divf %710, %711 : vector<16x1xf32>
    %713 = vector.broadcast %712 : vector<16x1xf32> to vector<16x32xf32>
    %714 = arith.subf %704, %713 : vector<16x32xf32>
    %715 = arith.mulf %714, %714 : vector<16x32xf32>
    %cst_252 = arith.constant dense<0.000000e+00> : vector<16xf32>
    %716 = vector.multi_reduction <add>, %715, %cst_252 [1] : vector<16x32xf32> to vector<16xf32>
    %717 = vector.shape_cast %716 : vector<16xf32> to vector<16x1xf32>
    %cst_253 = arith.constant 3.200000e+01 : f32
    %718 = vector.broadcast %cst_253 : f32 to vector<16x1xf32>
    %719 = arith.divf %717, %718 : vector<16x1xf32>
    %720 = vector.broadcast %712 : vector<16x1xf32> to vector<16x32xf32>
    %721 = arith.subf %704, %720 : vector<16x32xf32>
    %cst_254 = arith.constant 9.99999974E-6 : f32
    %722 = vector.broadcast %cst_254 : f32 to vector<16x1xf32>
    %723 = arith.addf %719, %722 : vector<16x1xf32>
    %724 = math.rsqrt %723 : vector<16x1xf32>
    %725 = vector.broadcast %724 : vector<16x1xf32> to vector<16x32xf32>
    %726 = arith.mulf %721, %725 : vector<16x32xf32>
    %727 = vector.broadcast %706 : vector<1x32xf32> to vector<16x32xf32>
    %728 = arith.mulf %726, %727 : vector<16x32xf32>
    %729 = vector.broadcast %708 : vector<1x32xf32> to vector<16x32xf32>
    %730 = arith.addf %728, %729 : vector<16x32xf32>
    %c1_255 = arith.constant 1 : index
    %c0_256 = arith.constant 0 : index
    %c0_257 = arith.constant 0 : index
    %731 = vector.load %arg14[%c1_255, %c0_256, %c0_257] : memref<2x32x32xf32, #tpu.memory_space<vmem>>, vector<1x32x32xf32>
    %732 = vector.shape_cast %731 : vector<1x32x32xf32> to vector<32x32xf32>
    %cst_258 = arith.constant dense<0.000000e+00> : vector<16x32xf32>
    %733 = tpu.matmul %730, %732, %cst_258 {dimension_numbers = #tpu.dot_dimension_numbers<[1], [0], [0], [1], [0, 0, 1, 1], [], []>} : vector<16x32xf32>, vector<32x32xf32>, vector<16x32xf32> -> vector<16x32xf32>
    %c1_259 = arith.constant 1 : index
    %c0_260 = arith.constant 0 : index
    %c0_261 = arith.constant 0 : index
    %734 = vector.load %arg15[%c1_259, %c0_260, %c0_261] : memref<2x1x32xf32, #tpu.memory_space<vmem>>, vector<1x1x32xf32>
    %735 = vector.shape_cast %734 : vector<1x1x32xf32> to vector<1x32xf32>
    %736 = vector.broadcast %735 : vector<1x32xf32> to vector<16x32xf32>
    %737 = arith.addf %733, %736 : vector<16x32xf32>
    %c1_262 = arith.constant 1 : index
    %c0_263 = arith.constant 0 : index
    %c0_264 = arith.constant 0 : index
    %738 = vector.load %arg16[%c1_262, %c0_263, %c0_264] : memref<2x32x64xf32, #tpu.memory_space<vmem>>, vector<1x32x64xf32>
    %739 = vector.shape_cast %738 : vector<1x32x64xf32> to vector<32x64xf32>
    %cst_265 = arith.constant dense<0.000000e+00> : vector<16x64xf32>
    %740 = tpu.matmul %50, %739, %cst_265 {dimension_numbers = #tpu.dot_dimension_numbers<[1], [0], [0], [1], [0, 0, 1, 1], [], []>} : vector<16x32xf32>, vector<32x64xf32>, vector<16x64xf32> -> vector<16x64xf32>
    %c1_266 = arith.constant 1 : index
    %c0_267 = arith.constant 0 : index
    %c0_268 = arith.constant 0 : index
    %741 = vector.load %arg17[%c1_266, %c0_267, %c0_268] : memref<2x1x64xf32, #tpu.memory_space<vmem>>, vector<1x1x64xf32>
    %742 = vector.shape_cast %741 : vector<1x1x64xf32> to vector<1x64xf32>
    %743 = vector.broadcast %742 : vector<1x64xf32> to vector<16x64xf32>
    %744 = arith.addf %740, %743 : vector<16x64xf32>
    %745 = vector.extract_strided_slice %744 {offsets = [0, 0], sizes = [16, 32], strides = [1, 1]} : vector<16x64xf32> to vector<16x32xf32>
    %746 = vector.extract_strided_slice %744 {offsets = [0, 32], sizes = [16, 32], strides = [1, 1]} : vector<16x64xf32> to vector<16x32xf32>
    %c1_269 = arith.constant 1 : index
    %c0_270 = arith.constant 0 : index
    %c0_271 = arith.constant 0 : index
    %747 = vector.load %arg18[%c1_269, %c0_270, %c0_271] : memref<2x32x32xf32, #tpu.memory_space<vmem>>, vector<1x32x32xf32>
    %748 = vector.shape_cast %747 : vector<1x32x32xf32> to vector<32x32xf32>
    %c1_272 = arith.constant 1 : index
    %c0_273 = arith.constant 0 : index
    %c0_274 = arith.constant 0 : index
    %749 = vector.load %arg19[%c1_272, %c0_273, %c0_274] : memref<2x1x32xf32, #tpu.memory_space<vmem>>, vector<1x1x32xf32>
    %750 = vector.shape_cast %749 : vector<1x1x32xf32> to vector<1x32xf32>
    %751 = vector.extract_strided_slice %737 {offsets = [0, 0], sizes = [8, 32], strides = [1, 1]} : vector<16x32xf32> to vector<8x32xf32>
    %752 = vector.extract_strided_slice %745 {offsets = [0, 0], sizes = [8, 32], strides = [1, 1]} : vector<16x32xf32> to vector<8x32xf32>
    %753 = vector.extract_strided_slice %746 {offsets = [0, 0], sizes = [8, 32], strides = [1, 1]} : vector<16x32xf32> to vector<8x32xf32>
    %cst_275 = arith.constant 0.000000e+00 : f32
    %754 = vector.broadcast %cst_275 : f32 to vector<8x32xf32>
    %755 = vector.extract_strided_slice %751 {offsets = [0, 0], sizes = [8, 8], strides = [1, 1]} : vector<8x32xf32> to vector<8x8xf32>
    %756 = vector.extract_strided_slice %752 {offsets = [0, 0], sizes = [8, 8], strides = [1, 1]} : vector<8x32xf32> to vector<8x8xf32>
    %cst_276 = arith.constant dense<0.000000e+00> : vector<8x8xf32>
    %757 = tpu.matmul %755, %756, %cst_276 {dimension_numbers = #tpu.dot_dimension_numbers<[1], [1], [0], [0], [0, 0, 1, 0], [], []>} : vector<8x8xf32>, vector<8x8xf32>, vector<8x8xf32> -> vector<8x8xf32>
    %758 = vector.broadcast %48 : vector<1x8xf32> to vector<8x8xf32>
    %759 = arith.addf %757, %758 : vector<8x8xf32>
    %cst_277 = arith.constant dense<0xFF800000> : vector<8xf32>
    %760 = vector.multi_reduction <maximumf>, %759, %cst_277 [1] : vector<8x8xf32> to vector<8xf32>
    %761 = vector.shape_cast %760 : vector<8xf32> to vector<8x1xf32>
    %762 = vector.broadcast %761 : vector<8x1xf32> to vector<8x8xf32>
    %763 = arith.subf %759, %762 : vector<8x8xf32>
    %764 = math.exp %763 : vector<8x8xf32>
    %cst_278 = arith.constant dense<0.000000e+00> : vector<8xf32>
    %765 = vector.multi_reduction <add>, %764, %cst_278 [1] : vector<8x8xf32> to vector<8xf32>
    %766 = vector.shape_cast %765 : vector<8xf32> to vector<8x1xf32>
    %767 = tpu.reciprocal %766 {approx = true} : vector<8x1xf32> -> vector<8x1xf32>
    %768 = vector.broadcast %767 : vector<8x1xf32> to vector<8x8xf32>
    %769 = arith.mulf %764, %768 : vector<8x8xf32>
    %770 = vector.extract_strided_slice %753 {offsets = [0, 0], sizes = [8, 8], strides = [1, 1]} : vector<8x32xf32> to vector<8x8xf32>
    %cst_279 = arith.constant dense<0.000000e+00> : vector<8x8xf32>
    %771 = tpu.matmul %769, %770, %cst_279 {dimension_numbers = #tpu.dot_dimension_numbers<[1], [0], [0], [1], [0, 0, 1, 1], [], []>} : vector<8x8xf32>, vector<8x8xf32>, vector<8x8xf32> -> vector<8x8xf32>
    %772 = vector.extract_strided_slice %748 {offsets = [0, 0], sizes = [8, 32], strides = [1, 1]} : vector<32x32xf32> to vector<8x32xf32>
    %cst_280 = arith.constant dense<0.000000e+00> : vector<8x32xf32>
    %773 = tpu.matmul %771, %772, %cst_280 {dimension_numbers = #tpu.dot_dimension_numbers<[1], [0], [0], [1], [0, 0, 1, 1], [], []>} : vector<8x8xf32>, vector<8x32xf32>, vector<8x32xf32> -> vector<8x32xf32>
    %774 = arith.addf %754, %773 : vector<8x32xf32>
    %775 = vector.extract_strided_slice %751 {offsets = [0, 8], sizes = [8, 8], strides = [1, 1]} : vector<8x32xf32> to vector<8x8xf32>
    %776 = vector.extract_strided_slice %752 {offsets = [0, 8], sizes = [8, 8], strides = [1, 1]} : vector<8x32xf32> to vector<8x8xf32>
    %cst_281 = arith.constant dense<0.000000e+00> : vector<8x8xf32>
    %777 = tpu.matmul %775, %776, %cst_281 {dimension_numbers = #tpu.dot_dimension_numbers<[1], [1], [0], [0], [0, 0, 1, 0], [], []>} : vector<8x8xf32>, vector<8x8xf32>, vector<8x8xf32> -> vector<8x8xf32>
    %778 = vector.broadcast %48 : vector<1x8xf32> to vector<8x8xf32>
    %779 = arith.addf %777, %778 : vector<8x8xf32>
    %cst_282 = arith.constant dense<0xFF800000> : vector<8xf32>
    %780 = vector.multi_reduction <maximumf>, %779, %cst_282 [1] : vector<8x8xf32> to vector<8xf32>
    %781 = vector.shape_cast %780 : vector<8xf32> to vector<8x1xf32>
    %782 = vector.broadcast %781 : vector<8x1xf32> to vector<8x8xf32>
    %783 = arith.subf %779, %782 : vector<8x8xf32>
    %784 = math.exp %783 : vector<8x8xf32>
    %cst_283 = arith.constant dense<0.000000e+00> : vector<8xf32>
    %785 = vector.multi_reduction <add>, %784, %cst_283 [1] : vector<8x8xf32> to vector<8xf32>
    %786 = vector.shape_cast %785 : vector<8xf32> to vector<8x1xf32>
    %787 = tpu.reciprocal %786 {approx = true} : vector<8x1xf32> -> vector<8x1xf32>
    %788 = vector.broadcast %787 : vector<8x1xf32> to vector<8x8xf32>
    %789 = arith.mulf %784, %788 : vector<8x8xf32>
    %790 = vector.extract_strided_slice %753 {offsets = [0, 8], sizes = [8, 8], strides = [1, 1]} : vector<8x32xf32> to vector<8x8xf32>
    %cst_284 = arith.constant dense<0.000000e+00> : vector<8x8xf32>
    %791 = tpu.matmul %789, %790, %cst_284 {dimension_numbers = #tpu.dot_dimension_numbers<[1], [0], [0], [1], [0, 0, 1, 1], [], []>} : vector<8x8xf32>, vector<8x8xf32>, vector<8x8xf32> -> vector<8x8xf32>
    %792 = vector.extract_strided_slice %748 {offsets = [8, 0], sizes = [8, 32], strides = [1, 1]} : vector<32x32xf32> to vector<8x32xf32>
    %cst_285 = arith.constant dense<0.000000e+00> : vector<8x32xf32>
    %793 = tpu.matmul %791, %792, %cst_285 {dimension_numbers = #tpu.dot_dimension_numbers<[1], [0], [0], [1], [0, 0, 1, 1], [], []>} : vector<8x8xf32>, vector<8x32xf32>, vector<8x32xf32> -> vector<8x32xf32>
    %794 = arith.addf %774, %793 : vector<8x32xf32>
    %795 = vector.extract_strided_slice %751 {offsets = [0, 16], sizes = [8, 8], strides = [1, 1]} : vector<8x32xf32> to vector<8x8xf32>
    %796 = vector.extract_strided_slice %752 {offsets = [0, 16], sizes = [8, 8], strides = [1, 1]} : vector<8x32xf32> to vector<8x8xf32>
    %cst_286 = arith.constant dense<0.000000e+00> : vector<8x8xf32>
    %797 = tpu.matmul %795, %796, %cst_286 {dimension_numbers = #tpu.dot_dimension_numbers<[1], [1], [0], [0], [0, 0, 1, 0], [], []>} : vector<8x8xf32>, vector<8x8xf32>, vector<8x8xf32> -> vector<8x8xf32>
    %798 = vector.broadcast %48 : vector<1x8xf32> to vector<8x8xf32>
    %799 = arith.addf %797, %798 : vector<8x8xf32>
    %cst_287 = arith.constant dense<0xFF800000> : vector<8xf32>
    %800 = vector.multi_reduction <maximumf>, %799, %cst_287 [1] : vector<8x8xf32> to vector<8xf32>
    %801 = vector.shape_cast %800 : vector<8xf32> to vector<8x1xf32>
    %802 = vector.broadcast %801 : vector<8x1xf32> to vector<8x8xf32>
    %803 = arith.subf %799, %802 : vector<8x8xf32>
    %804 = math.exp %803 : vector<8x8xf32>
    %cst_288 = arith.constant dense<0.000000e+00> : vector<8xf32>
    %805 = vector.multi_reduction <add>, %804, %cst_288 [1] : vector<8x8xf32> to vector<8xf32>
    %806 = vector.shape_cast %805 : vector<8xf32> to vector<8x1xf32>
    %807 = tpu.reciprocal %806 {approx = true} : vector<8x1xf32> -> vector<8x1xf32>
    %808 = vector.broadcast %807 : vector<8x1xf32> to vector<8x8xf32>
    %809 = arith.mulf %804, %808 : vector<8x8xf32>
    %810 = vector.extract_strided_slice %753 {offsets = [0, 16], sizes = [8, 8], strides = [1, 1]} : vector<8x32xf32> to vector<8x8xf32>
    %cst_289 = arith.constant dense<0.000000e+00> : vector<8x8xf32>
    %811 = tpu.matmul %809, %810, %cst_289 {dimension_numbers = #tpu.dot_dimension_numbers<[1], [0], [0], [1], [0, 0, 1, 1], [], []>} : vector<8x8xf32>, vector<8x8xf32>, vector<8x8xf32> -> vector<8x8xf32>
    %812 = vector.extract_strided_slice %748 {offsets = [16, 0], sizes = [8, 32], strides = [1, 1]} : vector<32x32xf32> to vector<8x32xf32>
    %cst_290 = arith.constant dense<0.000000e+00> : vector<8x32xf32>
    %813 = tpu.matmul %811, %812, %cst_290 {dimension_numbers = #tpu.dot_dimension_numbers<[1], [0], [0], [1], [0, 0, 1, 1], [], []>} : vector<8x8xf32>, vector<8x32xf32>, vector<8x32xf32> -> vector<8x32xf32>
    %814 = arith.addf %794, %813 : vector<8x32xf32>
    %815 = vector.extract_strided_slice %751 {offsets = [0, 24], sizes = [8, 8], strides = [1, 1]} : vector<8x32xf32> to vector<8x8xf32>
    %816 = vector.extract_strided_slice %752 {offsets = [0, 24], sizes = [8, 8], strides = [1, 1]} : vector<8x32xf32> to vector<8x8xf32>
    %cst_291 = arith.constant dense<0.000000e+00> : vector<8x8xf32>
    %817 = tpu.matmul %815, %816, %cst_291 {dimension_numbers = #tpu.dot_dimension_numbers<[1], [1], [0], [0], [0, 0, 1, 0], [], []>} : vector<8x8xf32>, vector<8x8xf32>, vector<8x8xf32> -> vector<8x8xf32>
    %818 = vector.broadcast %48 : vector<1x8xf32> to vector<8x8xf32>
    %819 = arith.addf %817, %818 : vector<8x8xf32>
    %cst_292 = arith.constant dense<0xFF800000> : vector<8xf32>
    %820 = vector.multi_reduction <maximumf>, %819, %cst_292 [1] : vector<8x8xf32> to vector<8xf32>
    %821 = vector.shape_cast %820 : vector<8xf32> to vector<8x1xf32>
    %822 = vector.broadcast %821 : vector<8x1xf32> to vector<8x8xf32>
    %823 = arith.subf %819, %822 : vector<8x8xf32>
    %824 = math.exp %823 : vector<8x8xf32>
    %cst_293 = arith.constant dense<0.000000e+00> : vector<8xf32>
    %825 = vector.multi_reduction <add>, %824, %cst_293 [1] : vector<8x8xf32> to vector<8xf32>
    %826 = vector.shape_cast %825 : vector<8xf32> to vector<8x1xf32>
    %827 = tpu.reciprocal %826 {approx = true} : vector<8x1xf32> -> vector<8x1xf32>
    %828 = vector.broadcast %827 : vector<8x1xf32> to vector<8x8xf32>
    %829 = arith.mulf %824, %828 : vector<8x8xf32>
    %830 = vector.extract_strided_slice %753 {offsets = [0, 24], sizes = [8, 8], strides = [1, 1]} : vector<8x32xf32> to vector<8x8xf32>
    %cst_294 = arith.constant dense<0.000000e+00> : vector<8x8xf32>
    %831 = tpu.matmul %829, %830, %cst_294 {dimension_numbers = #tpu.dot_dimension_numbers<[1], [0], [0], [1], [0, 0, 1, 1], [], []>} : vector<8x8xf32>, vector<8x8xf32>, vector<8x8xf32> -> vector<8x8xf32>
    %832 = vector.extract_strided_slice %748 {offsets = [24, 0], sizes = [8, 32], strides = [1, 1]} : vector<32x32xf32> to vector<8x32xf32>
    %cst_295 = arith.constant dense<0.000000e+00> : vector<8x32xf32>
    %833 = tpu.matmul %831, %832, %cst_295 {dimension_numbers = #tpu.dot_dimension_numbers<[1], [0], [0], [1], [0, 0, 1, 1], [], []>} : vector<8x8xf32>, vector<8x32xf32>, vector<8x32xf32> -> vector<8x32xf32>
    %834 = arith.addf %814, %833 : vector<8x32xf32>
    %835 = vector.extract_strided_slice %737 {offsets = [8, 0], sizes = [8, 32], strides = [1, 1]} : vector<16x32xf32> to vector<8x32xf32>
    %836 = vector.extract_strided_slice %745 {offsets = [8, 0], sizes = [8, 32], strides = [1, 1]} : vector<16x32xf32> to vector<8x32xf32>
    %837 = vector.extract_strided_slice %746 {offsets = [8, 0], sizes = [8, 32], strides = [1, 1]} : vector<16x32xf32> to vector<8x32xf32>
    %cst_296 = arith.constant 0.000000e+00 : f32
    %838 = vector.broadcast %cst_296 : f32 to vector<8x32xf32>
    %839 = vector.extract_strided_slice %835 {offsets = [0, 0], sizes = [8, 8], strides = [1, 1]} : vector<8x32xf32> to vector<8x8xf32>
    %840 = vector.extract_strided_slice %836 {offsets = [0, 0], sizes = [8, 8], strides = [1, 1]} : vector<8x32xf32> to vector<8x8xf32>
    %cst_297 = arith.constant dense<0.000000e+00> : vector<8x8xf32>
    %841 = tpu.matmul %839, %840, %cst_297 {dimension_numbers = #tpu.dot_dimension_numbers<[1], [1], [0], [0], [0, 0, 1, 0], [], []>} : vector<8x8xf32>, vector<8x8xf32>, vector<8x8xf32> -> vector<8x8xf32>
    %842 = vector.broadcast %49 : vector<1x8xf32> to vector<8x8xf32>
    %843 = arith.addf %841, %842 : vector<8x8xf32>
    %cst_298 = arith.constant dense<0xFF800000> : vector<8xf32>
    %844 = vector.multi_reduction <maximumf>, %843, %cst_298 [1] : vector<8x8xf32> to vector<8xf32>
    %845 = vector.shape_cast %844 : vector<8xf32> to vector<8x1xf32>
    %846 = vector.broadcast %845 : vector<8x1xf32> to vector<8x8xf32>
    %847 = arith.subf %843, %846 : vector<8x8xf32>
    %848 = math.exp %847 : vector<8x8xf32>
    %cst_299 = arith.constant dense<0.000000e+00> : vector<8xf32>
    %849 = vector.multi_reduction <add>, %848, %cst_299 [1] : vector<8x8xf32> to vector<8xf32>
    %850 = vector.shape_cast %849 : vector<8xf32> to vector<8x1xf32>
    %851 = tpu.reciprocal %850 {approx = true} : vector<8x1xf32> -> vector<8x1xf32>
    %852 = vector.broadcast %851 : vector<8x1xf32> to vector<8x8xf32>
    %853 = arith.mulf %848, %852 : vector<8x8xf32>
    %854 = vector.extract_strided_slice %837 {offsets = [0, 0], sizes = [8, 8], strides = [1, 1]} : vector<8x32xf32> to vector<8x8xf32>
    %cst_300 = arith.constant dense<0.000000e+00> : vector<8x8xf32>
    %855 = tpu.matmul %853, %854, %cst_300 {dimension_numbers = #tpu.dot_dimension_numbers<[1], [0], [0], [1], [0, 0, 1, 1], [], []>} : vector<8x8xf32>, vector<8x8xf32>, vector<8x8xf32> -> vector<8x8xf32>
    %856 = vector.extract_strided_slice %748 {offsets = [0, 0], sizes = [8, 32], strides = [1, 1]} : vector<32x32xf32> to vector<8x32xf32>
    %cst_301 = arith.constant dense<0.000000e+00> : vector<8x32xf32>
    %857 = tpu.matmul %855, %856, %cst_301 {dimension_numbers = #tpu.dot_dimension_numbers<[1], [0], [0], [1], [0, 0, 1, 1], [], []>} : vector<8x8xf32>, vector<8x32xf32>, vector<8x32xf32> -> vector<8x32xf32>
    %858 = arith.addf %838, %857 : vector<8x32xf32>
    %859 = vector.extract_strided_slice %835 {offsets = [0, 8], sizes = [8, 8], strides = [1, 1]} : vector<8x32xf32> to vector<8x8xf32>
    %860 = vector.extract_strided_slice %836 {offsets = [0, 8], sizes = [8, 8], strides = [1, 1]} : vector<8x32xf32> to vector<8x8xf32>
    %cst_302 = arith.constant dense<0.000000e+00> : vector<8x8xf32>
    %861 = tpu.matmul %859, %860, %cst_302 {dimension_numbers = #tpu.dot_dimension_numbers<[1], [1], [0], [0], [0, 0, 1, 0], [], []>} : vector<8x8xf32>, vector<8x8xf32>, vector<8x8xf32> -> vector<8x8xf32>
    %862 = vector.broadcast %49 : vector<1x8xf32> to vector<8x8xf32>
    %863 = arith.addf %861, %862 : vector<8x8xf32>
    %cst_303 = arith.constant dense<0xFF800000> : vector<8xf32>
    %864 = vector.multi_reduction <maximumf>, %863, %cst_303 [1] : vector<8x8xf32> to vector<8xf32>
    %865 = vector.shape_cast %864 : vector<8xf32> to vector<8x1xf32>
    %866 = vector.broadcast %865 : vector<8x1xf32> to vector<8x8xf32>
    %867 = arith.subf %863, %866 : vector<8x8xf32>
    %868 = math.exp %867 : vector<8x8xf32>
    %cst_304 = arith.constant dense<0.000000e+00> : vector<8xf32>
    %869 = vector.multi_reduction <add>, %868, %cst_304 [1] : vector<8x8xf32> to vector<8xf32>
    %870 = vector.shape_cast %869 : vector<8xf32> to vector<8x1xf32>
    %871 = tpu.reciprocal %870 {approx = true} : vector<8x1xf32> -> vector<8x1xf32>
    %872 = vector.broadcast %871 : vector<8x1xf32> to vector<8x8xf32>
    %873 = arith.mulf %868, %872 : vector<8x8xf32>
    %874 = vector.extract_strided_slice %837 {offsets = [0, 8], sizes = [8, 8], strides = [1, 1]} : vector<8x32xf32> to vector<8x8xf32>
    %cst_305 = arith.constant dense<0.000000e+00> : vector<8x8xf32>
    %875 = tpu.matmul %873, %874, %cst_305 {dimension_numbers = #tpu.dot_dimension_numbers<[1], [0], [0], [1], [0, 0, 1, 1], [], []>} : vector<8x8xf32>, vector<8x8xf32>, vector<8x8xf32> -> vector<8x8xf32>
    %876 = vector.extract_strided_slice %748 {offsets = [8, 0], sizes = [8, 32], strides = [1, 1]} : vector<32x32xf32> to vector<8x32xf32>
    %cst_306 = arith.constant dense<0.000000e+00> : vector<8x32xf32>
    %877 = tpu.matmul %875, %876, %cst_306 {dimension_numbers = #tpu.dot_dimension_numbers<[1], [0], [0], [1], [0, 0, 1, 1], [], []>} : vector<8x8xf32>, vector<8x32xf32>, vector<8x32xf32> -> vector<8x32xf32>
    %878 = arith.addf %858, %877 : vector<8x32xf32>
    %879 = vector.extract_strided_slice %835 {offsets = [0, 16], sizes = [8, 8], strides = [1, 1]} : vector<8x32xf32> to vector<8x8xf32>
    %880 = vector.extract_strided_slice %836 {offsets = [0, 16], sizes = [8, 8], strides = [1, 1]} : vector<8x32xf32> to vector<8x8xf32>
    %cst_307 = arith.constant dense<0.000000e+00> : vector<8x8xf32>
    %881 = tpu.matmul %879, %880, %cst_307 {dimension_numbers = #tpu.dot_dimension_numbers<[1], [1], [0], [0], [0, 0, 1, 0], [], []>} : vector<8x8xf32>, vector<8x8xf32>, vector<8x8xf32> -> vector<8x8xf32>
    %882 = vector.broadcast %49 : vector<1x8xf32> to vector<8x8xf32>
    %883 = arith.addf %881, %882 : vector<8x8xf32>
    %cst_308 = arith.constant dense<0xFF800000> : vector<8xf32>
    %884 = vector.multi_reduction <maximumf>, %883, %cst_308 [1] : vector<8x8xf32> to vector<8xf32>
    %885 = vector.shape_cast %884 : vector<8xf32> to vector<8x1xf32>
    %886 = vector.broadcast %885 : vector<8x1xf32> to vector<8x8xf32>
    %887 = arith.subf %883, %886 : vector<8x8xf32>
    %888 = math.exp %887 : vector<8x8xf32>
    %cst_309 = arith.constant dense<0.000000e+00> : vector<8xf32>
    %889 = vector.multi_reduction <add>, %888, %cst_309 [1] : vector<8x8xf32> to vector<8xf32>
    %890 = vector.shape_cast %889 : vector<8xf32> to vector<8x1xf32>
    %891 = tpu.reciprocal %890 {approx = true} : vector<8x1xf32> -> vector<8x1xf32>
    %892 = vector.broadcast %891 : vector<8x1xf32> to vector<8x8xf32>
    %893 = arith.mulf %888, %892 : vector<8x8xf32>
    %894 = vector.extract_strided_slice %837 {offsets = [0, 16], sizes = [8, 8], strides = [1, 1]} : vector<8x32xf32> to vector<8x8xf32>
    %cst_310 = arith.constant dense<0.000000e+00> : vector<8x8xf32>
    %895 = tpu.matmul %893, %894, %cst_310 {dimension_numbers = #tpu.dot_dimension_numbers<[1], [0], [0], [1], [0, 0, 1, 1], [], []>} : vector<8x8xf32>, vector<8x8xf32>, vector<8x8xf32> -> vector<8x8xf32>
    %896 = vector.extract_strided_slice %748 {offsets = [16, 0], sizes = [8, 32], strides = [1, 1]} : vector<32x32xf32> to vector<8x32xf32>
    %cst_311 = arith.constant dense<0.000000e+00> : vector<8x32xf32>
    %897 = tpu.matmul %895, %896, %cst_311 {dimension_numbers = #tpu.dot_dimension_numbers<[1], [0], [0], [1], [0, 0, 1, 1], [], []>} : vector<8x8xf32>, vector<8x32xf32>, vector<8x32xf32> -> vector<8x32xf32>
    %898 = arith.addf %878, %897 : vector<8x32xf32>
    %899 = vector.extract_strided_slice %835 {offsets = [0, 24], sizes = [8, 8], strides = [1, 1]} : vector<8x32xf32> to vector<8x8xf32>
    %900 = vector.extract_strided_slice %836 {offsets = [0, 24], sizes = [8, 8], strides = [1, 1]} : vector<8x32xf32> to vector<8x8xf32>
    %cst_312 = arith.constant dense<0.000000e+00> : vector<8x8xf32>
    %901 = tpu.matmul %899, %900, %cst_312 {dimension_numbers = #tpu.dot_dimension_numbers<[1], [1], [0], [0], [0, 0, 1, 0], [], []>} : vector<8x8xf32>, vector<8x8xf32>, vector<8x8xf32> -> vector<8x8xf32>
    %902 = vector.broadcast %49 : vector<1x8xf32> to vector<8x8xf32>
    %903 = arith.addf %901, %902 : vector<8x8xf32>
    %cst_313 = arith.constant dense<0xFF800000> : vector<8xf32>
    %904 = vector.multi_reduction <maximumf>, %903, %cst_313 [1] : vector<8x8xf32> to vector<8xf32>
    %905 = vector.shape_cast %904 : vector<8xf32> to vector<8x1xf32>
    %906 = vector.broadcast %905 : vector<8x1xf32> to vector<8x8xf32>
    %907 = arith.subf %903, %906 : vector<8x8xf32>
    %908 = math.exp %907 : vector<8x8xf32>
    %cst_314 = arith.constant dense<0.000000e+00> : vector<8xf32>
    %909 = vector.multi_reduction <add>, %908, %cst_314 [1] : vector<8x8xf32> to vector<8xf32>
    %910 = vector.shape_cast %909 : vector<8xf32> to vector<8x1xf32>
    %911 = tpu.reciprocal %910 {approx = true} : vector<8x1xf32> -> vector<8x1xf32>
    %912 = vector.broadcast %911 : vector<8x1xf32> to vector<8x8xf32>
    %913 = arith.mulf %908, %912 : vector<8x8xf32>
    %914 = vector.extract_strided_slice %837 {offsets = [0, 24], sizes = [8, 8], strides = [1, 1]} : vector<8x32xf32> to vector<8x8xf32>
    %cst_315 = arith.constant dense<0.000000e+00> : vector<8x8xf32>
    %915 = tpu.matmul %913, %914, %cst_315 {dimension_numbers = #tpu.dot_dimension_numbers<[1], [0], [0], [1], [0, 0, 1, 1], [], []>} : vector<8x8xf32>, vector<8x8xf32>, vector<8x8xf32> -> vector<8x8xf32>
    %916 = vector.extract_strided_slice %748 {offsets = [24, 0], sizes = [8, 32], strides = [1, 1]} : vector<32x32xf32> to vector<8x32xf32>
    %cst_316 = arith.constant dense<0.000000e+00> : vector<8x32xf32>
    %917 = tpu.matmul %915, %916, %cst_316 {dimension_numbers = #tpu.dot_dimension_numbers<[1], [0], [0], [1], [0, 0, 1, 1], [], []>} : vector<8x8xf32>, vector<8x32xf32>, vector<8x32xf32> -> vector<8x32xf32>
    %918 = arith.addf %898, %917 : vector<8x32xf32>
    %919 = tpu.concatenate %834, %918 in 0 : vector<8x32xf32>, vector<8x32xf32> -> vector<16x32xf32>
    %920 = vector.broadcast %750 : vector<1x32xf32> to vector<16x32xf32>
    %921 = arith.addf %919, %920 : vector<16x32xf32>
    %922 = arith.addf %730, %921 : vector<16x32xf32>
    %c1_317 = arith.constant 1 : index
    %c0_318 = arith.constant 0 : index
    %c0_319 = arith.constant 0 : index
    %923 = vector.load %arg20[%c1_317, %c0_318, %c0_319] : memref<2x1x32xf32, #tpu.memory_space<vmem>>, vector<1x1x32xf32>
    %924 = vector.shape_cast %923 : vector<1x1x32xf32> to vector<1x32xf32>
    %c1_320 = arith.constant 1 : index
    %c0_321 = arith.constant 0 : index
    %c0_322 = arith.constant 0 : index
    %925 = vector.load %arg21[%c1_320, %c0_321, %c0_322] : memref<2x1x32xf32, #tpu.memory_space<vmem>>, vector<1x1x32xf32>
    %926 = vector.shape_cast %925 : vector<1x1x32xf32> to vector<1x32xf32>
    %cst_323 = arith.constant dense<0.000000e+00> : vector<16xf32>
    %927 = vector.multi_reduction <add>, %922, %cst_323 [1] : vector<16x32xf32> to vector<16xf32>
    %928 = vector.shape_cast %927 : vector<16xf32> to vector<16x1xf32>
    %cst_324 = arith.constant 3.200000e+01 : f32
    %929 = vector.broadcast %cst_324 : f32 to vector<16x1xf32>
    %930 = arith.divf %928, %929 : vector<16x1xf32>
    %931 = vector.broadcast %930 : vector<16x1xf32> to vector<16x32xf32>
    %932 = arith.subf %922, %931 : vector<16x32xf32>
    %933 = arith.mulf %932, %932 : vector<16x32xf32>
    %cst_325 = arith.constant dense<0.000000e+00> : vector<16xf32>
    %934 = vector.multi_reduction <add>, %933, %cst_325 [1] : vector<16x32xf32> to vector<16xf32>
    %935 = vector.shape_cast %934 : vector<16xf32> to vector<16x1xf32>
    %cst_326 = arith.constant 3.200000e+01 : f32
    %936 = vector.broadcast %cst_326 : f32 to vector<16x1xf32>
    %937 = arith.divf %935, %936 : vector<16x1xf32>
    %938 = vector.broadcast %930 : vector<16x1xf32> to vector<16x32xf32>
    %939 = arith.subf %922, %938 : vector<16x32xf32>
    %cst_327 = arith.constant 9.99999974E-6 : f32
    %940 = vector.broadcast %cst_327 : f32 to vector<16x1xf32>
    %941 = arith.addf %937, %940 : vector<16x1xf32>
    %942 = math.rsqrt %941 : vector<16x1xf32>
    %943 = vector.broadcast %942 : vector<16x1xf32> to vector<16x32xf32>
    %944 = arith.mulf %939, %943 : vector<16x32xf32>
    %945 = vector.broadcast %924 : vector<1x32xf32> to vector<16x32xf32>
    %946 = arith.mulf %944, %945 : vector<16x32xf32>
    %947 = vector.broadcast %926 : vector<1x32xf32> to vector<16x32xf32>
    %948 = arith.addf %946, %947 : vector<16x32xf32>
    %c1_328 = arith.constant 1 : index
    %c0_329 = arith.constant 0 : index
    %c0_330 = arith.constant 0 : index
    %949 = vector.load %arg22[%c1_328, %c0_329, %c0_330] : memref<2x32x64xf32, #tpu.memory_space<vmem>>, vector<1x32x64xf32>
    %950 = vector.shape_cast %949 : vector<1x32x64xf32> to vector<32x64xf32>
    %cst_331 = arith.constant dense<0.000000e+00> : vector<16x64xf32>
    %951 = tpu.matmul %948, %950, %cst_331 {dimension_numbers = #tpu.dot_dimension_numbers<[1], [0], [0], [1], [0, 0, 1, 1], [], []>} : vector<16x32xf32>, vector<32x64xf32>, vector<16x64xf32> -> vector<16x64xf32>
    %c1_332 = arith.constant 1 : index
    %c0_333 = arith.constant 0 : index
    %c0_334 = arith.constant 0 : index
    %952 = vector.load %arg23[%c1_332, %c0_333, %c0_334] : memref<2x1x64xf32, #tpu.memory_space<vmem>>, vector<1x1x64xf32>
    %953 = vector.shape_cast %952 : vector<1x1x64xf32> to vector<1x64xf32>
    %954 = vector.broadcast %953 : vector<1x64xf32> to vector<16x64xf32>
    %955 = arith.addf %951, %954 : vector<16x64xf32>
    %956 = arith.mulf %955, %955 : vector<16x64xf32>
    %957 = arith.mulf %955, %956 : vector<16x64xf32>
    %cst_335 = arith.constant 4.471500e-02 : f32
    %958 = vector.broadcast %cst_335 : f32 to vector<16x64xf32>
    %959 = arith.mulf %958, %957 : vector<16x64xf32>
    %960 = arith.addf %955, %959 : vector<16x64xf32>
    %cst_336 = arith.constant 0.797884583 : f32
    %961 = vector.broadcast %cst_336 : f32 to vector<16x64xf32>
    %962 = arith.mulf %961, %960 : vector<16x64xf32>
    %963 = math.tanh %962 : vector<16x64xf32>
    %cst_337 = arith.constant 1.000000e+00 : f32
    %964 = vector.broadcast %cst_337 : f32 to vector<16x64xf32>
    %965 = arith.addf %964, %963 : vector<16x64xf32>
    %cst_338 = arith.constant 5.000000e-01 : f32
    %966 = vector.broadcast %cst_338 : f32 to vector<16x64xf32>
    %967 = arith.mulf %966, %965 : vector<16x64xf32>
    %968 = arith.mulf %955, %967 : vector<16x64xf32>
    %c1_339 = arith.constant 1 : index
    %c0_340 = arith.constant 0 : index
    %c0_341 = arith.constant 0 : index
    %969 = vector.load %arg24[%c1_339, %c0_340, %c0_341] : memref<2x64x32xf32, #tpu.memory_space<vmem>>, vector<1x64x32xf32>
    %970 = vector.shape_cast %969 : vector<1x64x32xf32> to vector<64x32xf32>
    %cst_342 = arith.constant dense<0.000000e+00> : vector<16x32xf32>
    %971 = tpu.matmul %968, %970, %cst_342 {dimension_numbers = #tpu.dot_dimension_numbers<[1], [0], [0], [1], [0, 0, 1, 1], [], []>} : vector<16x64xf32>, vector<64x32xf32>, vector<16x32xf32> -> vector<16x32xf32>
    %c1_343 = arith.constant 1 : index
    %c0_344 = arith.constant 0 : index
    %c0_345 = arith.constant 0 : index
    %972 = vector.load %arg25[%c1_343, %c0_344, %c0_345] : memref<2x1x32xf32, #tpu.memory_space<vmem>>, vector<1x1x32xf32>
    %973 = vector.shape_cast %972 : vector<1x1x32xf32> to vector<1x32xf32>
    %974 = vector.broadcast %973 : vector<1x32xf32> to vector<16x32xf32>
    %975 = arith.addf %971, %974 : vector<16x32xf32>
    %976 = arith.addf %948, %975 : vector<16x32xf32>
    %c1_346 = arith.constant 1 : index
    %c0_347 = arith.constant 0 : index
    %c0_348 = arith.constant 0 : index
    %977 = vector.load %arg26[%c1_346, %c0_347, %c0_348] : memref<2x1x32xf32, #tpu.memory_space<vmem>>, vector<1x1x32xf32>
    %978 = vector.shape_cast %977 : vector<1x1x32xf32> to vector<1x32xf32>
    %c1_349 = arith.constant 1 : index
    %c0_350 = arith.constant 0 : index
    %c0_351 = arith.constant 0 : index
    %979 = vector.load %arg27[%c1_349, %c0_350, %c0_351] : memref<2x1x32xf32, #tpu.memory_space<vmem>>, vector<1x1x32xf32>
    %980 = vector.shape_cast %979 : vector<1x1x32xf32> to vector<1x32xf32>
    %cst_352 = arith.constant dense<0.000000e+00> : vector<16xf32>
    %981 = vector.multi_reduction <add>, %976, %cst_352 [1] : vector<16x32xf32> to vector<16xf32>
    %982 = vector.shape_cast %981 : vector<16xf32> to vector<16x1xf32>
    %cst_353 = arith.constant 3.200000e+01 : f32
    %983 = vector.broadcast %cst_353 : f32 to vector<16x1xf32>
    %984 = arith.divf %982, %983 : vector<16x1xf32>
    %985 = vector.broadcast %984 : vector<16x1xf32> to vector<16x32xf32>
    %986 = arith.subf %976, %985 : vector<16x32xf32>
    %987 = arith.mulf %986, %986 : vector<16x32xf32>
    %cst_354 = arith.constant dense<0.000000e+00> : vector<16xf32>
    %988 = vector.multi_reduction <add>, %987, %cst_354 [1] : vector<16x32xf32> to vector<16xf32>
    %989 = vector.shape_cast %988 : vector<16xf32> to vector<16x1xf32>
    %cst_355 = arith.constant 3.200000e+01 : f32
    %990 = vector.broadcast %cst_355 : f32 to vector<16x1xf32>
    %991 = arith.divf %989, %990 : vector<16x1xf32>
    %992 = vector.broadcast %984 : vector<16x1xf32> to vector<16x32xf32>
    %993 = arith.subf %976, %992 : vector<16x32xf32>
    %cst_356 = arith.constant 9.99999974E-6 : f32
    %994 = vector.broadcast %cst_356 : f32 to vector<16x1xf32>
    %995 = arith.addf %991, %994 : vector<16x1xf32>
    %996 = math.rsqrt %995 : vector<16x1xf32>
    %997 = vector.broadcast %996 : vector<16x1xf32> to vector<16x32xf32>
    %998 = arith.mulf %993, %997 : vector<16x32xf32>
    %999 = vector.broadcast %978 : vector<1x32xf32> to vector<16x32xf32>
    %1000 = arith.mulf %998, %999 : vector<16x32xf32>
    %1001 = vector.broadcast %980 : vector<1x32xf32> to vector<16x32xf32>
    %1002 = arith.addf %1000, %1001 : vector<16x32xf32>
    %c0_357 = arith.constant 0 : index
    %c0_358 = arith.constant 0 : index
    %1003 = vector.load %arg31[%c0_357, %c0_358] : memref<16x32xf32, #tpu.memory_space<vmem>>, vector<16x32xf32>
    tpu.vector_store %arg31[%c0_357, %c0_358], %1002 {strides = array<i32>} : memref<16x32xf32, #tpu.memory_space<vmem>>, vector<16x32xf32>,
    %c0_359 = arith.constant 0 : index
    %c0_360 = arith.constant 0 : index
    %1004 = vector.load %arg28[%c0_359, %c0_360] : memref<32x64xf32, #tpu.memory_space<vmem>>, vector<32x64xf32>
    %cst_361 = arith.constant dense<0.000000e+00> : vector<16x64xf32>
    %1005 = tpu.matmul %1002, %1004, %cst_361 {dimension_numbers = #tpu.dot_dimension_numbers<[1], [0], [0], [1], [0, 0, 1, 1], [], []>} : vector<16x32xf32>, vector<32x64xf32>, vector<16x64xf32> -> vector<16x64xf32>
    %c0_362 = arith.constant 0 : index
    %c0_363 = arith.constant 0 : index
    %1006 = vector.load %arg29[%c0_362, %c0_363] : memref<1x64xf32, #tpu.memory_space<vmem>>, vector<1x64xf32>
    %1007 = vector.broadcast %1006 : vector<1x64xf32> to vector<16x64xf32>
    %1008 = arith.addf %1005, %1007 : vector<16x64xf32>
    %c0_364 = arith.constant 0 : index
    %c0_365 = arith.constant 0 : index
    %1009 = vector.load %arg30[%c0_364, %c0_365] : memref<16x64xf32, #tpu.memory_space<vmem>>, vector<16x64xf32>
    tpu.vector_store %arg30[%c0_364, %c0_365], %1008 {strides = array<i32>} : memref<16x64xf32, #tpu.memory_space<vmem>>, vector<16x64xf32>,
    return
  }
}

</mosaic_0001>

<llo_original>
// kernel: decoder_forward.1
$region0: #{decoder_forward.1}
  #allocation0 [shape = 'u32[]', space=smem, size = 0x4, offset = 0x4, fixed_abs, tag = 'smem constant byte address 0x4 - core index']
  #allocation1 [shape = 'u32[144,128]{1,0:T(1,128)}', space=vmem, size = 0x12000, scoped, tag = 'internal scratch']
  %s0 = inlined_call_operand.smem [shape: u32[32], index: -1, kind: input, shape index: {}]
  %s1 = sld [smem:[%s0]]
  %s2 = scalar_lea.smem %s0, 1
  %s3 = sld [smem:[%s2]]
  %s4 = scalar_lea.smem %s0, 2
  %s5 = sld [smem:[%s4]]
  %s6 = scalar_lea.smem %s0, 3
  %s7 = sld [smem:[%s6]]
  %s8 = scalar_lea.smem %s0, 4
  %s9 = sld [smem:[%s8]]
  %s10 = scalar_lea.smem %s0, 5
  %s11 = sld [smem:[%s10]]
  %s12 = scalar_lea.smem %s0, 6
  %s13 = sld [smem:[%s12]]
  %s14 = scalar_lea.smem %s0, 7
  %s15 = sld [smem:[%s14]]
  %s16 = scalar_lea.smem %s0, 8
  %s17 = sld [smem:[%s16]]
  %s18 = scalar_lea.smem %s0, 9
  %s19 = sld [smem:[%s18]]
  %s20 = scalar_lea.smem %s0, 10
  %s21 = sld [smem:[%s20]]
  %s22 = scalar_lea.smem %s0, 11
  %s23 = sld [smem:[%s22]]
  %s24 = scalar_lea.smem %s0, 12
  %s25 = sld [smem:[%s24]]
  %s26 = scalar_lea.smem %s0, 13
  %s27 = sld [smem:[%s26]]
  %s28 = scalar_lea.smem %s0, 14
  %s29 = sld [smem:[%s28]]
  %s30 = scalar_lea.smem %s0, 15
  %s31 = sld [smem:[%s30]]
  %s32 = scalar_lea.smem %s0, 16
  %s33 = sld [smem:[%s32]]
  %s34 = scalar_lea.smem %s0, 17
  %s35 = sld [smem:[%s34]]
  %s36 = scalar_lea.smem %s0, 18
  %s37 = sld [smem:[%s36]]
  %s38 = scalar_lea.smem %s0, 19
  %s39 = sld [smem:[%s38]]
  %s40 = scalar_lea.smem %s0, 20
  %s41 = sld [smem:[%s40]]
  %s42 = scalar_lea.smem %s0, 21
  %s43 = sld [smem:[%s42]]
  %s44 = scalar_lea.smem %s0, 22
  %s45 = sld [smem:[%s44]]
  %s46 = scalar_lea.smem %s0, 23
  %s47 = sld [smem:[%s46]]
  %s48 = scalar_lea.smem %s0, 24
  %s49 = sld [smem:[%s48]]
  %s50 = scalar_lea.smem %s0, 25
  %s51 = sld [smem:[%s50]]
  %s52 = scalar_lea.smem %s0, 26
  %s53 = sld [smem:[%s52]]
  %s54 = scalar_lea.smem %s0, 27
  %s55 = sld [smem:[%s54]]
  %s56 = scalar_lea.smem %s0, 28
  %s57 = sld [smem:[%s56]]
  %s58 = scalar_lea.smem %s0, 29
  %s59 = sld [smem:[%s58]]
  %s60 = scalar_lea.smem %s0, 30
  %s61 = sld [smem:[%s60]]
  %s62 = scalar_lea.smem %s0, 31
  %s63 = sld [smem:[%s62]]
  %64 = xla_tuple %s61, %s63
  %s65 = sld [smem:[#allocation0]]
  $region138: #{decoder_forward.1} parent=0
    _
  %s67 = ssub.s32 1, %s65
  %s68 = scalar_select 0, %s67, %s65
  $region1: #{decoder_forward.1} parent=0
    #allocation2 [shape = 'u8[8192]{0}', space=vmem, size = 0x2000, scoped, tag = 'output window, operand 0, single buffered']
    #allocation3 [shape = 's32[1]{0}', space=sflag, size = 0x4, scoped, tag = 'scoped memory for decoder_forward.1']
    #allocation4 [shape = 'u8[8192]{0}', space=vmem, size = 0x2000, scoped, tag = 'output window, operand 1, single buffered']
    #allocation5 [shape = 's32[1]{0}', space=sflag, size = 0x4, scoped, tag = 'scoped memory for decoder_forward.1']
    %69 = vsyncpa [#allocation3], 0
    %70 = vsyncpa [#allocation5], 0
    // Predicated region
    $region2: #{decoder_forward.1} parent=1 // pred_check
      _
    $region3: #{decoder_forward.1} parent=1 // pred_check_branch
      %72 = sbr.rel (0) target = $region5
    $region4: #{decoder_forward.1} parent=1 // pred_region
      _
    $region5: #{decoder_forward.1} parent=1 // pred_fallthru
      _
    // Predicated region
    $region6: #{decoder_forward.1} parent=1 // pred_check
      _
    $region7: #{decoder_forward.1} parent=1 // pred_check_branch
      %74 = sbr.rel (0) target = $region9
    $region8: #{decoder_forward.1} parent=1 // pred_region
      _
    $region9: #{decoder_forward.1} parent=1 // pred_fallthru
      _
    // Predicated region
    $region10: #{decoder_forward.1} parent=1 // pred_check
      _
    $region11: #{decoder_forward.1} parent=1 // pred_check_branch
      %76 = sbr.rel (0) target = $region13
    $region12: #{decoder_forward.1} parent=1 // pred_region
      _
    $region13: #{decoder_forward.1} parent=1 // pred_fallthru
      _
    // Predicated region
    $region14: #{decoder_forward.1} parent=1 // pred_check
      _
    $region15: #{decoder_forward.1} parent=1 // pred_check_branch
      %78 = sbr.rel (0) target = $region17
    $region16: #{decoder_forward.1} parent=1 // pred_region
      _
    $region17: #{decoder_forward.1} parent=1 // pred_fallthru
      _
    // Predicated region
    $region18: #{decoder_forward.1} parent=1 // pred_check
      _
    $region19: #{decoder_forward.1} parent=1 // pred_check_branch
      %80 = sbr.rel (0) target = $region21
    $region20: #{decoder_forward.1} parent=1 // pred_region
      _
    $region21: #{decoder_forward.1} parent=1 // pred_fallthru
      _
    // Predicated region
    $region22: #{decoder_forward.1} parent=1 // pred_check
      _
    $region23: #{decoder_forward.1} parent=1 // pred_check_branch
      %82 = sbr.rel (0) target = $region25
    $region24: #{decoder_forward.1} parent=1 // pred_region
      _
    $region25: #{decoder_forward.1} parent=1 // pred_fallthru
      _
    // Predicated region
    $region26: #{decoder_forward.1} parent=1 // pred_check
      _
    $region27: #{decoder_forward.1} parent=1 // pred_check_branch
      %84 = sbr.rel (0) target = $region29
    $region28: #{decoder_forward.1} parent=1 // pred_region
      _
    $region29: #{decoder_forward.1} parent=1 // pred_fallthru
      _
    // Predicated region
    $region30: #{decoder_forward.1} parent=1 // pred_check
      _
    $region31: #{decoder_forward.1} parent=1 // pred_check_branch
      %86 = sbr.rel (0) target = $region33
    $region32: #{decoder_forward.1} parent=1 // pred_region
      _
    $region33: #{decoder_forward.1} parent=1 // pred_fallthru
      _
    // Predicated region
    $region34: #{decoder_forward.1} parent=1 // pred_check
      _
    $region35: #{decoder_forward.1} parent=1 // pred_check_branch
      %88 = sbr.rel (0) target = $region37
    $region36: #{decoder_forward.1} parent=1 // pred_region
      _
    $region37: #{decoder_forward.1} parent=1 // pred_fallthru
      _
    // Predicated region
    $region38: #{decoder_forward.1} parent=1 // pred_check
      _
    $region39: #{decoder_forward.1} parent=1 // pred_check_branch
      %90 = sbr.rel (0) target = $region41
    $region40: #{decoder_forward.1} parent=1 // pred_region
      _
    $region41: #{decoder_forward.1} parent=1 // pred_fallthru
      _
    // Predicated region
    $region42: #{decoder_forward.1} parent=1 // pred_check
      _
    $region43: #{decoder_forward.1} parent=1 // pred_check_branch
      %92 = sbr.rel (0) target = $region45
    $region44: #{decoder_forward.1} parent=1 // pred_region
      _
    $region45: #{decoder_forward.1} parent=1 // pred_fallthru
      _
    // Predicated region
    $region46: #{decoder_forward.1} parent=1 // pred_check
      _
    $region47: #{decoder_forward.1} parent=1 // pred_check_branch
      %94 = sbr.rel (0) target = $region49
    $region48: #{decoder_forward.1} parent=1 // pred_region
      _
    $region49: #{decoder_forward.1} parent=1 // pred_fallthru
      _
    // Predicated region
    $region50: #{decoder_forward.1} parent=1 // pred_check
      _
    $region51: #{decoder_forward.1} parent=1 // pred_check_branch
      %96 = sbr.rel (0) target = $region53
    $region52: #{decoder_forward.1} parent=1 // pred_region
      _
    $region53: #{decoder_forward.1} parent=1 // pred_fallthru
      _
    // Predicated region
    $region54: #{decoder_forward.1} parent=1 // pred_check
      _
    $region55: #{decoder_forward.1} parent=1 // pred_check_branch
      %98 = sbr.rel (0) target = $region57
    $region56: #{decoder_forward.1} parent=1 // pred_region
      _
    $region57: #{decoder_forward.1} parent=1 // pred_fallthru
      _
    // Predicated region
    $region58: #{decoder_forward.1} parent=1 // pred_check
      _
    $region59: #{decoder_forward.1} parent=1 // pred_check_branch
      %100 = sbr.rel (0) target = $region61
    $region60: #{decoder_forward.1} parent=1 // pred_region
      _
    $region61: #{decoder_forward.1} parent=1 // pred_fallthru
      _
    // Predicated region
    $region62: #{decoder_forward.1} parent=1 // pred_check
      _
    $region63: #{decoder_forward.1} parent=1 // pred_check_branch
      %102 = sbr.rel (0) target = $region65
    $region64: #{decoder_forward.1} parent=1 // pred_region
      _
    $region65: #{decoder_forward.1} parent=1 // pred_fallthru
      _
    // Predicated region
    $region66: #{decoder_forward.1} parent=1 // pred_check
      _
    $region67: #{decoder_forward.1} parent=1 // pred_check_branch
      %104 = sbr.rel (0) target = $region69
    $region68: #{decoder_forward.1} parent=1 // pred_region
      _
    $region69: #{decoder_forward.1} parent=1 // pred_fallthru
      _
    // Predicated region
    $region70: #{decoder_forward.1} parent=1 // pred_check
      _
    $region71: #{decoder_forward.1} parent=1 // pred_check_branch
      %106 = sbr.rel (0) target = $region73
    $region72: #{decoder_forward.1} parent=1 // pred_region
      _
    $region73: #{decoder_forward.1} parent=1 // pred_fallthru
      _
    // Predicated region
    $region74: #{decoder_forward.1} parent=1 // pred_check
      _
    $region75: #{decoder_forward.1} parent=1 // pred_check_branch
      %108 = sbr.rel (0) target = $region77
    $region76: #{decoder_forward.1} parent=1 // pred_region
      _
    $region77: #{decoder_forward.1} parent=1 // pred_fallthru
      _
    // Predicated region
    $region78: #{decoder_forward.1} parent=1 // pred_check
      _
    $region79: #{decoder_forward.1} parent=1 // pred_check_branch
      %110 = sbr.rel (0) target = $region81
    $region80: #{decoder_forward.1} parent=1 // pred_region
      _
    $region81: #{decoder_forward.1} parent=1 // pred_fallthru
      _
    // Predicated region
    $region82: #{decoder_forward.1} parent=1 // pred_check
      _
    $region83: #{decoder_forward.1} parent=1 // pred_check_branch
      %112 = sbr.rel (0) target = $region85
    $region84: #{decoder_forward.1} parent=1 // pred_region
      _
    $region85: #{decoder_forward.1} parent=1 // pred_fallthru
      _
    // Predicated region
    $region86: #{decoder_forward.1} parent=1 // pred_check
      _
    $region87: #{decoder_forward.1} parent=1 // pred_check_branch
      %114 = sbr.rel (0) target = $region89
    $region88: #{decoder_forward.1} parent=1 // pred_region
      _
    $region89: #{decoder_forward.1} parent=1 // pred_fallthru
      _
    // Predicated region
    $region90: #{decoder_forward.1} parent=1 // pred_check
      _
    $region91: #{decoder_forward.1} parent=1 // pred_check_branch
      %116 = sbr.rel (0) target = $region93
    $region92: #{decoder_forward.1} parent=1 // pred_region
      _
    $region93: #{decoder_forward.1} parent=1 // pred_fallthru
      _
    // Predicated region
    $region94: #{decoder_forward.1} parent=1 // pred_check
      _
    $region95: #{decoder_forward.1} parent=1 // pred_check_branch
      %118 = sbr.rel (0) target = $region97
    $region96: #{decoder_forward.1} parent=1 // pred_region
      _
    $region97: #{decoder_forward.1} parent=1 // pred_fallthru
      _
    // Predicated region
    $region98: #{decoder_forward.1} parent=1 // pred_check
      _
    $region99: #{decoder_forward.1} parent=1 // pred_check_branch
      %120 = sbr.rel (0) target = $region101
    $region100: #{decoder_forward.1} parent=1 // pred_region
      _
    $region101: #{decoder_forward.1} parent=1 // pred_fallthru
      _
    // Predicated region
    $region102: #{decoder_forward.1} parent=1 // pred_check
      _
    $region103: #{decoder_forward.1} parent=1 // pred_check_branch
      %122 = sbr.rel (0) target = $region105
    $region104: #{decoder_forward.1} parent=1 // pred_region
      _
    $region105: #{decoder_forward.1} parent=1 // pred_fallthru
      _
    // Predicated region
    $region106: #{decoder_forward.1} parent=1 // pred_check
      _
    $region107: #{decoder_forward.1} parent=1 // pred_check_branch
      %124 = sbr.rel (0) target = $region109
    $region108: #{decoder_forward.1} parent=1 // pred_region
      _
    $region109: #{decoder_forward.1} parent=1 // pred_fallthru
      _
    // Predicated region
    $region110: #{decoder_forward.1} parent=1 // pred_check
      _
    $region111: #{decoder_forward.1} parent=1 // pred_check_branch
      %126 = sbr.rel (0) target = $region113
    $region112: #{decoder_forward.1} parent=1 // pred_region
      _
    $region113: #{decoder_forward.1} parent=1 // pred_fallthru
      _
    // Predicated region
    $region114: #{decoder_forward.1} parent=1 // pred_check
      _
    $region115: #{decoder_forward.1} parent=1 // pred_check_branch
      %128 = sbr.rel (0) target = $region117
    $region116: #{decoder_forward.1} parent=1 // pred_region
      _
    $region117: #{decoder_forward.1} parent=1 // pred_fallthru
      _
    // Predicated region
    $region118: #{decoder_forward.1} parent=1 // pred_check
      _
    $region119: #{decoder_forward.1} parent=1 // pred_check_branch
      %130 = sbr.rel (0) target = $region121
    $region120: #{decoder_forward.1} parent=1 // pred_region
      _
    $region121: #{decoder_forward.1} parent=1 // pred_fallthru
      _
    %v131 = vld [vmem:[%s1] sm:$0xff]
    %v132 = vld [vmem:[%s1 + $0x8] sm:$0xff]
    %v133 = vlaneseq
    %v134 = vand.u32 %v133, 127
    %135 = vset.pattern.permute.xlu0 0
    %136 = vperm.xlu0 %135, %v131
    %v137 = vpop.permute.xlu0 %136
    %138 = vset.pattern.permute.xlu0 0
    %139 = vperm.xlu0 %138, %v132
    %v140 = vpop.permute.xlu0 %139
    %vm141 = vcmp.eq.s32.totalorder %v134, %v137
    %vm142 = vcmp.eq.s32.totalorder %v134, %v140
    %v143 = vsel %vm141, 1, 0
    %v144 = vsel %vm142, 1, 0
    %v145 = vcvt.s32.f32 %v143
    %v146 = vcvt.s32.f32 %v144
    %v147 = vld [vmem:[%s11] sm:$0xff]
    %v148 = vld [vmem:[%s11 + $0x8] sm:$0xff]
    %v149 = vld [vmem:[%s11 + $0x10] sm:$0xff]
    %v150 = vld [vmem:[%s11 + $0x18] sm:$0xff]
    %v151 = vld [vmem:[%s11 + $0x20] sm:$0xff]
    %v152 = vld [vmem:[%s11 + $0x28] sm:$0xff]
    %v153 = vld [vmem:[%s11 + $0x30] sm:$0xff]
    %v154 = vld [vmem:[%s11 + $0x38] sm:$0xff]
    %v155 = vld [vmem:[%s3] sm:$0xff]
    %v156 = vld [vmem:[%s3 + $0x8] sm:$0xff]
    %vm157 = vcmask 523264
    %v159 = vsel %vm157, %v145, 0
    %v162 = vsel %vm157, %v146, 0
    %164 = vmatprep.subr.mxu0 0.0
    %165 = vmatpush1.msra.mxu0 0.0
    %166 = vmatprep.subr.mxu0 0.0
    %167 = vmatpush1.msra.mxu0 0.0
    %168 = vmatprep.subr.mxu0 0.0
    %169 = vmatpush1.msra.mxu0 0.0
    %170 = vmatprep.subr.mxu0 0.0
    %171 = vmatpush1.msra.mxu0 0.0
    %172 = vmatprep.subr.mxu0 0.0
    %173 = vmatpush1.msra.mxu0 0.0
    %174 = vmatprep.subr.mxu0 0.0
    %175 = vmatpush1.msra.mxu0 0.0
    %176 = vmatprep.subr.mxu0 0.0
    %177 = vmatpush1.msra.mxu0 0.0
    %178 = vmatprep.subr.mxu0 0.0
    %179 = vmatpush1.msra.mxu0 0.0
    %180 = vmatprep.subr.mxu0 0.0
    %181 = vmatpush1.msra.mxu0 %v154
    %182 = vmatprep.subr.mxu0 0.0
    %183 = vmatpush1.msra.mxu0 %v153
    %184 = vmatprep.subr.mxu0 0.0
    %185 = vmatpush1.msra.mxu0 %v152
    %186 = vmatprep.subr.mxu0 0.0
    %187 = vmatpush1.msra.mxu0 %v151
    %188 = vmatprep.subr.mxu0 0.0
    %189 = vmatpush1.msra.mxu0 %v150
    %190 = vmatprep.subr.mxu0 0.0
    %191 = vmatpush1.msra.mxu0 %v149
    %192 = vmatprep.subr.mxu0 0.0
    %193 = vmatpush1.msra.mxu0 %v148
    %194 = vmatprep.subr.mxu0 0.0
    %195 = vmatpush1.msra.mxu0 %v147
    %196 = vmatprep.subr.mxu0 0.0
    %197 = vmatpush2.msra.mxu0 0.0
    %198 = vmatprep.subr.mxu0 0.0
    %199 = vmatpush2.msra.mxu0 0.0
    %200 = vmatprep.subr.mxu0 0.0
    %201 = vmatpush2.msra.mxu0 0.0
    %202 = vmatprep.subr.mxu0 0.0
    %203 = vmatpush2.msra.mxu0 0.0
    %204 = vmatprep.subr.mxu0 0.0
    %205 = vmatpush2.msra.mxu0 0.0
    %206 = vmatprep.subr.mxu0 0.0
    %207 = vmatpush2.msra.mxu0 0.0
    %208 = vmatprep.subr.mxu0 0.0
    %209 = vmatpush2.msra.mxu0 0.0
    %210 = vmatprep.subr.mxu0 0.0
    %211 = vmatpush2.msra.mxu0 0.0
    %212 = vmatprep.subr.mxu0 0.0
    %213 = vmatpush2.msra.mxu0 0.0
    %214 = vmatprep.subr.mxu0 0.0
    %215 = vmatpush2.msra.mxu0 0.0
    %216 = vmatprep.subr.mxu0 0.0
    %217 = vmatpush2.msra.mxu0 0.0
    %218 = vmatprep.subr.mxu0 0.0
    %219 = vmatpush2.msra.mxu0 0.0
    %220 = vmatprep.subr.mxu0 0.0
    %221 = vmatpush2.msra.mxu0 0.0
    %222 = vmatprep.subr.mxu0 0.0
    %223 = vmatpush2.msra.mxu0 0.0
    %224 = vmatprep.subr.mxu0 0.0
    %225 = vmatpush2.msra.mxu0 0.0
    %226 = vmatprep.subr.mxu0 0.0
    %227 = vmatpush2.msra.mxu0 0.0
    %228 = vmatprep.mubr.f32.mxu0 0.0
    %229 = vmatmul.mubr.f32.gmra.mxu0 %v159
    %v230 = vpop.f32.mrf.mxu0
    %v231 = vadd.f32 %v155, %v230
    %v232 = vpop.f32.mrf.mxu0
    %233 = vmatprep.mubr.f32.mxu0 0.0
    %234 = vmatmul.mubr.f32.gmra.mxu0 %v162
    %v235 = vpop.f32.mrf.mxu0
    %v236 = vadd.f32 %v156, %v235
    %v237 = vpop.f32.mrf.mxu0
    %238 = vdwg.mxu0
    %v239 = vld [vmem:[%s13] sm:$0x1]
    %v240 = vld [vmem:[%s15] sm:$0x1]
    %vm241 = vcmask 261120
    %v242 = vsel %vm241, %v231, 0.0
    %243 = vadd.xlane.f32.xlu0 %v242
    %v244 = vpop.xlane.xlu0 %243
    %v245 = vsel %vm241, %v236, 0.0
    %246 = vadd.xlane.f32.xlu0 %v245
    %v247 = vpop.xlane.xlu0 %246
    %v248 = vrcp.pop 32.0
    %v249 = vmul.f32 %v244, %v248
    %v250 = vmul.f32 %v247, %v248
    %v251 = vsub.f32 %v231, %v249
    %v252 = vsub.f32 %v236, %v250
    %v253 = vmul.f32 %v251, %v251
    %v254 = vmul.f32 %v252, %v252
    %v255 = vsel %vm241, %v253, 0.0
    %256 = vadd.xlane.f32.xlu0 %v255
    %v257 = vpop.xlane.xlu0 %256
    %v258 = vsel %vm241, %v254, 0.0
    %259 = vadd.xlane.f32.xlu0 %v258
    %v260 = vpop.xlane.xlu0 %259
    %v261 = vmul.f32 %v257, %v248
    %v262 = vmul.f32 %v260, %v248
    %v263 = vadd.f32 %v261, 1e-05
    %v264 = vadd.f32 %v262, 1e-05
    %v265 = vrsqrt.pop %v263
    %v266 = vrsqrt.pop %v264
    %v267 = vmul.f32 %v251, %v265
    %v268 = vmul.f32 %v252, %v266
    %v270 = vlaneseq
    %v271 = vshrl.u32 %v270, 7
    %v272 = vsub.s32 0, %v271
    %v273 = vrot.slane %v239, %v272
    %v275 = vmul.f32 %v267, %v273
    %v276 = vmul.f32 %v268, %v273
    %v278 = vlaneseq
    %v279 = vshrl.u32 %v278, 7
    %v280 = vsub.s32 0, %v279
    %v281 = vrot.slane %v240, %v280
    %v283 = vadd.f32 %v275, %v281
    %v284 = vadd.f32 %v276, %v281
    %v285 = vlaneseq
    %v286 = vshrl.u32 %v285, 7
    %vm287 = vcmp.ge.s32.totalorder %v286, %v134
    %v288 = vsel %vm287, 0.0, -1e+09
    %v289 = vld [vmem:[%s7] sm:$0x3]
    %v290 = vld [vmem:[%s9] sm:$0x3]
    %v291 = vlaneseq
    %v292 = vshrl.u32 %v291, 7
    %v293 = vsub.s32 0, %v292
    %v294 = vrot.slane %v289, %v293
    %v295 = vadd.f32 %v288, %v294
    %v296 = vlaneseq
    %v297 = vshrl.u32 %v296, 7
    %v298 = vsub.s32 1, %v297
    %v299 = vrot.slane %v289, %v298
    %v300 = vadd.f32 %v288, %v299
    %v301 = vld [vmem:[%s5] sm:$0xff]
    %v302 = vld [vmem:[%s5 + $0x8] sm:$0xff]
    %v303 = vld [vmem:[%s17] sm:$0xff]
    %v304 = vld [vmem:[%s17 + $0x8] sm:$0xff]
    %v305 = vld [vmem:[%s17 + $0x10] sm:$0xff]
    %v306 = vld [vmem:[%s17 + $0x18] sm:$0xff]
    %v307 = vld [vmem:[%s19] sm:$0x1]
    %v309 = vlaneseq
    %v310 = vshrl.u32 %v309, 7
    %v311 = vsub.s32 0, %v310
    %v312 = vrot.slane %v307, %v311
    %v315 = vsel %vm241, %v283, 0
    %v318 = vsel %vm241, %v284, 0
    %320 = vmatprep.subr.mxu0 0.0
    %321 = vmatpush1.msra.mxu0 0.0
    %322 = vmatprep.subr.mxu0 0.0
    %323 = vmatpush1.msra.mxu0 0.0
    %324 = vmatprep.subr.mxu0 0.0
    %325 = vmatpush1.msra.mxu0 0.0
    %326 = vmatprep.subr.mxu0 0.0
    %327 = vmatpush1.msra.mxu0 0.0
    %328 = vmatprep.subr.mxu0 0.0
    %329 = vmatpush1.msra.mxu0 0.0
    %330 = vmatprep.subr.mxu0 0.0
    %331 = vmatpush1.msra.mxu0 0.0
    %332 = vmatprep.subr.mxu0 0.0
    %333 = vmatpush1.msra.mxu0 0.0
    %334 = vmatprep.subr.mxu0 0.0
    %335 = vmatpush1.msra.mxu0 0.0
    %336 = vmatprep.subr.mxu0 0.0
    %337 = vmatpush1.msra.mxu0 0.0
    %338 = vmatprep.subr.mxu0 0.0
    %339 = vmatpush1.msra.mxu0 0.0
    %340 = vmatprep.subr.mxu0 0.0
    %341 = vmatpush1.msra.mxu0 0.0
    %342 = vmatprep.subr.mxu0 0.0
    %343 = vmatpush1.msra.mxu0 0.0
    %344 = vmatprep.subr.mxu0 0.0
    %345 = vmatpush1.msra.mxu0 %v306
    %346 = vmatprep.subr.mxu0 0.0
    %347 = vmatpush1.msra.mxu0 %v305
    %348 = vmatprep.subr.mxu0 0.0
    %349 = vmatpush1.msra.mxu0 %v304
    %350 = vmatprep.subr.mxu0 0.0
    %351 = vmatpush1.msra.mxu0 %v303
    %352 = vmatprep.subr.mxu0 0.0
    %353 = vmatpush2.msra.mxu0 0.0
    %354 = vmatprep.subr.mxu0 0.0
    %355 = vmatpush2.msra.mxu0 0.0
    %356 = vmatprep.subr.mxu0 0.0
    %357 = vmatpush2.msra.mxu0 0.0
    %358 = vmatprep.subr.mxu0 0.0
    %359 = vmatpush2.msra.mxu0 0.0
    %360 = vmatprep.subr.mxu0 0.0
    %361 = vmatpush2.msra.mxu0 0.0
    %362 = vmatprep.subr.mxu0 0.0
    %363 = vmatpush2.msra.mxu0 0.0
    %364 = vmatprep.subr.mxu0 0.0
    %365 = vmatpush2.msra.mxu0 0.0
    %366 = vmatprep.subr.mxu0 0.0
    %367 = vmatpush2.msra.mxu0 0.0
    %368 = vmatprep.subr.mxu0 0.0
    %369 = vmatpush2.msra.mxu0 0.0
    %370 = vmatprep.subr.mxu0 0.0
    %371 = vmatpush2.msra.mxu0 0.0
    %372 = vmatprep.subr.mxu0 0.0
    %373 = vmatpush2.msra.mxu0 0.0
    %374 = vmatprep.subr.mxu0 0.0
    %375 = vmatpush2.msra.mxu0 0.0
    %376 = vmatprep.subr.mxu0 0.0
    %377 = vmatpush2.msra.mxu0 0.0
    %378 = vmatprep.subr.mxu0 0.0
    %379 = vmatpush2.msra.mxu0 0.0
    %380 = vmatprep.subr.mxu0 0.0
    %381 = vmatpush2.msra.mxu0 0.0
    %382 = vmatprep.subr.mxu0 0.0
    %383 = vmatpush2.msra.mxu0 0.0
    %384 = vmatprep.mubr.f32.mxu0 0.0
    %385 = vmatmul.mubr.f32.gmra.mxu0 %v315
    %v386 = vpop.f32.mrf.mxu0
    %v387 = vadd.f32 %v312, %v386
    %v388 = vpop.f32.mrf.mxu0
    %389 = vmatprep.mubr.f32.mxu0 0.0
    %390 = vmatmul.mubr.f32.gmra.mxu0 %v318
    %v391 = vpop.f32.mrf.mxu0
    %v392 = vadd.f32 %v312, %v391
    %v393 = vpop.f32.mrf.mxu0
    %394 = vdwg.mxu0
    %v395 = vld [vmem:[%s21] sm:$0xff]
    %v396 = vld [vmem:[%s21 + $0x8] sm:$0xff]
    %v397 = vld [vmem:[%s21 + $0x10] sm:$0xff]
    %v398 = vld [vmem:[%s21 + $0x18] sm:$0xff]
    %v399 = vld [vmem:[%s23] sm:$0x1]
    %401 = vrot.lane.b32.xlu0 %v387, 96
    %v402 = vpop.permute.xlu0 %401
    %vm403 = vcmask 64512
    %v404 = vsel %vm403, %v387, 0
    %v406 = vsel %vm403, %v402, 0
    %408 = vmatprep.subr.mxu0 0.0
    %409 = vmatpush1.xpose.msra.mxu0 0.0
    %410 = vmatprep.subr.mxu0 0.0
    %411 = vmatpush1.xpose.msra.mxu0 0.0
    %412 = vmatprep.subr.mxu0 0.0
    %413 = vmatpush1.xpose.msra.mxu0 0.0
    %414 = vmatprep.subr.mxu0 0.0
    %415 = vmatpush1.xpose.msra.mxu0 0.0
    %416 = vmatprep.subr.mxu0 0.0
    %417 = vmatpush1.xpose.msra.mxu0 0.0
    %418 = vmatprep.subr.mxu0 0.0
    %419 = vmatpush1.xpose.msra.mxu0 0.0
    %420 = vmatprep.subr.mxu0 0.0
    %421 = vmatpush1.xpose.msra.mxu0 0.0
    %422 = vmatprep.subr.mxu0 0.0
    %423 = vmatpush1.xpose.msra.mxu0 0.0
    %424 = vmatprep.subr.mxu0 0.0
    %425 = vmatpush1.xpose.msra.mxu0 0.0
    %426 = vmatprep.subr.mxu0 0.0
    %427 = vmatpush1.xpose.msra.mxu0 0.0
    %428 = vmatprep.subr.mxu0 0.0
    %429 = vmatpush1.xpose.msra.mxu0 0.0
    %430 = vmatprep.subr.mxu0 0.0
    %431 = vmatpush1.xpose.msra.mxu0 0.0
    %432 = vmatprep.subr.mxu0 0.0
    %433 = vmatpush1.xpose.msra.mxu0 0.0
    %434 = vmatprep.subr.mxu0 0.0
    %435 = vmatpush1.xpose.msra.mxu0 0.0
    %436 = vmatprep.subr.mxu0 0.0
    %437 = vmatpush1.xpose.msra.mxu0 0.0
    %438 = vmatprep.subr.mxu0 0.0
    %439 = vmatpush1.xpose.msra.mxu0 %v406
    %440 = vmatprep.subr.mxu0 0.0
    %441 = vmatpush2.xpose.msra.mxu0 0.0
    %442 = vmatprep.subr.mxu0 0.0
    %443 = vmatpush2.xpose.msra.mxu0 0.0
    %444 = vmatprep.subr.mxu0 0.0
    %445 = vmatpush2.xpose.msra.mxu0 0.0
    %446 = vmatprep.subr.mxu0 0.0
    %447 = vmatpush2.xpose.msra.mxu0 0.0
    %448 = vmatprep.subr.mxu0 0.0
    %449 = vmatpush2.xpose.msra.mxu0 0.0
    %450 = vmatprep.subr.mxu0 0.0
    %451 = vmatpush2.xpose.msra.mxu0 0.0
    %452 = vmatprep.subr.mxu0 0.0
    %453 = vmatpush2.xpose.msra.mxu0 0.0
    %454 = vmatprep.subr.mxu0 0.0
    %455 = vmatpush2.xpose.msra.mxu0 0.0
    %456 = vmatprep.subr.mxu0 0.0
    %457 = vmatpush2.xpose.msra.mxu0 0.0
    %458 = vmatprep.subr.mxu0 0.0
    %459 = vmatpush2.xpose.msra.mxu0 0.0
    %460 = vmatprep.subr.mxu0 0.0
    %461 = vmatpush2.xpose.msra.mxu0 0.0
    %462 = vmatprep.subr.mxu0 0.0
    %463 = vmatpush2.xpose.msra.mxu0 0.0
    %464 = vmatprep.subr.mxu0 0.0
    %465 = vmatpush2.xpose.msra.mxu0 0.0
    %466 = vmatprep.subr.mxu0 0.0
    %467 = vmatpush2.xpose.msra.mxu0 0.0
    %468 = vmatprep.subr.mxu0 0.0
    %469 = vmatpush2.xpose.msra.mxu0 0.0
    %470 = vmatprep.subr.mxu0 0.0
    %471 = vmatpush2.xpose.msra.mxu0 0.0
    %472 = vmatprep.mubr.f32.mxu0 0.0
    %473 = vmatmul.mubr.f32.gmra.mxu0 %v404
    %v474 = vpop.f32.mrf.mxu0
    %v475 = vadd.f32 %v295, %v474
    %v476 = vpop.f32.mrf.mxu0
    %477 = vdwg.mxu0
    %v478 = vsel %vm403, %v475, -inf
    %479 = vmax.xlane.f32.xlu0 %v478
    %v480 = vpop.xlane.xlu0 %479
    %v481 = vsub.f32 %v475, %v480
    %v482 = vmul.f32 %v481, 1.442695
    %v483 = vpow.pop %v482
    %v484 = vsel %vm403, %v483, 0.0
    %485 = vadd.xlane.f32.xlu0 %v484
    %v486 = vpop.xlane.xlu0 %485
    %v487 = vrcp.pop %v486
    %v488 = vmul.f32 %v483, %v487
    %489 = vrot.lane.b32.xlu0 %v387, 64
    %v490 = vpop.permute.xlu0 %489
    %v493 = vsel %vm403, %v488, 0
    %495 = vmatprep.subr.mxu0 0.0
    %496 = vmatpush1.msra.mxu0 0.0
    %497 = vmatprep.subr.mxu0 0.0
    %498 = vmatpush1.msra.mxu0 0.0
    %499 = vmatprep.subr.mxu0 0.0
    %500 = vmatpush1.msra.mxu0 0.0
    %501 = vmatprep.subr.mxu0 0.0
    %502 = vmatpush1.msra.mxu0 0.0
    %503 = vmatprep.subr.mxu0 0.0
    %504 = vmatpush1.msra.mxu0 0.0
    %505 = vmatprep.subr.mxu0 0.0
    %506 = vmatpush1.msra.mxu0 0.0
    %507 = vmatprep.subr.mxu0 0.0
    %508 = vmatpush1.msra.mxu0 0.0
    %509 = vmatprep.subr.mxu0 0.0
    %510 = vmatpush1.msra.mxu0 0.0
    %511 = vmatprep.subr.mxu0 0.0
    %512 = vmatpush1.msra.mxu0 0.0
    %513 = vmatprep.subr.mxu0 0.0
    %514 = vmatpush1.msra.mxu0 0.0
    %515 = vmatprep.subr.mxu0 0.0
    %516 = vmatpush1.msra.mxu0 0.0
    %517 = vmatprep.subr.mxu0 0.0
    %518 = vmatpush1.msra.mxu0 0.0
    %519 = vmatprep.subr.mxu0 0.0
    %520 = vmatpush1.msra.mxu0 0.0
    %521 = vmatprep.subr.mxu0 0.0
    %522 = vmatpush1.msra.mxu0 0.0
    %523 = vmatprep.subr.mxu0 0.0
    %524 = vmatpush1.msra.mxu0 0.0
    %525 = vmatprep.subr.mxu0 0.0
    %526 = vmatpush1.msra.mxu0 %v490
    %527 = vmatprep.subr.mxu0 0.0
    %528 = vmatpush2.msra.mxu0 0.0
    %529 = vmatprep.subr.mxu0 0.0
    %530 = vmatpush2.msra.mxu0 0.0
    %531 = vmatprep.subr.mxu0 0.0
    %532 = vmatpush2.msra.mxu0 0.0
    %533 = vmatprep.subr.mxu0 0.0
    %534 = vmatpush2.msra.mxu0 0.0
    %535 = vmatprep.subr.mxu0 0.0
    %536 = vmatpush2.msra.mxu0 0.0
    %537 = vmatprep.subr.mxu0 0.0
    %538 = vmatpush2.msra.mxu0 0.0
    %539 = vmatprep.subr.mxu0 0.0
    %540 = vmatpush2.msra.mxu0 0.0
    %541 = vmatprep.subr.mxu0 0.0
    %542 = vmatpush2.msra.mxu0 0.0
    %543 = vmatprep.subr.mxu0 0.0
    %544 = vmatpush2.msra.mxu0 0.0
    %545 = vmatprep.subr.mxu0 0.0
    %546 = vmatpush2.msra.mxu0 0.0
    %547 = vmatprep.subr.mxu0 0.0
    %548 = vmatpush2.msra.mxu0 0.0
    %549 = vmatprep.subr.mxu0 0.0
    %550 = vmatpush2.msra.mxu0 0.0
    %551 = vmatprep.subr.mxu0 0.0
    %552 = vmatpush2.msra.mxu0 0.0
    %553 = vmatprep.subr.mxu0 0.0
    %554 = vmatpush2.msra.mxu0 0.0
    %555 = vmatprep.subr.mxu0 0.0
    %556 = vmatpush2.msra.mxu0 0.0
    %557 = vmatprep.subr.mxu0 0.0
    %558 = vmatpush2.msra.mxu0 0.0
    %559 = vmatprep.mubr.f32.mxu0 0.0
    %560 = vmatmul.mubr.f32.gmra.mxu0 %v493
    %v561 = vpop.f32.mrf.mxu0
    %v562 = vadd.f32 0.0, %v561
    %v563 = vpop.f32.mrf.mxu0
    %564 = vdwg.mxu0
    %565 = vrot.lane.b32.xlu0 %v387, 120
    %v566 = vpop.permute.xlu0 %565
    %567 = vrot.lane.b32.xlu0 %v387, 88
    %v568 = vpop.permute.xlu0 %567
    %v569 = vsel %vm403, %v566, 0
    %v571 = vsel %vm403, %v568, 0
    %573 = vmatprep.subr.mxu0 0.0
    %574 = vmatpush1.xpose.msra.mxu0 0.0
    %575 = vmatprep.subr.mxu0 0.0
    %576 = vmatpush1.xpose.msra.mxu0 0.0
    %577 = vmatprep.subr.mxu0 0.0
    %578 = vmatpush1.xpose.msra.mxu0 0.0
    %579 = vmatprep.subr.mxu0 0.0
    %580 = vmatpush1.xpose.msra.mxu0 0.0
    %581 = vmatprep.subr.mxu0 0.0
    %582 = vmatpush1.xpose.msra.mxu0 0.0
    %583 = vmatprep.subr.mxu0 0.0
    %584 = vmatpush1.xpose.msra.mxu0 0.0
    %585 = vmatprep.subr.mxu0 0.0
    %586 = vmatpush1.xpose.msra.mxu0 0.0
    %587 = vmatprep.subr.mxu0 0.0
    %588 = vmatpush1.xpose.msra.mxu0 0.0
    %589 = vmatprep.subr.mxu0 0.0
    %590 = vmatpush1.xpose.msra.mxu0 0.0
    %591 = vmatprep.subr.mxu0 0.0
    %592 = vmatpush1.xpose.msra.mxu0 0.0
    %593 = vmatprep.subr.mxu0 0.0
    %594 = vmatpush1.xpose.msra.mxu0 0.0
    %595 = vmatprep.subr.mxu0 0.0
    %596 = vmatpush1.xpose.msra.mxu0 0.0
    %597 = vmatprep.subr.mxu0 0.0
    %598 = vmatpush1.xpose.msra.mxu0 0.0
    %599 = vmatprep.subr.mxu0 0.0
    %600 = vmatpush1.xpose.msra.mxu0 0.0
    %601 = vmatprep.subr.mxu0 0.0
    %602 = vmatpush1.xpose.msra.mxu0 0.0
    %603 = vmatprep.subr.mxu0 0.0
    %604 = vmatpush1.xpose.msra.mxu0 %v571
    %605 = vmatprep.subr.mxu0 0.0
    %606 = vmatpush2.xpose.msra.mxu0 0.0
    %607 = vmatprep.subr.mxu0 0.0
    %608 = vmatpush2.xpose.msra.mxu0 0.0
    %609 = vmatprep.subr.mxu0 0.0
    %610 = vmatpush2.xpose.msra.mxu0 0.0
    %611 = vmatprep.subr.mxu0 0.0
    %612 = vmatpush2.xpose.msra.mxu0 0.0
    %613 = vmatprep.subr.mxu0 0.0
    %614 = vmatpush2.xpose.msra.mxu0 0.0
    %615 = vmatprep.subr.mxu0 0.0
    %616 = vmatpush2.xpose.msra.mxu0 0.0
    %617 = vmatprep.subr.mxu0 0.0
    %618 = vmatpush2.xpose.msra.mxu0 0.0
    %619 = vmatprep.subr.mxu0 0.0
    %620 = vmatpush2.xpose.msra.mxu0 0.0
    %621 = vmatprep.subr.mxu0 0.0
    %622 = vmatpush2.xpose.msra.mxu0 0.0
    %623 = vmatprep.subr.mxu0 0.0
    %624 = vmatpush2.xpose.msra.mxu0 0.0
    %625 = vmatprep.subr.mxu0 0.0
    %626 = vmatpush2.xpose.msra.mxu0 0.0
    %627 = vmatprep.subr.mxu0 0.0
    %628 = vmatpush2.xpose.msra.mxu0 0.0
    %629 = vmatprep.subr.mxu0 0.0
    %630 = vmatpush2.xpose.msra.mxu0 0.0
    %631 = vmatprep.subr.mxu0 0.0
    %632 = vmatpush2.xpose.msra.mxu0 0.0
    %633 = vmatprep.subr.mxu0 0.0
    %634 = vmatpush2.xpose.msra.mxu0 0.0
    %635 = vmatprep.subr.mxu0 0.0
    %636 = vmatpush2.xpose.msra.mxu0 0.0
    %637 = vmatprep.mubr.f32.mxu0 0.0
    %638 = vmatmul.mubr.f32.gmra.mxu0 %v569
    %v639 = vpop.f32.mrf.mxu0
    %v640 = vadd.f32 %v295, %v639
    %v641 = vpop.f32.mrf.mxu0
    %642 = vdwg.mxu0
    %v643 = vsel %vm403, %v640, -inf
    %644 = vmax.xlane.f32.xlu0 %v643
    %v645 = vpop.xlane.xlu0 %644
    %v646 = vsub.f32 %v640, %v645
    %v647 = vmul.f32 %v646, 1.442695
    %v648 = vpow.pop %v647
    %v649 = vsel %vm403, %v648, 0.0
    %650 = vadd.xlane.f32.xlu0 %v649
    %v651 = vpop.xlane.xlu0 %650
    %v652 = vrcp.pop %v651
    %v653 = vmul.f32 %v648, %v652
    %654 = vrot.lane.b32.xlu0 %v387, 56
    %v655 = vpop.permute.xlu0 %654
    %v658 = vsel %vm403, %v653, 0
    %660 = vmatprep.subr.mxu0 0.0
    %661 = vmatpush1.msra.mxu0 0.0
    %662 = vmatprep.subr.mxu0 0.0
    %663 = vmatpush1.msra.mxu0 0.0
    %664 = vmatprep.subr.mxu0 0.0
    %665 = vmatpush1.msra.mxu0 0.0
    %666 = vmatprep.subr.mxu0 0.0
    %667 = vmatpush1.msra.mxu0 0.0
    %668 = vmatprep.subr.mxu0 0.0
    %669 = vmatpush1.msra.mxu0 0.0
    %670 = vmatprep.subr.mxu0 0.0
    %671 = vmatpush1.msra.mxu0 0.0
    %672 = vmatprep.subr.mxu0 0.0
    %673 = vmatpush1.msra.mxu0 0.0
    %674 = vmatprep.subr.mxu0 0.0
    %675 = vmatpush1.msra.mxu0 0.0
    %676 = vmatprep.subr.mxu0 0.0
    %677 = vmatpush1.msra.mxu0 0.0
    %678 = vmatprep.subr.mxu0 0.0
    %679 = vmatpush1.msra.mxu0 0.0
    %680 = vmatprep.subr.mxu0 0.0
    %681 = vmatpush1.msra.mxu0 0.0
    %682 = vmatprep.subr.mxu0 0.0
    %683 = vmatpush1.msra.mxu0 0.0
    %684 = vmatprep.subr.mxu0 0.0
    %685 = vmatpush1.msra.mxu0 0.0
    %686 = vmatprep.subr.mxu0 0.0
    %687 = vmatpush1.msra.mxu0 0.0
    %688 = vmatprep.subr.mxu0 0.0
    %689 = vmatpush1.msra.mxu0 0.0
    %690 = vmatprep.subr.mxu0 0.0
    %691 = vmatpush1.msra.mxu0 %v655
    %692 = vmatprep.subr.mxu0 0.0
    %693 = vmatpush2.msra.mxu0 0.0
    %694 = vmatprep.subr.mxu0 0.0
    %695 = vmatpush2.msra.mxu0 0.0
    %696 = vmatprep.subr.mxu0 0.0
    %697 = vmatpush2.msra.mxu0 0.0
    %698 = vmatprep.subr.mxu0 0.0
    %699 = vmatpush2.msra.mxu0 0.0
    %700 = vmatprep.subr.mxu0 0.0
    %701 = vmatpush2.msra.mxu0 0.0
    %702 = vmatprep.subr.mxu0 0.0
    %703 = vmatpush2.msra.mxu0 0.0
    %704 = vmatprep.subr.mxu0 0.0
    %705 = vmatpush2.msra.mxu0 0.0
    %706 = vmatprep.subr.mxu0 0.0
    %707 = vmatpush2.msra.mxu0 0.0
    %708 = vmatprep.subr.mxu0 0.0
    %709 = vmatpush2.msra.mxu0 0.0
    %710 = vmatprep.subr.mxu0 0.0
    %711 = vmatpush2.msra.mxu0 0.0
    %712 = vmatprep.subr.mxu0 0.0
    %713 = vmatpush2.msra.mxu0 0.0
    %714 = vmatprep.subr.mxu0 0.0
    %715 = vmatpush2.msra.mxu0 0.0
    %716 = vmatprep.subr.mxu0 0.0
    %717 = vmatpush2.msra.mxu0 0.0
    %718 = vmatprep.subr.mxu0 0.0
    %719 = vmatpush2.msra.mxu0 0.0
    %720 = vmatprep.subr.mxu0 0.0
    %721 = vmatpush2.msra.mxu0 0.0
    %722 = vmatprep.subr.mxu0 0.0
    %723 = vmatpush2.msra.mxu0 0.0
    %724 = vmatprep.mubr.f32.mxu0 0.0
    %725 = vmatmul.mubr.f32.gmra.mxu0 %v658
    %v726 = vpop.f32.mrf.mxu0
    %v727 = vadd.f32 0.0, %v726
    %v728 = vpop.f32.mrf.mxu0
    %729 = vdwg.mxu0
    %v731 = vsel %vm403, %v727, 0
    %733 = vmatprep.subr.mxu0 0.0
    %734 = vmatpush1.msra.mxu0 0.0
    %735 = vmatprep.subr.mxu0 0.0
    %736 = vmatpush1.msra.mxu0 0.0
    %737 = vmatprep.subr.mxu0 0.0
    %738 = vmatpush1.msra.mxu0 0.0
    %739 = vmatprep.subr.mxu0 0.0
    %740 = vmatpush1.msra.mxu0 0.0
    %741 = vmatprep.subr.mxu0 0.0
    %742 = vmatpush1.msra.mxu0 0.0
    %743 = vmatprep.subr.mxu0 0.0
    %744 = vmatpush1.msra.mxu0 0.0
    %745 = vmatprep.subr.mxu0 0.0
    %746 = vmatpush1.msra.mxu0 0.0
    %747 = vmatprep.subr.mxu0 0.0
    %748 = vmatpush1.msra.mxu0 0.0
    %749 = vmatprep.subr.mxu0 0.0
    %750 = vmatpush1.msra.mxu0 0.0
    %751 = vmatprep.subr.mxu0 0.0
    %752 = vmatpush1.msra.mxu0 0.0
    %753 = vmatprep.subr.mxu0 0.0
    %754 = vmatpush1.msra.mxu0 0.0
    %755 = vmatprep.subr.mxu0 0.0
    %756 = vmatpush1.msra.mxu0 0.0
    %757 = vmatprep.subr.mxu0 0.0
    %758 = vmatpush1.msra.mxu0 0.0
    %759 = vmatprep.subr.mxu0 0.0
    %760 = vmatpush1.msra.mxu0 0.0
    %761 = vmatprep.subr.mxu0 0.0
    %762 = vmatpush1.msra.mxu0 0.0
    %763 = vmatprep.subr.mxu0 0.0
    %764 = vmatpush1.msra.mxu0 %v396
    %765 = vmatprep.subr.mxu0 0.0
    %766 = vmatpush2.msra.mxu0 0.0
    %767 = vmatprep.subr.mxu0 0.0
    %768 = vmatpush2.msra.mxu0 0.0
    %769 = vmatprep.subr.mxu0 0.0
    %770 = vmatpush2.msra.mxu0 0.0
    %771 = vmatprep.subr.mxu0 0.0
    %772 = vmatpush2.msra.mxu0 0.0
    %773 = vmatprep.subr.mxu0 0.0
    %774 = vmatpush2.msra.mxu0 0.0
    %775 = vmatprep.subr.mxu0 0.0
    %776 = vmatpush2.msra.mxu0 0.0
    %777 = vmatprep.subr.mxu0 0.0
    %778 = vmatpush2.msra.mxu0 0.0
    %779 = vmatprep.subr.mxu0 0.0
    %780 = vmatpush2.msra.mxu0 0.0
    %781 = vmatprep.subr.mxu0 0.0
    %782 = vmatpush2.msra.mxu0 0.0
    %783 = vmatprep.subr.mxu0 0.0
    %784 = vmatpush2.msra.mxu0 0.0
    %785 = vmatprep.subr.mxu0 0.0
    %786 = vmatpush2.msra.mxu0 0.0
    %787 = vmatprep.subr.mxu0 0.0
    %788 = vmatpush2.msra.mxu0 0.0
    %789 = vmatprep.subr.mxu0 0.0
    %790 = vmatpush2.msra.mxu0 0.0
    %791 = vmatprep.subr.mxu0 0.0
    %792 = vmatpush2.msra.mxu0 0.0
    %793 = vmatprep.subr.mxu0 0.0
    %794 = vmatpush2.msra.mxu0 0.0
    %795 = vmatprep.subr.mxu0 0.0
    %796 = vmatpush2.msra.mxu0 0.0
    %797 = vmatprep.mubr.f32.mxu0 0.0
    %798 = vmatmul.mubr.f32.gmra.mxu0 %v731
    %v799 = vpop.f32.mrf.mxu0
    %v800 = vadd.f32 0.0, %v799
    %v801 = vpop.f32.mrf.mxu0
    %802 = vdwg.mxu0
    %v804 = vsel %vm403, %v562, 0
    %806 = vmatprep.subr.mxu0 0.0
    %807 = vmatpush1.msra.mxu0 0.0
    %808 = vmatprep.subr.mxu0 0.0
    %809 = vmatpush1.msra.mxu0 0.0
    %810 = vmatprep.subr.mxu0 0.0
    %811 = vmatpush1.msra.mxu0 0.0
    %812 = vmatprep.subr.mxu0 0.0
    %813 = vmatpush1.msra.mxu0 0.0
    %814 = vmatprep.subr.mxu0 0.0
    %815 = vmatpush1.msra.mxu0 0.0
    %816 = vmatprep.subr.mxu0 0.0
    %817 = vmatpush1.msra.mxu0 0.0
    %818 = vmatprep.subr.mxu0 0.0
    %819 = vmatpush1.msra.mxu0 0.0
    %820 = vmatprep.subr.mxu0 0.0
    %821 = vmatpush1.msra.mxu0 0.0
    %822 = vmatprep.subr.mxu0 0.0
    %823 = vmatpush1.msra.mxu0 0.0
    %824 = vmatprep.subr.mxu0 0.0
    %825 = vmatpush1.msra.mxu0 0.0
    %826 = vmatprep.subr.mxu0 0.0
    %827 = vmatpush1.msra.mxu0 0.0
    %828 = vmatprep.subr.mxu0 0.0
    %829 = vmatpush1.msra.mxu0 0.0
    %830 = vmatprep.subr.mxu0 0.0
    %831 = vmatpush1.msra.mxu0 0.0
    %832 = vmatprep.subr.mxu0 0.0
    %833 = vmatpush1.msra.mxu0 0.0
    %834 = vmatprep.subr.mxu0 0.0
    %835 = vmatpush1.msra.mxu0 0.0
    %836 = vmatprep.subr.mxu0 0.0
    %837 = vmatpush1.msra.mxu0 %v395
    %838 = vmatprep.subr.mxu0 0.0
    %839 = vmatpush2.msra.mxu0 0.0
    %840 = vmatprep.subr.mxu0 0.0
    %841 = vmatpush2.msra.mxu0 0.0
    %842 = vmatprep.subr.mxu0 0.0
    %843 = vmatpush2.msra.mxu0 0.0
    %844 = vmatprep.subr.mxu0 0.0
    %845 = vmatpush2.msra.mxu0 0.0
    %846 = vmatprep.subr.mxu0 0.0
    %847 = vmatpush2.msra.mxu0 0.0
    %848 = vmatprep.subr.mxu0 0.0
    %849 = vmatpush2.msra.mxu0 0.0
    %850 = vmatprep.subr.mxu0 0.0
    %851 = vmatpush2.msra.mxu0 0.0
    %852 = vmatprep.subr.mxu0 0.0
    %853 = vmatpush2.msra.mxu0 0.0
    %854 = vmatprep.subr.mxu0 0.0
    %855 = vmatpush2.msra.mxu0 0.0
    %856 = vmatprep.subr.mxu0 0.0
    %857 = vmatpush2.msra.mxu0 0.0
    %858 = vmatprep.subr.mxu0 0.0
    %859 = vmatpush2.msra.mxu0 0.0
    %860 = vmatprep.subr.mxu0 0.0
    %861 = vmatpush2.msra.mxu0 0.0
    %862 = vmatprep.subr.mxu0 0.0
    %863 = vmatpush2.msra.mxu0 0.0
    %864 = vmatprep.subr.mxu0 0.0
    %865 = vmatpush2.msra.mxu0 0.0
    %866 = vmatprep.subr.mxu0 0.0
    %867 = vmatpush2.msra.mxu0 0.0
    %868 = vmatprep.subr.mxu0 0.0
    %869 = vmatpush2.msra.mxu0 0.0
    %870 = vmatprep.mubr.f32.mxu0 0.0
    %871 = vmatmul.mubr.f32.gmra.mxu0 %v804
    %v872 = vpop.f32.mrf.mxu0
    %v873 = vadd.f32 %v800, %v872
    %v874 = vpop.f32.mrf.mxu0
    %875 = vdwg.mxu0
    %876 = vrot.lane.b32.xlu0 %v387, 112
    %v877 = vpop.permute.xlu0 %876
    %878 = vrot.lane.b32.xlu0 %v387, 80
    %v879 = vpop.permute.xlu0 %878
    %v880 = vsel %vm403, %v877, 0
    %v882 = vsel %vm403, %v879, 0
    %884 = vmatprep.subr.mxu0 0.0
    %885 = vmatpush1.xpose.msra.mxu0 0.0
    %886 = vmatprep.subr.mxu0 0.0
    %887 = vmatpush1.xpose.msra.mxu0 0.0
    %888 = vmatprep.subr.mxu0 0.0
    %889 = vmatpush1.xpose.msra.mxu0 0.0
    %890 = vmatprep.subr.mxu0 0.0
    %891 = vmatpush1.xpose.msra.mxu0 0.0
    %892 = vmatprep.subr.mxu0 0.0
    %893 = vmatpush1.xpose.msra.mxu0 0.0
    %894 = vmatprep.subr.mxu0 0.0
    %895 = vmatpush1.xpose.msra.mxu0 0.0
    %896 = vmatprep.subr.mxu0 0.0
    %897 = vmatpush1.xpose.msra.mxu0 0.0
    %898 = vmatprep.subr.mxu0 0.0
    %899 = vmatpush1.xpose.msra.mxu0 0.0
    %900 = vmatprep.subr.mxu0 0.0
    %901 = vmatpush1.xpose.msra.mxu0 0.0
    %902 = vmatprep.subr.mxu0 0.0
    %903 = vmatpush1.xpose.msra.mxu0 0.0
    %904 = vmatprep.subr.mxu0 0.0
    %905 = vmatpush1.xpose.msra.mxu0 0.0
    %906 = vmatprep.subr.mxu0 0.0
    %907 = vmatpush1.xpose.msra.mxu0 0.0
    %908 = vmatprep.subr.mxu0 0.0
    %909 = vmatpush1.xpose.msra.mxu0 0.0
    %910 = vmatprep.subr.mxu0 0.0
    %911 = vmatpush1.xpose.msra.mxu0 0.0
    %912 = vmatprep.subr.mxu0 0.0
    %913 = vmatpush1.xpose.msra.mxu0 0.0
    %914 = vmatprep.subr.mxu0 0.0
    %915 = vmatpush1.xpose.msra.mxu0 %v882
    %916 = vmatprep.subr.mxu0 0.0
    %917 = vmatpush2.xpose.msra.mxu0 0.0
    %918 = vmatprep.subr.mxu0 0.0
    %919 = vmatpush2.xpose.msra.mxu0 0.0
    %920 = vmatprep.subr.mxu0 0.0
    %921 = vmatpush2.xpose.msra.mxu0 0.0
    %922 = vmatprep.subr.mxu0 0.0
    %923 = vmatpush2.xpose.msra.mxu0 0.0
    %924 = vmatprep.subr.mxu0 0.0
    %925 = vmatpush2.xpose.msra.mxu0 0.0
    %926 = vmatprep.subr.mxu0 0.0
    %927 = vmatpush2.xpose.msra.mxu0 0.0
    %928 = vmatprep.subr.mxu0 0.0
    %929 = vmatpush2.xpose.msra.mxu0 0.0
    %930 = vmatprep.subr.mxu0 0.0
    %931 = vmatpush2.xpose.msra.mxu0 0.0
    %932 = vmatprep.subr.mxu0 0.0
    %933 = vmatpush2.xpose.msra.mxu0 0.0
    %934 = vmatprep.subr.mxu0 0.0
    %935 = vmatpush2.xpose.msra.mxu0 0.0
    %936 = vmatprep.subr.mxu0 0.0
    %937 = vmatpush2.xpose.msra.mxu0 0.0
    %938 = vmatprep.subr.mxu0 0.0
    %939 = vmatpush2.xpose.msra.mxu0 0.0
    %940 = vmatprep.subr.mxu0 0.0
    %941 = vmatpush2.xpose.msra.mxu0 0.0
    %942 = vmatprep.subr.mxu0 0.0
    %943 = vmatpush2.xpose.msra.mxu0 0.0
    %944 = vmatprep.subr.mxu0 0.0
    %945 = vmatpush2.xpose.msra.mxu0 0.0
    %946 = vmatprep.subr.mxu0 0.0
    %947 = vmatpush2.xpose.msra.mxu0 0.0
    %948 = vmatprep.mubr.f32.mxu0 0.0
    %949 = vmatmul.mubr.f32.gmra.mxu0 %v880
    %v950 = vpop.f32.mrf.mxu0
    %v951 = vadd.f32 %v295, %v950
    %v952 = vpop.f32.mrf.mxu0
    %953 = vdwg.mxu0
    %v954 = vsel %vm403, %v951, -inf
    %955 = vmax.xlane.f32.xlu0 %v954
    %v956 = vpop.xlane.xlu0 %955
    %v957 = vsub.f32 %v951, %v956
    %v958 = vmul.f32 %v957, 1.442695
    %v959 = vpow.pop %v958
    %v960 = vsel %vm403, %v959, 0.0
    %961 = vadd.xlane.f32.xlu0 %v960
    %v962 = vpop.xlane.xlu0 %961
    %v963 = vrcp.pop %v962
    %v964 = vmul.f32 %v959, %v963
    %965 = vrot.lane.b32.xlu0 %v387, 48
    %v966 = vpop.permute.xlu0 %965
    %v969 = vsel %vm403, %v964, 0
    %971 = vmatprep.subr.mxu0 0.0
    %972 = vmatpush1.msra.mxu0 0.0
    %973 = vmatprep.subr.mxu0 0.0
    %974 = vmatpush1.msra.mxu0 0.0
    %975 = vmatprep.subr.mxu0 0.0
    %976 = vmatpush1.msra.mxu0 0.0
    %977 = vmatprep.subr.mxu0 0.0
    %978 = vmatpush1.msra.mxu0 0.0
    %979 = vmatprep.subr.mxu0 0.0
    %980 = vmatpush1.msra.mxu0 0.0
    %981 = vmatprep.subr.mxu0 0.0
    %982 = vmatpush1.msra.mxu0 0.0
    %983 = vmatprep.subr.mxu0 0.0
    %984 = vmatpush1.msra.mxu0 0.0
    %985 = vmatprep.subr.mxu0 0.0
    %986 = vmatpush1.msra.mxu0 0.0
    %987 = vmatprep.subr.mxu0 0.0
    %988 = vmatpush1.msra.mxu0 0.0
    %989 = vmatprep.subr.mxu0 0.0
    %990 = vmatpush1.msra.mxu0 0.0
    %991 = vmatprep.subr.mxu0 0.0
    %992 = vmatpush1.msra.mxu0 0.0
    %993 = vmatprep.subr.mxu0 0.0
    %994 = vmatpush1.msra.mxu0 0.0
    %995 = vmatprep.subr.mxu0 0.0
    %996 = vmatpush1.msra.mxu0 0.0
    %997 = vmatprep.subr.mxu0 0.0
    %998 = vmatpush1.msra.mxu0 0.0
    %999 = vmatprep.subr.mxu0 0.0
    %1000 = vmatpush1.msra.mxu0 0.0
    %1001 = vmatprep.subr.mxu0 0.0
    %1002 = vmatpush1.msra.mxu0 %v966
    %1003 = vmatprep.subr.mxu0 0.0
    %1004 = vmatpush2.msra.mxu0 0.0
    %1005 = vmatprep.subr.mxu0 0.0
    %1006 = vmatpush2.msra.mxu0 0.0
    %1007 = vmatprep.subr.mxu0 0.0
    %1008 = vmatpush2.msra.mxu0 0.0
    %1009 = vmatprep.subr.mxu0 0.0
    %1010 = vmatpush2.msra.mxu0 0.0
    %1011 = vmatprep.subr.mxu0 0.0
    %1012 = vmatpush2.msra.mxu0 0.0
    %1013 = vmatprep.subr.mxu0 0.0
    %1014 = vmatpush2.msra.mxu0 0.0
    %1015 = vmatprep.subr.mxu0 0.0
    %1016 = vmatpush2.msra.mxu0 0.0
    %1017 = vmatprep.subr.mxu0 0.0
    %1018 = vmatpush2.msra.mxu0 0.0
    %1019 = vmatprep.subr.mxu0 0.0
    %1020 = vmatpush2.msra.mxu0 0.0
    %1021 = vmatprep.subr.mxu0 0.0
    %1022 = vmatpush2.msra.mxu0 0.0
    %1023 = vmatprep.subr.mxu0 0.0
    %1024 = vmatpush2.msra.mxu0 0.0
    %1025 = vmatprep.subr.mxu0 0.0
    %1026 = vmatpush2.msra.mxu0 0.0
    %1027 = vmatprep.subr.mxu0 0.0
    %1028 = vmatpush2.msra.mxu0 0.0
    %1029 = vmatprep.subr.mxu0 0.0
    %1030 = vmatpush2.msra.mxu0 0.0
    %1031 = vmatprep.subr.mxu0 0.0
    %1032 = vmatpush2.msra.mxu0 0.0
    %1033 = vmatprep.subr.mxu0 0.0
    %1034 = vmatpush2.msra.mxu0 0.0
    %1035 = vmatprep.mubr.f32.mxu0 0.0
    %1036 = vmatmul.mubr.f32.gmra.mxu0 %v969
    %v1037 = vpop.f32.mrf.mxu0
    %v1038 = vadd.f32 0.0, %v1037
    %v1039 = vpop.f32.mrf.mxu0
    %1040 = vdwg.mxu0
    %v1042 = vsel %vm403, %v1038, 0
    %1044 = vmatprep.subr.mxu0 0.0
    %1045 = vmatpush1.msra.mxu0 0.0
    %1046 = vmatprep.subr.mxu0 0.0
    %1047 = vmatpush1.msra.mxu0 0.0
    %1048 = vmatprep.subr.mxu0 0.0
    %1049 = vmatpush1.msra.mxu0 0.0
    %1050 = vmatprep.subr.mxu0 0.0
    %1051 = vmatpush1.msra.mxu0 0.0
    %1052 = vmatprep.subr.mxu0 0.0
    %1053 = vmatpush1.msra.mxu0 0.0
    %1054 = vmatprep.subr.mxu0 0.0
    %1055 = vmatpush1.msra.mxu0 0.0
    %1056 = vmatprep.subr.mxu0 0.0
    %1057 = vmatpush1.msra.mxu0 0.0
    %1058 = vmatprep.subr.mxu0 0.0
    %1059 = vmatpush1.msra.mxu0 0.0
    %1060 = vmatprep.subr.mxu0 0.0
    %1061 = vmatpush1.msra.mxu0 0.0
    %1062 = vmatprep.subr.mxu0 0.0
    %1063 = vmatpush1.msra.mxu0 0.0
    %1064 = vmatprep.subr.mxu0 0.0
    %1065 = vmatpush1.msra.mxu0 0.0
    %1066 = vmatprep.subr.mxu0 0.0
    %1067 = vmatpush1.msra.mxu0 0.0
    %1068 = vmatprep.subr.mxu0 0.0
    %1069 = vmatpush1.msra.mxu0 0.0
    %1070 = vmatprep.subr.mxu0 0.0
    %1071 = vmatpush1.msra.mxu0 0.0
    %1072 = vmatprep.subr.mxu0 0.0
    %1073 = vmatpush1.msra.mxu0 0.0
    %1074 = vmatprep.subr.mxu0 0.0
    %1075 = vmatpush1.msra.mxu0 %v397
    %1076 = vmatprep.subr.mxu0 0.0
    %1077 = vmatpush2.msra.mxu0 0.0
    %1078 = vmatprep.subr.mxu0 0.0
    %1079 = vmatpush2.msra.mxu0 0.0
    %1080 = vmatprep.subr.mxu0 0.0
    %1081 = vmatpush2.msra.mxu0 0.0
    %1082 = vmatprep.subr.mxu0 0.0
    %1083 = vmatpush2.msra.mxu0 0.0
    %1084 = vmatprep.subr.mxu0 0.0
    %1085 = vmatpush2.msra.mxu0 0.0
    %1086 = vmatprep.subr.mxu0 0.0
    %1087 = vmatpush2.msra.mxu0 0.0
    %1088 = vmatprep.subr.mxu0 0.0
    %1089 = vmatpush2.msra.mxu0 0.0
    %1090 = vmatprep.subr.mxu0 0.0
    %1091 = vmatpush2.msra.mxu0 0.0
    %1092 = vmatprep.subr.mxu0 0.0
    %1093 = vmatpush2.msra.mxu0 0.0
    %1094 = vmatprep.subr.mxu0 0.0
    %1095 = vmatpush2.msra.mxu0 0.0
    %1096 = vmatprep.subr.mxu0 0.0
    %1097 = vmatpush2.msra.mxu0 0.0
    %1098 = vmatprep.subr.mxu0 0.0
    %1099 = vmatpush2.msra.mxu0 0.0
    %1100 = vmatprep.subr.mxu0 0.0
    %1101 = vmatpush2.msra.mxu0 0.0
    %1102 = vmatprep.subr.mxu0 0.0
    %1103 = vmatpush2.msra.mxu0 0.0
    %1104 = vmatprep.subr.mxu0 0.0
    %1105 = vmatpush2.msra.mxu0 0.0
    %1106 = vmatprep.subr.mxu0 0.0
    %1107 = vmatpush2.msra.mxu0 0.0
    %1108 = vmatprep.mubr.f32.mxu0 0.0
    %1109 = vmatmul.mubr.f32.gmra.mxu0 %v1042
    %v1110 = vpop.f32.mrf.mxu0
    %v1111 = vadd.f32 0.0, %v1110
    %v1112 = vpop.f32.mrf.mxu0
    %1113 = vdwg.mxu0
    %v1114 = vadd.f32 %v873, %v1111
    %1115 = vrot.lane.b32.xlu0 %v387, 104
    %v1116 = vpop.permute.xlu0 %1115
    %1117 = vrot.lane.b32.xlu0 %v387, 72
    %v1118 = vpop.permute.xlu0 %1117
    %v1119 = vsel %vm403, %v1116, 0
    %v1121 = vsel %vm403, %v1118, 0
    %1123 = vmatprep.subr.mxu0 0.0
    %1124 = vmatpush1.xpose.msra.mxu0 0.0
    %1125 = vmatprep.subr.mxu0 0.0
    %1126 = vmatpush1.xpose.msra.mxu0 0.0
    %1127 = vmatprep.subr.mxu0 0.0
    %1128 = vmatpush1.xpose.msra.mxu0 0.0
    %1129 = vmatprep.subr.mxu0 0.0
    %1130 = vmatpush1.xpose.msra.mxu0 0.0
    %1131 = vmatprep.subr.mxu0 0.0
    %1132 = vmatpush1.xpose.msra.mxu0 0.0
    %1133 = vmatprep.subr.mxu0 0.0
    %1134 = vmatpush1.xpose.msra.mxu0 0.0
    %1135 = vmatprep.subr.mxu0 0.0
    %1136 = vmatpush1.xpose.msra.mxu0 0.0
    %1137 = vmatprep.subr.mxu0 0.0
    %1138 = vmatpush1.xpose.msra.mxu0 0.0
    %1139 = vmatprep.subr.mxu0 0.0
    %1140 = vmatpush1.xpose.msra.mxu0 0.0
    %1141 = vmatprep.subr.mxu0 0.0
    %1142 = vmatpush1.xpose.msra.mxu0 0.0
    %1143 = vmatprep.subr.mxu0 0.0
    %1144 = vmatpush1.xpose.msra.mxu0 0.0
    %1145 = vmatprep.subr.mxu0 0.0
    %1146 = vmatpush1.xpose.msra.mxu0 0.0
    %1147 = vmatprep.subr.mxu0 0.0
    %1148 = vmatpush1.xpose.msra.mxu0 0.0
    %1149 = vmatprep.subr.mxu0 0.0
    %1150 = vmatpush1.xpose.msra.mxu0 0.0
    %1151 = vmatprep.subr.mxu0 0.0
    %1152 = vmatpush1.xpose.msra.mxu0 0.0
    %1153 = vmatprep.subr.mxu0 0.0
    %1154 = vmatpush1.xpose.msra.mxu0 %v1121
    %1155 = vmatprep.subr.mxu0 0.0
    %1156 = vmatpush2.xpose.msra.mxu0 0.0
    %1157 = vmatprep.subr.mxu0 0.0
    %1158 = vmatpush2.xpose.msra.mxu0 0.0
    %1159 = vmatprep.subr.mxu0 0.0
    %1160 = vmatpush2.xpose.msra.mxu0 0.0
    %1161 = vmatprep.subr.mxu0 0.0
    %1162 = vmatpush2.xpose.msra.mxu0 0.0
    %1163 = vmatprep.subr.mxu0 0.0
    %1164 = vmatpush2.xpose.msra.mxu0 0.0
    %1165 = vmatprep.subr.mxu0 0.0
    %1166 = vmatpush2.xpose.msra.mxu0 0.0
    %1167 = vmatprep.subr.mxu0 0.0
    %1168 = vmatpush2.xpose.msra.mxu0 0.0
    %1169 = vmatprep.subr.mxu0 0.0
    %1170 = vmatpush2.xpose.msra.mxu0 0.0
    %1171 = vmatprep.subr.mxu0 0.0
    %1172 = vmatpush2.xpose.msra.mxu0 0.0
    %1173 = vmatprep.subr.mxu0 0.0
    %1174 = vmatpush2.xpose.msra.mxu0 0.0
    %1175 = vmatprep.subr.mxu0 0.0
    %1176 = vmatpush2.xpose.msra.mxu0 0.0
    %1177 = vmatprep.subr.mxu0 0.0
    %1178 = vmatpush2.xpose.msra.mxu0 0.0
    %1179 = vmatprep.subr.mxu0 0.0
    %1180 = vmatpush2.xpose.msra.mxu0 0.0
    %1181 = vmatprep.subr.mxu0 0.0
    %1182 = vmatpush2.xpose.msra.mxu0 0.0
    %1183 = vmatprep.subr.mxu0 0.0
    %1184 = vmatpush2.xpose.msra.mxu0 0.0
    %1185 = vmatprep.subr.mxu0 0.0
    %1186 = vmatpush2.xpose.msra.mxu0 0.0
    %1187 = vmatprep.mubr.f32.mxu0 0.0
    %1188 = vmatmul.mubr.f32.gmra.mxu0 %v1119
    %v1189 = vpop.f32.mrf.mxu0
    %v1190 = vadd.f32 %v295, %v1189
    %v1191 = vpop.f32.mrf.mxu0
    %1192 = vdwg.mxu0
    %v1193 = vsel %vm403, %v1190, -inf
    %1194 = vmax.xlane.f32.xlu0 %v1193
    %v1195 = vpop.xlane.xlu0 %1194
    %v1196 = vsub.f32 %v1190, %v1195
    %v1197 = vmul.f32 %v1196, 1.442695
    %v1198 = vpow.pop %v1197
    %v1199 = vsel %vm403, %v1198, 0.0
    %1200 = vadd.xlane.f32.xlu0 %v1199
    %v1201 = vpop.xlane.xlu0 %1200
    %v1202 = vrcp.pop %v1201
    %v1203 = vmul.f32 %v1198, %v1202
    %1204 = vrot.lane.b32.xlu0 %v387, 40
    %v1205 = vpop.permute.xlu0 %1204
    %v1208 = vsel %vm403, %v1203, 0
    %1210 = vmatprep.subr.mxu0 0.0
    %1211 = vmatpush1.msra.mxu0 0.0
    %1212 = vmatprep.subr.mxu0 0.0
    %1213 = vmatpush1.msra.mxu0 0.0
    %1214 = vmatprep.subr.mxu0 0.0
    %1215 = vmatpush1.msra.mxu0 0.0
    %1216 = vmatprep.subr.mxu0 0.0
    %1217 = vmatpush1.msra.mxu0 0.0
    %1218 = vmatprep.subr.mxu0 0.0
    %1219 = vmatpush1.msra.mxu0 0.0
    %1220 = vmatprep.subr.mxu0 0.0
    %1221 = vmatpush1.msra.mxu0 0.0
    %1222 = vmatprep.subr.mxu0 0.0
    %1223 = vmatpush1.msra.mxu0 0.0
    %1224 = vmatprep.subr.mxu0 0.0
    %1225 = vmatpush1.msra.mxu0 0.0
    %1226 = vmatprep.subr.mxu0 0.0
    %1227 = vmatpush1.msra.mxu0 0.0
    %1228 = vmatprep.subr.mxu0 0.0
    %1229 = vmatpush1.msra.mxu0 0.0
    %1230 = vmatprep.subr.mxu0 0.0
    %1231 = vmatpush1.msra.mxu0 0.0
    %1232 = vmatprep.subr.mxu0 0.0
    %1233 = vmatpush1.msra.mxu0 0.0
    %1234 = vmatprep.subr.mxu0 0.0
    %1235 = vmatpush1.msra.mxu0 0.0
    %1236 = vmatprep.subr.mxu0 0.0
    %1237 = vmatpush1.msra.mxu0 0.0
    %1238 = vmatprep.subr.mxu0 0.0
    %1239 = vmatpush1.msra.mxu0 0.0
    %1240 = vmatprep.subr.mxu0 0.0
    %1241 = vmatpush1.msra.mxu0 %v1205
    %1242 = vmatprep.subr.mxu0 0.0
    %1243 = vmatpush2.msra.mxu0 0.0
    %1244 = vmatprep.subr.mxu0 0.0
    %1245 = vmatpush2.msra.mxu0 0.0
    %1246 = vmatprep.subr.mxu0 0.0
    %1247 = vmatpush2.msra.mxu0 0.0
    %1248 = vmatprep.subr.mxu0 0.0
    %1249 = vmatpush2.msra.mxu0 0.0
    %1250 = vmatprep.subr.mxu0 0.0
    %1251 = vmatpush2.msra.mxu0 0.0
    %1252 = vmatprep.subr.mxu0 0.0
    %1253 = vmatpush2.msra.mxu0 0.0
    %1254 = vmatprep.subr.mxu0 0.0
    %1255 = vmatpush2.msra.mxu0 0.0
    %1256 = vmatprep.subr.mxu0 0.0
    %1257 = vmatpush2.msra.mxu0 0.0
    %1258 = vmatprep.subr.mxu0 0.0
    %1259 = vmatpush2.msra.mxu0 0.0
    %1260 = vmatprep.subr.mxu0 0.0
    %1261 = vmatpush2.msra.mxu0 0.0
    %1262 = vmatprep.subr.mxu0 0.0
    %1263 = vmatpush2.msra.mxu0 0.0
    %1264 = vmatprep.subr.mxu0 0.0
    %1265 = vmatpush2.msra.mxu0 0.0
    %1266 = vmatprep.subr.mxu0 0.0
    %1267 = vmatpush2.msra.mxu0 0.0
    %1268 = vmatprep.subr.mxu0 0.0
    %1269 = vmatpush2.msra.mxu0 0.0
    %1270 = vmatprep.subr.mxu0 0.0
    %1271 = vmatpush2.msra.mxu0 0.0
    %1272 = vmatprep.subr.mxu0 0.0
    %1273 = vmatpush2.msra.mxu0 0.0
    %1274 = vmatprep.mubr.f32.mxu0 0.0
    %1275 = vmatmul.mubr.f32.gmra.mxu0 %v1208
    %v1276 = vpop.f32.mrf.mxu0
    %v1277 = vadd.f32 0.0, %v1276
    %v1278 = vpop.f32.mrf.mxu0
    %1279 = vdwg.mxu0
    %v1281 = vsel %vm403, %v1277, 0
    %1283 = vmatprep.subr.mxu0 0.0
    %1284 = vmatpush1.msra.mxu0 0.0
    %1285 = vmatprep.subr.mxu0 0.0
    %1286 = vmatpush1.msra.mxu0 0.0
    %1287 = vmatprep.subr.mxu0 0.0
    %1288 = vmatpush1.msra.mxu0 0.0
    %1289 = vmatprep.subr.mxu0 0.0
    %1290 = vmatpush1.msra.mxu0 0.0
    %1291 = vmatprep.subr.mxu0 0.0
    %1292 = vmatpush1.msra.mxu0 0.0
    %1293 = vmatprep.subr.mxu0 0.0
    %1294 = vmatpush1.msra.mxu0 0.0
    %1295 = vmatprep.subr.mxu0 0.0
    %1296 = vmatpush1.msra.mxu0 0.0
    %1297 = vmatprep.subr.mxu0 0.0
    %1298 = vmatpush1.msra.mxu0 0.0
    %1299 = vmatprep.subr.mxu0 0.0
    %1300 = vmatpush1.msra.mxu0 0.0
    %1301 = vmatprep.subr.mxu0 0.0
    %1302 = vmatpush1.msra.mxu0 0.0
    %1303 = vmatprep.subr.mxu0 0.0
    %1304 = vmatpush1.msra.mxu0 0.0
    %1305 = vmatprep.subr.mxu0 0.0
    %1306 = vmatpush1.msra.mxu0 0.0
    %1307 = vmatprep.subr.mxu0 0.0
    %1308 = vmatpush1.msra.mxu0 0.0
    %1309 = vmatprep.subr.mxu0 0.0
    %1310 = vmatpush1.msra.mxu0 0.0
    %1311 = vmatprep.subr.mxu0 0.0
    %1312 = vmatpush1.msra.mxu0 0.0
    %1313 = vmatprep.subr.mxu0 0.0
    %1314 = vmatpush1.msra.mxu0 %v398
    %1315 = vmatprep.subr.mxu0 0.0
    %1316 = vmatpush2.msra.mxu0 0.0
    %1317 = vmatprep.subr.mxu0 0.0
    %1318 = vmatpush2.msra.mxu0 0.0
    %1319 = vmatprep.subr.mxu0 0.0
    %1320 = vmatpush2.msra.mxu0 0.0
    %1321 = vmatprep.subr.mxu0 0.0
    %1322 = vmatpush2.msra.mxu0 0.0
    %1323 = vmatprep.subr.mxu0 0.0
    %1324 = vmatpush2.msra.mxu0 0.0
    %1325 = vmatprep.subr.mxu0 0.0
    %1326 = vmatpush2.msra.mxu0 0.0
    %1327 = vmatprep.subr.mxu0 0.0
    %1328 = vmatpush2.msra.mxu0 0.0
    %1329 = vmatprep.subr.mxu0 0.0
    %1330 = vmatpush2.msra.mxu0 0.0
    %1331 = vmatprep.subr.mxu0 0.0
    %1332 = vmatpush2.msra.mxu0 0.0
    %1333 = vmatprep.subr.mxu0 0.0
    %1334 = vmatpush2.msra.mxu0 0.0
    %1335 = vmatprep.subr.mxu0 0.0
    %1336 = vmatpush2.msra.mxu0 0.0
    %1337 = vmatprep.subr.mxu0 0.0
    %1338 = vmatpush2.msra.mxu0 0.0
    %1339 = vmatprep.subr.mxu0 0.0
    %1340 = vmatpush2.msra.mxu0 0.0
    %1341 = vmatprep.subr.mxu0 0.0
    %1342 = vmatpush2.msra.mxu0 0.0
    %1343 = vmatprep.subr.mxu0 0.0
    %1344 = vmatpush2.msra.mxu0 0.0
    %1345 = vmatprep.subr.mxu0 0.0
    %1346 = vmatpush2.msra.mxu0 0.0
    %1347 = vmatprep.mubr.f32.mxu0 0.0
    %1348 = vmatmul.mubr.f32.gmra.mxu0 %v1281
    %v1349 = vpop.f32.mrf.mxu0
    %v1350 = vadd.f32 0.0, %v1349
    %v1351 = vpop.f32.mrf.mxu0
    %1352 = vdwg.mxu0
    %v1353 = vadd.f32 %v1114, %v1350
    %1355 = vrot.lane.b32.xlu0 %v392, 96
    %v1356 = vpop.permute.xlu0 %1355
    %v1357 = vsel %vm403, %v392, 0
    %v1359 = vsel %vm403, %v1356, 0
    %1361 = vmatprep.subr.mxu0 0.0
    %1362 = vmatpush1.xpose.msra.mxu0 0.0
    %1363 = vmatprep.subr.mxu0 0.0
    %1364 = vmatpush1.xpose.msra.mxu0 0.0
    %1365 = vmatprep.subr.mxu0 0.0
    %1366 = vmatpush1.xpose.msra.mxu0 0.0
    %1367 = vmatprep.subr.mxu0 0.0
    %1368 = vmatpush1.xpose.msra.mxu0 0.0
    %1369 = vmatprep.subr.mxu0 0.0
    %1370 = vmatpush1.xpose.msra.mxu0 0.0
    %1371 = vmatprep.subr.mxu0 0.0
    %1372 = vmatpush1.xpose.msra.mxu0 0.0
    %1373 = vmatprep.subr.mxu0 0.0
    %1374 = vmatpush1.xpose.msra.mxu0 0.0
    %1375 = vmatprep.subr.mxu0 0.0
    %1376 = vmatpush1.xpose.msra.mxu0 0.0
    %1377 = vmatprep.subr.mxu0 0.0
    %1378 = vmatpush1.xpose.msra.mxu0 0.0
    %1379 = vmatprep.subr.mxu0 0.0
    %1380 = vmatpush1.xpose.msra.mxu0 0.0
    %1381 = vmatprep.subr.mxu0 0.0
    %1382 = vmatpush1.xpose.msra.mxu0 0.0
    %1383 = vmatprep.subr.mxu0 0.0
    %1384 = vmatpush1.xpose.msra.mxu0 0.0
    %1385 = vmatprep.subr.mxu0 0.0
    %1386 = vmatpush1.xpose.msra.mxu0 0.0
    %1387 = vmatprep.subr.mxu0 0.0
    %1388 = vmatpush1.xpose.msra.mxu0 0.0
    %1389 = vmatprep.subr.mxu0 0.0
    %1390 = vmatpush1.xpose.msra.mxu0 0.0
    %1391 = vmatprep.subr.mxu0 0.0
    %1392 = vmatpush1.xpose.msra.mxu0 %v1359
    %1393 = vmatprep.subr.mxu0 0.0
    %1394 = vmatpush2.xpose.msra.mxu0 0.0
    %1395 = vmatprep.subr.mxu0 0.0
    %1396 = vmatpush2.xpose.msra.mxu0 0.0
    %1397 = vmatprep.subr.mxu0 0.0
    %1398 = vmatpush2.xpose.msra.mxu0 0.0
    %1399 = vmatprep.subr.mxu0 0.0
    %1400 = vmatpush2.xpose.msra.mxu0 0.0
    %1401 = vmatprep.subr.mxu0 0.0
    %1402 = vmatpush2.xpose.msra.mxu0 0.0
    %1403 = vmatprep.subr.mxu0 0.0
    %1404 = vmatpush2.xpose.msra.mxu0 0.0
    %1405 = vmatprep.subr.mxu0 0.0
    %1406 = vmatpush2.xpose.msra.mxu0 0.0
    %1407 = vmatprep.subr.mxu0 0.0
    %1408 = vmatpush2.xpose.msra.mxu0 0.0
    %1409 = vmatprep.subr.mxu0 0.0
    %1410 = vmatpush2.xpose.msra.mxu0 0.0
    %1411 = vmatprep.subr.mxu0 0.0
    %1412 = vmatpush2.xpose.msra.mxu0 0.0
    %1413 = vmatprep.subr.mxu0 0.0
    %1414 = vmatpush2.xpose.msra.mxu0 0.0
    %1415 = vmatprep.subr.mxu0 0.0
    %1416 = vmatpush2.xpose.msra.mxu0 0.0
    %1417 = vmatprep.subr.mxu0 0.0
    %1418 = vmatpush2.xpose.msra.mxu0 0.0
    %1419 = vmatprep.subr.mxu0 0.0
    %1420 = vmatpush2.xpose.msra.mxu0 0.0
    %1421 = vmatprep.subr.mxu0 0.0
    %1422 = vmatpush2.xpose.msra.mxu0 0.0
    %1423 = vmatprep.subr.mxu0 0.0
    %1424 = vmatpush2.xpose.msra.mxu0 0.0
    %1425 = vmatprep.mubr.f32.mxu0 0.0
    %1426 = vmatmul.mubr.f32.gmra.mxu0 %v1357
    %v1427 = vpop.f32.mrf.mxu0
    %v1428 = vadd.f32 %v300, %v1427
    %v1429 = vpop.f32.mrf.mxu0
    %1430 = vdwg.mxu0
    %v1431 = vsel %vm403, %v1428, -inf
    %1432 = vmax.xlane.f32.xlu0 %v1431
    %v1433 = vpop.xlane.xlu0 %1432
    %v1434 = vsub.f32 %v1428, %v1433
    %v1435 = vmul.f32 %v1434, 1.442695
    %v1436 = vpow.pop %v1435
    %v1437 = vsel %vm403, %v1436, 0.0
    %1438 = vadd.xlane.f32.xlu0 %v1437
    %v1439 = vpop.xlane.xlu0 %1438
    %v1440 = vrcp.pop %v1439
    %v1441 = vmul.f32 %v1436, %v1440
    %1442 = vrot.lane.b32.xlu0 %v392, 64
    %v1443 = vpop.permute.xlu0 %1442
    %v1446 = vsel %vm403, %v1441, 0
    %1448 = vmatprep.subr.mxu0 0.0
    %1449 = vmatpush1.msra.mxu0 0.0
    %1450 = vmatprep.subr.mxu0 0.0
    %1451 = vmatpush1.msra.mxu0 0.0
    %1452 = vmatprep.subr.mxu0 0.0
    %1453 = vmatpush1.msra.mxu0 0.0
    %1454 = vmatprep.subr.mxu0 0.0
    %1455 = vmatpush1.msra.mxu0 0.0
    %1456 = vmatprep.subr.mxu0 0.0
    %1457 = vmatpush1.msra.mxu0 0.0
    %1458 = vmatprep.subr.mxu0 0.0
    %1459 = vmatpush1.msra.mxu0 0.0
    %1460 = vmatprep.subr.mxu0 0.0
    %1461 = vmatpush1.msra.mxu0 0.0
    %1462 = vmatprep.subr.mxu0 0.0
    %1463 = vmatpush1.msra.mxu0 0.0
    %1464 = vmatprep.subr.mxu0 0.0
    %1465 = vmatpush1.msra.mxu0 0.0
    %1466 = vmatprep.subr.mxu0 0.0
    %1467 = vmatpush1.msra.mxu0 0.0
    %1468 = vmatprep.subr.mxu0 0.0
    %1469 = vmatpush1.msra.mxu0 0.0
    %1470 = vmatprep.subr.mxu0 0.0
    %1471 = vmatpush1.msra.mxu0 0.0
    %1472 = vmatprep.subr.mxu0 0.0
    %1473 = vmatpush1.msra.mxu0 0.0
    %1474 = vmatprep.subr.mxu0 0.0
    %1475 = vmatpush1.msra.mxu0 0.0
    %1476 = vmatprep.subr.mxu0 0.0
    %1477 = vmatpush1.msra.mxu0 0.0
    %1478 = vmatprep.subr.mxu0 0.0
    %1479 = vmatpush1.msra.mxu0 %v1443
    %1480 = vmatprep.subr.mxu0 0.0
    %1481 = vmatpush2.msra.mxu0 0.0
    %1482 = vmatprep.subr.mxu0 0.0
    %1483 = vmatpush2.msra.mxu0 0.0
    %1484 = vmatprep.subr.mxu0 0.0
    %1485 = vmatpush2.msra.mxu0 0.0
    %1486 = vmatprep.subr.mxu0 0.0
    %1487 = vmatpush2.msra.mxu0 0.0
    %1488 = vmatprep.subr.mxu0 0.0
    %1489 = vmatpush2.msra.mxu0 0.0
    %1490 = vmatprep.subr.mxu0 0.0
    %1491 = vmatpush2.msra.mxu0 0.0
    %1492 = vmatprep.subr.mxu0 0.0
    %1493 = vmatpush2.msra.mxu0 0.0
    %1494 = vmatprep.subr.mxu0 0.0
    %1495 = vmatpush2.msra.mxu0 0.0
    %1496 = vmatprep.subr.mxu0 0.0
    %1497 = vmatpush2.msra.mxu0 0.0
    %1498 = vmatprep.subr.mxu0 0.0
    %1499 = vmatpush2.msra.mxu0 0.0
    %1500 = vmatprep.subr.mxu0 0.0
    %1501 = vmatpush2.msra.mxu0 0.0
    %1502 = vmatprep.subr.mxu0 0.0
    %1503 = vmatpush2.msra.mxu0 0.0
    %1504 = vmatprep.subr.mxu0 0.0
    %1505 = vmatpush2.msra.mxu0 0.0
    %1506 = vmatprep.subr.mxu0 0.0
    %1507 = vmatpush2.msra.mxu0 0.0
    %1508 = vmatprep.subr.mxu0 0.0
    %1509 = vmatpush2.msra.mxu0 0.0
    %1510 = vmatprep.subr.mxu0 0.0
    %1511 = vmatpush2.msra.mxu0 0.0
    %1512 = vmatprep.mubr.f32.mxu0 0.0
    %1513 = vmatmul.mubr.f32.gmra.mxu0 %v1446
    %v1514 = vpop.f32.mrf.mxu0
    %v1515 = vadd.f32 0.0, %v1514
    %v1516 = vpop.f32.mrf.mxu0
    %1517 = vdwg.mxu0
    %1518 = vrot.lane.b32.xlu0 %v392, 120
    %v1519 = vpop.permute.xlu0 %1518
    %1520 = vrot.lane.b32.xlu0 %v392, 88
    %v1521 = vpop.permute.xlu0 %1520
    %v1522 = vsel %vm403, %v1519, 0
    %v1524 = vsel %vm403, %v1521, 0
    %1526 = vmatprep.subr.mxu0 0.0
    %1527 = vmatpush1.xpose.msra.mxu0 0.0
    %1528 = vmatprep.subr.mxu0 0.0
    %1529 = vmatpush1.xpose.msra.mxu0 0.0
    %1530 = vmatprep.subr.mxu0 0.0
    %1531 = vmatpush1.xpose.msra.mxu0 0.0
    %1532 = vmatprep.subr.mxu0 0.0
    %1533 = vmatpush1.xpose.msra.mxu0 0.0
    %1534 = vmatprep.subr.mxu0 0.0
    %1535 = vmatpush1.xpose.msra.mxu0 0.0
    %1536 = vmatprep.subr.mxu0 0.0
    %1537 = vmatpush1.xpose.msra.mxu0 0.0
    %1538 = vmatprep.subr.mxu0 0.0
    %1539 = vmatpush1.xpose.msra.mxu0 0.0
    %1540 = vmatprep.subr.mxu0 0.0
    %1541 = vmatpush1.xpose.msra.mxu0 0.0
    %1542 = vmatprep.subr.mxu0 0.0
    %1543 = vmatpush1.xpose.msra.mxu0 0.0
    %1544 = vmatprep.subr.mxu0 0.0
    %1545 = vmatpush1.xpose.msra.mxu0 0.0
    %1546 = vmatprep.subr.mxu0 0.0
    %1547 = vmatpush1.xpose.msra.mxu0 0.0
    %1548 = vmatprep.subr.mxu0 0.0
    %1549 = vmatpush1.xpose.msra.mxu0 0.0
    %1550 = vmatprep.subr.mxu0 0.0
    %1551 = vmatpush1.xpose.msra.mxu0 0.0
    %1552 = vmatprep.subr.mxu0 0.0
    %1553 = vmatpush1.xpose.msra.mxu0 0.0
    %1554 = vmatprep.subr.mxu0 0.0
    %1555 = vmatpush1.xpose.msra.mxu0 0.0
    %1556 = vmatprep.subr.mxu0 0.0
    %1557 = vmatpush1.xpose.msra.mxu0 %v1524
    %1558 = vmatprep.subr.mxu0 0.0
    %1559 = vmatpush2.xpose.msra.mxu0 0.0
    %1560 = vmatprep.subr.mxu0 0.0
    %1561 = vmatpush2.xpose.msra.mxu0 0.0
    %1562 = vmatprep.subr.mxu0 0.0
    %1563 = vmatpush2.xpose.msra.mxu0 0.0
    %1564 = vmatprep.subr.mxu0 0.0
    %1565 = vmatpush2.xpose.msra.mxu0 0.0
    %1566 = vmatprep.subr.mxu0 0.0
    %1567 = vmatpush2.xpose.msra.mxu0 0.0
    %1568 = vmatprep.subr.mxu0 0.0
    %1569 = vmatpush2.xpose.msra.mxu0 0.0
    %1570 = vmatprep.subr.mxu0 0.0
    %1571 = vmatpush2.xpose.msra.mxu0 0.0
    %1572 = vmatprep.subr.mxu0 0.0
    %1573 = vmatpush2.xpose.msra.mxu0 0.0
    %1574 = vmatprep.subr.mxu0 0.0
    %1575 = vmatpush2.xpose.msra.mxu0 0.0
    %1576 = vmatprep.subr.mxu0 0.0
    %1577 = vmatpush2.xpose.msra.mxu0 0.0
    %1578 = vmatprep.subr.mxu0 0.0
    %1579 = vmatpush2.xpose.msra.mxu0 0.0
    %1580 = vmatprep.subr.mxu0 0.0
    %1581 = vmatpush2.xpose.msra.mxu0 0.0
    %1582 = vmatprep.subr.mxu0 0.0
    %1583 = vmatpush2.xpose.msra.mxu0 0.0
    %1584 = vmatprep.subr.mxu0 0.0
    %1585 = vmatpush2.xpose.msra.mxu0 0.0
    %1586 = vmatprep.subr.mxu0 0.0
    %1587 = vmatpush2.xpose.msra.mxu0 0.0
    %1588 = vmatprep.subr.mxu0 0.0
    %1589 = vmatpush2.xpose.msra.mxu0 0.0
    %1590 = vmatprep.mubr.f32.mxu0 0.0
    %1591 = vmatmul.mubr.f32.gmra.mxu0 %v1522
    %v1592 = vpop.f32.mrf.mxu0
    %v1593 = vadd.f32 %v300, %v1592
    %v1594 = vpop.f32.mrf.mxu0
    %1595 = vdwg.mxu0
    %v1596 = vsel %vm403, %v1593, -inf
    %1597 = vmax.xlane.f32.xlu0 %v1596
    %v1598 = vpop.xlane.xlu0 %1597
    %v1599 = vsub.f32 %v1593, %v1598
    %v1600 = vmul.f32 %v1599, 1.442695
    %v1601 = vpow.pop %v1600
    %v1602 = vsel %vm403, %v1601, 0.0
    %1603 = vadd.xlane.f32.xlu0 %v1602
    %v1604 = vpop.xlane.xlu0 %1603
    %v1605 = vrcp.pop %v1604
    %v1606 = vmul.f32 %v1601, %v1605
    %1607 = vrot.lane.b32.xlu0 %v392, 56
    %v1608 = vpop.permute.xlu0 %1607
    %v1611 = vsel %vm403, %v1606, 0
    %1613 = vmatprep.subr.mxu0 0.0
    %1614 = vmatpush1.msra.mxu0 0.0
    %1615 = vmatprep.subr.mxu0 0.0
    %1616 = vmatpush1.msra.mxu0 0.0
    %1617 = vmatprep.subr.mxu0 0.0
    %1618 = vmatpush1.msra.mxu0 0.0
    %1619 = vmatprep.subr.mxu0 0.0
    %1620 = vmatpush1.msra.mxu0 0.0
    %1621 = vmatprep.subr.mxu0 0.0
    %1622 = vmatpush1.msra.mxu0 0.0
    %1623 = vmatprep.subr.mxu0 0.0
    %1624 = vmatpush1.msra.mxu0 0.0
    %1625 = vmatprep.subr.mxu0 0.0
    %1626 = vmatpush1.msra.mxu0 0.0
    %1627 = vmatprep.subr.mxu0 0.0
    %1628 = vmatpush1.msra.mxu0 0.0
    %1629 = vmatprep.subr.mxu0 0.0
    %1630 = vmatpush1.msra.mxu0 0.0
    %1631 = vmatprep.subr.mxu0 0.0
    %1632 = vmatpush1.msra.mxu0 0.0
    %1633 = vmatprep.subr.mxu0 0.0
    %1634 = vmatpush1.msra.mxu0 0.0
    %1635 = vmatprep.subr.mxu0 0.0
    %1636 = vmatpush1.msra.mxu0 0.0
    %1637 = vmatprep.subr.mxu0 0.0
    %1638 = vmatpush1.msra.mxu0 0.0
    %1639 = vmatprep.subr.mxu0 0.0
    %1640 = vmatpush1.msra.mxu0 0.0
    %1641 = vmatprep.subr.mxu0 0.0
    %1642 = vmatpush1.msra.mxu0 0.0
    %1643 = vmatprep.subr.mxu0 0.0
    %1644 = vmatpush1.msra.mxu0 %v1608
    %1645 = vmatprep.subr.mxu0 0.0
    %1646 = vmatpush2.msra.mxu0 0.0
    %1647 = vmatprep.subr.mxu0 0.0
    %1648 = vmatpush2.msra.mxu0 0.0
    %1649 = vmatprep.subr.mxu0 0.0
    %1650 = vmatpush2.msra.mxu0 0.0
    %1651 = vmatprep.subr.mxu0 0.0
    %1652 = vmatpush2.msra.mxu0 0.0
    %1653 = vmatprep.subr.mxu0 0.0
    %1654 = vmatpush2.msra.mxu0 0.0
    %1655 = vmatprep.subr.mxu0 0.0
    %1656 = vmatpush2.msra.mxu0 0.0
    %1657 = vmatprep.subr.mxu0 0.0
    %1658 = vmatpush2.msra.mxu0 0.0
    %1659 = vmatprep.subr.mxu0 0.0
    %1660 = vmatpush2.msra.mxu0 0.0
    %1661 = vmatprep.subr.mxu0 0.0
    %1662 = vmatpush2.msra.mxu0 0.0
    %1663 = vmatprep.subr.mxu0 0.0
    %1664 = vmatpush2.msra.mxu0 0.0
    %1665 = vmatprep.subr.mxu0 0.0
    %1666 = vmatpush2.msra.mxu0 0.0
    %1667 = vmatprep.subr.mxu0 0.0
    %1668 = vmatpush2.msra.mxu0 0.0
    %1669 = vmatprep.subr.mxu0 0.0
    %1670 = vmatpush2.msra.mxu0 0.0
    %1671 = vmatprep.subr.mxu0 0.0
    %1672 = vmatpush2.msra.mxu0 0.0
    %1673 = vmatprep.subr.mxu0 0.0
    %1674 = vmatpush2.msra.mxu0 0.0
    %1675 = vmatprep.subr.mxu0 0.0
    %1676 = vmatpush2.msra.mxu0 0.0
    %1677 = vmatprep.mubr.f32.mxu0 0.0
    %1678 = vmatmul.mubr.f32.gmra.mxu0 %v1611
    %v1679 = vpop.f32.mrf.mxu0
    %v1680 = vadd.f32 0.0, %v1679
    %v1681 = vpop.f32.mrf.mxu0
    %1682 = vdwg.mxu0
    %v1684 = vsel %vm403, %v1680, 0
    %1686 = vmatprep.subr.mxu0 0.0
    %1687 = vmatpush1.msra.mxu0 0.0
    %1688 = vmatprep.subr.mxu0 0.0
    %1689 = vmatpush1.msra.mxu0 0.0
    %1690 = vmatprep.subr.mxu0 0.0
    %1691 = vmatpush1.msra.mxu0 0.0
    %1692 = vmatprep.subr.mxu0 0.0
    %1693 = vmatpush1.msra.mxu0 0.0
    %1694 = vmatprep.subr.mxu0 0.0
    %1695 = vmatpush1.msra.mxu0 0.0
    %1696 = vmatprep.subr.mxu0 0.0
    %1697 = vmatpush1.msra.mxu0 0.0
    %1698 = vmatprep.subr.mxu0 0.0
    %1699 = vmatpush1.msra.mxu0 0.0
    %1700 = vmatprep.subr.mxu0 0.0
    %1701 = vmatpush1.msra.mxu0 0.0
    %1702 = vmatprep.subr.mxu0 0.0
    %1703 = vmatpush1.msra.mxu0 0.0
    %1704 = vmatprep.subr.mxu0 0.0
    %1705 = vmatpush1.msra.mxu0 0.0
    %1706 = vmatprep.subr.mxu0 0.0
    %1707 = vmatpush1.msra.mxu0 0.0
    %1708 = vmatprep.subr.mxu0 0.0
    %1709 = vmatpush1.msra.mxu0 0.0
    %1710 = vmatprep.subr.mxu0 0.0
    %1711 = vmatpush1.msra.mxu0 0.0
    %1712 = vmatprep.subr.mxu0 0.0
    %1713 = vmatpush1.msra.mxu0 0.0
    %1714 = vmatprep.subr.mxu0 0.0
    %1715 = vmatpush1.msra.mxu0 0.0
    %1716 = vmatprep.subr.mxu0 0.0
    %1717 = vmatpush1.msra.mxu0 %v396
    %1718 = vmatprep.subr.mxu0 0.0
    %1719 = vmatpush2.msra.mxu0 0.0
    %1720 = vmatprep.subr.mxu0 0.0
    %1721 = vmatpush2.msra.mxu0 0.0
    %1722 = vmatprep.subr.mxu0 0.0
    %1723 = vmatpush2.msra.mxu0 0.0
    %1724 = vmatprep.subr.mxu0 0.0
    %1725 = vmatpush2.msra.mxu0 0.0
    %1726 = vmatprep.subr.mxu0 0.0
    %1727 = vmatpush2.msra.mxu0 0.0
    %1728 = vmatprep.subr.mxu0 0.0
    %1729 = vmatpush2.msra.mxu0 0.0
    %1730 = vmatprep.subr.mxu0 0.0
    %1731 = vmatpush2.msra.mxu0 0.0
    %1732 = vmatprep.subr.mxu0 0.0
    %1733 = vmatpush2.msra.mxu0 0.0
    %1734 = vmatprep.subr.mxu0 0.0
    %1735 = vmatpush2.msra.mxu0 0.0
    %1736 = vmatprep.subr.mxu0 0.0
    %1737 = vmatpush2.msra.mxu0 0.0
    %1738 = vmatprep.subr.mxu0 0.0
    %1739 = vmatpush2.msra.mxu0 0.0
    %1740 = vmatprep.subr.mxu0 0.0
    %1741 = vmatpush2.msra.mxu0 0.0
    %1742 = vmatprep.subr.mxu0 0.0
    %1743 = vmatpush2.msra.mxu0 0.0
    %1744 = vmatprep.subr.mxu0 0.0
    %1745 = vmatpush2.msra.mxu0 0.0
    %1746 = vmatprep.subr.mxu0 0.0
    %1747 = vmatpush2.msra.mxu0 0.0
    %1748 = vmatprep.subr.mxu0 0.0
    %1749 = vmatpush2.msra.mxu0 0.0
    %1750 = vmatprep.mubr.f32.mxu0 0.0
    %1751 = vmatmul.mubr.f32.gmra.mxu0 %v1684
    %v1752 = vpop.f32.mrf.mxu0
    %v1753 = vadd.f32 0.0, %v1752
    %v1754 = vpop.f32.mrf.mxu0
    %1755 = vdwg.mxu0
    %v1757 = vsel %vm403, %v1515, 0
    %1759 = vmatprep.subr.mxu0 0.0
    %1760 = vmatpush1.msra.mxu0 0.0
    %1761 = vmatprep.subr.mxu0 0.0
    %1762 = vmatpush1.msra.mxu0 0.0
    %1763 = vmatprep.subr.mxu0 0.0
    %1764 = vmatpush1.msra.mxu0 0.0
    %1765 = vmatprep.subr.mxu0 0.0
    %1766 = vmatpush1.msra.mxu0 0.0
    %1767 = vmatprep.subr.mxu0 0.0
    %1768 = vmatpush1.msra.mxu0 0.0
    %1769 = vmatprep.subr.mxu0 0.0
    %1770 = vmatpush1.msra.mxu0 0.0
    %1771 = vmatprep.subr.mxu0 0.0
    %1772 = vmatpush1.msra.mxu0 0.0
    %1773 = vmatprep.subr.mxu0 0.0
    %1774 = vmatpush1.msra.mxu0 0.0
    %1775 = vmatprep.subr.mxu0 0.0
    %1776 = vmatpush1.msra.mxu0 0.0
    %1777 = vmatprep.subr.mxu0 0.0
    %1778 = vmatpush1.msra.mxu0 0.0
    %1779 = vmatprep.subr.mxu0 0.0
    %1780 = vmatpush1.msra.mxu0 0.0
    %1781 = vmatprep.subr.mxu0 0.0
    %1782 = vmatpush1.msra.mxu0 0.0
    %1783 = vmatprep.subr.mxu0 0.0
    %1784 = vmatpush1.msra.mxu0 0.0
    %1785 = vmatprep.subr.mxu0 0.0
    %1786 = vmatpush1.msra.mxu0 0.0
    %1787 = vmatprep.subr.mxu0 0.0
    %1788 = vmatpush1.msra.mxu0 0.0
    %1789 = vmatprep.subr.mxu0 0.0
    %1790 = vmatpush1.msra.mxu0 %v395
    %1791 = vmatprep.subr.mxu0 0.0
    %1792 = vmatpush2.msra.mxu0 0.0
    %1793 = vmatprep.subr.mxu0 0.0
    %1794 = vmatpush2.msra.mxu0 0.0
    %1795 = vmatprep.subr.mxu0 0.0
    %1796 = vmatpush2.msra.mxu0 0.0
    %1797 = vmatprep.subr.mxu0 0.0
    %1798 = vmatpush2.msra.mxu0 0.0
    %1799 = vmatprep.subr.mxu0 0.0
    %1800 = vmatpush2.msra.mxu0 0.0
    %1801 = vmatprep.subr.mxu0 0.0
    %1802 = vmatpush2.msra.mxu0 0.0
    %1803 = vmatprep.subr.mxu0 0.0
    %1804 = vmatpush2.msra.mxu0 0.0
    %1805 = vmatprep.subr.mxu0 0.0
    %1806 = vmatpush2.msra.mxu0 0.0
    %1807 = vmatprep.subr.mxu0 0.0
    %1808 = vmatpush2.msra.mxu0 0.0
    %1809 = vmatprep.subr.mxu0 0.0
    %1810 = vmatpush2.msra.mxu0 0.0
    %1811 = vmatprep.subr.mxu0 0.0
    %1812 = vmatpush2.msra.mxu0 0.0
    %1813 = vmatprep.subr.mxu0 0.0
    %1814 = vmatpush2.msra.mxu0 0.0
    %1815 = vmatprep.subr.mxu0 0.0
    %1816 = vmatpush2.msra.mxu0 0.0
    %1817 = vmatprep.subr.mxu0 0.0
    %1818 = vmatpush2.msra.mxu0 0.0
    %1819 = vmatprep.subr.mxu0 0.0
    %1820 = vmatpush2.msra.mxu0 0.0
    %1821 = vmatprep.subr.mxu0 0.0
    %1822 = vmatpush2.msra.mxu0 0.0
    %1823 = vmatprep.mubr.f32.mxu0 0.0
    %1824 = vmatmul.mubr.f32.gmra.mxu0 %v1757
    %v1825 = vpop.f32.mrf.mxu0
    %v1826 = vadd.f32 %v1753, %v1825
    %v1827 = vpop.f32.mrf.mxu0
    %1828 = vdwg.mxu0
    %1829 = vrot.lane.b32.xlu0 %v392, 112
    %v1830 = vpop.permute.xlu0 %1829
    %1831 = vrot.lane.b32.xlu0 %v392, 80
    %v1832 = vpop.permute.xlu0 %1831
    %v1833 = vsel %vm403, %v1830, 0
    %v1835 = vsel %vm403, %v1832, 0
    %1837 = vmatprep.subr.mxu0 0.0
    %1838 = vmatpush1.xpose.msra.mxu0 0.0
    %1839 = vmatprep.subr.mxu0 0.0
    %1840 = vmatpush1.xpose.msra.mxu0 0.0
    %1841 = vmatprep.subr.mxu0 0.0
    %1842 = vmatpush1.xpose.msra.mxu0 0.0
    %1843 = vmatprep.subr.mxu0 0.0
    %1844 = vmatpush1.xpose.msra.mxu0 0.0
    %1845 = vmatprep.subr.mxu0 0.0
    %1846 = vmatpush1.xpose.msra.mxu0 0.0
    %1847 = vmatprep.subr.mxu0 0.0
    %1848 = vmatpush1.xpose.msra.mxu0 0.0
    %1849 = vmatprep.subr.mxu0 0.0
    %1850 = vmatpush1.xpose.msra.mxu0 0.0
    %1851 = vmatprep.subr.mxu0 0.0
    %1852 = vmatpush1.xpose.msra.mxu0 0.0
    %1853 = vmatprep.subr.mxu0 0.0
    %1854 = vmatpush1.xpose.msra.mxu0 0.0
    %1855 = vmatprep.subr.mxu0 0.0
    %1856 = vmatpush1.xpose.msra.mxu0 0.0
    %1857 = vmatprep.subr.mxu0 0.0
    %1858 = vmatpush1.xpose.msra.mxu0 0.0
    %1859 = vmatprep.subr.mxu0 0.0
    %1860 = vmatpush1.xpose.msra.mxu0 0.0
    %1861 = vmatprep.subr.mxu0 0.0
    %1862 = vmatpush1.xpose.msra.mxu0 0.0
    %1863 = vmatprep.subr.mxu0 0.0
    %1864 = vmatpush1.xpose.msra.mxu0 0.0
    %1865 = vmatprep.subr.mxu0 0.0
    %1866 = vmatpush1.xpose.msra.mxu0 0.0
    %1867 = vmatprep.subr.mxu0 0.0
    %1868 = vmatpush1.xpose.msra.mxu0 %v1835
    %1869 = vmatprep.subr.mxu0 0.0
    %1870 = vmatpush2.xpose.msra.mxu0 0.0
    %1871 = vmatprep.subr.mxu0 0.0
    %1872 = vmatpush2.xpose.msra.mxu0 0.0
    %1873 = vmatprep.subr.mxu0 0.0
    %1874 = vmatpush2.xpose.msra.mxu0 0.0
    %1875 = vmatprep.subr.mxu0 0.0
    %1876 = vmatpush2.xpose.msra.mxu0 0.0
    %1877 = vmatprep.subr.mxu0 0.0
    %1878 = vmatpush2.xpose.msra.mxu0 0.0
    %1879 = vmatprep.subr.mxu0 0.0
    %1880 = vmatpush2.xpose.msra.mxu0 0.0
    %1881 = vmatprep.subr.mxu0 0.0
    %1882 = vmatpush2.xpose.msra.mxu0 0.0
    %1883 = vmatprep.subr.mxu0 0.0
    %1884 = vmatpush2.xpose.msra.mxu0 0.0
    %1885 = vmatprep.subr.mxu0 0.0
    %1886 = vmatpush2.xpose.msra.mxu0 0.0
    %1887 = vmatprep.subr.mxu0 0.0
    %1888 = vmatpush2.xpose.msra.mxu0 0.0
    %1889 = vmatprep.subr.mxu0 0.0
    %1890 = vmatpush2.xpose.msra.mxu0 0.0
    %1891 = vmatprep.subr.mxu0 0.0
    %1892 = vmatpush2.xpose.msra.mxu0 0.0
    %1893 = vmatprep.subr.mxu0 0.0
    %1894 = vmatpush2.xpose.msra.mxu0 0.0
    %1895 = vmatprep.subr.mxu0 0.0
    %1896 = vmatpush2.xpose.msra.mxu0 0.0
    %1897 = vmatprep.subr.mxu0 0.0
    %1898 = vmatpush2.xpose.msra.mxu0 0.0
    %1899 = vmatprep.subr.mxu0 0.0
    %1900 = vmatpush2.xpose.msra.mxu0 0.0
    %1901 = vmatprep.mubr.f32.mxu0 0.0
    %1902 = vmatmul.mubr.f32.gmra.mxu0 %v1833
    %v1903 = vpop.f32.mrf.mxu0
    %v1904 = vadd.f32 %v300, %v1903
    %v1905 = vpop.f32.mrf.mxu0
    %1906 = vdwg.mxu0
    %v1907 = vsel %vm403, %v1904, -inf
    %1908 = vmax.xlane.f32.xlu0 %v1907
    %v1909 = vpop.xlane.xlu0 %1908
    %v1910 = vsub.f32 %v1904, %v1909
    %v1911 = vmul.f32 %v1910, 1.442695
    %v1912 = vpow.pop %v1911
    %v1913 = vsel %vm403, %v1912, 0.0
    %1914 = vadd.xlane.f32.xlu0 %v1913
    %v1915 = vpop.xlane.xlu0 %1914
    %v1916 = vrcp.pop %v1915
    %v1917 = vmul.f32 %v1912, %v1916
    %1918 = vrot.lane.b32.xlu0 %v392, 48
    %v1919 = vpop.permute.xlu0 %1918
    %v1922 = vsel %vm403, %v1917, 0
    %1924 = vmatprep.subr.mxu0 0.0
    %1925 = vmatpush1.msra.mxu0 0.0
    %1926 = vmatprep.subr.mxu0 0.0
    %1927 = vmatpush1.msra.mxu0 0.0
    %1928 = vmatprep.subr.mxu0 0.0
    %1929 = vmatpush1.msra.mxu0 0.0
    %1930 = vmatprep.subr.mxu0 0.0
    %1931 = vmatpush1.msra.mxu0 0.0
    %1932 = vmatprep.subr.mxu0 0.0
    %1933 = vmatpush1.msra.mxu0 0.0
    %1934 = vmatprep.subr.mxu0 0.0
    %1935 = vmatpush1.msra.mxu0 0.0
    %1936 = vmatprep.subr.mxu0 0.0
    %1937 = vmatpush1.msra.mxu0 0.0
    %1938 = vmatprep.subr.mxu0 0.0
    %1939 = vmatpush1.msra.mxu0 0.0
    %1940 = vmatprep.subr.mxu0 0.0
    %1941 = vmatpush1.msra.mxu0 0.0
    %1942 = vmatprep.subr.mxu0 0.0
    %1943 = vmatpush1.msra.mxu0 0.0
    %1944 = vmatprep.subr.mxu0 0.0
    %1945 = vmatpush1.msra.mxu0 0.0
    %1946 = vmatprep.subr.mxu0 0.0
    %1947 = vmatpush1.msra.mxu0 0.0
    %1948 = vmatprep.subr.mxu0 0.0
    %1949 = vmatpush1.msra.mxu0 0.0
    %1950 = vmatprep.subr.mxu0 0.0
    %1951 = vmatpush1.msra.mxu0 0.0
    %1952 = vmatprep.subr.mxu0 0.0
    %1953 = vmatpush1.msra.mxu0 0.0
    %1954 = vmatprep.subr.mxu0 0.0
    %1955 = vmatpush1.msra.mxu0 %v1919
    %1956 = vmatprep.subr.mxu0 0.0
    %1957 = vmatpush2.msra.mxu0 0.0
    %1958 = vmatprep.subr.mxu0 0.0
    %1959 = vmatpush2.msra.mxu0 0.0
    %1960 = vmatprep.subr.mxu0 0.0
    %1961 = vmatpush2.msra.mxu0 0.0
    %1962 = vmatprep.subr.mxu0 0.0
    %1963 = vmatpush2.msra.mxu0 0.0
    %1964 = vmatprep.subr.mxu0 0.0
    %1965 = vmatpush2.msra.mxu0 0.0
    %1966 = vmatprep.subr.mxu0 0.0
    %1967 = vmatpush2.msra.mxu0 0.0
    %1968 = vmatprep.subr.mxu0 0.0
    %1969 = vmatpush2.msra.mxu0 0.0
    %1970 = vmatprep.subr.mxu0 0.0
    %1971 = vmatpush2.msra.mxu0 0.0
    %1972 = vmatprep.subr.mxu0 0.0
    %1973 = vmatpush2.msra.mxu0 0.0
    %1974 = vmatprep.subr.mxu0 0.0
    %1975 = vmatpush2.msra.mxu0 0.0
    %1976 = vmatprep.subr.mxu0 0.0
    %1977 = vmatpush2.msra.mxu0 0.0
    %1978 = vmatprep.subr.mxu0 0.0
    %1979 = vmatpush2.msra.mxu0 0.0
    %1980 = vmatprep.subr.mxu0 0.0
    %1981 = vmatpush2.msra.mxu0 0.0
    %1982 = vmatprep.subr.mxu0 0.0
    %1983 = vmatpush2.msra.mxu0 0.0
    %1984 = vmatprep.subr.mxu0 0.0
    %1985 = vmatpush2.msra.mxu0 0.0
    %1986 = vmatprep.subr.mxu0 0.0
    %1987 = vmatpush2.msra.mxu0 0.0
    %1988 = vmatprep.mubr.f32.mxu0 0.0
    %1989 = vmatmul.mubr.f32.gmra.mxu0 %v1922
    %v1990 = vpop.f32.mrf.mxu0
    %v1991 = vadd.f32 0.0, %v1990
    %v1992 = vpop.f32.mrf.mxu0
    %1993 = vdwg.mxu0
    %v1995 = vsel %vm403, %v1991, 0
    %1997 = vmatprep.subr.mxu0 0.0
    %1998 = vmatpush1.msra.mxu0 0.0
    %1999 = vmatprep.subr.mxu0 0.0
    %2000 = vmatpush1.msra.mxu0 0.0
    %2001 = vmatprep.subr.mxu0 0.0
    %2002 = vmatpush1.msra.mxu0 0.0
    %2003 = vmatprep.subr.mxu0 0.0
    %2004 = vmatpush1.msra.mxu0 0.0
    %2005 = vmatprep.subr.mxu0 0.0
    %2006 = vmatpush1.msra.mxu0 0.0
    %2007 = vmatprep.subr.mxu0 0.0
    %2008 = vmatpush1.msra.mxu0 0.0
    %2009 = vmatprep.subr.mxu0 0.0
    %2010 = vmatpush1.msra.mxu0 0.0
    %2011 = vmatprep.subr.mxu0 0.0
    %2012 = vmatpush1.msra.mxu0 0.0
    %2013 = vmatprep.subr.mxu0 0.0
    %2014 = vmatpush1.msra.mxu0 0.0
    %2015 = vmatprep.subr.mxu0 0.0
    %2016 = vmatpush1.msra.mxu0 0.0
    %2017 = vmatprep.subr.mxu0 0.0
    %2018 = vmatpush1.msra.mxu0 0.0
    %2019 = vmatprep.subr.mxu0 0.0
    %2020 = vmatpush1.msra.mxu0 0.0
    %2021 = vmatprep.subr.mxu0 0.0
    %2022 = vmatpush1.msra.mxu0 0.0
    %2023 = vmatprep.subr.mxu0 0.0
    %2024 = vmatpush1.msra.mxu0 0.0
    %2025 = vmatprep.subr.mxu0 0.0
    %2026 = vmatpush1.msra.mxu0 0.0
    %2027 = vmatprep.subr.mxu0 0.0
    %2028 = vmatpush1.msra.mxu0 %v397
    %2029 = vmatprep.subr.mxu0 0.0
    %2030 = vmatpush2.msra.mxu0 0.0
    %2031 = vmatprep.subr.mxu0 0.0
    %2032 = vmatpush2.msra.mxu0 0.0
    %2033 = vmatprep.subr.mxu0 0.0
    %2034 = vmatpush2.msra.mxu0 0.0
    %2035 = vmatprep.subr.mxu0 0.0
    %2036 = vmatpush2.msra.mxu0 0.0
    %2037 = vmatprep.subr.mxu0 0.0
    %2038 = vmatpush2.msra.mxu0 0.0
    %2039 = vmatprep.subr.mxu0 0.0
    %2040 = vmatpush2.msra.mxu0 0.0
    %2041 = vmatprep.subr.mxu0 0.0
    %2042 = vmatpush2.msra.mxu0 0.0
    %2043 = vmatprep.subr.mxu0 0.0
    %2044 = vmatpush2.msra.mxu0 0.0
    %2045 = vmatprep.subr.mxu0 0.0
    %2046 = vmatpush2.msra.mxu0 0.0
    %2047 = vmatprep.subr.mxu0 0.0
    %2048 = vmatpush2.msra.mxu0 0.0
    %2049 = vmatprep.subr.mxu0 0.0
    %2050 = vmatpush2.msra.mxu0 0.0
    %2051 = vmatprep.subr.mxu0 0.0
    %2052 = vmatpush2.msra.mxu0 0.0
    %2053 = vmatprep.subr.mxu0 0.0
    %2054 = vmatpush2.msra.mxu0 0.0
    %2055 = vmatprep.subr.mxu0 0.0
    %2056 = vmatpush2.msra.mxu0 0.0
    %2057 = vmatprep.subr.mxu0 0.0
    %2058 = vmatpush2.msra.mxu0 0.0
    %2059 = vmatprep.subr.mxu0 0.0
    %2060 = vmatpush2.msra.mxu0 0.0
    %2061 = vmatprep.mubr.f32.mxu0 0.0
    %2062 = vmatmul.mubr.f32.gmra.mxu0 %v1995
    %v2063 = vpop.f32.mrf.mxu0
    %v2064 = vadd.f32 0.0, %v2063
    %v2065 = vpop.f32.mrf.mxu0
    %2066 = vdwg.mxu0
    %v2067 = vadd.f32 %v1826, %v2064
    %2068 = vrot.lane.b32.xlu0 %v392, 104
    %v2069 = vpop.permute.xlu0 %2068
    %2070 = vrot.lane.b32.xlu0 %v392, 72
    %v2071 = vpop.permute.xlu0 %2070
    %v2072 = vsel %vm403, %v2069, 0
    %v2074 = vsel %vm403, %v2071, 0
    %2076 = vmatprep.subr.mxu0 0.0
    %2077 = vmatpush1.xpose.msra.mxu0 0.0
    %2078 = vmatprep.subr.mxu0 0.0
    %2079 = vmatpush1.xpose.msra.mxu0 0.0
    %2080 = vmatprep.subr.mxu0 0.0
    %2081 = vmatpush1.xpose.msra.mxu0 0.0
    %2082 = vmatprep.subr.mxu0 0.0
    %2083 = vmatpush1.xpose.msra.mxu0 0.0
    %2084 = vmatprep.subr.mxu0 0.0
    %2085 = vmatpush1.xpose.msra.mxu0 0.0
    %2086 = vmatprep.subr.mxu0 0.0
    %2087 = vmatpush1.xpose.msra.mxu0 0.0
    %2088 = vmatprep.subr.mxu0 0.0
    %2089 = vmatpush1.xpose.msra.mxu0 0.0
    %2090 = vmatprep.subr.mxu0 0.0
    %2091 = vmatpush1.xpose.msra.mxu0 0.0
    %2092 = vmatprep.subr.mxu0 0.0
    %2093 = vmatpush1.xpose.msra.mxu0 0.0
    %2094 = vmatprep.subr.mxu0 0.0
    %2095 = vmatpush1.xpose.msra.mxu0 0.0
    %2096 = vmatprep.subr.mxu0 0.0
    %2097 = vmatpush1.xpose.msra.mxu0 0.0
    %2098 = vmatprep.subr.mxu0 0.0
    %2099 = vmatpush1.xpose.msra.mxu0 0.0
    %2100 = vmatprep.subr.mxu0 0.0
    %2101 = vmatpush1.xpose.msra.mxu0 0.0
    %2102 = vmatprep.subr.mxu0 0.0
    %2103 = vmatpush1.xpose.msra.mxu0 0.0
    %2104 = vmatprep.subr.mxu0 0.0
    %2105 = vmatpush1.xpose.msra.mxu0 0.0
    %2106 = vmatprep.subr.mxu0 0.0
    %2107 = vmatpush1.xpose.msra.mxu0 %v2074
    %2108 = vmatprep.subr.mxu0 0.0
    %2109 = vmatpush2.xpose.msra.mxu0 0.0
    %2110 = vmatprep.subr.mxu0 0.0
    %2111 = vmatpush2.xpose.msra.mxu0 0.0
    %2112 = vmatprep.subr.mxu0 0.0
    %2113 = vmatpush2.xpose.msra.mxu0 0.0
    %2114 = vmatprep.subr.mxu0 0.0
    %2115 = vmatpush2.xpose.msra.mxu0 0.0
    %2116 = vmatprep.subr.mxu0 0.0
    %2117 = vmatpush2.xpose.msra.mxu0 0.0
    %2118 = vmatprep.subr.mxu0 0.0
    %2119 = vmatpush2.xpose.msra.mxu0 0.0
    %2120 = vmatprep.subr.mxu0 0.0
    %2121 = vmatpush2.xpose.msra.mxu0 0.0
    %2122 = vmatprep.subr.mxu0 0.0
    %2123 = vmatpush2.xpose.msra.mxu0 0.0
    %2124 = vmatprep.subr.mxu0 0.0
    %2125 = vmatpush2.xpose.msra.mxu0 0.0
    %2126 = vmatprep.subr.mxu0 0.0
    %2127 = vmatpush2.xpose.msra.mxu0 0.0
    %2128 = vmatprep.subr.mxu0 0.0
    %2129 = vmatpush2.xpose.msra.mxu0 0.0
    %2130 = vmatprep.subr.mxu0 0.0
    %2131 = vmatpush2.xpose.msra.mxu0 0.0
    %2132 = vmatprep.subr.mxu0 0.0
    %2133 = vmatpush2.xpose.msra.mxu0 0.0
    %2134 = vmatprep.subr.mxu0 0.0
    %2135 = vmatpush2.xpose.msra.mxu0 0.0
    %2136 = vmatprep.subr.mxu0 0.0
    %2137 = vmatpush2.xpose.msra.mxu0 0.0
    %2138 = vmatprep.subr.mxu0 0.0
    %2139 = vmatpush2.xpose.msra.mxu0 0.0
    %2140 = vmatprep.mubr.f32.mxu0 0.0
    %2141 = vmatmul.mubr.f32.gmra.mxu0 %v2072
    %v2142 = vpop.f32.mrf.mxu0
    %v2143 = vadd.f32 %v300, %v2142
    %v2144 = vpop.f32.mrf.mxu0
    %2145 = vdwg.mxu0
    %v2146 = vsel %vm403, %v2143, -inf
    %2147 = vmax.xlane.f32.xlu0 %v2146
    %v2148 = vpop.xlane.xlu0 %2147
    %v2149 = vsub.f32 %v2143, %v2148
    %v2150 = vmul.f32 %v2149, 1.442695
    %v2151 = vpow.pop %v2150
    %v2152 = vsel %vm403, %v2151, 0.0
    %2153 = vadd.xlane.f32.xlu0 %v2152
    %v2154 = vpop.xlane.xlu0 %2153
    %v2155 = vrcp.pop %v2154
    %v2156 = vmul.f32 %v2151, %v2155
    %2157 = vrot.lane.b32.xlu0 %v392, 40
    %v2158 = vpop.permute.xlu0 %2157
    %v2161 = vsel %vm403, %v2156, 0
    %2163 = vmatprep.subr.mxu0 0.0
    %2164 = vmatpush1.msra.mxu0 0.0
    %2165 = vmatprep.subr.mxu0 0.0
    %2166 = vmatpush1.msra.mxu0 0.0
    %2167 = vmatprep.subr.mxu0 0.0
    %2168 = vmatpush1.msra.mxu0 0.0
    %2169 = vmatprep.subr.mxu0 0.0
    %2170 = vmatpush1.msra.mxu0 0.0
    %2171 = vmatprep.subr.mxu0 0.0
    %2172 = vmatpush1.msra.mxu0 0.0
    %2173 = vmatprep.subr.mxu0 0.0
    %2174 = vmatpush1.msra.mxu0 0.0
    %2175 = vmatprep.subr.mxu0 0.0
    %2176 = vmatpush1.msra.mxu0 0.0
    %2177 = vmatprep.subr.mxu0 0.0
    %2178 = vmatpush1.msra.mxu0 0.0
    %2179 = vmatprep.subr.mxu0 0.0
    %2180 = vmatpush1.msra.mxu0 0.0
    %2181 = vmatprep.subr.mxu0 0.0
    %2182 = vmatpush1.msra.mxu0 0.0
    %2183 = vmatprep.subr.mxu0 0.0
    %2184 = vmatpush1.msra.mxu0 0.0
    %2185 = vmatprep.subr.mxu0 0.0
    %2186 = vmatpush1.msra.mxu0 0.0
    %2187 = vmatprep.subr.mxu0 0.0
    %2188 = vmatpush1.msra.mxu0 0.0
    %2189 = vmatprep.subr.mxu0 0.0
    %2190 = vmatpush1.msra.mxu0 0.0
    %2191 = vmatprep.subr.mxu0 0.0
    %2192 = vmatpush1.msra.mxu0 0.0
    %2193 = vmatprep.subr.mxu0 0.0
    %2194 = vmatpush1.msra.mxu0 %v2158
    %2195 = vmatprep.subr.mxu0 0.0
    %2196 = vmatpush2.msra.mxu0 0.0
    %2197 = vmatprep.subr.mxu0 0.0
    %2198 = vmatpush2.msra.mxu0 0.0
    %2199 = vmatprep.subr.mxu0 0.0
    %2200 = vmatpush2.msra.mxu0 0.0
    %2201 = vmatprep.subr.mxu0 0.0
    %2202 = vmatpush2.msra.mxu0 0.0
    %2203 = vmatprep.subr.mxu0 0.0
    %2204 = vmatpush2.msra.mxu0 0.0
    %2205 = vmatprep.subr.mxu0 0.0
    %2206 = vmatpush2.msra.mxu0 0.0
    %2207 = vmatprep.subr.mxu0 0.0
    %2208 = vmatpush2.msra.mxu0 0.0
    %2209 = vmatprep.subr.mxu0 0.0
    %2210 = vmatpush2.msra.mxu0 0.0
    %2211 = vmatprep.subr.mxu0 0.0
    %2212 = vmatpush2.msra.mxu0 0.0
    %2213 = vmatprep.subr.mxu0 0.0
    %2214 = vmatpush2.msra.mxu0 0.0
    %2215 = vmatprep.subr.mxu0 0.0
    %2216 = vmatpush2.msra.mxu0 0.0
    %2217 = vmatprep.subr.mxu0 0.0
    %2218 = vmatpush2.msra.mxu0 0.0
    %2219 = vmatprep.subr.mxu0 0.0
    %2220 = vmatpush2.msra.mxu0 0.0
    %2221 = vmatprep.subr.mxu0 0.0
    %2222 = vmatpush2.msra.mxu0 0.0
    %2223 = vmatprep.subr.mxu0 0.0
    %2224 = vmatpush2.msra.mxu0 0.0
    %2225 = vmatprep.subr.mxu0 0.0
    %2226 = vmatpush2.msra.mxu0 0.0
    %2227 = vmatprep.mubr.f32.mxu0 0.0
    %2228 = vmatmul.mubr.f32.gmra.mxu0 %v2161
    %v2229 = vpop.f32.mrf.mxu0
    %v2230 = vadd.f32 0.0, %v2229
    %v2231 = vpop.f32.mrf.mxu0
    %2232 = vdwg.mxu0
    %v2234 = vsel %vm403, %v2230, 0
    %2236 = vmatprep.subr.mxu0 0.0
    %2237 = vmatpush1.msra.mxu0 0.0
    %2238 = vmatprep.subr.mxu0 0.0
    %2239 = vmatpush1.msra.mxu0 0.0
    %2240 = vmatprep.subr.mxu0 0.0
    %2241 = vmatpush1.msra.mxu0 0.0
    %2242 = vmatprep.subr.mxu0 0.0
    %2243 = vmatpush1.msra.mxu0 0.0
    %2244 = vmatprep.subr.mxu0 0.0
    %2245 = vmatpush1.msra.mxu0 0.0
    %2246 = vmatprep.subr.mxu0 0.0
    %2247 = vmatpush1.msra.mxu0 0.0
    %2248 = vmatprep.subr.mxu0 0.0
    %2249 = vmatpush1.msra.mxu0 0.0
    %2250 = vmatprep.subr.mxu0 0.0
    %2251 = vmatpush1.msra.mxu0 0.0
    %2252 = vmatprep.subr.mxu0 0.0
    %2253 = vmatpush1.msra.mxu0 0.0
    %2254 = vmatprep.subr.mxu0 0.0
    %2255 = vmatpush1.msra.mxu0 0.0
    %2256 = vmatprep.subr.mxu0 0.0
    %2257 = vmatpush1.msra.mxu0 0.0
    %2258 = vmatprep.subr.mxu0 0.0
    %2259 = vmatpush1.msra.mxu0 0.0
    %2260 = vmatprep.subr.mxu0 0.0
    %2261 = vmatpush1.msra.mxu0 0.0
    %2262 = vmatprep.subr.mxu0 0.0
    %2263 = vmatpush1.msra.mxu0 0.0
    %2264 = vmatprep.subr.mxu0 0.0
    %2265 = vmatpush1.msra.mxu0 0.0
    %2266 = vmatprep.subr.mxu0 0.0
    %2267 = vmatpush1.msra.mxu0 %v398
    %2268 = vmatprep.subr.mxu0 0.0
    %2269 = vmatpush2.msra.mxu0 0.0
    %2270 = vmatprep.subr.mxu0 0.0
    %2271 = vmatpush2.msra.mxu0 0.0
    %2272 = vmatprep.subr.mxu0 0.0
    %2273 = vmatpush2.msra.mxu0 0.0
    %2274 = vmatprep.subr.mxu0 0.0
    %2275 = vmatpush2.msra.mxu0 0.0
    %2276 = vmatprep.subr.mxu0 0.0
    %2277 = vmatpush2.msra.mxu0 0.0
    %2278 = vmatprep.subr.mxu0 0.0
    %2279 = vmatpush2.msra.mxu0 0.0
    %2280 = vmatprep.subr.mxu0 0.0
    %2281 = vmatpush2.msra.mxu0 0.0
    %2282 = vmatprep.subr.mxu0 0.0
    %2283 = vmatpush2.msra.mxu0 0.0
    %2284 = vmatprep.subr.mxu0 0.0
    %2285 = vmatpush2.msra.mxu0 0.0
    %2286 = vmatprep.subr.mxu0 0.0
    %2287 = vmatpush2.msra.mxu0 0.0
    %2288 = vmatprep.subr.mxu0 0.0
    %2289 = vmatpush2.msra.mxu0 0.0
    %2290 = vmatprep.subr.mxu0 0.0
    %2291 = vmatpush2.msra.mxu0 0.0
    %2292 = vmatprep.subr.mxu0 0.0
    %2293 = vmatpush2.msra.mxu0 0.0
    %2294 = vmatprep.subr.mxu0 0.0
    %2295 = vmatpush2.msra.mxu0 0.0
    %2296 = vmatprep.subr.mxu0 0.0
    %2297 = vmatpush2.msra.mxu0 0.0
    %2298 = vmatprep.subr.mxu0 0.0
    %2299 = vmatpush2.msra.mxu0 0.0
    %2300 = vmatprep.mubr.f32.mxu0 0.0
    %2301 = vmatmul.mubr.f32.gmra.mxu0 %v2234
    %v2302 = vpop.f32.mrf.mxu0
    %v2303 = vadd.f32 0.0, %v2302
    %v2304 = vpop.f32.mrf.mxu0
    %2305 = vdwg.mxu0
    %v2306 = vadd.f32 %v2067, %v2303
    %v2308 = vlaneseq
    %v2309 = vshrl.u32 %v2308, 7
    %v2310 = vsub.s32 0, %v2309
    %v2311 = vrot.slane %v399, %v2310
    %v2313 = vadd.f32 %v1353, %v2311
    %v2314 = vadd.f32 %v2306, %v2311
    %v2315 = vadd.f32 %v283, %v2313
    %v2316 = vadd.f32 %v284, %v2314
    %v2317 = vld [vmem:[%s25] sm:$0x1]
    %v2318 = vld [vmem:[%s27] sm:$0x1]
    %v2319 = vsel %vm241, %v2315, 0.0
    %2320 = vadd.xlane.f32.xlu0 %v2319
    %v2321 = vpop.xlane.xlu0 %2320
    %v2322 = vsel %vm241, %v2316, 0.0
    %2323 = vadd.xlane.f32.xlu0 %v2322
    %v2324 = vpop.xlane.xlu0 %2323
    %v2325 = vmul.f32 %v2321, %v248
    %v2326 = vmul.f32 %v2324, %v248
    %v2327 = vsub.f32 %v2315, %v2325
    %v2328 = vsub.f32 %v2316, %v2326
    %v2329 = vmul.f32 %v2327, %v2327
    %v2330 = vmul.f32 %v2328, %v2328
    %v2331 = vsel %vm241, %v2329, 0.0
    %2332 = vadd.xlane.f32.xlu0 %v2331
    %v2333 = vpop.xlane.xlu0 %2332
    %v2334 = vsel %vm241, %v2330, 0.0
    %2335 = vadd.xlane.f32.xlu0 %v2334
    %v2336 = vpop.xlane.xlu0 %2335
    %v2337 = vmul.f32 %v2333, %v248
    %v2338 = vmul.f32 %v2336, %v248
    %v2339 = vadd.f32 %v2337, 1e-05
    %v2340 = vadd.f32 %v2338, 1e-05
    %v2341 = vrsqrt.pop %v2339
    %v2342 = vrsqrt.pop %v2340
    %v2343 = vmul.f32 %v2327, %v2341
    %v2344 = vmul.f32 %v2328, %v2342
    %v2346 = vlaneseq
    %v2347 = vshrl.u32 %v2346, 7
    %v2348 = vsub.s32 0, %v2347
    %v2349 = vrot.slane %v2317, %v2348
    %v2351 = vmul.f32 %v2343, %v2349
    %v2352 = vmul.f32 %v2344, %v2349
    %v2354 = vlaneseq
    %v2355 = vshrl.u32 %v2354, 7
    %v2356 = vsub.s32 0, %v2355
    %v2357 = vrot.slane %v2318, %v2356
    %v2359 = vadd.f32 %v2351, %v2357
    %v2360 = vadd.f32 %v2352, %v2357
    %v2361 = vld [vmem:[%s29] sm:$0xff]
    %v2362 = vld [vmem:[%s29 + $0x8] sm:$0xff]
    %v2363 = vld [vmem:[%s29 + $0x10] sm:$0xff]
    %v2364 = vld [vmem:[%s29 + $0x18] sm:$0xff]
    %v2365 = vld [vmem:[%s31] sm:$0x1]
    %v2367 = vlaneseq
    %v2368 = vshrl.u32 %v2367, 7
    %v2369 = vsub.s32 0, %v2368
    %v2370 = vrot.slane %v2365, %v2369
    %v2373 = vsel %vm241, %v2359, 0
    %v2376 = vsel %vm241, %v2360, 0
    %2378 = vmatprep.subr.mxu0 0.0
    %2379 = vmatpush1.msra.mxu0 0.0
    %2380 = vmatprep.subr.mxu0 0.0
    %2381 = vmatpush1.msra.mxu0 0.0
    %2382 = vmatprep.subr.mxu0 0.0
    %2383 = vmatpush1.msra.mxu0 0.0
    %2384 = vmatprep.subr.mxu0 0.0
    %2385 = vmatpush1.msra.mxu0 0.0
    %2386 = vmatprep.subr.mxu0 0.0
    %2387 = vmatpush1.msra.mxu0 0.0
    %2388 = vmatprep.subr.mxu0 0.0
    %2389 = vmatpush1.msra.mxu0 0.0
    %2390 = vmatprep.subr.mxu0 0.0
    %2391 = vmatpush1.msra.mxu0 0.0
    %2392 = vmatprep.subr.mxu0 0.0
    %2393 = vmatpush1.msra.mxu0 0.0
    %2394 = vmatprep.subr.mxu0 0.0
    %2395 = vmatpush1.msra.mxu0 0.0
    %2396 = vmatprep.subr.mxu0 0.0
    %2397 = vmatpush1.msra.mxu0 0.0
    %2398 = vmatprep.subr.mxu0 0.0
    %2399 = vmatpush1.msra.mxu0 0.0
    %2400 = vmatprep.subr.mxu0 0.0
    %2401 = vmatpush1.msra.mxu0 0.0
    %2402 = vmatprep.subr.mxu0 0.0
    %2403 = vmatpush1.msra.mxu0 %v2364
    %2404 = vmatprep.subr.mxu0 0.0
    %2405 = vmatpush1.msra.mxu0 %v2363
    %2406 = vmatprep.subr.mxu0 0.0
    %2407 = vmatpush1.msra.mxu0 %v2362
    %2408 = vmatprep.subr.mxu0 0.0
    %2409 = vmatpush1.msra.mxu0 %v2361
    %2410 = vmatprep.subr.mxu0 0.0
    %2411 = vmatpush2.msra.mxu0 0.0
    %2412 = vmatprep.subr.mxu0 0.0
    %2413 = vmatpush2.msra.mxu0 0.0
    %2414 = vmatprep.subr.mxu0 0.0
    %2415 = vmatpush2.msra.mxu0 0.0
    %2416 = vmatprep.subr.mxu0 0.0
    %2417 = vmatpush2.msra.mxu0 0.0
    %2418 = vmatprep.subr.mxu0 0.0
    %2419 = vmatpush2.msra.mxu0 0.0
    %2420 = vmatprep.subr.mxu0 0.0
    %2421 = vmatpush2.msra.mxu0 0.0
    %2422 = vmatprep.subr.mxu0 0.0
    %2423 = vmatpush2.msra.mxu0 0.0
    %2424 = vmatprep.subr.mxu0 0.0
    %2425 = vmatpush2.msra.mxu0 0.0
    %2426 = vmatprep.subr.mxu0 0.0
    %2427 = vmatpush2.msra.mxu0 0.0
    %2428 = vmatprep.subr.mxu0 0.0
    %2429 = vmatpush2.msra.mxu0 0.0
    %2430 = vmatprep.subr.mxu0 0.0
    %2431 = vmatpush2.msra.mxu0 0.0
    %2432 = vmatprep.subr.mxu0 0.0
    %2433 = vmatpush2.msra.mxu0 0.0
    %2434 = vmatprep.subr.mxu0 0.0
    %2435 = vmatpush2.msra.mxu0 0.0
    %2436 = vmatprep.subr.mxu0 0.0
    %2437 = vmatpush2.msra.mxu0 0.0
    %2438 = vmatprep.subr.mxu0 0.0
    %2439 = vmatpush2.msra.mxu0 0.0
    %2440 = vmatprep.subr.mxu0 0.0
    %2441 = vmatpush2.msra.mxu0 0.0
    %2442 = vmatprep.mubr.f32.mxu0 0.0
    %2443 = vmatmul.mubr.f32.gmra.mxu0 %v2373
    %v2444 = vpop.f32.mrf.mxu0
    %v2445 = vadd.f32 %v2370, %v2444
    %v2446 = vpop.f32.mrf.mxu0
    %2447 = vmatprep.mubr.f32.mxu0 0.0
    %2448 = vmatmul.mubr.f32.gmra.mxu0 %v2376
    %v2449 = vpop.f32.mrf.mxu0
    %v2450 = vadd.f32 %v2370, %v2449
    %v2451 = vpop.f32.mrf.mxu0
    %2452 = vdwg.mxu0
    %v2453 = vld [vmem:[%s33] sm:$0xff]
    %v2454 = vld [vmem:[%s33 + $0x8] sm:$0xff]
    %v2455 = vld [vmem:[%s33 + $0x10] sm:$0xff]
    %v2456 = vld [vmem:[%s33 + $0x18] sm:$0xff]
    %v2457 = vld [vmem:[%s35] sm:$0x1]
    %v2459 = vlaneseq
    %v2460 = vshrl.u32 %v2459, 7
    %v2461 = vsub.s32 0, %v2460
    %v2462 = vrot.slane %v2457, %v2461
    %v2465 = vsel %vm241, %v301, 0
    %v2468 = vsel %vm241, %v302, 0
    %2470 = vmatprep.subr.mxu0 0.0
    %2471 = vmatpush1.msra.mxu0 0.0
    %2472 = vmatprep.subr.mxu0 0.0
    %2473 = vmatpush1.msra.mxu0 0.0
    %2474 = vmatprep.subr.mxu0 0.0
    %2475 = vmatpush1.msra.mxu0 0.0
    %2476 = vmatprep.subr.mxu0 0.0
    %2477 = vmatpush1.msra.mxu0 0.0
    %2478 = vmatprep.subr.mxu0 0.0
    %2479 = vmatpush1.msra.mxu0 0.0
    %2480 = vmatprep.subr.mxu0 0.0
    %2481 = vmatpush1.msra.mxu0 0.0
    %2482 = vmatprep.subr.mxu0 0.0
    %2483 = vmatpush1.msra.mxu0 0.0
    %2484 = vmatprep.subr.mxu0 0.0
    %2485 = vmatpush1.msra.mxu0 0.0
    %2486 = vmatprep.subr.mxu0 0.0
    %2487 = vmatpush1.msra.mxu0 0.0
    %2488 = vmatprep.subr.mxu0 0.0
    %2489 = vmatpush1.msra.mxu0 0.0
    %2490 = vmatprep.subr.mxu0 0.0
    %2491 = vmatpush1.msra.mxu0 0.0
    %2492 = vmatprep.subr.mxu0 0.0
    %2493 = vmatpush1.msra.mxu0 0.0
    %2494 = vmatprep.subr.mxu0 0.0
    %2495 = vmatpush1.msra.mxu0 %v2456
    %2496 = vmatprep.subr.mxu0 0.0
    %2497 = vmatpush1.msra.mxu0 %v2455
    %2498 = vmatprep.subr.mxu0 0.0
    %2499 = vmatpush1.msra.mxu0 %v2454
    %2500 = vmatprep.subr.mxu0 0.0
    %2501 = vmatpush1.msra.mxu0 %v2453
    %2502 = vmatprep.subr.mxu0 0.0
    %2503 = vmatpush2.msra.mxu0 0.0
    %2504 = vmatprep.subr.mxu0 0.0
    %2505 = vmatpush2.msra.mxu0 0.0
    %2506 = vmatprep.subr.mxu0 0.0
    %2507 = vmatpush2.msra.mxu0 0.0
    %2508 = vmatprep.subr.mxu0 0.0
    %2509 = vmatpush2.msra.mxu0 0.0
    %2510 = vmatprep.subr.mxu0 0.0
    %2511 = vmatpush2.msra.mxu0 0.0
    %2512 = vmatprep.subr.mxu0 0.0
    %2513 = vmatpush2.msra.mxu0 0.0
    %2514 = vmatprep.subr.mxu0 0.0
    %2515 = vmatpush2.msra.mxu0 0.0
    %2516 = vmatprep.subr.mxu0 0.0
    %2517 = vmatpush2.msra.mxu0 0.0
    %2518 = vmatprep.subr.mxu0 0.0
    %2519 = vmatpush2.msra.mxu0 0.0
    %2520 = vmatprep.subr.mxu0 0.0
    %2521 = vmatpush2.msra.mxu0 0.0
    %2522 = vmatprep.subr.mxu0 0.0
    %2523 = vmatpush2.msra.mxu0 0.0
    %2524 = vmatprep.subr.mxu0 0.0
    %2525 = vmatpush2.msra.mxu0 0.0
    %2526 = vmatprep.subr.mxu0 0.0
    %2527 = vmatpush2.msra.mxu0 0.0
    %2528 = vmatprep.subr.mxu0 0.0
    %2529 = vmatpush2.msra.mxu0 0.0
    %2530 = vmatprep.subr.mxu0 0.0
    %2531 = vmatpush2.msra.mxu0 0.0
    %2532 = vmatprep.subr.mxu0 0.0
    %2533 = vmatpush2.msra.mxu0 0.0
    %2534 = vmatprep.mubr.f32.mxu0 0.0
    %2535 = vmatmul.mubr.f32.gmra.mxu0 %v2465
    %v2536 = vpop.f32.mrf.mxu0
    %v2537 = vadd.f32 %v2462, %v2536
    %v2538 = vpop.f32.mrf.mxu0
    %2539 = vmatprep.mubr.f32.mxu0 0.0
    %2540 = vmatmul.mubr.f32.gmra.mxu0 %v2468
    %v2541 = vpop.f32.mrf.mxu0
    %v2542 = vadd.f32 %v2462, %v2541
    %v2543 = vpop.f32.mrf.mxu0
    %2544 = vdwg.mxu0
    %v2545 = vld [vmem:[%s37] sm:$0xff]
    %v2546 = vld [vmem:[%s37 + $0x8] sm:$0xff]
    %v2547 = vld [vmem:[%s37 + $0x10] sm:$0xff]
    %v2548 = vld [vmem:[%s37 + $0x18] sm:$0xff]
    %v2549 = vld [vmem:[%s39] sm:$0x1]
    %v2550 = vlaneseq
    %v2551 = vshrl.u32 %v2550, 7
    %v2552 = vsub.s32 0, %v2551
    %v2553 = vrot.slane %v290, %v2552
    %v2555 = vsel %vm403, %v2445, 0
    %v2558 = vsel %vm403, %v2537, 0
    %2560 = vmatprep.subr.mxu0 0.0
    %2561 = vmatpush1.xpose.msra.mxu0 0.0
    %2562 = vmatprep.subr.mxu0 0.0
    %2563 = vmatpush1.xpose.msra.mxu0 0.0
    %2564 = vmatprep.subr.mxu0 0.0
    %2565 = vmatpush1.xpose.msra.mxu0 0.0
    %2566 = vmatprep.subr.mxu0 0.0
    %2567 = vmatpush1.xpose.msra.mxu0 0.0
    %2568 = vmatprep.subr.mxu0 0.0
    %2569 = vmatpush1.xpose.msra.mxu0 0.0
    %2570 = vmatprep.subr.mxu0 0.0
    %2571 = vmatpush1.xpose.msra.mxu0 0.0
    %2572 = vmatprep.subr.mxu0 0.0
    %2573 = vmatpush1.xpose.msra.mxu0 0.0
    %2574 = vmatprep.subr.mxu0 0.0
    %2575 = vmatpush1.xpose.msra.mxu0 0.0
    %2576 = vmatprep.subr.mxu0 0.0
    %2577 = vmatpush1.xpose.msra.mxu0 0.0
    %2578 = vmatprep.subr.mxu0 0.0
    %2579 = vmatpush1.xpose.msra.mxu0 0.0
    %2580 = vmatprep.subr.mxu0 0.0
    %2581 = vmatpush1.xpose.msra.mxu0 0.0
    %2582 = vmatprep.subr.mxu0 0.0
    %2583 = vmatpush1.xpose.msra.mxu0 0.0
    %2584 = vmatprep.subr.mxu0 0.0
    %2585 = vmatpush1.xpose.msra.mxu0 0.0
    %2586 = vmatprep.subr.mxu0 0.0
    %2587 = vmatpush1.xpose.msra.mxu0 0.0
    %2588 = vmatprep.subr.mxu0 0.0
    %2589 = vmatpush1.xpose.msra.mxu0 0.0
    %2590 = vmatprep.subr.mxu0 0.0
    %2591 = vmatpush1.xpose.msra.mxu0 %v2558
    %2592 = vmatprep.subr.mxu0 0.0
    %2593 = vmatpush2.xpose.msra.mxu0 0.0
    %2594 = vmatprep.subr.mxu0 0.0
    %2595 = vmatpush2.xpose.msra.mxu0 0.0
    %2596 = vmatprep.subr.mxu0 0.0
    %2597 = vmatpush2.xpose.msra.mxu0 0.0
    %2598 = vmatprep.subr.mxu0 0.0
    %2599 = vmatpush2.xpose.msra.mxu0 0.0
    %2600 = vmatprep.subr.mxu0 0.0
    %2601 = vmatpush2.xpose.msra.mxu0 0.0
    %2602 = vmatprep.subr.mxu0 0.0
    %2603 = vmatpush2.xpose.msra.mxu0 0.0
    %2604 = vmatprep.subr.mxu0 0.0
    %2605 = vmatpush2.xpose.msra.mxu0 0.0
    %2606 = vmatprep.subr.mxu0 0.0
    %2607 = vmatpush2.xpose.msra.mxu0 0.0
    %2608 = vmatprep.subr.mxu0 0.0
    %2609 = vmatpush2.xpose.msra.mxu0 0.0
    %2610 = vmatprep.subr.mxu0 0.0
    %2611 = vmatpush2.xpose.msra.mxu0 0.0
    %2612 = vmatprep.subr.mxu0 0.0
    %2613 = vmatpush2.xpose.msra.mxu0 0.0
    %2614 = vmatprep.subr.mxu0 0.0
    %2615 = vmatpush2.xpose.msra.mxu0 0.0
    %2616 = vmatprep.subr.mxu0 0.0
    %2617 = vmatpush2.xpose.msra.mxu0 0.0
    %2618 = vmatprep.subr.mxu0 0.0
    %2619 = vmatpush2.xpose.msra.mxu0 0.0
    %2620 = vmatprep.subr.mxu0 0.0
    %2621 = vmatpush2.xpose.msra.mxu0 0.0
    %2622 = vmatprep.subr.mxu0 0.0
    %2623 = vmatpush2.xpose.msra.mxu0 0.0
    %2624 = vmatprep.mubr.f32.mxu0 0.0
    %2625 = vmatmul.mubr.f32.gmra.mxu0 %v2555
    %v2626 = vpop.f32.mrf.mxu0
    %v2627 = vadd.f32 %v2553, %v2626
    %v2628 = vpop.f32.mrf.mxu0
    %2629 = vdwg.mxu0
    %v2630 = vsel %vm403, %v2627, -inf
    %2631 = vmax.xlane.f32.xlu0 %v2630
    %v2632 = vpop.xlane.xlu0 %2631
    %v2633 = vsub.f32 %v2627, %v2632
    %v2634 = vmul.f32 %v2633, 1.442695
    %v2635 = vpow.pop %v2634
    %v2636 = vsel %vm403, %v2635, 0.0
    %2637 = vadd.xlane.f32.xlu0 %v2636
    %v2638 = vpop.xlane.xlu0 %2637
    %v2639 = vrcp.pop %v2638
    %v2640 = vmul.f32 %v2635, %v2639
    %2641 = vrot.lane.b32.xlu0 %v2537, 96
    %v2642 = vpop.permute.xlu0 %2641
    %v2645 = vsel %vm403, %v2640, 0
    %2647 = vmatprep.subr.mxu0 0.0
    %2648 = vmatpush1.msra.mxu0 0.0
    %2649 = vmatprep.subr.mxu0 0.0
    %2650 = vmatpush1.msra.mxu0 0.0
    %2651 = vmatprep.subr.mxu0 0.0
    %2652 = vmatpush1.msra.mxu0 0.0
    %2653 = vmatprep.subr.mxu0 0.0
    %2654 = vmatpush1.msra.mxu0 0.0
    %2655 = vmatprep.subr.mxu0 0.0
    %2656 = vmatpush1.msra.mxu0 0.0
    %2657 = vmatprep.subr.mxu0 0.0
    %2658 = vmatpush1.msra.mxu0 0.0
    %2659 = vmatprep.subr.mxu0 0.0
    %2660 = vmatpush1.msra.mxu0 0.0
    %2661 = vmatprep.subr.mxu0 0.0
    %2662 = vmatpush1.msra.mxu0 0.0
    %2663 = vmatprep.subr.mxu0 0.0
    %2664 = vmatpush1.msra.mxu0 0.0
    %2665 = vmatprep.subr.mxu0 0.0
    %2666 = vmatpush1.msra.mxu0 0.0
    %2667 = vmatprep.subr.mxu0 0.0
    %2668 = vmatpush1.msra.mxu0 0.0
    %2669 = vmatprep.subr.mxu0 0.0
    %2670 = vmatpush1.msra.mxu0 0.0
    %2671 = vmatprep.subr.mxu0 0.0
    %2672 = vmatpush1.msra.mxu0 0.0
    %2673 = vmatprep.subr.mxu0 0.0
    %2674 = vmatpush1.msra.mxu0 0.0
    %2675 = vmatprep.subr.mxu0 0.0
    %2676 = vmatpush1.msra.mxu0 0.0
    %2677 = vmatprep.subr.mxu0 0.0
    %2678 = vmatpush1.msra.mxu0 %v2642
    %2679 = vmatprep.subr.mxu0 0.0
    %2680 = vmatpush2.msra.mxu0 0.0
    %2681 = vmatprep.subr.mxu0 0.0
    %2682 = vmatpush2.msra.mxu0 0.0
    %2683 = vmatprep.subr.mxu0 0.0
    %2684 = vmatpush2.msra.mxu0 0.0
    %2685 = vmatprep.subr.mxu0 0.0
    %2686 = vmatpush2.msra.mxu0 0.0
    %2687 = vmatprep.subr.mxu0 0.0
    %2688 = vmatpush2.msra.mxu0 0.0
    %2689 = vmatprep.subr.mxu0 0.0
    %2690 = vmatpush2.msra.mxu0 0.0
    %2691 = vmatprep.subr.mxu0 0.0
    %2692 = vmatpush2.msra.mxu0 0.0
    %2693 = vmatprep.subr.mxu0 0.0
    %2694 = vmatpush2.msra.mxu0 0.0
    %2695 = vmatprep.subr.mxu0 0.0
    %2696 = vmatpush2.msra.mxu0 0.0
    %2697 = vmatprep.subr.mxu0 0.0
    %2698 = vmatpush2.msra.mxu0 0.0
    %2699 = vmatprep.subr.mxu0 0.0
    %2700 = vmatpush2.msra.mxu0 0.0
    %2701 = vmatprep.subr.mxu0 0.0
    %2702 = vmatpush2.msra.mxu0 0.0
    %2703 = vmatprep.subr.mxu0 0.0
    %2704 = vmatpush2.msra.mxu0 0.0
    %2705 = vmatprep.subr.mxu0 0.0
    %2706 = vmatpush2.msra.mxu0 0.0
    %2707 = vmatprep.subr.mxu0 0.0
    %2708 = vmatpush2.msra.mxu0 0.0
    %2709 = vmatprep.subr.mxu0 0.0
    %2710 = vmatpush2.msra.mxu0 0.0
    %2711 = vmatprep.mubr.f32.mxu0 0.0
    %2712 = vmatmul.mubr.f32.gmra.mxu0 %v2645
    %v2713 = vpop.f32.mrf.mxu0
    %v2714 = vadd.f32 0.0, %v2713
    %v2715 = vpop.f32.mrf.mxu0
    %2716 = vdwg.mxu0
    %2717 = vrot.lane.b32.xlu0 %v2445, 120
    %v2718 = vpop.permute.xlu0 %2717
    %2719 = vrot.lane.b32.xlu0 %v2537, 120
    %v2720 = vpop.permute.xlu0 %2719
    %v2721 = vsel %vm403, %v2718, 0
    %v2723 = vsel %vm403, %v2720, 0
    %2725 = vmatprep.subr.mxu0 0.0
    %2726 = vmatpush1.xpose.msra.mxu0 0.0
    %2727 = vmatprep.subr.mxu0 0.0
    %2728 = vmatpush1.xpose.msra.mxu0 0.0
    %2729 = vmatprep.subr.mxu0 0.0
    %2730 = vmatpush1.xpose.msra.mxu0 0.0
    %2731 = vmatprep.subr.mxu0 0.0
    %2732 = vmatpush1.xpose.msra.mxu0 0.0
    %2733 = vmatprep.subr.mxu0 0.0
    %2734 = vmatpush1.xpose.msra.mxu0 0.0
    %2735 = vmatprep.subr.mxu0 0.0
    %2736 = vmatpush1.xpose.msra.mxu0 0.0
    %2737 = vmatprep.subr.mxu0 0.0
    %2738 = vmatpush1.xpose.msra.mxu0 0.0
    %2739 = vmatprep.subr.mxu0 0.0
    %2740 = vmatpush1.xpose.msra.mxu0 0.0
    %2741 = vmatprep.subr.mxu0 0.0
    %2742 = vmatpush1.xpose.msra.mxu0 0.0
    %2743 = vmatprep.subr.mxu0 0.0
    %2744 = vmatpush1.xpose.msra.mxu0 0.0
    %2745 = vmatprep.subr.mxu0 0.0
    %2746 = vmatpush1.xpose.msra.mxu0 0.0
    %2747 = vmatprep.subr.mxu0 0.0
    %2748 = vmatpush1.xpose.msra.mxu0 0.0
    %2749 = vmatprep.subr.mxu0 0.0
    %2750 = vmatpush1.xpose.msra.mxu0 0.0
    %2751 = vmatprep.subr.mxu0 0.0
    %2752 = vmatpush1.xpose.msra.mxu0 0.0
    %2753 = vmatprep.subr.mxu0 0.0
    %2754 = vmatpush1.xpose.msra.mxu0 0.0
    %2755 = vmatprep.subr.mxu0 0.0
    %2756 = vmatpush1.xpose.msra.mxu0 %v2723
    %2757 = vmatprep.subr.mxu0 0.0
    %2758 = vmatpush2.xpose.msra.mxu0 0.0
    %2759 = vmatprep.subr.mxu0 0.0
    %2760 = vmatpush2.xpose.msra.mxu0 0.0
    %2761 = vmatprep.subr.mxu0 0.0
    %2762 = vmatpush2.xpose.msra.mxu0 0.0
    %2763 = vmatprep.subr.mxu0 0.0
    %2764 = vmatpush2.xpose.msra.mxu0 0.0
    %2765 = vmatprep.subr.mxu0 0.0
    %2766 = vmatpush2.xpose.msra.mxu0 0.0
    %2767 = vmatprep.subr.mxu0 0.0
    %2768 = vmatpush2.xpose.msra.mxu0 0.0
    %2769 = vmatprep.subr.mxu0 0.0
    %2770 = vmatpush2.xpose.msra.mxu0 0.0
    %2771 = vmatprep.subr.mxu0 0.0
    %2772 = vmatpush2.xpose.msra.mxu0 0.0
    %2773 = vmatprep.subr.mxu0 0.0
    %2774 = vmatpush2.xpose.msra.mxu0 0.0
    %2775 = vmatprep.subr.mxu0 0.0
    %2776 = vmatpush2.xpose.msra.mxu0 0.0
    %2777 = vmatprep.subr.mxu0 0.0
    %2778 = vmatpush2.xpose.msra.mxu0 0.0
    %2779 = vmatprep.subr.mxu0 0.0
    %2780 = vmatpush2.xpose.msra.mxu0 0.0
    %2781 = vmatprep.subr.mxu0 0.0
    %2782 = vmatpush2.xpose.msra.mxu0 0.0
    %2783 = vmatprep.subr.mxu0 0.0
    %2784 = vmatpush2.xpose.msra.mxu0 0.0
    %2785 = vmatprep.subr.mxu0 0.0
    %2786 = vmatpush2.xpose.msra.mxu0 0.0
    %2787 = vmatprep.subr.mxu0 0.0
    %2788 = vmatpush2.xpose.msra.mxu0 0.0
    %2789 = vmatprep.mubr.f32.mxu0 0.0
    %2790 = vmatmul.mubr.f32.gmra.mxu0 %v2721
    %v2791 = vpop.f32.mrf.mxu0
    %v2792 = vadd.f32 %v2553, %v2791
    %v2793 = vpop.f32.mrf.mxu0
    %2794 = vdwg.mxu0
    %v2795 = vsel %vm403, %v2792, -inf
    %2796 = vmax.xlane.f32.xlu0 %v2795
    %v2797 = vpop.xlane.xlu0 %2796
    %v2798 = vsub.f32 %v2792, %v2797
    %v2799 = vmul.f32 %v2798, 1.442695
    %v2800 = vpow.pop %v2799
    %v2801 = vsel %vm403, %v2800, 0.0
    %2802 = vadd.xlane.f32.xlu0 %v2801
    %v2803 = vpop.xlane.xlu0 %2802
    %v2804 = vrcp.pop %v2803
    %v2805 = vmul.f32 %v2800, %v2804
    %2806 = vrot.lane.b32.xlu0 %v2537, 88
    %v2807 = vpop.permute.xlu0 %2806
    %v2810 = vsel %vm403, %v2805, 0
    %2812 = vmatprep.subr.mxu0 0.0
    %2813 = vmatpush1.msra.mxu0 0.0
    %2814 = vmatprep.subr.mxu0 0.0
    %2815 = vmatpush1.msra.mxu0 0.0
    %2816 = vmatprep.subr.mxu0 0.0
    %2817 = vmatpush1.msra.mxu0 0.0
    %2818 = vmatprep.subr.mxu0 0.0
    %2819 = vmatpush1.msra.mxu0 0.0
    %2820 = vmatprep.subr.mxu0 0.0
    %2821 = vmatpush1.msra.mxu0 0.0
    %2822 = vmatprep.subr.mxu0 0.0
    %2823 = vmatpush1.msra.mxu0 0.0
    %2824 = vmatprep.subr.mxu0 0.0
    %2825 = vmatpush1.msra.mxu0 0.0
    %2826 = vmatprep.subr.mxu0 0.0
    %2827 = vmatpush1.msra.mxu0 0.0
    %2828 = vmatprep.subr.mxu0 0.0
    %2829 = vmatpush1.msra.mxu0 0.0
    %2830 = vmatprep.subr.mxu0 0.0
    %2831 = vmatpush1.msra.mxu0 0.0
    %2832 = vmatprep.subr.mxu0 0.0
    %2833 = vmatpush1.msra.mxu0 0.0
    %2834 = vmatprep.subr.mxu0 0.0
    %2835 = vmatpush1.msra.mxu0 0.0
    %2836 = vmatprep.subr.mxu0 0.0
    %2837 = vmatpush1.msra.mxu0 0.0
    %2838 = vmatprep.subr.mxu0 0.0
    %2839 = vmatpush1.msra.mxu0 0.0
    %2840 = vmatprep.subr.mxu0 0.0
    %2841 = vmatpush1.msra.mxu0 0.0
    %2842 = vmatprep.subr.mxu0 0.0
    %2843 = vmatpush1.msra.mxu0 %v2807
    %2844 = vmatprep.subr.mxu0 0.0
    %2845 = vmatpush2.msra.mxu0 0.0
    %2846 = vmatprep.subr.mxu0 0.0
    %2847 = vmatpush2.msra.mxu0 0.0
    %2848 = vmatprep.subr.mxu0 0.0
    %2849 = vmatpush2.msra.mxu0 0.0
    %2850 = vmatprep.subr.mxu0 0.0
    %2851 = vmatpush2.msra.mxu0 0.0
    %2852 = vmatprep.subr.mxu0 0.0
    %2853 = vmatpush2.msra.mxu0 0.0
    %2854 = vmatprep.subr.mxu0 0.0
    %2855 = vmatpush2.msra.mxu0 0.0
    %2856 = vmatprep.subr.mxu0 0.0
    %2857 = vmatpush2.msra.mxu0 0.0
    %2858 = vmatprep.subr.mxu0 0.0
    %2859 = vmatpush2.msra.mxu0 0.0
    %2860 = vmatprep.subr.mxu0 0.0
    %2861 = vmatpush2.msra.mxu0 0.0
    %2862 = vmatprep.subr.mxu0 0.0
    %2863 = vmatpush2.msra.mxu0 0.0
    %2864 = vmatprep.subr.mxu0 0.0
    %2865 = vmatpush2.msra.mxu0 0.0
    %2866 = vmatprep.subr.mxu0 0.0
    %2867 = vmatpush2.msra.mxu0 0.0
    %2868 = vmatprep.subr.mxu0 0.0
    %2869 = vmatpush2.msra.mxu0 0.0
    %2870 = vmatprep.subr.mxu0 0.0
    %2871 = vmatpush2.msra.mxu0 0.0
    %2872 = vmatprep.subr.mxu0 0.0
    %2873 = vmatpush2.msra.mxu0 0.0
    %2874 = vmatprep.subr.mxu0 0.0
    %2875 = vmatpush2.msra.mxu0 0.0
    %2876 = vmatprep.mubr.f32.mxu0 0.0
    %2877 = vmatmul.mubr.f32.gmra.mxu0 %v2810
    %v2878 = vpop.f32.mrf.mxu0
    %v2879 = vadd.f32 0.0, %v2878
    %v2880 = vpop.f32.mrf.mxu0
    %2881 = vdwg.mxu0
    %v2883 = vsel %vm403, %v2879, 0
    %2885 = vmatprep.subr.mxu0 0.0
    %2886 = vmatpush1.msra.mxu0 0.0
    %2887 = vmatprep.subr.mxu0 0.0
    %2888 = vmatpush1.msra.mxu0 0.0
    %2889 = vmatprep.subr.mxu0 0.0
    %2890 = vmatpush1.msra.mxu0 0.0
    %2891 = vmatprep.subr.mxu0 0.0
    %2892 = vmatpush1.msra.mxu0 0.0
    %2893 = vmatprep.subr.mxu0 0.0
    %2894 = vmatpush1.msra.mxu0 0.0
    %2895 = vmatprep.subr.mxu0 0.0
    %2896 = vmatpush1.msra.mxu0 0.0
    %2897 = vmatprep.subr.mxu0 0.0
    %2898 = vmatpush1.msra.mxu0 0.0
    %2899 = vmatprep.subr.mxu0 0.0
    %2900 = vmatpush1.msra.mxu0 0.0
    %2901 = vmatprep.subr.mxu0 0.0
    %2902 = vmatpush1.msra.mxu0 0.0
    %2903 = vmatprep.subr.mxu0 0.0
    %2904 = vmatpush1.msra.mxu0 0.0
    %2905 = vmatprep.subr.mxu0 0.0
    %2906 = vmatpush1.msra.mxu0 0.0
    %2907 = vmatprep.subr.mxu0 0.0
    %2908 = vmatpush1.msra.mxu0 0.0
    %2909 = vmatprep.subr.mxu0 0.0
    %2910 = vmatpush1.msra.mxu0 0.0
    %2911 = vmatprep.subr.mxu0 0.0
    %2912 = vmatpush1.msra.mxu0 0.0
    %2913 = vmatprep.subr.mxu0 0.0
    %2914 = vmatpush1.msra.mxu0 0.0
    %2915 = vmatprep.subr.mxu0 0.0
    %2916 = vmatpush1.msra.mxu0 %v2546
    %2917 = vmatprep.subr.mxu0 0.0
    %2918 = vmatpush2.msra.mxu0 0.0
    %2919 = vmatprep.subr.mxu0 0.0
    %2920 = vmatpush2.msra.mxu0 0.0
    %2921 = vmatprep.subr.mxu0 0.0
    %2922 = vmatpush2.msra.mxu0 0.0
    %2923 = vmatprep.subr.mxu0 0.0
    %2924 = vmatpush2.msra.mxu0 0.0
    %2925 = vmatprep.subr.mxu0 0.0
    %2926 = vmatpush2.msra.mxu0 0.0
    %2927 = vmatprep.subr.mxu0 0.0
    %2928 = vmatpush2.msra.mxu0 0.0
    %2929 = vmatprep.subr.mxu0 0.0
    %2930 = vmatpush2.msra.mxu0 0.0
    %2931 = vmatprep.subr.mxu0 0.0
    %2932 = vmatpush2.msra.mxu0 0.0
    %2933 = vmatprep.subr.mxu0 0.0
    %2934 = vmatpush2.msra.mxu0 0.0
    %2935 = vmatprep.subr.mxu0 0.0
    %2936 = vmatpush2.msra.mxu0 0.0
    %2937 = vmatprep.subr.mxu0 0.0
    %2938 = vmatpush2.msra.mxu0 0.0
    %2939 = vmatprep.subr.mxu0 0.0
    %2940 = vmatpush2.msra.mxu0 0.0
    %2941 = vmatprep.subr.mxu0 0.0
    %2942 = vmatpush2.msra.mxu0 0.0
    %2943 = vmatprep.subr.mxu0 0.0
    %2944 = vmatpush2.msra.mxu0 0.0
    %2945 = vmatprep.subr.mxu0 0.0
    %2946 = vmatpush2.msra.mxu0 0.0
    %2947 = vmatprep.subr.mxu0 0.0
    %2948 = vmatpush2.msra.mxu0 0.0
    %2949 = vmatprep.mubr.f32.mxu0 0.0
    %2950 = vmatmul.mubr.f32.gmra.mxu0 %v2883
    %v2951 = vpop.f32.mrf.mxu0
    %v2952 = vadd.f32 0.0, %v2951
    %v2953 = vpop.f32.mrf.mxu0
    %2954 = vdwg.mxu0
    %v2956 = vsel %vm403, %v2714, 0
    %2958 = vmatprep.subr.mxu0 0.0
    %2959 = vmatpush1.msra.mxu0 0.0
    %2960 = vmatprep.subr.mxu0 0.0
    %2961 = vmatpush1.msra.mxu0 0.0
    %2962 = vmatprep.subr.mxu0 0.0
    %2963 = vmatpush1.msra.mxu0 0.0
    %2964 = vmatprep.subr.mxu0 0.0
    %2965 = vmatpush1.msra.mxu0 0.0
    %2966 = vmatprep.subr.mxu0 0.0
    %2967 = vmatpush1.msra.mxu0 0.0
    %2968 = vmatprep.subr.mxu0 0.0
    %2969 = vmatpush1.msra.mxu0 0.0
    %2970 = vmatprep.subr.mxu0 0.0
    %2971 = vmatpush1.msra.mxu0 0.0
    %2972 = vmatprep.subr.mxu0 0.0
    %2973 = vmatpush1.msra.mxu0 0.0
    %2974 = vmatprep.subr.mxu0 0.0
    %2975 = vmatpush1.msra.mxu0 0.0
    %2976 = vmatprep.subr.mxu0 0.0
    %2977 = vmatpush1.msra.mxu0 0.0
    %2978 = vmatprep.subr.mxu0 0.0
    %2979 = vmatpush1.msra.mxu0 0.0
    %2980 = vmatprep.subr.mxu0 0.0
    %2981 = vmatpush1.msra.mxu0 0.0
    %2982 = vmatprep.subr.mxu0 0.0
    %2983 = vmatpush1.msra.mxu0 0.0
    %2984 = vmatprep.subr.mxu0 0.0
    %2985 = vmatpush1.msra.mxu0 0.0
    %2986 = vmatprep.subr.mxu0 0.0
    %2987 = vmatpush1.msra.mxu0 0.0
    %2988 = vmatprep.subr.mxu0 0.0
    %2989 = vmatpush1.msra.mxu0 %v2545
    %2990 = vmatprep.subr.mxu0 0.0
    %2991 = vmatpush2.msra.mxu0 0.0
    %2992 = vmatprep.subr.mxu0 0.0
    %2993 = vmatpush2.msra.mxu0 0.0
    %2994 = vmatprep.subr.mxu0 0.0
    %2995 = vmatpush2.msra.mxu0 0.0
    %2996 = vmatprep.subr.mxu0 0.0
    %2997 = vmatpush2.msra.mxu0 0.0
    %2998 = vmatprep.subr.mxu0 0.0
    %2999 = vmatpush2.msra.mxu0 0.0
    %3000 = vmatprep.subr.mxu0 0.0
    %3001 = vmatpush2.msra.mxu0 0.0
    %3002 = vmatprep.subr.mxu0 0.0
    %3003 = vmatpush2.msra.mxu0 0.0
    %3004 = vmatprep.subr.mxu0 0.0
    %3005 = vmatpush2.msra.mxu0 0.0
    %3006 = vmatprep.subr.mxu0 0.0
    %3007 = vmatpush2.msra.mxu0 0.0
    %3008 = vmatprep.subr.mxu0 0.0
    %3009 = vmatpush2.msra.mxu0 0.0
    %3010 = vmatprep.subr.mxu0 0.0
    %3011 = vmatpush2.msra.mxu0 0.0
    %3012 = vmatprep.subr.mxu0 0.0
    %3013 = vmatpush2.msra.mxu0 0.0
    %3014 = vmatprep.subr.mxu0 0.0
    %3015 = vmatpush2.msra.mxu0 0.0
    %3016 = vmatprep.subr.mxu0 0.0
    %3017 = vmatpush2.msra.mxu0 0.0
    %3018 = vmatprep.subr.mxu0 0.0
    %3019 = vmatpush2.msra.mxu0 0.0
    %3020 = vmatprep.subr.mxu0 0.0
    %3021 = vmatpush2.msra.mxu0 0.0
    %3022 = vmatprep.mubr.f32.mxu0 0.0
    %3023 = vmatmul.mubr.f32.gmra.mxu0 %v2956
    %v3024 = vpop.f32.mrf.mxu0
    %v3025 = vadd.f32 %v2952, %v3024
    %v3026 = vpop.f32.mrf.mxu0
    %3027 = vdwg.mxu0
    %3028 = vrot.lane.b32.xlu0 %v2445, 112
    %v3029 = vpop.permute.xlu0 %3028
    %3030 = vrot.lane.b32.xlu0 %v2537, 112
    %v3031 = vpop.permute.xlu0 %3030
    %v3032 = vsel %vm403, %v3029, 0
    %v3034 = vsel %vm403, %v3031, 0
    %3036 = vmatprep.subr.mxu0 0.0
    %3037 = vmatpush1.xpose.msra.mxu0 0.0
    %3038 = vmatprep.subr.mxu0 0.0
    %3039 = vmatpush1.xpose.msra.mxu0 0.0
    %3040 = vmatprep.subr.mxu0 0.0
    %3041 = vmatpush1.xpose.msra.mxu0 0.0
    %3042 = vmatprep.subr.mxu0 0.0
    %3043 = vmatpush1.xpose.msra.mxu0 0.0
    %3044 = vmatprep.subr.mxu0 0.0
    %3045 = vmatpush1.xpose.msra.mxu0 0.0
    %3046 = vmatprep.subr.mxu0 0.0
    %3047 = vmatpush1.xpose.msra.mxu0 0.0
    %3048 = vmatprep.subr.mxu0 0.0
    %3049 = vmatpush1.xpose.msra.mxu0 0.0
    %3050 = vmatprep.subr.mxu0 0.0
    %3051 = vmatpush1.xpose.msra.mxu0 0.0
    %3052 = vmatprep.subr.mxu0 0.0
    %3053 = vmatpush1.xpose.msra.mxu0 0.0
    %3054 = vmatprep.subr.mxu0 0.0
    %3055 = vmatpush1.xpose.msra.mxu0 0.0
    %3056 = vmatprep.subr.mxu0 0.0
    %3057 = vmatpush1.xpose.msra.mxu0 0.0
    %3058 = vmatprep.subr.mxu0 0.0
    %3059 = vmatpush1.xpose.msra.mxu0 0.0
    %3060 = vmatprep.subr.mxu0 0.0
    %3061 = vmatpush1.xpose.msra.mxu0 0.0
    %3062 = vmatprep.subr.mxu0 0.0
    %3063 = vmatpush1.xpose.msra.mxu0 0.0
    %3064 = vmatprep.subr.mxu0 0.0
    %3065 = vmatpush1.xpose.msra.mxu0 0.0
    %3066 = vmatprep.subr.mxu0 0.0
    %3067 = vmatpush1.xpose.msra.mxu0 %v3034
    %3068 = vmatprep.subr.mxu0 0.0
    %3069 = vmatpush2.xpose.msra.mxu0 0.0
    %3070 = vmatprep.subr.mxu0 0.0
    %3071 = vmatpush2.xpose.msra.mxu0 0.0
    %3072 = vmatprep.subr.mxu0 0.0
    %3073 = vmatpush2.xpose.msra.mxu0 0.0
    %3074 = vmatprep.subr.mxu0 0.0
    %3075 = vmatpush2.xpose.msra.mxu0 0.0
    %3076 = vmatprep.subr.mxu0 0.0
    %3077 = vmatpush2.xpose.msra.mxu0 0.0
    %3078 = vmatprep.subr.mxu0 0.0
    %3079 = vmatpush2.xpose.msra.mxu0 0.0
    %3080 = vmatprep.subr.mxu0 0.0
    %3081 = vmatpush2.xpose.msra.mxu0 0.0
    %3082 = vmatprep.subr.mxu0 0.0
    %3083 = vmatpush2.xpose.msra.mxu0 0.0
    %3084 = vmatprep.subr.mxu0 0.0
    %3085 = vmatpush2.xpose.msra.mxu0 0.0
    %3086 = vmatprep.subr.mxu0 0.0
    %3087 = vmatpush2.xpose.msra.mxu0 0.0
    %3088 = vmatprep.subr.mxu0 0.0
    %3089 = vmatpush2.xpose.msra.mxu0 0.0
    %3090 = vmatprep.subr.mxu0 0.0
    %3091 = vmatpush2.xpose.msra.mxu0 0.0
    %3092 = vmatprep.subr.mxu0 0.0
    %3093 = vmatpush2.xpose.msra.mxu0 0.0
    %3094 = vmatprep.subr.mxu0 0.0
    %3095 = vmatpush2.xpose.msra.mxu0 0.0
    %3096 = vmatprep.subr.mxu0 0.0
    %3097 = vmatpush2.xpose.msra.mxu0 0.0
    %3098 = vmatprep.subr.mxu0 0.0
    %3099 = vmatpush2.xpose.msra.mxu0 0.0
    %3100 = vmatprep.mubr.f32.mxu0 0.0
    %3101 = vmatmul.mubr.f32.gmra.mxu0 %v3032
    %v3102 = vpop.f32.mrf.mxu0
    %v3103 = vadd.f32 %v2553, %v3102
    %v3104 = vpop.f32.mrf.mxu0
    %3105 = vdwg.mxu0
    %v3106 = vsel %vm403, %v3103, -inf
    %3107 = vmax.xlane.f32.xlu0 %v3106
    %v3108 = vpop.xlane.xlu0 %3107
    %v3109 = vsub.f32 %v3103, %v3108
    %v3110 = vmul.f32 %v3109, 1.442695
    %v3111 = vpow.pop %v3110
    %v3112 = vsel %vm403, %v3111, 0.0
    %3113 = vadd.xlane.f32.xlu0 %v3112
    %v3114 = vpop.xlane.xlu0 %3113
    %v3115 = vrcp.pop %v3114
    %v3116 = vmul.f32 %v3111, %v3115
    %3117 = vrot.lane.b32.xlu0 %v2537, 80
    %v3118 = vpop.permute.xlu0 %3117
    %v3121 = vsel %vm403, %v3116, 0
    %3123 = vmatprep.subr.mxu0 0.0
    %3124 = vmatpush1.msra.mxu0 0.0
    %3125 = vmatprep.subr.mxu0 0.0
    %3126 = vmatpush1.msra.mxu0 0.0
    %3127 = vmatprep.subr.mxu0 0.0
    %3128 = vmatpush1.msra.mxu0 0.0
    %3129 = vmatprep.subr.mxu0 0.0
    %3130 = vmatpush1.msra.mxu0 0.0
    %3131 = vmatprep.subr.mxu0 0.0
    %3132 = vmatpush1.msra.mxu0 0.0
    %3133 = vmatprep.subr.mxu0 0.0
    %3134 = vmatpush1.msra.mxu0 0.0
    %3135 = vmatprep.subr.mxu0 0.0
    %3136 = vmatpush1.msra.mxu0 0.0
    %3137 = vmatprep.subr.mxu0 0.0
    %3138 = vmatpush1.msra.mxu0 0.0
    %3139 = vmatprep.subr.mxu0 0.0
    %3140 = vmatpush1.msra.mxu0 0.0
    %3141 = vmatprep.subr.mxu0 0.0
    %3142 = vmatpush1.msra.mxu0 0.0
    %3143 = vmatprep.subr.mxu0 0.0
    %3144 = vmatpush1.msra.mxu0 0.0
    %3145 = vmatprep.subr.mxu0 0.0
    %3146 = vmatpush1.msra.mxu0 0.0
    %3147 = vmatprep.subr.mxu0 0.0
    %3148 = vmatpush1.msra.mxu0 0.0
    %3149 = vmatprep.subr.mxu0 0.0
    %3150 = vmatpush1.msra.mxu0 0.0
    %3151 = vmatprep.subr.mxu0 0.0
    %3152 = vmatpush1.msra.mxu0 0.0
    %3153 = vmatprep.subr.mxu0 0.0
    %3154 = vmatpush1.msra.mxu0 %v3118
    %3155 = vmatprep.subr.mxu0 0.0
    %3156 = vmatpush2.msra.mxu0 0.0
    %3157 = vmatprep.subr.mxu0 0.0
    %3158 = vmatpush2.msra.mxu0 0.0
    %3159 = vmatprep.subr.mxu0 0.0
    %3160 = vmatpush2.msra.mxu0 0.0
    %3161 = vmatprep.subr.mxu0 0.0
    %3162 = vmatpush2.msra.mxu0 0.0
    %3163 = vmatprep.subr.mxu0 0.0
    %3164 = vmatpush2.msra.mxu0 0.0
    %3165 = vmatprep.subr.mxu0 0.0
    %3166 = vmatpush2.msra.mxu0 0.0
    %3167 = vmatprep.subr.mxu0 0.0
    %3168 = vmatpush2.msra.mxu0 0.0
    %3169 = vmatprep.subr.mxu0 0.0
    %3170 = vmatpush2.msra.mxu0 0.0
    %3171 = vmatprep.subr.mxu0 0.0
    %3172 = vmatpush2.msra.mxu0 0.0
    %3173 = vmatprep.subr.mxu0 0.0
    %3174 = vmatpush2.msra.mxu0 0.0
    %3175 = vmatprep.subr.mxu0 0.0
    %3176 = vmatpush2.msra.mxu0 0.0
    %3177 = vmatprep.subr.mxu0 0.0
    %3178 = vmatpush2.msra.mxu0 0.0
    %3179 = vmatprep.subr.mxu0 0.0
    %3180 = vmatpush2.msra.mxu0 0.0
    %3181 = vmatprep.subr.mxu0 0.0
    %3182 = vmatpush2.msra.mxu0 0.0
    %3183 = vmatprep.subr.mxu0 0.0
    %3184 = vmatpush2.msra.mxu0 0.0
    %3185 = vmatprep.subr.mxu0 0.0
    %3186 = vmatpush2.msra.mxu0 0.0
    %3187 = vmatprep.mubr.f32.mxu0 0.0
    %3188 = vmatmul.mubr.f32.gmra.mxu0 %v3121
    %v3189 = vpop.f32.mrf.mxu0
    %v3190 = vadd.f32 0.0, %v3189
    %v3191 = vpop.f32.mrf.mxu0
    %3192 = vdwg.mxu0
    %v3194 = vsel %vm403, %v3190, 0
    %3196 = vmatprep.subr.mxu0 0.0
    %3197 = vmatpush1.msra.mxu0 0.0
    %3198 = vmatprep.subr.mxu0 0.0
    %3199 = vmatpush1.msra.mxu0 0.0
    %3200 = vmatprep.subr.mxu0 0.0
    %3201 = vmatpush1.msra.mxu0 0.0
    %3202 = vmatprep.subr.mxu0 0.0
    %3203 = vmatpush1.msra.mxu0 0.0
    %3204 = vmatprep.subr.mxu0 0.0
    %3205 = vmatpush1.msra.mxu0 0.0
    %3206 = vmatprep.subr.mxu0 0.0
    %3207 = vmatpush1.msra.mxu0 0.0
    %3208 = vmatprep.subr.mxu0 0.0
    %3209 = vmatpush1.msra.mxu0 0.0
    %3210 = vmatprep.subr.mxu0 0.0
    %3211 = vmatpush1.msra.mxu0 0.0
    %3212 = vmatprep.subr.mxu0 0.0
    %3213 = vmatpush1.msra.mxu0 0.0
    %3214 = vmatprep.subr.mxu0 0.0
    %3215 = vmatpush1.msra.mxu0 0.0
    %3216 = vmatprep.subr.mxu0 0.0
    %3217 = vmatpush1.msra.mxu0 0.0
    %3218 = vmatprep.subr.mxu0 0.0
    %3219 = vmatpush1.msra.mxu0 0.0
    %3220 = vmatprep.subr.mxu0 0.0
    %3221 = vmatpush1.msra.mxu0 0.0
    %3222 = vmatprep.subr.mxu0 0.0
    %3223 = vmatpush1.msra.mxu0 0.0
    %3224 = vmatprep.subr.mxu0 0.0
    %3225 = vmatpush1.msra.mxu0 0.0
    %3226 = vmatprep.subr.mxu0 0.0
    %3227 = vmatpush1.msra.mxu0 %v2547
    %3228 = vmatprep.subr.mxu0 0.0
    %3229 = vmatpush2.msra.mxu0 0.0
    %3230 = vmatprep.subr.mxu0 0.0
    %3231 = vmatpush2.msra.mxu0 0.0
    %3232 = vmatprep.subr.mxu0 0.0
    %3233 = vmatpush2.msra.mxu0 0.0
    %3234 = vmatprep.subr.mxu0 0.0
    %3235 = vmatpush2.msra.mxu0 0.0
    %3236 = vmatprep.subr.mxu0 0.0
    %3237 = vmatpush2.msra.mxu0 0.0
    %3238 = vmatprep.subr.mxu0 0.0
    %3239 = vmatpush2.msra.mxu0 0.0
    %3240 = vmatprep.subr.mxu0 0.0
    %3241 = vmatpush2.msra.mxu0 0.0
    %3242 = vmatprep.subr.mxu0 0.0
    %3243 = vmatpush2.msra.mxu0 0.0
    %3244 = vmatprep.subr.mxu0 0.0
    %3245 = vmatpush2.msra.mxu0 0.0
    %3246 = vmatprep.subr.mxu0 0.0
    %3247 = vmatpush2.msra.mxu0 0.0
    %3248 = vmatprep.subr.mxu0 0.0
    %3249 = vmatpush2.msra.mxu0 0.0
    %3250 = vmatprep.subr.mxu0 0.0
    %3251 = vmatpush2.msra.mxu0 0.0
    %3252 = vmatprep.subr.mxu0 0.0
    %3253 = vmatpush2.msra.mxu0 0.0
    %3254 = vmatprep.subr.mxu0 0.0
    %3255 = vmatpush2.msra.mxu0 0.0
    %3256 = vmatprep.subr.mxu0 0.0
    %3257 = vmatpush2.msra.mxu0 0.0
    %3258 = vmatprep.subr.mxu0 0.0
    %3259 = vmatpush2.msra.mxu0 0.0
    %3260 = vmatprep.mubr.f32.mxu0 0.0
    %3261 = vmatmul.mubr.f32.gmra.mxu0 %v3194
    %v3262 = vpop.f32.mrf.mxu0
    %v3263 = vadd.f32 0.0, %v3262
    %v3264 = vpop.f32.mrf.mxu0
    %3265 = vdwg.mxu0
    %v3266 = vadd.f32 %v3025, %v3263
    %3267 = vrot.lane.b32.xlu0 %v2445, 104
    %v3268 = vpop.permute.xlu0 %3267
    %3269 = vrot.lane.b32.xlu0 %v2537, 104
    %v3270 = vpop.permute.xlu0 %3269
    %v3271 = vsel %vm403, %v3268, 0
    %v3273 = vsel %vm403, %v3270, 0
    %3275 = vmatprep.subr.mxu0 0.0
    %3276 = vmatpush1.xpose.msra.mxu0 0.0
    %3277 = vmatprep.subr.mxu0 0.0
    %3278 = vmatpush1.xpose.msra.mxu0 0.0
    %3279 = vmatprep.subr.mxu0 0.0
    %3280 = vmatpush1.xpose.msra.mxu0 0.0
    %3281 = vmatprep.subr.mxu0 0.0
    %3282 = vmatpush1.xpose.msra.mxu0 0.0
    %3283 = vmatprep.subr.mxu0 0.0
    %3284 = vmatpush1.xpose.msra.mxu0 0.0
    %3285 = vmatprep.subr.mxu0 0.0
    %3286 = vmatpush1.xpose.msra.mxu0 0.0
    %3287 = vmatprep.subr.mxu0 0.0
    %3288 = vmatpush1.xpose.msra.mxu0 0.0
    %3289 = vmatprep.subr.mxu0 0.0
    %3290 = vmatpush1.xpose.msra.mxu0 0.0
    %3291 = vmatprep.subr.mxu0 0.0
    %3292 = vmatpush1.xpose.msra.mxu0 0.0
    %3293 = vmatprep.subr.mxu0 0.0
    %3294 = vmatpush1.xpose.msra.mxu0 0.0
    %3295 = vmatprep.subr.mxu0 0.0
    %3296 = vmatpush1.xpose.msra.mxu0 0.0
    %3297 = vmatprep.subr.mxu0 0.0
    %3298 = vmatpush1.xpose.msra.mxu0 0.0
    %3299 = vmatprep.subr.mxu0 0.0
    %3300 = vmatpush1.xpose.msra.mxu0 0.0
    %3301 = vmatprep.subr.mxu0 0.0
    %3302 = vmatpush1.xpose.msra.mxu0 0.0
    %3303 = vmatprep.subr.mxu0 0.0
    %3304 = vmatpush1.xpose.msra.mxu0 0.0
    %3305 = vmatprep.subr.mxu0 0.0
    %3306 = vmatpush1.xpose.msra.mxu0 %v3273
    %3307 = vmatprep.subr.mxu0 0.0
    %3308 = vmatpush2.xpose.msra.mxu0 0.0
    %3309 = vmatprep.subr.mxu0 0.0
    %3310 = vmatpush2.xpose.msra.mxu0 0.0
    %3311 = vmatprep.subr.mxu0 0.0
    %3312 = vmatpush2.xpose.msra.mxu0 0.0
    %3313 = vmatprep.subr.mxu0 0.0
    %3314 = vmatpush2.xpose.msra.mxu0 0.0
    %3315 = vmatprep.subr.mxu0 0.0
    %3316 = vmatpush2.xpose.msra.mxu0 0.0
    %3317 = vmatprep.subr.mxu0 0.0
    %3318 = vmatpush2.xpose.msra.mxu0 0.0
    %3319 = vmatprep.subr.mxu0 0.0
    %3320 = vmatpush2.xpose.msra.mxu0 0.0
    %3321 = vmatprep.subr.mxu0 0.0
    %3322 = vmatpush2.xpose.msra.mxu0 0.0
    %3323 = vmatprep.subr.mxu0 0.0
    %3324 = vmatpush2.xpose.msra.mxu0 0.0
    %3325 = vmatprep.subr.mxu0 0.0
    %3326 = vmatpush2.xpose.msra.mxu0 0.0
    %3327 = vmatprep.subr.mxu0 0.0
    %3328 = vmatpush2.xpose.msra.mxu0 0.0
    %3329 = vmatprep.subr.mxu0 0.0
    %3330 = vmatpush2.xpose.msra.mxu0 0.0
    %3331 = vmatprep.subr.mxu0 0.0
    %3332 = vmatpush2.xpose.msra.mxu0 0.0
    %3333 = vmatprep.subr.mxu0 0.0
    %3334 = vmatpush2.xpose.msra.mxu0 0.0
    %3335 = vmatprep.subr.mxu0 0.0
    %3336 = vmatpush2.xpose.msra.mxu0 0.0
    %3337 = vmatprep.subr.mxu0 0.0
    %3338 = vmatpush2.xpose.msra.mxu0 0.0
    %3339 = vmatprep.mubr.f32.mxu0 0.0
    %3340 = vmatmul.mubr.f32.gmra.mxu0 %v3271
    %v3341 = vpop.f32.mrf.mxu0
    %v3342 = vadd.f32 %v2553, %v3341
    %v3343 = vpop.f32.mrf.mxu0
    %3344 = vdwg.mxu0
    %v3345 = vsel %vm403, %v3342, -inf
    %3346 = vmax.xlane.f32.xlu0 %v3345
    %v3347 = vpop.xlane.xlu0 %3346
    %v3348 = vsub.f32 %v3342, %v3347
    %v3349 = vmul.f32 %v3348, 1.442695
    %v3350 = vpow.pop %v3349
    %v3351 = vsel %vm403, %v3350, 0.0
    %3352 = vadd.xlane.f32.xlu0 %v3351
    %v3353 = vpop.xlane.xlu0 %3352
    %v3354 = vrcp.pop %v3353
    %v3355 = vmul.f32 %v3350, %v3354
    %3356 = vrot.lane.b32.xlu0 %v2537, 72
    %v3357 = vpop.permute.xlu0 %3356
    %v3360 = vsel %vm403, %v3355, 0
    %3362 = vmatprep.subr.mxu0 0.0
    %3363 = vmatpush1.msra.mxu0 0.0
    %3364 = vmatprep.subr.mxu0 0.0
    %3365 = vmatpush1.msra.mxu0 0.0
    %3366 = vmatprep.subr.mxu0 0.0
    %3367 = vmatpush1.msra.mxu0 0.0
    %3368 = vmatprep.subr.mxu0 0.0
    %3369 = vmatpush1.msra.mxu0 0.0
    %3370 = vmatprep.subr.mxu0 0.0
    %3371 = vmatpush1.msra.mxu0 0.0
    %3372 = vmatprep.subr.mxu0 0.0
    %3373 = vmatpush1.msra.mxu0 0.0
    %3374 = vmatprep.subr.mxu0 0.0
    %3375 = vmatpush1.msra.mxu0 0.0
    %3376 = vmatprep.subr.mxu0 0.0
    %3377 = vmatpush1.msra.mxu0 0.0
    %3378 = vmatprep.subr.mxu0 0.0
    %3379 = vmatpush1.msra.mxu0 0.0
    %3380 = vmatprep.subr.mxu0 0.0
    %3381 = vmatpush1.msra.mxu0 0.0
    %3382 = vmatprep.subr.mxu0 0.0
    %3383 = vmatpush1.msra.mxu0 0.0
    %3384 = vmatprep.subr.mxu0 0.0
    %3385 = vmatpush1.msra.mxu0 0.0
    %3386 = vmatprep.subr.mxu0 0.0
    %3387 = vmatpush1.msra.mxu0 0.0
    %3388 = vmatprep.subr.mxu0 0.0
    %3389 = vmatpush1.msra.mxu0 0.0
    %3390 = vmatprep.subr.mxu0 0.0
    %3391 = vmatpush1.msra.mxu0 0.0
    %3392 = vmatprep.subr.mxu0 0.0
    %3393 = vmatpush1.msra.mxu0 %v3357
    %3394 = vmatprep.subr.mxu0 0.0
    %3395 = vmatpush2.msra.mxu0 0.0
    %3396 = vmatprep.subr.mxu0 0.0
    %3397 = vmatpush2.msra.mxu0 0.0
    %3398 = vmatprep.subr.mxu0 0.0
    %3399 = vmatpush2.msra.mxu0 0.0
    %3400 = vmatprep.subr.mxu0 0.0
    %3401 = vmatpush2.msra.mxu0 0.0
    %3402 = vmatprep.subr.mxu0 0.0
    %3403 = vmatpush2.msra.mxu0 0.0
    %3404 = vmatprep.subr.mxu0 0.0
    %3405 = vmatpush2.msra.mxu0 0.0
    %3406 = vmatprep.subr.mxu0 0.0
    %3407 = vmatpush2.msra.mxu0 0.0
    %3408 = vmatprep.subr.mxu0 0.0
    %3409 = vmatpush2.msra.mxu0 0.0
    %3410 = vmatprep.subr.mxu0 0.0
    %3411 = vmatpush2.msra.mxu0 0.0
    %3412 = vmatprep.subr.mxu0 0.0
    %3413 = vmatpush2.msra.mxu0 0.0
    %3414 = vmatprep.subr.mxu0 0.0
    %3415 = vmatpush2.msra.mxu0 0.0
    %3416 = vmatprep.subr.mxu0 0.0
    %3417 = vmatpush2.msra.mxu0 0.0
    %3418 = vmatprep.subr.mxu0 0.0
    %3419 = vmatpush2.msra.mxu0 0.0
    %3420 = vmatprep.subr.mxu0 0.0
    %3421 = vmatpush2.msra.mxu0 0.0
    %3422 = vmatprep.subr.mxu0 0.0
    %3423 = vmatpush2.msra.mxu0 0.0
    %3424 = vmatprep.subr.mxu0 0.0
    %3425 = vmatpush2.msra.mxu0 0.0
    %3426 = vmatprep.mubr.f32.mxu0 0.0
    %3427 = vmatmul.mubr.f32.gmra.mxu0 %v3360
    %v3428 = vpop.f32.mrf.mxu0
    %v3429 = vadd.f32 0.0, %v3428
    %v3430 = vpop.f32.mrf.mxu0
    %3431 = vdwg.mxu0
    %v3433 = vsel %vm403, %v3429, 0
    %3435 = vmatprep.subr.mxu0 0.0
    %3436 = vmatpush1.msra.mxu0 0.0
    %3437 = vmatprep.subr.mxu0 0.0
    %3438 = vmatpush1.msra.mxu0 0.0
    %3439 = vmatprep.subr.mxu0 0.0
    %3440 = vmatpush1.msra.mxu0 0.0
    %3441 = vmatprep.subr.mxu0 0.0
    %3442 = vmatpush1.msra.mxu0 0.0
    %3443 = vmatprep.subr.mxu0 0.0
    %3444 = vmatpush1.msra.mxu0 0.0
    %3445 = vmatprep.subr.mxu0 0.0
    %3446 = vmatpush1.msra.mxu0 0.0
    %3447 = vmatprep.subr.mxu0 0.0
    %3448 = vmatpush1.msra.mxu0 0.0
    %3449 = vmatprep.subr.mxu0 0.0
    %3450 = vmatpush1.msra.mxu0 0.0
    %3451 = vmatprep.subr.mxu0 0.0
    %3452 = vmatpush1.msra.mxu0 0.0
    %3453 = vmatprep.subr.mxu0 0.0
    %3454 = vmatpush1.msra.mxu0 0.0
    %3455 = vmatprep.subr.mxu0 0.0
    %3456 = vmatpush1.msra.mxu0 0.0
    %3457 = vmatprep.subr.mxu0 0.0
    %3458 = vmatpush1.msra.mxu0 0.0
    %3459 = vmatprep.subr.mxu0 0.0
    %3460 = vmatpush1.msra.mxu0 0.0
    %3461 = vmatprep.subr.mxu0 0.0
    %3462 = vmatpush1.msra.mxu0 0.0
    %3463 = vmatprep.subr.mxu0 0.0
    %3464 = vmatpush1.msra.mxu0 0.0
    %3465 = vmatprep.subr.mxu0 0.0
    %3466 = vmatpush1.msra.mxu0 %v2548
    %3467 = vmatprep.subr.mxu0 0.0
    %3468 = vmatpush2.msra.mxu0 0.0
    %3469 = vmatprep.subr.mxu0 0.0
    %3470 = vmatpush2.msra.mxu0 0.0
    %3471 = vmatprep.subr.mxu0 0.0
    %3472 = vmatpush2.msra.mxu0 0.0
    %3473 = vmatprep.subr.mxu0 0.0
    %3474 = vmatpush2.msra.mxu0 0.0
    %3475 = vmatprep.subr.mxu0 0.0
    %3476 = vmatpush2.msra.mxu0 0.0
    %3477 = vmatprep.subr.mxu0 0.0
    %3478 = vmatpush2.msra.mxu0 0.0
    %3479 = vmatprep.subr.mxu0 0.0
    %3480 = vmatpush2.msra.mxu0 0.0
    %3481 = vmatprep.subr.mxu0 0.0
    %3482 = vmatpush2.msra.mxu0 0.0
    %3483 = vmatprep.subr.mxu0 0.0
    %3484 = vmatpush2.msra.mxu0 0.0
    %3485 = vmatprep.subr.mxu0 0.0
    %3486 = vmatpush2.msra.mxu0 0.0
    %3487 = vmatprep.subr.mxu0 0.0
    %3488 = vmatpush2.msra.mxu0 0.0
    %3489 = vmatprep.subr.mxu0 0.0
    %3490 = vmatpush2.msra.mxu0 0.0
    %3491 = vmatprep.subr.mxu0 0.0
    %3492 = vmatpush2.msra.mxu0 0.0
    %3493 = vmatprep.subr.mxu0 0.0
    %3494 = vmatpush2.msra.mxu0 0.0
    %3495 = vmatprep.subr.mxu0 0.0
    %3496 = vmatpush2.msra.mxu0 0.0
    %3497 = vmatprep.subr.mxu0 0.0
    %3498 = vmatpush2.msra.mxu0 0.0
    %3499 = vmatprep.mubr.f32.mxu0 0.0
    %3500 = vmatmul.mubr.f32.gmra.mxu0 %v3433
    %v3501 = vpop.f32.mrf.mxu0
    %v3502 = vadd.f32 0.0, %v3501
    %v3503 = vpop.f32.mrf.mxu0
    %3504 = vdwg.mxu0
    %v3505 = vadd.f32 %v3266, %v3502
    %v3506 = vlaneseq
    %v3507 = vshrl.u32 %v3506, 7
    %v3508 = vsub.s32 1, %v3507
    %v3509 = vrot.slane %v290, %v3508
    %v3511 = vsel %vm403, %v2450, 0
    %v3514 = vsel %vm403, %v2542, 0
    %3516 = vmatprep.subr.mxu0 0.0
    %3517 = vmatpush1.xpose.msra.mxu0 0.0
    %3518 = vmatprep.subr.mxu0 0.0
    %3519 = vmatpush1.xpose.msra.mxu0 0.0
    %3520 = vmatprep.subr.mxu0 0.0
    %3521 = vmatpush1.xpose.msra.mxu0 0.0
    %3522 = vmatprep.subr.mxu0 0.0
    %3523 = vmatpush1.xpose.msra.mxu0 0.0
    %3524 = vmatprep.subr.mxu0 0.0
    %3525 = vmatpush1.xpose.msra.mxu0 0.0
    %3526 = vmatprep.subr.mxu0 0.0
    %3527 = vmatpush1.xpose.msra.mxu0 0.0
    %3528 = vmatprep.subr.mxu0 0.0
    %3529 = vmatpush1.xpose.msra.mxu0 0.0
    %3530 = vmatprep.subr.mxu0 0.0
    %3531 = vmatpush1.xpose.msra.mxu0 0.0
    %3532 = vmatprep.subr.mxu0 0.0
    %3533 = vmatpush1.xpose.msra.mxu0 0.0
    %3534 = vmatprep.subr.mxu0 0.0
    %3535 = vmatpush1.xpose.msra.mxu0 0.0
    %3536 = vmatprep.subr.mxu0 0.0
    %3537 = vmatpush1.xpose.msra.mxu0 0.0
    %3538 = vmatprep.subr.mxu0 0.0
    %3539 = vmatpush1.xpose.msra.mxu0 0.0
    %3540 = vmatprep.subr.mxu0 0.0
    %3541 = vmatpush1.xpose.msra.mxu0 0.0
    %3542 = vmatprep.subr.mxu0 0.0
    %3543 = vmatpush1.xpose.msra.mxu0 0.0
    %3544 = vmatprep.subr.mxu0 0.0
    %3545 = vmatpush1.xpose.msra.mxu0 0.0
    %3546 = vmatprep.subr.mxu0 0.0
    %3547 = vmatpush1.xpose.msra.mxu0 %v3514
    %3548 = vmatprep.subr.mxu0 0.0
    %3549 = vmatpush2.xpose.msra.mxu0 0.0
    %3550 = vmatprep.subr.mxu0 0.0
    %3551 = vmatpush2.xpose.msra.mxu0 0.0
    %3552 = vmatprep.subr.mxu0 0.0
    %3553 = vmatpush2.xpose.msra.mxu0 0.0
    %3554 = vmatprep.subr.mxu0 0.0
    %3555 = vmatpush2.xpose.msra.mxu0 0.0
    %3556 = vmatprep.subr.mxu0 0.0
    %3557 = vmatpush2.xpose.msra.mxu0 0.0
    %3558 = vmatprep.subr.mxu0 0.0
    %3559 = vmatpush2.xpose.msra.mxu0 0.0
    %3560 = vmatprep.subr.mxu0 0.0
    %3561 = vmatpush2.xpose.msra.mxu0 0.0
    %3562 = vmatprep.subr.mxu0 0.0
    %3563 = vmatpush2.xpose.msra.mxu0 0.0
    %3564 = vmatprep.subr.mxu0 0.0
    %3565 = vmatpush2.xpose.msra.mxu0 0.0
    %3566 = vmatprep.subr.mxu0 0.0
    %3567 = vmatpush2.xpose.msra.mxu0 0.0
    %3568 = vmatprep.subr.mxu0 0.0
    %3569 = vmatpush2.xpose.msra.mxu0 0.0
    %3570 = vmatprep.subr.mxu0 0.0
    %3571 = vmatpush2.xpose.msra.mxu0 0.0
    %3572 = vmatprep.subr.mxu0 0.0
    %3573 = vmatpush2.xpose.msra.mxu0 0.0
    %3574 = vmatprep.subr.mxu0 0.0
    %3575 = vmatpush2.xpose.msra.mxu0 0.0
    %3576 = vmatprep.subr.mxu0 0.0
    %3577 = vmatpush2.xpose.msra.mxu0 0.0
    %3578 = vmatprep.subr.mxu0 0.0
    %3579 = vmatpush2.xpose.msra.mxu0 0.0
    %3580 = vmatprep.mubr.f32.mxu0 0.0
    %3581 = vmatmul.mubr.f32.gmra.mxu0 %v3511
    %v3582 = vpop.f32.mrf.mxu0
    %v3583 = vadd.f32 %v3509, %v3582
    %v3584 = vpop.f32.mrf.mxu0
    %3585 = vdwg.mxu0
    %v3586 = vsel %vm403, %v3583, -inf
    %3587 = vmax.xlane.f32.xlu0 %v3586
    %v3588 = vpop.xlane.xlu0 %3587
    %v3589 = vsub.f32 %v3583, %v3588
    %v3590 = vmul.f32 %v3589, 1.442695
    %v3591 = vpow.pop %v3590
    %v3592 = vsel %vm403, %v3591, 0.0
    %3593 = vadd.xlane.f32.xlu0 %v3592
    %v3594 = vpop.xlane.xlu0 %3593
    %v3595 = vrcp.pop %v3594
    %v3596 = vmul.f32 %v3591, %v3595
    %3597 = vrot.lane.b32.xlu0 %v2542, 96
    %v3598 = vpop.permute.xlu0 %3597
    %v3601 = vsel %vm403, %v3596, 0
    %3603 = vmatprep.subr.mxu0 0.0
    %3604 = vmatpush1.msra.mxu0 0.0
    %3605 = vmatprep.subr.mxu0 0.0
    %3606 = vmatpush1.msra.mxu0 0.0
    %3607 = vmatprep.subr.mxu0 0.0
    %3608 = vmatpush1.msra.mxu0 0.0
    %3609 = vmatprep.subr.mxu0 0.0
    %3610 = vmatpush1.msra.mxu0 0.0
    %3611 = vmatprep.subr.mxu0 0.0
    %3612 = vmatpush1.msra.mxu0 0.0
    %3613 = vmatprep.subr.mxu0 0.0
    %3614 = vmatpush1.msra.mxu0 0.0
    %3615 = vmatprep.subr.mxu0 0.0
    %3616 = vmatpush1.msra.mxu0 0.0
    %3617 = vmatprep.subr.mxu0 0.0
    %3618 = vmatpush1.msra.mxu0 0.0
    %3619 = vmatprep.subr.mxu0 0.0
    %3620 = vmatpush1.msra.mxu0 0.0
    %3621 = vmatprep.subr.mxu0 0.0
    %3622 = vmatpush1.msra.mxu0 0.0
    %3623 = vmatprep.subr.mxu0 0.0
    %3624 = vmatpush1.msra.mxu0 0.0
    %3625 = vmatprep.subr.mxu0 0.0
    %3626 = vmatpush1.msra.mxu0 0.0
    %3627 = vmatprep.subr.mxu0 0.0
    %3628 = vmatpush1.msra.mxu0 0.0
    %3629 = vmatprep.subr.mxu0 0.0
    %3630 = vmatpush1.msra.mxu0 0.0
    %3631 = vmatprep.subr.mxu0 0.0
    %3632 = vmatpush1.msra.mxu0 0.0
    %3633 = vmatprep.subr.mxu0 0.0
    %3634 = vmatpush1.msra.mxu0 %v3598
    %3635 = vmatprep.subr.mxu0 0.0
    %3636 = vmatpush2.msra.mxu0 0.0
    %3637 = vmatprep.subr.mxu0 0.0
    %3638 = vmatpush2.msra.mxu0 0.0
    %3639 = vmatprep.subr.mxu0 0.0
    %3640 = vmatpush2.msra.mxu0 0.0
    %3641 = vmatprep.subr.mxu0 0.0
    %3642 = vmatpush2.msra.mxu0 0.0
    %3643 = vmatprep.subr.mxu0 0.0
    %3644 = vmatpush2.msra.mxu0 0.0
    %3645 = vmatprep.subr.mxu0 0.0
    %3646 = vmatpush2.msra.mxu0 0.0
    %3647 = vmatprep.subr.mxu0 0.0
    %3648 = vmatpush2.msra.mxu0 0.0
    %3649 = vmatprep.subr.mxu0 0.0
    %3650 = vmatpush2.msra.mxu0 0.0
    %3651 = vmatprep.subr.mxu0 0.0
    %3652 = vmatpush2.msra.mxu0 0.0
    %3653 = vmatprep.subr.mxu0 0.0
    %3654 = vmatpush2.msra.mxu0 0.0
    %3655 = vmatprep.subr.mxu0 0.0
    %3656 = vmatpush2.msra.mxu0 0.0
    %3657 = vmatprep.subr.mxu0 0.0
    %3658 = vmatpush2.msra.mxu0 0.0
    %3659 = vmatprep.subr.mxu0 0.0
    %3660 = vmatpush2.msra.mxu0 0.0
    %3661 = vmatprep.subr.mxu0 0.0
    %3662 = vmatpush2.msra.mxu0 0.0
    %3663 = vmatprep.subr.mxu0 0.0
    %3664 = vmatpush2.msra.mxu0 0.0
    %3665 = vmatprep.subr.mxu0 0.0
    %3666 = vmatpush2.msra.mxu0 0.0
    %3667 = vmatprep.mubr.f32.mxu0 0.0
    %3668 = vmatmul.mubr.f32.gmra.mxu0 %v3601
    %v3669 = vpop.f32.mrf.mxu0
    %v3670 = vadd.f32 0.0, %v3669
    %v3671 = vpop.f32.mrf.mxu0
    %3672 = vdwg.mxu0
    %3673 = vrot.lane.b32.xlu0 %v2450, 120
    %v3674 = vpop.permute.xlu0 %3673
    %3675 = vrot.lane.b32.xlu0 %v2542, 120
    %v3676 = vpop.permute.xlu0 %3675
    %v3677 = vsel %vm403, %v3674, 0
    %v3679 = vsel %vm403, %v3676, 0
    %3681 = vmatprep.subr.mxu0 0.0
    %3682 = vmatpush1.xpose.msra.mxu0 0.0
    %3683 = vmatprep.subr.mxu0 0.0
    %3684 = vmatpush1.xpose.msra.mxu0 0.0
    %3685 = vmatprep.subr.mxu0 0.0
    %3686 = vmatpush1.xpose.msra.mxu0 0.0
    %3687 = vmatprep.subr.mxu0 0.0
    %3688 = vmatpush1.xpose.msra.mxu0 0.0
    %3689 = vmatprep.subr.mxu0 0.0
    %3690 = vmatpush1.xpose.msra.mxu0 0.0
    %3691 = vmatprep.subr.mxu0 0.0
    %3692 = vmatpush1.xpose.msra.mxu0 0.0
    %3693 = vmatprep.subr.mxu0 0.0
    %3694 = vmatpush1.xpose.msra.mxu0 0.0
    %3695 = vmatprep.subr.mxu0 0.0
    %3696 = vmatpush1.xpose.msra.mxu0 0.0
    %3697 = vmatprep.subr.mxu0 0.0
    %3698 = vmatpush1.xpose.msra.mxu0 0.0
    %3699 = vmatprep.subr.mxu0 0.0
    %3700 = vmatpush1.xpose.msra.mxu0 0.0
    %3701 = vmatprep.subr.mxu0 0.0
    %3702 = vmatpush1.xpose.msra.mxu0 0.0
    %3703 = vmatprep.subr.mxu0 0.0
    %3704 = vmatpush1.xpose.msra.mxu0 0.0
    %3705 = vmatprep.subr.mxu0 0.0
    %3706 = vmatpush1.xpose.msra.mxu0 0.0
    %3707 = vmatprep.subr.mxu0 0.0
    %3708 = vmatpush1.xpose.msra.mxu0 0.0
    %3709 = vmatprep.subr.mxu0 0.0
    %3710 = vmatpush1.xpose.msra.mxu0 0.0
    %3711 = vmatprep.subr.mxu0 0.0
    %3712 = vmatpush1.xpose.msra.mxu0 %v3679
    %3713 = vmatprep.subr.mxu0 0.0
    %3714 = vmatpush2.xpose.msra.mxu0 0.0
    %3715 = vmatprep.subr.mxu0 0.0
    %3716 = vmatpush2.xpose.msra.mxu0 0.0
    %3717 = vmatprep.subr.mxu0 0.0
    %3718 = vmatpush2.xpose.msra.mxu0 0.0
    %3719 = vmatprep.subr.mxu0 0.0
    %3720 = vmatpush2.xpose.msra.mxu0 0.0
    %3721 = vmatprep.subr.mxu0 0.0
    %3722 = vmatpush2.xpose.msra.mxu0 0.0
    %3723 = vmatprep.subr.mxu0 0.0
    %3724 = vmatpush2.xpose.msra.mxu0 0.0
    %3725 = vmatprep.subr.mxu0 0.0
    %3726 = vmatpush2.xpose.msra.mxu0 0.0
    %3727 = vmatprep.subr.mxu0 0.0
    %3728 = vmatpush2.xpose.msra.mxu0 0.0
    %3729 = vmatprep.subr.mxu0 0.0
    %3730 = vmatpush2.xpose.msra.mxu0 0.0
    %3731 = vmatprep.subr.mxu0 0.0
    %3732 = vmatpush2.xpose.msra.mxu0 0.0
    %3733 = vmatprep.subr.mxu0 0.0
    %3734 = vmatpush2.xpose.msra.mxu0 0.0
    %3735 = vmatprep.subr.mxu0 0.0
    %3736 = vmatpush2.xpose.msra.mxu0 0.0
    %3737 = vmatprep.subr.mxu0 0.0
    %3738 = vmatpush2.xpose.msra.mxu0 0.0
    %3739 = vmatprep.subr.mxu0 0.0
    %3740 = vmatpush2.xpose.msra.mxu0 0.0
    %3741 = vmatprep.subr.mxu0 0.0
    %3742 = vmatpush2.xpose.msra.mxu0 0.0
    %3743 = vmatprep.subr.mxu0 0.0
    %3744 = vmatpush2.xpose.msra.mxu0 0.0
    %3745 = vmatprep.mubr.f32.mxu0 0.0
    %3746 = vmatmul.mubr.f32.gmra.mxu0 %v3677
    %v3747 = vpop.f32.mrf.mxu0
    %v3748 = vadd.f32 %v3509, %v3747
    %v3749 = vpop.f32.mrf.mxu0
    %3750 = vdwg.mxu0
    %v3751 = vsel %vm403, %v3748, -inf
    %3752 = vmax.xlane.f32.xlu0 %v3751
    %v3753 = vpop.xlane.xlu0 %3752
    %v3754 = vsub.f32 %v3748, %v3753
    %v3755 = vmul.f32 %v3754, 1.442695
    %v3756 = vpow.pop %v3755
    %v3757 = vsel %vm403, %v3756, 0.0
    %3758 = vadd.xlane.f32.xlu0 %v3757
    %v3759 = vpop.xlane.xlu0 %3758
    %v3760 = vrcp.pop %v3759
    %v3761 = vmul.f32 %v3756, %v3760
    %3762 = vrot.lane.b32.xlu0 %v2542, 88
    %v3763 = vpop.permute.xlu0 %3762
    %v3766 = vsel %vm403, %v3761, 0
    %3768 = vmatprep.subr.mxu0 0.0
    %3769 = vmatpush1.msra.mxu0 0.0
    %3770 = vmatprep.subr.mxu0 0.0
    %3771 = vmatpush1.msra.mxu0 0.0
    %3772 = vmatprep.subr.mxu0 0.0
    %3773 = vmatpush1.msra.mxu0 0.0
    %3774 = vmatprep.subr.mxu0 0.0
    %3775 = vmatpush1.msra.mxu0 0.0
    %3776 = vmatprep.subr.mxu0 0.0
    %3777 = vmatpush1.msra.mxu0 0.0
    %3778 = vmatprep.subr.mxu0 0.0
    %3779 = vmatpush1.msra.mxu0 0.0
    %3780 = vmatprep.subr.mxu0 0.0
    %3781 = vmatpush1.msra.mxu0 0.0
    %3782 = vmatprep.subr.mxu0 0.0
    %3783 = vmatpush1.msra.mxu0 0.0
    %3784 = vmatprep.subr.mxu0 0.0
    %3785 = vmatpush1.msra.mxu0 0.0
    %3786 = vmatprep.subr.mxu0 0.0
    %3787 = vmatpush1.msra.mxu0 0.0
    %3788 = vmatprep.subr.mxu0 0.0
    %3789 = vmatpush1.msra.mxu0 0.0
    %3790 = vmatprep.subr.mxu0 0.0
    %3791 = vmatpush1.msra.mxu0 0.0
    %3792 = vmatprep.subr.mxu0 0.0
    %3793 = vmatpush1.msra.mxu0 0.0
    %3794 = vmatprep.subr.mxu0 0.0
    %3795 = vmatpush1.msra.mxu0 0.0
    %3796 = vmatprep.subr.mxu0 0.0
    %3797 = vmatpush1.msra.mxu0 0.0
    %3798 = vmatprep.subr.mxu0 0.0
    %3799 = vmatpush1.msra.mxu0 %v3763
    %3800 = vmatprep.subr.mxu0 0.0
    %3801 = vmatpush2.msra.mxu0 0.0
    %3802 = vmatprep.subr.mxu0 0.0
    %3803 = vmatpush2.msra.mxu0 0.0
    %3804 = vmatprep.subr.mxu0 0.0
    %3805 = vmatpush2.msra.mxu0 0.0
    %3806 = vmatprep.subr.mxu0 0.0
    %3807 = vmatpush2.msra.mxu0 0.0
    %3808 = vmatprep.subr.mxu0 0.0
    %3809 = vmatpush2.msra.mxu0 0.0
    %3810 = vmatprep.subr.mxu0 0.0
    %3811 = vmatpush2.msra.mxu0 0.0
    %3812 = vmatprep.subr.mxu0 0.0
    %3813 = vmatpush2.msra.mxu0 0.0
    %3814 = vmatprep.subr.mxu0 0.0
    %3815 = vmatpush2.msra.mxu0 0.0
    %3816 = vmatprep.subr.mxu0 0.0
    %3817 = vmatpush2.msra.mxu0 0.0
    %3818 = vmatprep.subr.mxu0 0.0
    %3819 = vmatpush2.msra.mxu0 0.0
    %3820 = vmatprep.subr.mxu0 0.0
    %3821 = vmatpush2.msra.mxu0 0.0
    %3822 = vmatprep.subr.mxu0 0.0
    %3823 = vmatpush2.msra.mxu0 0.0
    %3824 = vmatprep.subr.mxu0 0.0
    %3825 = vmatpush2.msra.mxu0 0.0
    %3826 = vmatprep.subr.mxu0 0.0
    %3827 = vmatpush2.msra.mxu0 0.0
    %3828 = vmatprep.subr.mxu0 0.0
    %3829 = vmatpush2.msra.mxu0 0.0
    %3830 = vmatprep.subr.mxu0 0.0
    %3831 = vmatpush2.msra.mxu0 0.0
    %3832 = vmatprep.mubr.f32.mxu0 0.0
    %3833 = vmatmul.mubr.f32.gmra.mxu0 %v3766
    %v3834 = vpop.f32.mrf.mxu0
    %v3835 = vadd.f32 0.0, %v3834
    %v3836 = vpop.f32.mrf.mxu0
    %3837 = vdwg.mxu0
    %v3839 = vsel %vm403, %v3835, 0
    %3841 = vmatprep.subr.mxu0 0.0
    %3842 = vmatpush1.msra.mxu0 0.0
    %3843 = vmatprep.subr.mxu0 0.0
    %3844 = vmatpush1.msra.mxu0 0.0
    %3845 = vmatprep.subr.mxu0 0.0
    %3846 = vmatpush1.msra.mxu0 0.0
    %3847 = vmatprep.subr.mxu0 0.0
    %3848 = vmatpush1.msra.mxu0 0.0
    %3849 = vmatprep.subr.mxu0 0.0
    %3850 = vmatpush1.msra.mxu0 0.0
    %3851 = vmatprep.subr.mxu0 0.0
    %3852 = vmatpush1.msra.mxu0 0.0
    %3853 = vmatprep.subr.mxu0 0.0
    %3854 = vmatpush1.msra.mxu0 0.0
    %3855 = vmatprep.subr.mxu0 0.0
    %3856 = vmatpush1.msra.mxu0 0.0
    %3857 = vmatprep.subr.mxu0 0.0
    %3858 = vmatpush1.msra.mxu0 0.0
    %3859 = vmatprep.subr.mxu0 0.0
    %3860 = vmatpush1.msra.mxu0 0.0
    %3861 = vmatprep.subr.mxu0 0.0
    %3862 = vmatpush1.msra.mxu0 0.0
    %3863 = vmatprep.subr.mxu0 0.0
    %3864 = vmatpush1.msra.mxu0 0.0
    %3865 = vmatprep.subr.mxu0 0.0
    %3866 = vmatpush1.msra.mxu0 0.0
    %3867 = vmatprep.subr.mxu0 0.0
    %3868 = vmatpush1.msra.mxu0 0.0
    %3869 = vmatprep.subr.mxu0 0.0
    %3870 = vmatpush1.msra.mxu0 0.0
    %3871 = vmatprep.subr.mxu0 0.0
    %3872 = vmatpush1.msra.mxu0 %v2546
    %3873 = vmatprep.subr.mxu0 0.0
    %3874 = vmatpush2.msra.mxu0 0.0
    %3875 = vmatprep.subr.mxu0 0.0
    %3876 = vmatpush2.msra.mxu0 0.0
    %3877 = vmatprep.subr.mxu0 0.0
    %3878 = vmatpush2.msra.mxu0 0.0
    %3879 = vmatprep.subr.mxu0 0.0
    %3880 = vmatpush2.msra.mxu0 0.0
    %3881 = vmatprep.subr.mxu0 0.0
    %3882 = vmatpush2.msra.mxu0 0.0
    %3883 = vmatprep.subr.mxu0 0.0
    %3884 = vmatpush2.msra.mxu0 0.0
    %3885 = vmatprep.subr.mxu0 0.0
    %3886 = vmatpush2.msra.mxu0 0.0
    %3887 = vmatprep.subr.mxu0 0.0
    %3888 = vmatpush2.msra.mxu0 0.0
    %3889 = vmatprep.subr.mxu0 0.0
    %3890 = vmatpush2.msra.mxu0 0.0
    %3891 = vmatprep.subr.mxu0 0.0
    %3892 = vmatpush2.msra.mxu0 0.0
    %3893 = vmatprep.subr.mxu0 0.0
    %3894 = vmatpush2.msra.mxu0 0.0
    %3895 = vmatprep.subr.mxu0 0.0
    %3896 = vmatpush2.msra.mxu0 0.0
    %3897 = vmatprep.subr.mxu0 0.0
    %3898 = vmatpush2.msra.mxu0 0.0
    %3899 = vmatprep.subr.mxu0 0.0
    %3900 = vmatpush2.msra.mxu0 0.0
    %3901 = vmatprep.subr.mxu0 0.0
    %3902 = vmatpush2.msra.mxu0 0.0
    %3903 = vmatprep.subr.mxu0 0.0
    %3904 = vmatpush2.msra.mxu0 0.0
    %3905 = vmatprep.mubr.f32.mxu0 0.0
    %3906 = vmatmul.mubr.f32.gmra.mxu0 %v3839
    %v3907 = vpop.f32.mrf.mxu0
    %v3908 = vadd.f32 0.0, %v3907
    %v3909 = vpop.f32.mrf.mxu0
    %3910 = vdwg.mxu0
    %v3912 = vsel %vm403, %v3670, 0
    %3914 = vmatprep.subr.mxu0 0.0
    %3915 = vmatpush1.msra.mxu0 0.0
    %3916 = vmatprep.subr.mxu0 0.0
    %3917 = vmatpush1.msra.mxu0 0.0
    %3918 = vmatprep.subr.mxu0 0.0
    %3919 = vmatpush1.msra.mxu0 0.0
    %3920 = vmatprep.subr.mxu0 0.0
    %3921 = vmatpush1.msra.mxu0 0.0
    %3922 = vmatprep.subr.mxu0 0.0
    %3923 = vmatpush1.msra.mxu0 0.0
    %3924 = vmatprep.subr.mxu0 0.0
    %3925 = vmatpush1.msra.mxu0 0.0
    %3926 = vmatprep.subr.mxu0 0.0
    %3927 = vmatpush1.msra.mxu0 0.0
    %3928 = vmatprep.subr.mxu0 0.0
    %3929 = vmatpush1.msra.mxu0 0.0
    %3930 = vmatprep.subr.mxu0 0.0
    %3931 = vmatpush1.msra.mxu0 0.0
    %3932 = vmatprep.subr.mxu0 0.0
    %3933 = vmatpush1.msra.mxu0 0.0
    %3934 = vmatprep.subr.mxu0 0.0
    %3935 = vmatpush1.msra.mxu0 0.0
    %3936 = vmatprep.subr.mxu0 0.0
    %3937 = vmatpush1.msra.mxu0 0.0
    %3938 = vmatprep.subr.mxu0 0.0
    %3939 = vmatpush1.msra.mxu0 0.0
    %3940 = vmatprep.subr.mxu0 0.0
    %3941 = vmatpush1.msra.mxu0 0.0
    %3942 = vmatprep.subr.mxu0 0.0
    %3943 = vmatpush1.msra.mxu0 0.0
    %3944 = vmatprep.subr.mxu0 0.0
    %3945 = vmatpush1.msra.mxu0 %v2545
    %3946 = vmatprep.subr.mxu0 0.0
    %3947 = vmatpush2.msra.mxu0 0.0
    %3948 = vmatprep.subr.mxu0 0.0
    %3949 = vmatpush2.msra.mxu0 0.0
    %3950 = vmatprep.subr.mxu0 0.0
    %3951 = vmatpush2.msra.mxu0 0.0
    %3952 = vmatprep.subr.mxu0 0.0
    %3953 = vmatpush2.msra.mxu0 0.0
    %3954 = vmatprep.subr.mxu0 0.0
    %3955 = vmatpush2.msra.mxu0 0.0
    %3956 = vmatprep.subr.mxu0 0.0
    %3957 = vmatpush2.msra.mxu0 0.0
    %3958 = vmatprep.subr.mxu0 0.0
    %3959 = vmatpush2.msra.mxu0 0.0
    %3960 = vmatprep.subr.mxu0 0.0
    %3961 = vmatpush2.msra.mxu0 0.0
    %3962 = vmatprep.subr.mxu0 0.0
    %3963 = vmatpush2.msra.mxu0 0.0
    %3964 = vmatprep.subr.mxu0 0.0
    %3965 = vmatpush2.msra.mxu0 0.0
    %3966 = vmatprep.subr.mxu0 0.0
    %3967 = vmatpush2.msra.mxu0 0.0
    %3968 = vmatprep.subr.mxu0 0.0
    %3969 = vmatpush2.msra.mxu0 0.0
    %3970 = vmatprep.subr.mxu0 0.0
    %3971 = vmatpush2.msra.mxu0 0.0
    %3972 = vmatprep.subr.mxu0 0.0
    %3973 = vmatpush2.msra.mxu0 0.0
    %3974 = vmatprep.subr.mxu0 0.0
    %3975 = vmatpush2.msra.mxu0 0.0
    %3976 = vmatprep.subr.mxu0 0.0
    %3977 = vmatpush2.msra.mxu0 0.0
    %3978 = vmatprep.mubr.f32.mxu0 0.0
    %3979 = vmatmul.mubr.f32.gmra.mxu0 %v3912
    %v3980 = vpop.f32.mrf.mxu0
    %v3981 = vadd.f32 %v3908, %v3980
    %v3982 = vpop.f32.mrf.mxu0
    %3983 = vdwg.mxu0
    %3984 = vrot.lane.b32.xlu0 %v2450, 112
    %v3985 = vpop.permute.xlu0 %3984
    %3986 = vrot.lane.b32.xlu0 %v2542, 112
    %v3987 = vpop.permute.xlu0 %3986
    %v3988 = vsel %vm403, %v3985, 0
    %v3990 = vsel %vm403, %v3987, 0
    %3992 = vmatprep.subr.mxu0 0.0
    %3993 = vmatpush1.xpose.msra.mxu0 0.0
    %3994 = vmatprep.subr.mxu0 0.0
    %3995 = vmatpush1.xpose.msra.mxu0 0.0
    %3996 = vmatprep.subr.mxu0 0.0
    %3997 = vmatpush1.xpose.msra.mxu0 0.0
    %3998 = vmatprep.subr.mxu0 0.0
    %3999 = vmatpush1.xpose.msra.mxu0 0.0
    %4000 = vmatprep.subr.mxu0 0.0
    %4001 = vmatpush1.xpose.msra.mxu0 0.0
    %4002 = vmatprep.subr.mxu0 0.0
    %4003 = vmatpush1.xpose.msra.mxu0 0.0
    %4004 = vmatprep.subr.mxu0 0.0
    %4005 = vmatpush1.xpose.msra.mxu0 0.0
    %4006 = vmatprep.subr.mxu0 0.0
    %4007 = vmatpush1.xpose.msra.mxu0 0.0
    %4008 = vmatprep.subr.mxu0 0.0
    %4009 = vmatpush1.xpose.msra.mxu0 0.0
    %4010 = vmatprep.subr.mxu0 0.0
    %4011 = vmatpush1.xpose.msra.mxu0 0.0
    %4012 = vmatprep.subr.mxu0 0.0
    %4013 = vmatpush1.xpose.msra.mxu0 0.0
    %4014 = vmatprep.subr.mxu0 0.0
    %4015 = vmatpush1.xpose.msra.mxu0 0.0
    %4016 = vmatprep.subr.mxu0 0.0
    %4017 = vmatpush1.xpose.msra.mxu0 0.0
    %4018 = vmatprep.subr.mxu0 0.0
    %4019 = vmatpush1.xpose.msra.mxu0 0.0
    %4020 = vmatprep.subr.mxu0 0.0
    %4021 = vmatpush1.xpose.msra.mxu0 0.0
    %4022 = vmatprep.subr.mxu0 0.0
    %4023 = vmatpush1.xpose.msra.mxu0 %v3990
    %4024 = vmatprep.subr.mxu0 0.0
    %4025 = vmatpush2.xpose.msra.mxu0 0.0
    %4026 = vmatprep.subr.mxu0 0.0
    %4027 = vmatpush2.xpose.msra.mxu0 0.0
    %4028 = vmatprep.subr.mxu0 0.0
    %4029 = vmatpush2.xpose.msra.mxu0 0.0
    %4030 = vmatprep.subr.mxu0 0.0
    %4031 = vmatpush2.xpose.msra.mxu0 0.0
    %4032 = vmatprep.subr.mxu0 0.0
    %4033 = vmatpush2.xpose.msra.mxu0 0.0
    %4034 = vmatprep.subr.mxu0 0.0
    %4035 = vmatpush2.xpose.msra.mxu0 0.0
    %4036 = vmatprep.subr.mxu0 0.0
    %4037 = vmatpush2.xpose.msra.mxu0 0.0
    %4038 = vmatprep.subr.mxu0 0.0
    %4039 = vmatpush2.xpose.msra.mxu0 0.0
    %4040 = vmatprep.subr.mxu0 0.0
    %4041 = vmatpush2.xpose.msra.mxu0 0.0
    %4042 = vmatprep.subr.mxu0 0.0
    %4043 = vmatpush2.xpose.msra.mxu0 0.0
    %4044 = vmatprep.subr.mxu0 0.0
    %4045 = vmatpush2.xpose.msra.mxu0 0.0
    %4046 = vmatprep.subr.mxu0 0.0
    %4047 = vmatpush2.xpose.msra.mxu0 0.0
    %4048 = vmatprep.subr.mxu0 0.0
    %4049 = vmatpush2.xpose.msra.mxu0 0.0
    %4050 = vmatprep.subr.mxu0 0.0
    %4051 = vmatpush2.xpose.msra.mxu0 0.0
    %4052 = vmatprep.subr.mxu0 0.0
    %4053 = vmatpush2.xpose.msra.mxu0 0.0
    %4054 = vmatprep.subr.mxu0 0.0
    %4055 = vmatpush2.xpose.msra.mxu0 0.0
    %4056 = vmatprep.mubr.f32.mxu0 0.0
    %4057 = vmatmul.mubr.f32.gmra.mxu0 %v3988
    %v4058 = vpop.f32.mrf.mxu0
    %v4059 = vadd.f32 %v3509, %v4058
    %v4060 = vpop.f32.mrf.mxu0
    %4061 = vdwg.mxu0
    %v4062 = vsel %vm403, %v4059, -inf
    %4063 = vmax.xlane.f32.xlu0 %v4062
    %v4064 = vpop.xlane.xlu0 %4063
    %v4065 = vsub.f32 %v4059, %v4064
    %v4066 = vmul.f32 %v4065, 1.442695
    %v4067 = vpow.pop %v4066
    %v4068 = vsel %vm403, %v4067, 0.0
    %4069 = vadd.xlane.f32.xlu0 %v4068
    %v4070 = vpop.xlane.xlu0 %4069
    %v4071 = vrcp.pop %v4070
    %v4072 = vmul.f32 %v4067, %v4071
    %4073 = vrot.lane.b32.xlu0 %v2542, 80
    %v4074 = vpop.permute.xlu0 %4073
    %v4077 = vsel %vm403, %v4072, 0
    %4079 = vmatprep.subr.mxu0 0.0
    %4080 = vmatpush1.msra.mxu0 0.0
    %4081 = vmatprep.subr.mxu0 0.0
    %4082 = vmatpush1.msra.mxu0 0.0
    %4083 = vmatprep.subr.mxu0 0.0
    %4084 = vmatpush1.msra.mxu0 0.0
    %4085 = vmatprep.subr.mxu0 0.0
    %4086 = vmatpush1.msra.mxu0 0.0
    %4087 = vmatprep.subr.mxu0 0.0
    %4088 = vmatpush1.msra.mxu0 0.0
    %4089 = vmatprep.subr.mxu0 0.0
    %4090 = vmatpush1.msra.mxu0 0.0
    %4091 = vmatprep.subr.mxu0 0.0
    %4092 = vmatpush1.msra.mxu0 0.0
    %4093 = vmatprep.subr.mxu0 0.0
    %4094 = vmatpush1.msra.mxu0 0.0
    %4095 = vmatprep.subr.mxu0 0.0
    %4096 = vmatpush1.msra.mxu0 0.0
    %4097 = vmatprep.subr.mxu0 0.0
    %4098 = vmatpush1.msra.mxu0 0.0
    %4099 = vmatprep.subr.mxu0 0.0
    %4100 = vmatpush1.msra.mxu0 0.0
    %4101 = vmatprep.subr.mxu0 0.0
    %4102 = vmatpush1.msra.mxu0 0.0
    %4103 = vmatprep.subr.mxu0 0.0
    %4104 = vmatpush1.msra.mxu0 0.0
    %4105 = vmatprep.subr.mxu0 0.0
    %4106 = vmatpush1.msra.mxu0 0.0
    %4107 = vmatprep.subr.mxu0 0.0
    %4108 = vmatpush1.msra.mxu0 0.0
    %4109 = vmatprep.subr.mxu0 0.0
    %4110 = vmatpush1.msra.mxu0 %v4074
    %4111 = vmatprep.subr.mxu0 0.0
    %4112 = vmatpush2.msra.mxu0 0.0
    %4113 = vmatprep.subr.mxu0 0.0
    %4114 = vmatpush2.msra.mxu0 0.0
    %4115 = vmatprep.subr.mxu0 0.0
    %4116 = vmatpush2.msra.mxu0 0.0
    %4117 = vmatprep.subr.mxu0 0.0
    %4118 = vmatpush2.msra.mxu0 0.0
    %4119 = vmatprep.subr.mxu0 0.0
    %4120 = vmatpush2.msra.mxu0 0.0
    %4121 = vmatprep.subr.mxu0 0.0
    %4122 = vmatpush2.msra.mxu0 0.0
    %4123 = vmatprep.subr.mxu0 0.0
    %4124 = vmatpush2.msra.mxu0 0.0
    %4125 = vmatprep.subr.mxu0 0.0
    %4126 = vmatpush2.msra.mxu0 0.0
    %4127 = vmatprep.subr.mxu0 0.0
    %4128 = vmatpush2.msra.mxu0 0.0
    %4129 = vmatprep.subr.mxu0 0.0
    %4130 = vmatpush2.msra.mxu0 0.0
    %4131 = vmatprep.subr.mxu0 0.0
    %4132 = vmatpush2.msra.mxu0 0.0
    %4133 = vmatprep.subr.mxu0 0.0
    %4134 = vmatpush2.msra.mxu0 0.0
    %4135 = vmatprep.subr.mxu0 0.0
    %4136 = vmatpush2.msra.mxu0 0.0
    %4137 = vmatprep.subr.mxu0 0.0
    %4138 = vmatpush2.msra.mxu0 0.0
    %4139 = vmatprep.subr.mxu0 0.0
    %4140 = vmatpush2.msra.mxu0 0.0
    %4141 = vmatprep.subr.mxu0 0.0
    %4142 = vmatpush2.msra.mxu0 0.0
    %4143 = vmatprep.mubr.f32.mxu0 0.0
    %4144 = vmatmul.mubr.f32.gmra.mxu0 %v4077
    %v4145 = vpop.f32.mrf.mxu0
    %v4146 = vadd.f32 0.0, %v4145
    %v4147 = vpop.f32.mrf.mxu0
    %4148 = vdwg.mxu0
    %v4150 = vsel %vm403, %v4146, 0
    %4152 = vmatprep.subr.mxu0 0.0
    %4153 = vmatpush1.msra.mxu0 0.0
    %4154 = vmatprep.subr.mxu0 0.0
    %4155 = vmatpush1.msra.mxu0 0.0
    %4156 = vmatprep.subr.mxu0 0.0
    %4157 = vmatpush1.msra.mxu0 0.0
    %4158 = vmatprep.subr.mxu0 0.0
    %4159 = vmatpush1.msra.mxu0 0.0
    %4160 = vmatprep.subr.mxu0 0.0
    %4161 = vmatpush1.msra.mxu0 0.0
    %4162 = vmatprep.subr.mxu0 0.0
    %4163 = vmatpush1.msra.mxu0 0.0
    %4164 = vmatprep.subr.mxu0 0.0
    %4165 = vmatpush1.msra.mxu0 0.0
    %4166 = vmatprep.subr.mxu0 0.0
    %4167 = vmatpush1.msra.mxu0 0.0
    %4168 = vmatprep.subr.mxu0 0.0
    %4169 = vmatpush1.msra.mxu0 0.0
    %4170 = vmatprep.subr.mxu0 0.0
    %4171 = vmatpush1.msra.mxu0 0.0
    %4172 = vmatprep.subr.mxu0 0.0
    %4173 = vmatpush1.msra.mxu0 0.0
    %4174 = vmatprep.subr.mxu0 0.0
    %4175 = vmatpush1.msra.mxu0 0.0
    %4176 = vmatprep.subr.mxu0 0.0
    %4177 = vmatpush1.msra.mxu0 0.0
    %4178 = vmatprep.subr.mxu0 0.0
    %4179 = vmatpush1.msra.mxu0 0.0
    %4180 = vmatprep.subr.mxu0 0.0
    %4181 = vmatpush1.msra.mxu0 0.0
    %4182 = vmatprep.subr.mxu0 0.0
    %4183 = vmatpush1.msra.mxu0 %v2547
    %4184 = vmatprep.subr.mxu0 0.0
    %4185 = vmatpush2.msra.mxu0 0.0
    %4186 = vmatprep.subr.mxu0 0.0
    %4187 = vmatpush2.msra.mxu0 0.0
    %4188 = vmatprep.subr.mxu0 0.0
    %4189 = vmatpush2.msra.mxu0 0.0
    %4190 = vmatprep.subr.mxu0 0.0
    %4191 = vmatpush2.msra.mxu0 0.0
    %4192 = vmatprep.subr.mxu0 0.0
    %4193 = vmatpush2.msra.mxu0 0.0
    %4194 = vmatprep.subr.mxu0 0.0
    %4195 = vmatpush2.msra.mxu0 0.0
    %4196 = vmatprep.subr.mxu0 0.0
    %4197 = vmatpush2.msra.mxu0 0.0
    %4198 = vmatprep.subr.mxu0 0.0
    %4199 = vmatpush2.msra.mxu0 0.0
    %4200 = vmatprep.subr.mxu0 0.0
    %4201 = vmatpush2.msra.mxu0 0.0
    %4202 = vmatprep.subr.mxu0 0.0
    %4203 = vmatpush2.msra.mxu0 0.0
    %4204 = vmatprep.subr.mxu0 0.0
    %4205 = vmatpush2.msra.mxu0 0.0
    %4206 = vmatprep.subr.mxu0 0.0
    %4207 = vmatpush2.msra.mxu0 0.0
    %4208 = vmatprep.subr.mxu0 0.0
    %4209 = vmatpush2.msra.mxu0 0.0
    %4210 = vmatprep.subr.mxu0 0.0
    %4211 = vmatpush2.msra.mxu0 0.0
    %4212 = vmatprep.subr.mxu0 0.0
    %4213 = vmatpush2.msra.mxu0 0.0
    %4214 = vmatprep.subr.mxu0 0.0
    %4215 = vmatpush2.msra.mxu0 0.0
    %4216 = vmatprep.mubr.f32.mxu0 0.0
    %4217 = vmatmul.mubr.f32.gmra.mxu0 %v4150
    %v4218 = vpop.f32.mrf.mxu0
    %v4219 = vadd.f32 0.0, %v4218
    %v4220 = vpop.f32.mrf.mxu0
    %4221 = vdwg.mxu0
    %v4222 = vadd.f32 %v3981, %v4219
    %4223 = vrot.lane.b32.xlu0 %v2450, 104
    %v4224 = vpop.permute.xlu0 %4223
    %4225 = vrot.lane.b32.xlu0 %v2542, 104
    %v4226 = vpop.permute.xlu0 %4225
    %v4227 = vsel %vm403, %v4224, 0
    %v4229 = vsel %vm403, %v4226, 0
    %4231 = vmatprep.subr.mxu0 0.0
    %4232 = vmatpush1.xpose.msra.mxu0 0.0
    %4233 = vmatprep.subr.mxu0 0.0
    %4234 = vmatpush1.xpose.msra.mxu0 0.0
    %4235 = vmatprep.subr.mxu0 0.0
    %4236 = vmatpush1.xpose.msra.mxu0 0.0
    %4237 = vmatprep.subr.mxu0 0.0
    %4238 = vmatpush1.xpose.msra.mxu0 0.0
    %4239 = vmatprep.subr.mxu0 0.0
    %4240 = vmatpush1.xpose.msra.mxu0 0.0
    %4241 = vmatprep.subr.mxu0 0.0
    %4242 = vmatpush1.xpose.msra.mxu0 0.0
    %4243 = vmatprep.subr.mxu0 0.0
    %4244 = vmatpush1.xpose.msra.mxu0 0.0
    %4245 = vmatprep.subr.mxu0 0.0
    %4246 = vmatpush1.xpose.msra.mxu0 0.0
    %4247 = vmatprep.subr.mxu0 0.0
    %4248 = vmatpush1.xpose.msra.mxu0 0.0
    %4249 = vmatprep.subr.mxu0 0.0
    %4250 = vmatpush1.xpose.msra.mxu0 0.0
    %4251 = vmatprep.subr.mxu0 0.0
    %4252 = vmatpush1.xpose.msra.mxu0 0.0
    %4253 = vmatprep.subr.mxu0 0.0
    %4254 = vmatpush1.xpose.msra.mxu0 0.0
    %4255 = vmatprep.subr.mxu0 0.0
    %4256 = vmatpush1.xpose.msra.mxu0 0.0
    %4257 = vmatprep.subr.mxu0 0.0
    %4258 = vmatpush1.xpose.msra.mxu0 0.0
    %4259 = vmatprep.subr.mxu0 0.0
    %4260 = vmatpush1.xpose.msra.mxu0 0.0
    %4261 = vmatprep.subr.mxu0 0.0
    %4262 = vmatpush1.xpose.msra.mxu0 %v4229
    %4263 = vmatprep.subr.mxu0 0.0
    %4264 = vmatpush2.xpose.msra.mxu0 0.0
    %4265 = vmatprep.subr.mxu0 0.0
    %4266 = vmatpush2.xpose.msra.mxu0 0.0
    %4267 = vmatprep.subr.mxu0 0.0
    %4268 = vmatpush2.xpose.msra.mxu0 0.0
    %4269 = vmatprep.subr.mxu0 0.0
    %4270 = vmatpush2.xpose.msra.mxu0 0.0
    %4271 = vmatprep.subr.mxu0 0.0
    %4272 = vmatpush2.xpose.msra.mxu0 0.0
    %4273 = vmatprep.subr.mxu0 0.0
    %4274 = vmatpush2.xpose.msra.mxu0 0.0
    %4275 = vmatprep.subr.mxu0 0.0
    %4276 = vmatpush2.xpose.msra.mxu0 0.0
    %4277 = vmatprep.subr.mxu0 0.0
    %4278 = vmatpush2.xpose.msra.mxu0 0.0
    %4279 = vmatprep.subr.mxu0 0.0
    %4280 = vmatpush2.xpose.msra.mxu0 0.0
    %4281 = vmatprep.subr.mxu0 0.0
    %4282 = vmatpush2.xpose.msra.mxu0 0.0
    %4283 = vmatprep.subr.mxu0 0.0
    %4284 = vmatpush2.xpose.msra.mxu0 0.0
    %4285 = vmatprep.subr.mxu0 0.0
    %4286 = vmatpush2.xpose.msra.mxu0 0.0
    %4287 = vmatprep.subr.mxu0 0.0
    %4288 = vmatpush2.xpose.msra.mxu0 0.0
    %4289 = vmatprep.subr.mxu0 0.0
    %4290 = vmatpush2.xpose.msra.mxu0 0.0
    %4291 = vmatprep.subr.mxu0 0.0
    %4292 = vmatpush2.xpose.msra.mxu0 0.0
    %4293 = vmatprep.subr.mxu0 0.0
    %4294 = vmatpush2.xpose.msra.mxu0 0.0
    %4295 = vmatprep.mubr.f32.mxu0 0.0
    %4296 = vmatmul.mubr.f32.gmra.mxu0 %v4227
    %v4297 = vpop.f32.mrf.mxu0
    %v4298 = vadd.f32 %v3509, %v4297
    %v4299 = vpop.f32.mrf.mxu0
    %4300 = vdwg.mxu0
    %v4301 = vsel %vm403, %v4298, -inf
    %4302 = vmax.xlane.f32.xlu0 %v4301
    %v4303 = vpop.xlane.xlu0 %4302
    %v4304 = vsub.f32 %v4298, %v4303
    %v4305 = vmul.f32 %v4304, 1.442695
    %v4306 = vpow.pop %v4305
    %v4307 = vsel %vm403, %v4306, 0.0
    %4308 = vadd.xlane.f32.xlu0 %v4307
    %v4309 = vpop.xlane.xlu0 %4308
    %v4310 = vrcp.pop %v4309
    %v4311 = vmul.f32 %v4306, %v4310
    %4312 = vrot.lane.b32.xlu0 %v2542, 72
    %v4313 = vpop.permute.xlu0 %4312
    %v4316 = vsel %vm403, %v4311, 0
    %4318 = vmatprep.subr.mxu0 0.0
    %4319 = vmatpush1.msra.mxu0 0.0
    %4320 = vmatprep.subr.mxu0 0.0
    %4321 = vmatpush1.msra.mxu0 0.0
    %4322 = vmatprep.subr.mxu0 0.0
    %4323 = vmatpush1.msra.mxu0 0.0
    %4324 = vmatprep.subr.mxu0 0.0
    %4325 = vmatpush1.msra.mxu0 0.0
    %4326 = vmatprep.subr.mxu0 0.0
    %4327 = vmatpush1.msra.mxu0 0.0
    %4328 = vmatprep.subr.mxu0 0.0
    %4329 = vmatpush1.msra.mxu0 0.0
    %4330 = vmatprep.subr.mxu0 0.0
    %4331 = vmatpush1.msra.mxu0 0.0
    %4332 = vmatprep.subr.mxu0 0.0
    %4333 = vmatpush1.msra.mxu0 0.0
    %4334 = vmatprep.subr.mxu0 0.0
    %4335 = vmatpush1.msra.mxu0 0.0
    %4336 = vmatprep.subr.mxu0 0.0
    %4337 = vmatpush1.msra.mxu0 0.0
    %4338 = vmatprep.subr.mxu0 0.0
    %4339 = vmatpush1.msra.mxu0 0.0
    %4340 = vmatprep.subr.mxu0 0.0
    %4341 = vmatpush1.msra.mxu0 0.0
    %4342 = vmatprep.subr.mxu0 0.0
    %4343 = vmatpush1.msra.mxu0 0.0
    %4344 = vmatprep.subr.mxu0 0.0
    %4345 = vmatpush1.msra.mxu0 0.0
    %4346 = vmatprep.subr.mxu0 0.0
    %4347 = vmatpush1.msra.mxu0 0.0
    %4348 = vmatprep.subr.mxu0 0.0
    %4349 = vmatpush1.msra.mxu0 %v4313
    %4350 = vmatprep.subr.mxu0 0.0
    %4351 = vmatpush2.msra.mxu0 0.0
    %4352 = vmatprep.subr.mxu0 0.0
    %4353 = vmatpush2.msra.mxu0 0.0
    %4354 = vmatprep.subr.mxu0 0.0
    %4355 = vmatpush2.msra.mxu0 0.0
    %4356 = vmatprep.subr.mxu0 0.0
    %4357 = vmatpush2.msra.mxu0 0.0
    %4358 = vmatprep.subr.mxu0 0.0
    %4359 = vmatpush2.msra.mxu0 0.0
    %4360 = vmatprep.subr.mxu0 0.0
    %4361 = vmatpush2.msra.mxu0 0.0
    %4362 = vmatprep.subr.mxu0 0.0
    %4363 = vmatpush2.msra.mxu0 0.0
    %4364 = vmatprep.subr.mxu0 0.0
    %4365 = vmatpush2.msra.mxu0 0.0
    %4366 = vmatprep.subr.mxu0 0.0
    %4367 = vmatpush2.msra.mxu0 0.0
    %4368 = vmatprep.subr.mxu0 0.0
    %4369 = vmatpush2.msra.mxu0 0.0
    %4370 = vmatprep.subr.mxu0 0.0
    %4371 = vmatpush2.msra.mxu0 0.0
    %4372 = vmatprep.subr.mxu0 0.0
    %4373 = vmatpush2.msra.mxu0 0.0
    %4374 = vmatprep.subr.mxu0 0.0
    %4375 = vmatpush2.msra.mxu0 0.0
    %4376 = vmatprep.subr.mxu0 0.0
    %4377 = vmatpush2.msra.mxu0 0.0
    %4378 = vmatprep.subr.mxu0 0.0
    %4379 = vmatpush2.msra.mxu0 0.0
    %4380 = vmatprep.subr.mxu0 0.0
    %4381 = vmatpush2.msra.mxu0 0.0
    %4382 = vmatprep.mubr.f32.mxu0 0.0
    %4383 = vmatmul.mubr.f32.gmra.mxu0 %v4316
    %v4384 = vpop.f32.mrf.mxu0
    %v4385 = vadd.f32 0.0, %v4384
    %v4386 = vpop.f32.mrf.mxu0
    %4387 = vdwg.mxu0
    %v4389 = vsel %vm403, %v4385, 0
    %4391 = vmatprep.subr.mxu0 0.0
    %4392 = vmatpush1.msra.mxu0 0.0
    %4393 = vmatprep.subr.mxu0 0.0
    %4394 = vmatpush1.msra.mxu0 0.0
    %4395 = vmatprep.subr.mxu0 0.0
    %4396 = vmatpush1.msra.mxu0 0.0
    %4397 = vmatprep.subr.mxu0 0.0
    %4398 = vmatpush1.msra.mxu0 0.0
    %4399 = vmatprep.subr.mxu0 0.0
    %4400 = vmatpush1.msra.mxu0 0.0
    %4401 = vmatprep.subr.mxu0 0.0
    %4402 = vmatpush1.msra.mxu0 0.0
    %4403 = vmatprep.subr.mxu0 0.0
    %4404 = vmatpush1.msra.mxu0 0.0
    %4405 = vmatprep.subr.mxu0 0.0
    %4406 = vmatpush1.msra.mxu0 0.0
    %4407 = vmatprep.subr.mxu0 0.0
    %4408 = vmatpush1.msra.mxu0 0.0
    %4409 = vmatprep.subr.mxu0 0.0
    %4410 = vmatpush1.msra.mxu0 0.0
    %4411 = vmatprep.subr.mxu0 0.0
    %4412 = vmatpush1.msra.mxu0 0.0
    %4413 = vmatprep.subr.mxu0 0.0
    %4414 = vmatpush1.msra.mxu0 0.0
    %4415 = vmatprep.subr.mxu0 0.0
    %4416 = vmatpush1.msra.mxu0 0.0
    %4417 = vmatprep.subr.mxu0 0.0
    %4418 = vmatpush1.msra.mxu0 0.0
    %4419 = vmatprep.subr.mxu0 0.0
    %4420 = vmatpush1.msra.mxu0 0.0
    %4421 = vmatprep.subr.mxu0 0.0
    %4422 = vmatpush1.msra.mxu0 %v2548
    %4423 = vmatprep.subr.mxu0 0.0
    %4424 = vmatpush2.msra.mxu0 0.0
    %4425 = vmatprep.subr.mxu0 0.0
    %4426 = vmatpush2.msra.mxu0 0.0
    %4427 = vmatprep.subr.mxu0 0.0
    %4428 = vmatpush2.msra.mxu0 0.0
    %4429 = vmatprep.subr.mxu0 0.0
    %4430 = vmatpush2.msra.mxu0 0.0
    %4431 = vmatprep.subr.mxu0 0.0
    %4432 = vmatpush2.msra.mxu0 0.0
    %4433 = vmatprep.subr.mxu0 0.0
    %4434 = vmatpush2.msra.mxu0 0.0
    %4435 = vmatprep.subr.mxu0 0.0
    %4436 = vmatpush2.msra.mxu0 0.0
    %4437 = vmatprep.subr.mxu0 0.0
    %4438 = vmatpush2.msra.mxu0 0.0
    %4439 = vmatprep.subr.mxu0 0.0
    %4440 = vmatpush2.msra.mxu0 0.0
    %4441 = vmatprep.subr.mxu0 0.0
    %4442 = vmatpush2.msra.mxu0 0.0
    %4443 = vmatprep.subr.mxu0 0.0
    %4444 = vmatpush2.msra.mxu0 0.0
    %4445 = vmatprep.subr.mxu0 0.0
    %4446 = vmatpush2.msra.mxu0 0.0
    %4447 = vmatprep.subr.mxu0 0.0
    %4448 = vmatpush2.msra.mxu0 0.0
    %4449 = vmatprep.subr.mxu0 0.0
    %4450 = vmatpush2.msra.mxu0 0.0
    %4451 = vmatprep.subr.mxu0 0.0
    %4452 = vmatpush2.msra.mxu0 0.0
    %4453 = vmatprep.subr.mxu0 0.0
    %4454 = vmatpush2.msra.mxu0 0.0
    %4455 = vmatprep.mubr.f32.mxu0 0.0
    %4456 = vmatmul.mubr.f32.gmra.mxu0 %v4389
    %v4457 = vpop.f32.mrf.mxu0
    %v4458 = vadd.f32 0.0, %v4457
    %v4459 = vpop.f32.mrf.mxu0
    %4460 = vdwg.mxu0
    %v4461 = vadd.f32 %v4222, %v4458
    %v4463 = vlaneseq
    %v4464 = vshrl.u32 %v4463, 7
    %v4465 = vsub.s32 0, %v4464
    %v4466 = vrot.slane %v2549, %v4465
    %v4468 = vadd.f32 %v3505, %v4466
    %v4469 = vadd.f32 %v4461, %v4466
    %v4470 = vadd.f32 %v2359, %v4468
    %v4471 = vadd.f32 %v2360, %v4469
    %v4472 = vld [vmem:[%s41] sm:$0x1]
    %v4473 = vld [vmem:[%s43] sm:$0x1]
    %v4474 = vsel %vm241, %v4470, 0.0
    %4475 = vadd.xlane.f32.xlu0 %v4474
    %v4476 = vpop.xlane.xlu0 %4475
    %v4477 = vsel %vm241, %v4471, 0.0
    %4478 = vadd.xlane.f32.xlu0 %v4477
    %v4479 = vpop.xlane.xlu0 %4478
    %v4480 = vmul.f32 %v4476, %v248
    %v4481 = vmul.f32 %v4479, %v248
    %v4482 = vsub.f32 %v4470, %v4480
    %v4483 = vsub.f32 %v4471, %v4481
    %v4484 = vmul.f32 %v4482, %v4482
    %v4485 = vmul.f32 %v4483, %v4483
    %v4486 = vsel %vm241, %v4484, 0.0
    %4487 = vadd.xlane.f32.xlu0 %v4486
    %v4488 = vpop.xlane.xlu0 %4487
    %v4489 = vsel %vm241, %v4485, 0.0
    %4490 = vadd.xlane.f32.xlu0 %v4489
    %v4491 = vpop.xlane.xlu0 %4490
    %v4492 = vmul.f32 %v4488, %v248
    %v4493 = vmul.f32 %v4491, %v248
    %v4494 = vadd.f32 %v4492, 1e-05
    %v4495 = vadd.f32 %v4493, 1e-05
    %v4496 = vrsqrt.pop %v4494
    %v4497 = vrsqrt.pop %v4495
    %v4498 = vmul.f32 %v4482, %v4496
    %v4499 = vmul.f32 %v4483, %v4497
    %v4501 = vlaneseq
    %v4502 = vshrl.u32 %v4501, 7
    %v4503 = vsub.s32 0, %v4502
    %v4504 = vrot.slane %v4472, %v4503
    %v4506 = vmul.f32 %v4498, %v4504
    %v4507 = vmul.f32 %v4499, %v4504
    %v4509 = vlaneseq
    %v4510 = vshrl.u32 %v4509, 7
    %v4511 = vsub.s32 0, %v4510
    %v4512 = vrot.slane %v4473, %v4511
    %v4514 = vadd.f32 %v4506, %v4512
    %v4515 = vadd.f32 %v4507, %v4512
    %v4516 = vld [vmem:[%s45] sm:$0xff]
    %v4517 = vld [vmem:[%s45 + $0x8] sm:$0xff]
    %v4518 = vld [vmem:[%s45 + $0x10] sm:$0xff]
    %v4519 = vld [vmem:[%s45 + $0x18] sm:$0xff]
    %v4520 = vld [vmem:[%s47] sm:$0x1]
    %v4522 = vlaneseq
    %v4523 = vshrl.u32 %v4522, 7
    %v4524 = vsub.s32 0, %v4523
    %v4525 = vrot.slane %v4520, %v4524
    %v4528 = vsel %vm241, %v4514, 0
    %v4531 = vsel %vm241, %v4515, 0
    %4533 = vmatprep.subr.mxu0 0.0
    %4534 = vmatpush1.msra.mxu0 0.0
    %4535 = vmatprep.subr.mxu0 0.0
    %4536 = vmatpush1.msra.mxu0 0.0
    %4537 = vmatprep.subr.mxu0 0.0
    %4538 = vmatpush1.msra.mxu0 0.0
    %4539 = vmatprep.subr.mxu0 0.0
    %4540 = vmatpush1.msra.mxu0 0.0
    %4541 = vmatprep.subr.mxu0 0.0
    %4542 = vmatpush1.msra.mxu0 0.0
    %4543 = vmatprep.subr.mxu0 0.0
    %4544 = vmatpush1.msra.mxu0 0.0
    %4545 = vmatprep.subr.mxu0 0.0
    %4546 = vmatpush1.msra.mxu0 0.0
    %4547 = vmatprep.subr.mxu0 0.0
    %4548 = vmatpush1.msra.mxu0 0.0
    %4549 = vmatprep.subr.mxu0 0.0
    %4550 = vmatpush1.msra.mxu0 0.0
    %4551 = vmatprep.subr.mxu0 0.0
    %4552 = vmatpush1.msra.mxu0 0.0
    %4553 = vmatprep.subr.mxu0 0.0
    %4554 = vmatpush1.msra.mxu0 0.0
    %4555 = vmatprep.subr.mxu0 0.0
    %4556 = vmatpush1.msra.mxu0 0.0
    %4557 = vmatprep.subr.mxu0 0.0
    %4558 = vmatpush1.msra.mxu0 %v4519
    %4559 = vmatprep.subr.mxu0 0.0
    %4560 = vmatpush1.msra.mxu0 %v4518
    %4561 = vmatprep.subr.mxu0 0.0
    %4562 = vmatpush1.msra.mxu0 %v4517
    %4563 = vmatprep.subr.mxu0 0.0
    %4564 = vmatpush1.msra.mxu0 %v4516
    %4565 = vmatprep.subr.mxu0 0.0
    %4566 = vmatpush2.msra.mxu0 0.0
    %4567 = vmatprep.subr.mxu0 0.0
    %4568 = vmatpush2.msra.mxu0 0.0
    %4569 = vmatprep.subr.mxu0 0.0
    %4570 = vmatpush2.msra.mxu0 0.0
    %4571 = vmatprep.subr.mxu0 0.0
    %4572 = vmatpush2.msra.mxu0 0.0
    %4573 = vmatprep.subr.mxu0 0.0
    %4574 = vmatpush2.msra.mxu0 0.0
    %4575 = vmatprep.subr.mxu0 0.0
    %4576 = vmatpush2.msra.mxu0 0.0
    %4577 = vmatprep.subr.mxu0 0.0
    %4578 = vmatpush2.msra.mxu0 0.0
    %4579 = vmatprep.subr.mxu0 0.0
    %4580 = vmatpush2.msra.mxu0 0.0
    %4581 = vmatprep.subr.mxu0 0.0
    %4582 = vmatpush2.msra.mxu0 0.0
    %4583 = vmatprep.subr.mxu0 0.0
    %4584 = vmatpush2.msra.mxu0 0.0
    %4585 = vmatprep.subr.mxu0 0.0
    %4586 = vmatpush2.msra.mxu0 0.0
    %4587 = vmatprep.subr.mxu0 0.0
    %4588 = vmatpush2.msra.mxu0 0.0
    %4589 = vmatprep.subr.mxu0 0.0
    %4590 = vmatpush2.msra.mxu0 0.0
    %4591 = vmatprep.subr.mxu0 0.0
    %4592 = vmatpush2.msra.mxu0 0.0
    %4593 = vmatprep.subr.mxu0 0.0
    %4594 = vmatpush2.msra.mxu0 0.0
    %4595 = vmatprep.subr.mxu0 0.0
    %4596 = vmatpush2.msra.mxu0 0.0
    %4597 = vmatprep.mubr.f32.mxu0 0.0
    %4598 = vmatmul.mubr.f32.gmra.mxu0 %v4528
    %v4599 = vpop.f32.mrf.mxu0
    %v4600 = vadd.f32 %v4525, %v4599
    %v4601 = vpop.f32.mrf.mxu0
    %4602 = vmatprep.mubr.f32.mxu0 0.0
    %4603 = vmatmul.mubr.f32.gmra.mxu0 %v4531
    %v4604 = vpop.f32.mrf.mxu0
    %v4605 = vadd.f32 %v4525, %v4604
    %v4606 = vpop.f32.mrf.mxu0
    %4607 = vdwg.mxu0
    %v4608 = vmul.f32 %v4600, %v4600
    %v4609 = vmul.f32 %v4605, %v4605
    %v4610 = vmul.f32 %v4600, %v4608
    %v4611 = vmul.f32 %v4605, %v4609
    %v4612 = vmul.f32 %v4610, 0.044715
    %v4613 = vmul.f32 %v4611, 0.044715
    %v4614 = vadd.f32 %v4600, %v4612
    %v4615 = vadd.f32 %v4605, %v4613
    %v4616 = vmul.f32 %v4614, 0.7978846
    %v4617 = vmul.f32 %v4615, 0.7978846
    %v4618 = vtanh.pop %v4616
    %v4619 = vtanh.pop %v4617
    %v4620 = vadd.f32 %v4618, 1.0
    %v4621 = vadd.f32 %v4619, 1.0
    %v4622 = vmul.f32 %v4620, 0.5
    %v4623 = vmul.f32 %v4621, 0.5
    %v4624 = vmul.f32 %v4600, %v4622
    %v4625 = vmul.f32 %v4605, %v4623
    %v4626 = vld [vmem:[%s49] sm:$0xff]
    %v4627 = vld [vmem:[%s49 + $0x8] sm:$0xff]
    %v4628 = vld [vmem:[%s49 + $0x10] sm:$0xff]
    %v4629 = vld [vmem:[%s49 + $0x18] sm:$0xff]
    %v4630 = vld [vmem:[%s49 + $0x20] sm:$0xff]
    %v4631 = vld [vmem:[%s49 + $0x28] sm:$0xff]
    %v4632 = vld [vmem:[%s49 + $0x30] sm:$0xff]
    %v4633 = vld [vmem:[%s49 + $0x38] sm:$0xff]
    %v4634 = vld [vmem:[%s51] sm:$0x1]
    %v4636 = vlaneseq
    %v4637 = vshrl.u32 %v4636, 7
    %v4638 = vsub.s32 0, %v4637
    %v4639 = vrot.slane %v4634, %v4638
    %v4642 = vsel %vm157, %v4624, 0
    %v4645 = vsel %vm157, %v4625, 0
    %4647 = vmatprep.subr.mxu0 0.0
    %4648 = vmatpush1.msra.mxu0 0.0
    %4649 = vmatprep.subr.mxu0 0.0
    %4650 = vmatpush1.msra.mxu0 0.0
    %4651 = vmatprep.subr.mxu0 0.0
    %4652 = vmatpush1.msra.mxu0 0.0
    %4653 = vmatprep.subr.mxu0 0.0
    %4654 = vmatpush1.msra.mxu0 0.0
    %4655 = vmatprep.subr.mxu0 0.0
    %4656 = vmatpush1.msra.mxu0 0.0
    %4657 = vmatprep.subr.mxu0 0.0
    %4658 = vmatpush1.msra.mxu0 0.0
    %4659 = vmatprep.subr.mxu0 0.0
    %4660 = vmatpush1.msra.mxu0 0.0
    %4661 = vmatprep.subr.mxu0 0.0
    %4662 = vmatpush1.msra.mxu0 0.0
    %4663 = vmatprep.subr.mxu0 0.0
    %4664 = vmatpush1.msra.mxu0 %v4633
    %4665 = vmatprep.subr.mxu0 0.0
    %4666 = vmatpush1.msra.mxu0 %v4632
    %4667 = vmatprep.subr.mxu0 0.0
    %4668 = vmatpush1.msra.mxu0 %v4631
    %4669 = vmatprep.subr.mxu0 0.0
    %4670 = vmatpush1.msra.mxu0 %v4630
    %4671 = vmatprep.subr.mxu0 0.0
    %4672 = vmatpush1.msra.mxu0 %v4629
    %4673 = vmatprep.subr.mxu0 0.0
    %4674 = vmatpush1.msra.mxu0 %v4628
    %4675 = vmatprep.subr.mxu0 0.0
    %4676 = vmatpush1.msra.mxu0 %v4627
    %4677 = vmatprep.subr.mxu0 0.0
    %4678 = vmatpush1.msra.mxu0 %v4626
    %4679 = vmatprep.subr.mxu0 0.0
    %4680 = vmatpush2.msra.mxu0 0.0
    %4681 = vmatprep.subr.mxu0 0.0
    %4682 = vmatpush2.msra.mxu0 0.0
    %4683 = vmatprep.subr.mxu0 0.0
    %4684 = vmatpush2.msra.mxu0 0.0
    %4685 = vmatprep.subr.mxu0 0.0
    %4686 = vmatpush2.msra.mxu0 0.0
    %4687 = vmatprep.subr.mxu0 0.0
    %4688 = vmatpush2.msra.mxu0 0.0
    %4689 = vmatprep.subr.mxu0 0.0
    %4690 = vmatpush2.msra.mxu0 0.0
    %4691 = vmatprep.subr.mxu0 0.0
    %4692 = vmatpush2.msra.mxu0 0.0
    %4693 = vmatprep.subr.mxu0 0.0
    %4694 = vmatpush2.msra.mxu0 0.0
    %4695 = vmatprep.subr.mxu0 0.0
    %4696 = vmatpush2.msra.mxu0 0.0
    %4697 = vmatprep.subr.mxu0 0.0
    %4698 = vmatpush2.msra.mxu0 0.0
    %4699 = vmatprep.subr.mxu0 0.0
    %4700 = vmatpush2.msra.mxu0 0.0
    %4701 = vmatprep.subr.mxu0 0.0
    %4702 = vmatpush2.msra.mxu0 0.0
    %4703 = vmatprep.subr.mxu0 0.0
    %4704 = vmatpush2.msra.mxu0 0.0
    %4705 = vmatprep.subr.mxu0 0.0
    %4706 = vmatpush2.msra.mxu0 0.0
    %4707 = vmatprep.subr.mxu0 0.0
    %4708 = vmatpush2.msra.mxu0 0.0
    %4709 = vmatprep.subr.mxu0 0.0
    %4710 = vmatpush2.msra.mxu0 0.0
    %4711 = vmatprep.mubr.f32.mxu0 0.0
    %4712 = vmatmul.mubr.f32.gmra.mxu0 %v4642
    %v4713 = vpop.f32.mrf.mxu0
    %v4714 = vadd.f32 %v4639, %v4713
    %v4715 = vpop.f32.mrf.mxu0
    %4716 = vmatprep.mubr.f32.mxu0 0.0
    %4717 = vmatmul.mubr.f32.gmra.mxu0 %v4645
    %v4718 = vpop.f32.mrf.mxu0
    %v4719 = vadd.f32 %v4639, %v4718
    %v4720 = vpop.f32.mrf.mxu0
    %4721 = vdwg.mxu0
    %v4722 = vadd.f32 %v4514, %v4714
    %v4723 = vadd.f32 %v4515, %v4719
    %v4724 = vld [vmem:[%s53] sm:$0x1]
    %v4725 = vld [vmem:[%s55] sm:$0x1]
    %v4726 = vsel %vm241, %v4722, 0.0
    %4727 = vadd.xlane.f32.xlu0 %v4726
    %v4728 = vpop.xlane.xlu0 %4727
    %v4729 = vsel %vm241, %v4723, 0.0
    %4730 = vadd.xlane.f32.xlu0 %v4729
    %v4731 = vpop.xlane.xlu0 %4730
    %v4732 = vmul.f32 %v4728, %v248
    %v4733 = vmul.f32 %v4731, %v248
    %v4734 = vsub.f32 %v4722, %v4732
    %v4735 = vsub.f32 %v4723, %v4733
    %v4736 = vmul.f32 %v4734, %v4734
    %v4737 = vmul.f32 %v4735, %v4735
    %v4738 = vsel %vm241, %v4736, 0.0
    %4739 = vadd.xlane.f32.xlu0 %v4738
    %v4740 = vpop.xlane.xlu0 %4739
    %v4741 = vsel %vm241, %v4737, 0.0
    %4742 = vadd.xlane.f32.xlu0 %v4741
    %v4743 = vpop.xlane.xlu0 %4742
    %v4744 = vmul.f32 %v4740, %v248
    %v4745 = vmul.f32 %v4743, %v248
    %v4746 = vadd.f32 %v4744, 1e-05
    %v4747 = vadd.f32 %v4745, 1e-05
    %v4748 = vrsqrt.pop %v4746
    %v4749 = vrsqrt.pop %v4747
    %v4750 = vmul.f32 %v4734, %v4748
    %v4751 = vmul.f32 %v4735, %v4749
    %v4753 = vlaneseq
    %v4754 = vshrl.u32 %v4753, 7
    %v4755 = vsub.s32 0, %v4754
    %v4756 = vrot.slane %v4724, %v4755
    %v4758 = vmul.f32 %v4750, %v4756
    %v4759 = vmul.f32 %v4751, %v4756
    %v4761 = vlaneseq
    %v4762 = vshrl.u32 %v4761, 7
    %v4763 = vsub.s32 0, %v4762
    %v4764 = vrot.slane %v4725, %v4763
    %v4766 = vadd.f32 %v4758, %v4764
    %v4767 = vadd.f32 %v4759, %v4764
    %s4768 = scalar_lea.vmem %s17, 32
    %v4769 = vld [vmem:[%s4768] sm:$0xff]
    %v4770 = vld [vmem:[%s4768 + $0x8] sm:$0xff]
    %v4771 = vld [vmem:[%s4768 + $0x10] sm:$0xff]
    %v4772 = vld [vmem:[%s4768 + $0x18] sm:$0xff]
    %s4773 = scalar_lea.vmem %s19, 1
    %v4774 = vld [vmem:[%s4773] sm:$0x1]
    %v4776 = vlaneseq
    %v4777 = vshrl.u32 %v4776, 7
    %v4778 = vsub.s32 0, %v4777
    %v4779 = vrot.slane %v4774, %v4778
    %v4782 = vsel %vm241, %v4766, 0
    %v4785 = vsel %vm241, %v4767, 0
    %4787 = vmatprep.subr.mxu0 0.0
    %4788 = vmatpush1.msra.mxu0 0.0
    %4789 = vmatprep.subr.mxu0 0.0
    %4790 = vmatpush1.msra.mxu0 0.0
    %4791 = vmatprep.subr.mxu0 0.0
    %4792 = vmatpush1.msra.mxu0 0.0
    %4793 = vmatprep.subr.mxu0 0.0
    %4794 = vmatpush1.msra.mxu0 0.0
    %4795 = vmatprep.subr.mxu0 0.0
    %4796 = vmatpush1.msra.mxu0 0.0
    %4797 = vmatprep.subr.mxu0 0.0
    %4798 = vmatpush1.msra.mxu0 0.0
    %4799 = vmatprep.subr.mxu0 0.0
    %4800 = vmatpush1.msra.mxu0 0.0
    %4801 = vmatprep.subr.mxu0 0.0
    %4802 = vmatpush1.msra.mxu0 0.0
    %4803 = vmatprep.subr.mxu0 0.0
    %4804 = vmatpush1.msra.mxu0 0.0
    %4805 = vmatprep.subr.mxu0 0.0
    %4806 = vmatpush1.msra.mxu0 0.0
    %4807 = vmatprep.subr.mxu0 0.0
    %4808 = vmatpush1.msra.mxu0 0.0
    %4809 = vmatprep.subr.mxu0 0.0
    %4810 = vmatpush1.msra.mxu0 0.0
    %4811 = vmatprep.subr.mxu0 0.0
    %4812 = vmatpush1.msra.mxu0 %v4772
    %4813 = vmatprep.subr.mxu0 0.0
    %4814 = vmatpush1.msra.mxu0 %v4771
    %4815 = vmatprep.subr.mxu0 0.0
    %4816 = vmatpush1.msra.mxu0 %v4770
    %4817 = vmatprep.subr.mxu0 0.0
    %4818 = vmatpush1.msra.mxu0 %v4769
    %4819 = vmatprep.subr.mxu0 0.0
    %4820 = vmatpush2.msra.mxu0 0.0
    %4821 = vmatprep.subr.mxu0 0.0
    %4822 = vmatpush2.msra.mxu0 0.0
    %4823 = vmatprep.subr.mxu0 0.0
    %4824 = vmatpush2.msra.mxu0 0.0
    %4825 = vmatprep.subr.mxu0 0.0
    %4826 = vmatpush2.msra.mxu0 0.0
    %4827 = vmatprep.subr.mxu0 0.0
    %4828 = vmatpush2.msra.mxu0 0.0
    %4829 = vmatprep.subr.mxu0 0.0
    %4830 = vmatpush2.msra.mxu0 0.0
    %4831 = vmatprep.subr.mxu0 0.0
    %4832 = vmatpush2.msra.mxu0 0.0
    %4833 = vmatprep.subr.mxu0 0.0
    %4834 = vmatpush2.msra.mxu0 0.0
    %4835 = vmatprep.subr.mxu0 0.0
    %4836 = vmatpush2.msra.mxu0 0.0
    %4837 = vmatprep.subr.mxu0 0.0
    %4838 = vmatpush2.msra.mxu0 0.0
    %4839 = vmatprep.subr.mxu0 0.0
    %4840 = vmatpush2.msra.mxu0 0.0
    %4841 = vmatprep.subr.mxu0 0.0
    %4842 = vmatpush2.msra.mxu0 0.0
    %4843 = vmatprep.subr.mxu0 0.0
    %4844 = vmatpush2.msra.mxu0 0.0
    %4845 = vmatprep.subr.mxu0 0.0
    %4846 = vmatpush2.msra.mxu0 0.0
    %4847 = vmatprep.subr.mxu0 0.0
    %4848 = vmatpush2.msra.mxu0 0.0
    %4849 = vmatprep.subr.mxu0 0.0
    %4850 = vmatpush2.msra.mxu0 0.0
    %4851 = vmatprep.mubr.f32.mxu0 0.0
    %4852 = vmatmul.mubr.f32.gmra.mxu0 %v4782
    %v4853 = vpop.f32.mrf.mxu0
    %v4854 = vadd.f32 %v4779, %v4853
    %v4855 = vpop.f32.mrf.mxu0
    %4856 = vmatprep.mubr.f32.mxu0 0.0
    %4857 = vmatmul.mubr.f32.gmra.mxu0 %v4785
    %v4858 = vpop.f32.mrf.mxu0
    %v4859 = vadd.f32 %v4779, %v4858
    %v4860 = vpop.f32.mrf.mxu0
    %4861 = vdwg.mxu0
    %s4862 = scalar_lea.vmem %s21, 32
    %v4863 = vld [vmem:[%s4862] sm:$0xff]
    %v4864 = vld [vmem:[%s4862 + $0x8] sm:$0xff]
    %v4865 = vld [vmem:[%s4862 + $0x10] sm:$0xff]
    %v4866 = vld [vmem:[%s4862 + $0x18] sm:$0xff]
    %s4867 = scalar_lea.vmem %s23, 1
    %v4868 = vld [vmem:[%s4867] sm:$0x1]
    %4870 = vrot.lane.b32.xlu0 %v4854, 96
    %v4871 = vpop.permute.xlu0 %4870
    %v4872 = vsel %vm403, %v4854, 0
    %v4874 = vsel %vm403, %v4871, 0
    %4876 = vmatprep.subr.mxu0 0.0
    %4877 = vmatpush1.xpose.msra.mxu0 0.0
    %4878 = vmatprep.subr.mxu0 0.0
    %4879 = vmatpush1.xpose.msra.mxu0 0.0
    %4880 = vmatprep.subr.mxu0 0.0
    %4881 = vmatpush1.xpose.msra.mxu0 0.0
    %4882 = vmatprep.subr.mxu0 0.0
    %4883 = vmatpush1.xpose.msra.mxu0 0.0
    %4884 = vmatprep.subr.mxu0 0.0
    %4885 = vmatpush1.xpose.msra.mxu0 0.0
    %4886 = vmatprep.subr.mxu0 0.0
    %4887 = vmatpush1.xpose.msra.mxu0 0.0
    %4888 = vmatprep.subr.mxu0 0.0
    %4889 = vmatpush1.xpose.msra.mxu0 0.0
    %4890 = vmatprep.subr.mxu0 0.0
    %4891 = vmatpush1.xpose.msra.mxu0 0.0
    %4892 = vmatprep.subr.mxu0 0.0
    %4893 = vmatpush1.xpose.msra.mxu0 0.0
    %4894 = vmatprep.subr.mxu0 0.0
    %4895 = vmatpush1.xpose.msra.mxu0 0.0
    %4896 = vmatprep.subr.mxu0 0.0
    %4897 = vmatpush1.xpose.msra.mxu0 0.0
    %4898 = vmatprep.subr.mxu0 0.0
    %4899 = vmatpush1.xpose.msra.mxu0 0.0
    %4900 = vmatprep.subr.mxu0 0.0
    %4901 = vmatpush1.xpose.msra.mxu0 0.0
    %4902 = vmatprep.subr.mxu0 0.0
    %4903 = vmatpush1.xpose.msra.mxu0 0.0
    %4904 = vmatprep.subr.mxu0 0.0
    %4905 = vmatpush1.xpose.msra.mxu0 0.0
    %4906 = vmatprep.subr.mxu0 0.0
    %4907 = vmatpush1.xpose.msra.mxu0 %v4874
    %4908 = vmatprep.subr.mxu0 0.0
    %4909 = vmatpush2.xpose.msra.mxu0 0.0
    %4910 = vmatprep.subr.mxu0 0.0
    %4911 = vmatpush2.xpose.msra.mxu0 0.0
    %4912 = vmatprep.subr.mxu0 0.0
    %4913 = vmatpush2.xpose.msra.mxu0 0.0
    %4914 = vmatprep.subr.mxu0 0.0
    %4915 = vmatpush2.xpose.msra.mxu0 0.0
    %4916 = vmatprep.subr.mxu0 0.0
    %4917 = vmatpush2.xpose.msra.mxu0 0.0
    %4918 = vmatprep.subr.mxu0 0.0
    %4919 = vmatpush2.xpose.msra.mxu0 0.0
    %4920 = vmatprep.subr.mxu0 0.0
    %4921 = vmatpush2.xpose.msra.mxu0 0.0
    %4922 = vmatprep.subr.mxu0 0.0
    %4923 = vmatpush2.xpose.msra.mxu0 0.0
    %4924 = vmatprep.subr.mxu0 0.0
    %4925 = vmatpush2.xpose.msra.mxu0 0.0
    %4926 = vmatprep.subr.mxu0 0.0
    %4927 = vmatpush2.xpose.msra.mxu0 0.0
    %4928 = vmatprep.subr.mxu0 0.0
    %4929 = vmatpush2.xpose.msra.mxu0 0.0
    %4930 = vmatprep.subr.mxu0 0.0
    %4931 = vmatpush2.xpose.msra.mxu0 0.0
    %4932 = vmatprep.subr.mxu0 0.0
    %4933 = vmatpush2.xpose.msra.mxu0 0.0
    %4934 = vmatprep.subr.mxu0 0.0
    %4935 = vmatpush2.xpose.msra.mxu0 0.0
    %4936 = vmatprep.subr.mxu0 0.0
    %4937 = vmatpush2.xpose.msra.mxu0 0.0
    %4938 = vmatprep.subr.mxu0 0.0
    %4939 = vmatpush2.xpose.msra.mxu0 0.0
    %4940 = vmatprep.mubr.f32.mxu0 0.0
    %4941 = vmatmul.mubr.f32.gmra.mxu0 %v4872
    %v4942 = vpop.f32.mrf.mxu0
    %v4943 = vadd.f32 %v295, %v4942
    %v4944 = vpop.f32.mrf.mxu0
    %4945 = vdwg.mxu0
    %v4946 = vsel %vm403, %v4943, -inf
    %4947 = vmax.xlane.f32.xlu0 %v4946
    %v4948 = vpop.xlane.xlu0 %4947
    %v4949 = vsub.f32 %v4943, %v4948
    %v4950 = vmul.f32 %v4949, 1.442695
    %v4951 = vpow.pop %v4950
    %v4952 = vsel %vm403, %v4951, 0.0
    %4953 = vadd.xlane.f32.xlu0 %v4952
    %v4954 = vpop.xlane.xlu0 %4953
    %v4955 = vrcp.pop %v4954
    %v4956 = vmul.f32 %v4951, %v4955
    %4957 = vrot.lane.b32.xlu0 %v4854, 64
    %v4958 = vpop.permute.xlu0 %4957
    %v4961 = vsel %vm403, %v4956, 0
    %4963 = vmatprep.subr.mxu0 0.0
    %4964 = vmatpush1.msra.mxu0 0.0
    %4965 = vmatprep.subr.mxu0 0.0
    %4966 = vmatpush1.msra.mxu0 0.0
    %4967 = vmatprep.subr.mxu0 0.0
    %4968 = vmatpush1.msra.mxu0 0.0
    %4969 = vmatprep.subr.mxu0 0.0
    %4970 = vmatpush1.msra.mxu0 0.0
    %4971 = vmatprep.subr.mxu0 0.0
    %4972 = vmatpush1.msra.mxu0 0.0
    %4973 = vmatprep.subr.mxu0 0.0
    %4974 = vmatpush1.msra.mxu0 0.0
    %4975 = vmatprep.subr.mxu0 0.0
    %4976 = vmatpush1.msra.mxu0 0.0
    %4977 = vmatprep.subr.mxu0 0.0
    %4978 = vmatpush1.msra.mxu0 0.0
    %4979 = vmatprep.subr.mxu0 0.0
    %4980 = vmatpush1.msra.mxu0 0.0
    %4981 = vmatprep.subr.mxu0 0.0
    %4982 = vmatpush1.msra.mxu0 0.0
    %4983 = vmatprep.subr.mxu0 0.0
    %4984 = vmatpush1.msra.mxu0 0.0
    %4985 = vmatprep.subr.mxu0 0.0
    %4986 = vmatpush1.msra.mxu0 0.0
    %4987 = vmatprep.subr.mxu0 0.0
    %4988 = vmatpush1.msra.mxu0 0.0
    %4989 = vmatprep.subr.mxu0 0.0
    %4990 = vmatpush1.msra.mxu0 0.0
    %4991 = vmatprep.subr.mxu0 0.0
    %4992 = vmatpush1.msra.mxu0 0.0
    %4993 = vmatprep.subr.mxu0 0.0
    %4994 = vmatpush1.msra.mxu0 %v4958
    %4995 = vmatprep.subr.mxu0 0.0
    %4996 = vmatpush2.msra.mxu0 0.0
    %4997 = vmatprep.subr.mxu0 0.0
    %4998 = vmatpush2.msra.mxu0 0.0
    %4999 = vmatprep.subr.mxu0 0.0
    %5000 = vmatpush2.msra.mxu0 0.0
    %5001 = vmatprep.subr.mxu0 0.0
    %5002 = vmatpush2.msra.mxu0 0.0
    %5003 = vmatprep.subr.mxu0 0.0
    %5004 = vmatpush2.msra.mxu0 0.0
    %5005 = vmatprep.subr.mxu0 0.0
    %5006 = vmatpush2.msra.mxu0 0.0
    %5007 = vmatprep.subr.mxu0 0.0
    %5008 = vmatpush2.msra.mxu0 0.0
    %5009 = vmatprep.subr.mxu0 0.0
    %5010 = vmatpush2.msra.mxu0 0.0
    %5011 = vmatprep.subr.mxu0 0.0
    %5012 = vmatpush2.msra.mxu0 0.0
    %5013 = vmatprep.subr.mxu0 0.0
    %5014 = vmatpush2.msra.mxu0 0.0
    %5015 = vmatprep.subr.mxu0 0.0
    %5016 = vmatpush2.msra.mxu0 0.0
    %5017 = vmatprep.subr.mxu0 0.0
    %5018 = vmatpush2.msra.mxu0 0.0
    %5019 = vmatprep.subr.mxu0 0.0
    %5020 = vmatpush2.msra.mxu0 0.0
    %5021 = vmatprep.subr.mxu0 0.0
    %5022 = vmatpush2.msra.mxu0 0.0
    %5023 = vmatprep.subr.mxu0 0.0
    %5024 = vmatpush2.msra.mxu0 0.0
    %5025 = vmatprep.subr.mxu0 0.0
    %5026 = vmatpush2.msra.mxu0 0.0
    %5027 = vmatprep.mubr.f32.mxu0 0.0
    %5028 = vmatmul.mubr.f32.gmra.mxu0 %v4961
    %v5029 = vpop.f32.mrf.mxu0
    %v5030 = vadd.f32 0.0, %v5029
    %v5031 = vpop.f32.mrf.mxu0
    %5032 = vdwg.mxu0
    %5033 = vrot.lane.b32.xlu0 %v4854, 120
    %v5034 = vpop.permute.xlu0 %5033
    %5035 = vrot.lane.b32.xlu0 %v4854, 88
    %v5036 = vpop.permute.xlu0 %5035
    %v5037 = vsel %vm403, %v5034, 0
    %v5039 = vsel %vm403, %v5036, 0
    %5041 = vmatprep.subr.mxu0 0.0
    %5042 = vmatpush1.xpose.msra.mxu0 0.0
    %5043 = vmatprep.subr.mxu0 0.0
    %5044 = vmatpush1.xpose.msra.mxu0 0.0
    %5045 = vmatprep.subr.mxu0 0.0
    %5046 = vmatpush1.xpose.msra.mxu0 0.0
    %5047 = vmatprep.subr.mxu0 0.0
    %5048 = vmatpush1.xpose.msra.mxu0 0.0
    %5049 = vmatprep.subr.mxu0 0.0
    %5050 = vmatpush1.xpose.msra.mxu0 0.0
    %5051 = vmatprep.subr.mxu0 0.0
    %5052 = vmatpush1.xpose.msra.mxu0 0.0
    %5053 = vmatprep.subr.mxu0 0.0
    %5054 = vmatpush1.xpose.msra.mxu0 0.0
    %5055 = vmatprep.subr.mxu0 0.0
    %5056 = vmatpush1.xpose.msra.mxu0 0.0
    %5057 = vmatprep.subr.mxu0 0.0
    %5058 = vmatpush1.xpose.msra.mxu0 0.0
    %5059 = vmatprep.subr.mxu0 0.0
    %5060 = vmatpush1.xpose.msra.mxu0 0.0
    %5061 = vmatprep.subr.mxu0 0.0
    %5062 = vmatpush1.xpose.msra.mxu0 0.0
    %5063 = vmatprep.subr.mxu0 0.0
    %5064 = vmatpush1.xpose.msra.mxu0 0.0
    %5065 = vmatprep.subr.mxu0 0.0
    %5066 = vmatpush1.xpose.msra.mxu0 0.0
    %5067 = vmatprep.subr.mxu0 0.0
    %5068 = vmatpush1.xpose.msra.mxu0 0.0
    %5069 = vmatprep.subr.mxu0 0.0
    %5070 = vmatpush1.xpose.msra.mxu0 0.0
    %5071 = vmatprep.subr.mxu0 0.0
    %5072 = vmatpush1.xpose.msra.mxu0 %v5039
    %5073 = vmatprep.subr.mxu0 0.0
    %5074 = vmatpush2.xpose.msra.mxu0 0.0
    %5075 = vmatprep.subr.mxu0 0.0
    %5076 = vmatpush2.xpose.msra.mxu0 0.0
    %5077 = vmatprep.subr.mxu0 0.0
    %5078 = vmatpush2.xpose.msra.mxu0 0.0
    %5079 = vmatprep.subr.mxu0 0.0
    %5080 = vmatpush2.xpose.msra.mxu0 0.0
    %5081 = vmatprep.subr.mxu0 0.0
    %5082 = vmatpush2.xpose.msra.mxu0 0.0
    %5083 = vmatprep.subr.mxu0 0.0
    %5084 = vmatpush2.xpose.msra.mxu0 0.0
    %5085 = vmatprep.subr.mxu0 0.0
    %5086 = vmatpush2.xpose.msra.mxu0 0.0
    %5087 = vmatprep.subr.mxu0 0.0
    %5088 = vmatpush2.xpose.msra.mxu0 0.0
    %5089 = vmatprep.subr.mxu0 0.0
    %5090 = vmatpush2.xpose.msra.mxu0 0.0
    %5091 = vmatprep.subr.mxu0 0.0
    %5092 = vmatpush2.xpose.msra.mxu0 0.0
    %5093 = vmatprep.subr.mxu0 0.0
    %5094 = vmatpush2.xpose.msra.mxu0 0.0
    %5095 = vmatprep.subr.mxu0 0.0
    %5096 = vmatpush2.xpose.msra.mxu0 0.0
    %5097 = vmatprep.subr.mxu0 0.0
    %5098 = vmatpush2.xpose.msra.mxu0 0.0
    %5099 = vmatprep.subr.mxu0 0.0
    %5100 = vmatpush2.xpose.msra.mxu0 0.0
    %5101 = vmatprep.subr.mxu0 0.0
    %5102 = vmatpush2.xpose.msra.mxu0 0.0
    %5103 = vmatprep.subr.mxu0 0.0
    %5104 = vmatpush2.xpose.msra.mxu0 0.0
    %5105 = vmatprep.mubr.f32.mxu0 0.0
    %5106 = vmatmul.mubr.f32.gmra.mxu0 %v5037
    %v5107 = vpop.f32.mrf.mxu0
    %v5108 = vadd.f32 %v295, %v5107
    %v5109 = vpop.f32.mrf.mxu0
    %5110 = vdwg.mxu0
    %v5111 = vsel %vm403, %v5108, -inf
    %5112 = vmax.xlane.f32.xlu0 %v5111
    %v5113 = vpop.xlane.xlu0 %5112
    %v5114 = vsub.f32 %v5108, %v5113
    %v5115 = vmul.f32 %v5114, 1.442695
    %v5116 = vpow.pop %v5115
    %v5117 = vsel %vm403, %v5116, 0.0
    %5118 = vadd.xlane.f32.xlu0 %v5117
    %v5119 = vpop.xlane.xlu0 %5118
    %v5120 = vrcp.pop %v5119
    %v5121 = vmul.f32 %v5116, %v5120
    %5122 = vrot.lane.b32.xlu0 %v4854, 56
    %v5123 = vpop.permute.xlu0 %5122
    %v5126 = vsel %vm403, %v5121, 0
    %5128 = vmatprep.subr.mxu0 0.0
    %5129 = vmatpush1.msra.mxu0 0.0
    %5130 = vmatprep.subr.mxu0 0.0
    %5131 = vmatpush1.msra.mxu0 0.0
    %5132 = vmatprep.subr.mxu0 0.0
    %5133 = vmatpush1.msra.mxu0 0.0
    %5134 = vmatprep.subr.mxu0 0.0
    %5135 = vmatpush1.msra.mxu0 0.0
    %5136 = vmatprep.subr.mxu0 0.0
    %5137 = vmatpush1.msra.mxu0 0.0
    %5138 = vmatprep.subr.mxu0 0.0
    %5139 = vmatpush1.msra.mxu0 0.0
    %5140 = vmatprep.subr.mxu0 0.0
    %5141 = vmatpush1.msra.mxu0 0.0
    %5142 = vmatprep.subr.mxu0 0.0
    %5143 = vmatpush1.msra.mxu0 0.0
    %5144 = vmatprep.subr.mxu0 0.0
    %5145 = vmatpush1.msra.mxu0 0.0
    %5146 = vmatprep.subr.mxu0 0.0
    %5147 = vmatpush1.msra.mxu0 0.0
    %5148 = vmatprep.subr.mxu0 0.0
    %5149 = vmatpush1.msra.mxu0 0.0
    %5150 = vmatprep.subr.mxu0 0.0
    %5151 = vmatpush1.msra.mxu0 0.0
    %5152 = vmatprep.subr.mxu0 0.0
    %5153 = vmatpush1.msra.mxu0 0.0
    %5154 = vmatprep.subr.mxu0 0.0
    %5155 = vmatpush1.msra.mxu0 0.0
    %5156 = vmatprep.subr.mxu0 0.0
    %5157 = vmatpush1.msra.mxu0 0.0
    %5158 = vmatprep.subr.mxu0 0.0
    %5159 = vmatpush1.msra.mxu0 %v5123
    %5160 = vmatprep.subr.mxu0 0.0
    %5161 = vmatpush2.msra.mxu0 0.0
    %5162 = vmatprep.subr.mxu0 0.0
    %5163 = vmatpush2.msra.mxu0 0.0
    %5164 = vmatprep.subr.mxu0 0.0
    %5165 = vmatpush2.msra.mxu0 0.0
    %5166 = vmatprep.subr.mxu0 0.0
    %5167 = vmatpush2.msra.mxu0 0.0
    %5168 = vmatprep.subr.mxu0 0.0
    %5169 = vmatpush2.msra.mxu0 0.0
    %5170 = vmatprep.subr.mxu0 0.0
    %5171 = vmatpush2.msra.mxu0 0.0
    %5172 = vmatprep.subr.mxu0 0.0
    %5173 = vmatpush2.msra.mxu0 0.0
    %5174 = vmatprep.subr.mxu0 0.0
    %5175 = vmatpush2.msra.mxu0 0.0
    %5176 = vmatprep.subr.mxu0 0.0
    %5177 = vmatpush2.msra.mxu0 0.0
    %5178 = vmatprep.subr.mxu0 0.0
    %5179 = vmatpush2.msra.mxu0 0.0
    %5180 = vmatprep.subr.mxu0 0.0
    %5181 = vmatpush2.msra.mxu0 0.0
    %5182 = vmatprep.subr.mxu0 0.0
    %5183 = vmatpush2.msra.mxu0 0.0
    %5184 = vmatprep.subr.mxu0 0.0
    %5185 = vmatpush2.msra.mxu0 0.0
    %5186 = vmatprep.subr.mxu0 0.0
    %5187 = vmatpush2.msra.mxu0 0.0
    %5188 = vmatprep.subr.mxu0 0.0
    %5189 = vmatpush2.msra.mxu0 0.0
    %5190 = vmatprep.subr.mxu0 0.0
    %5191 = vmatpush2.msra.mxu0 0.0
    %5192 = vmatprep.mubr.f32.mxu0 0.0
    %5193 = vmatmul.mubr.f32.gmra.mxu0 %v5126
    %v5194 = vpop.f32.mrf.mxu0
    %v5195 = vadd.f32 0.0, %v5194
    %v5196 = vpop.f32.mrf.mxu0
    %5197 = vdwg.mxu0
    %v5199 = vsel %vm403, %v5195, 0
    %5201 = vmatprep.subr.mxu0 0.0
    %5202 = vmatpush1.msra.mxu0 0.0
    %5203 = vmatprep.subr.mxu0 0.0
    %5204 = vmatpush1.msra.mxu0 0.0
    %5205 = vmatprep.subr.mxu0 0.0
    %5206 = vmatpush1.msra.mxu0 0.0
    %5207 = vmatprep.subr.mxu0 0.0
    %5208 = vmatpush1.msra.mxu0 0.0
    %5209 = vmatprep.subr.mxu0 0.0
    %5210 = vmatpush1.msra.mxu0 0.0
    %5211 = vmatprep.subr.mxu0 0.0
    %5212 = vmatpush1.msra.mxu0 0.0
    %5213 = vmatprep.subr.mxu0 0.0
    %5214 = vmatpush1.msra.mxu0 0.0
    %5215 = vmatprep.subr.mxu0 0.0
    %5216 = vmatpush1.msra.mxu0 0.0
    %5217 = vmatprep.subr.mxu0 0.0
    %5218 = vmatpush1.msra.mxu0 0.0
    %5219 = vmatprep.subr.mxu0 0.0
    %5220 = vmatpush1.msra.mxu0 0.0
    %5221 = vmatprep.subr.mxu0 0.0
    %5222 = vmatpush1.msra.mxu0 0.0
    %5223 = vmatprep.subr.mxu0 0.0
    %5224 = vmatpush1.msra.mxu0 0.0
    %5225 = vmatprep.subr.mxu0 0.0
    %5226 = vmatpush1.msra.mxu0 0.0
    %5227 = vmatprep.subr.mxu0 0.0
    %5228 = vmatpush1.msra.mxu0 0.0
    %5229 = vmatprep.subr.mxu0 0.0
    %5230 = vmatpush1.msra.mxu0 0.0
    %5231 = vmatprep.subr.mxu0 0.0
    %5232 = vmatpush1.msra.mxu0 %v4864
    %5233 = vmatprep.subr.mxu0 0.0
    %5234 = vmatpush2.msra.mxu0 0.0
    %5235 = vmatprep.subr.mxu0 0.0
    %5236 = vmatpush2.msra.mxu0 0.0
    %5237 = vmatprep.subr.mxu0 0.0
    %5238 = vmatpush2.msra.mxu0 0.0
    %5239 = vmatprep.subr.mxu0 0.0
    %5240 = vmatpush2.msra.mxu0 0.0
    %5241 = vmatprep.subr.mxu0 0.0
    %5242 = vmatpush2.msra.mxu0 0.0
    %5243 = vmatprep.subr.mxu0 0.0
    %5244 = vmatpush2.msra.mxu0 0.0
    %5245 = vmatprep.subr.mxu0 0.0
    %5246 = vmatpush2.msra.mxu0 0.0
    %5247 = vmatprep.subr.mxu0 0.0
    %5248 = vmatpush2.msra.mxu0 0.0
    %5249 = vmatprep.subr.mxu0 0.0
    %5250 = vmatpush2.msra.mxu0 0.0
    %5251 = vmatprep.subr.mxu0 0.0
    %5252 = vmatpush2.msra.mxu0 0.0
    %5253 = vmatprep.subr.mxu0 0.0
    %5254 = vmatpush2.msra.mxu0 0.0
    %5255 = vmatprep.subr.mxu0 0.0
    %5256 = vmatpush2.msra.mxu0 0.0
    %5257 = vmatprep.subr.mxu0 0.0
    %5258 = vmatpush2.msra.mxu0 0.0
    %5259 = vmatprep.subr.mxu0 0.0
    %5260 = vmatpush2.msra.mxu0 0.0
    %5261 = vmatprep.subr.mxu0 0.0
    %5262 = vmatpush2.msra.mxu0 0.0
    %5263 = vmatprep.subr.mxu0 0.0
    %5264 = vmatpush2.msra.mxu0 0.0
    %5265 = vmatprep.mubr.f32.mxu0 0.0
    %5266 = vmatmul.mubr.f32.gmra.mxu0 %v5199
    %v5267 = vpop.f32.mrf.mxu0
    %v5268 = vadd.f32 0.0, %v5267
    %v5269 = vpop.f32.mrf.mxu0
    %5270 = vdwg.mxu0
    %v5272 = vsel %vm403, %v5030, 0
    %5274 = vmatprep.subr.mxu0 0.0
    %5275 = vmatpush1.msra.mxu0 0.0
    %5276 = vmatprep.subr.mxu0 0.0
    %5277 = vmatpush1.msra.mxu0 0.0
    %5278 = vmatprep.subr.mxu0 0.0
    %5279 = vmatpush1.msra.mxu0 0.0
    %5280 = vmatprep.subr.mxu0 0.0
    %5281 = vmatpush1.msra.mxu0 0.0
    %5282 = vmatprep.subr.mxu0 0.0
    %5283 = vmatpush1.msra.mxu0 0.0
    %5284 = vmatprep.subr.mxu0 0.0
    %5285 = vmatpush1.msra.mxu0 0.0
    %5286 = vmatprep.subr.mxu0 0.0
    %5287 = vmatpush1.msra.mxu0 0.0
    %5288 = vmatprep.subr.mxu0 0.0
    %5289 = vmatpush1.msra.mxu0 0.0
    %5290 = vmatprep.subr.mxu0 0.0
    %5291 = vmatpush1.msra.mxu0 0.0
    %5292 = vmatprep.subr.mxu0 0.0
    %5293 = vmatpush1.msra.mxu0 0.0
    %5294 = vmatprep.subr.mxu0 0.0
    %5295 = vmatpush1.msra.mxu0 0.0
    %5296 = vmatprep.subr.mxu0 0.0
    %5297 = vmatpush1.msra.mxu0 0.0
    %5298 = vmatprep.subr.mxu0 0.0
    %5299 = vmatpush1.msra.mxu0 0.0
    %5300 = vmatprep.subr.mxu0 0.0
    %5301 = vmatpush1.msra.mxu0 0.0
    %5302 = vmatprep.subr.mxu0 0.0
    %5303 = vmatpush1.msra.mxu0 0.0
    %5304 = vmatprep.subr.mxu0 0.0
    %5305 = vmatpush1.msra.mxu0 %v4863
    %5306 = vmatprep.subr.mxu0 0.0
    %5307 = vmatpush2.msra.mxu0 0.0
    %5308 = vmatprep.subr.mxu0 0.0
    %5309 = vmatpush2.msra.mxu0 0.0
    %5310 = vmatprep.subr.mxu0 0.0
    %5311 = vmatpush2.msra.mxu0 0.0
    %5312 = vmatprep.subr.mxu0 0.0
    %5313 = vmatpush2.msra.mxu0 0.0
    %5314 = vmatprep.subr.mxu0 0.0
    %5315 = vmatpush2.msra.mxu0 0.0
    %5316 = vmatprep.subr.mxu0 0.0
    %5317 = vmatpush2.msra.mxu0 0.0
    %5318 = vmatprep.subr.mxu0 0.0
    %5319 = vmatpush2.msra.mxu0 0.0
    %5320 = vmatprep.subr.mxu0 0.0
    %5321 = vmatpush2.msra.mxu0 0.0
    %5322 = vmatprep.subr.mxu0 0.0
    %5323 = vmatpush2.msra.mxu0 0.0
    %5324 = vmatprep.subr.mxu0 0.0
    %5325 = vmatpush2.msra.mxu0 0.0
    %5326 = vmatprep.subr.mxu0 0.0
    %5327 = vmatpush2.msra.mxu0 0.0
    %5328 = vmatprep.subr.mxu0 0.0
    %5329 = vmatpush2.msra.mxu0 0.0
    %5330 = vmatprep.subr.mxu0 0.0
    %5331 = vmatpush2.msra.mxu0 0.0
    %5332 = vmatprep.subr.mxu0 0.0
    %5333 = vmatpush2.msra.mxu0 0.0
    %5334 = vmatprep.subr.mxu0 0.0
    %5335 = vmatpush2.msra.mxu0 0.0
    %5336 = vmatprep.subr.mxu0 0.0
    %5337 = vmatpush2.msra.mxu0 0.0
    %5338 = vmatprep.mubr.f32.mxu0 0.0
    %5339 = vmatmul.mubr.f32.gmra.mxu0 %v5272
    %v5340 = vpop.f32.mrf.mxu0
    %v5341 = vadd.f32 %v5268, %v5340
    %v5342 = vpop.f32.mrf.mxu0
    %5343 = vdwg.mxu0
    %5344 = vrot.lane.b32.xlu0 %v4854, 112
    %v5345 = vpop.permute.xlu0 %5344
    %5346 = vrot.lane.b32.xlu0 %v4854, 80
    %v5347 = vpop.permute.xlu0 %5346
    %v5348 = vsel %vm403, %v5345, 0
    %v5350 = vsel %vm403, %v5347, 0
    %5352 = vmatprep.subr.mxu0 0.0
    %5353 = vmatpush1.xpose.msra.mxu0 0.0
    %5354 = vmatprep.subr.mxu0 0.0
    %5355 = vmatpush1.xpose.msra.mxu0 0.0
    %5356 = vmatprep.subr.mxu0 0.0
    %5357 = vmatpush1.xpose.msra.mxu0 0.0
    %5358 = vmatprep.subr.mxu0 0.0
    %5359 = vmatpush1.xpose.msra.mxu0 0.0
    %5360 = vmatprep.subr.mxu0 0.0
    %5361 = vmatpush1.xpose.msra.mxu0 0.0
    %5362 = vmatprep.subr.mxu0 0.0
    %5363 = vmatpush1.xpose.msra.mxu0 0.0
    %5364 = vmatprep.subr.mxu0 0.0
    %5365 = vmatpush1.xpose.msra.mxu0 0.0
    %5366 = vmatprep.subr.mxu0 0.0
    %5367 = vmatpush1.xpose.msra.mxu0 0.0
    %5368 = vmatprep.subr.mxu0 0.0
    %5369 = vmatpush1.xpose.msra.mxu0 0.0
    %5370 = vmatprep.subr.mxu0 0.0
    %5371 = vmatpush1.xpose.msra.mxu0 0.0
    %5372 = vmatprep.subr.mxu0 0.0
    %5373 = vmatpush1.xpose.msra.mxu0 0.0
    %5374 = vmatprep.subr.mxu0 0.0
    %5375 = vmatpush1.xpose.msra.mxu0 0.0
    %5376 = vmatprep.subr.mxu0 0.0
    %5377 = vmatpush1.xpose.msra.mxu0 0.0
    %5378 = vmatprep.subr.mxu0 0.0
    %5379 = vmatpush1.xpose.msra.mxu0 0.0
    %5380 = vmatprep.subr.mxu0 0.0
    %5381 = vmatpush1.xpose.msra.mxu0 0.0
    %5382 = vmatprep.subr.mxu0 0.0
    %5383 = vmatpush1.xpose.msra.mxu0 %v5350
    %5384 = vmatprep.subr.mxu0 0.0
    %5385 = vmatpush2.xpose.msra.mxu0 0.0
    %5386 = vmatprep.subr.mxu0 0.0
    %5387 = vmatpush2.xpose.msra.mxu0 0.0
    %5388 = vmatprep.subr.mxu0 0.0
    %5389 = vmatpush2.xpose.msra.mxu0 0.0
    %5390 = vmatprep.subr.mxu0 0.0
    %5391 = vmatpush2.xpose.msra.mxu0 0.0
    %5392 = vmatprep.subr.mxu0 0.0
    %5393 = vmatpush2.xpose.msra.mxu0 0.0
    %5394 = vmatprep.subr.mxu0 0.0
    %5395 = vmatpush2.xpose.msra.mxu0 0.0
    %5396 = vmatprep.subr.mxu0 0.0
    %5397 = vmatpush2.xpose.msra.mxu0 0.0
    %5398 = vmatprep.subr.mxu0 0.0
    %5399 = vmatpush2.xpose.msra.mxu0 0.0
    %5400 = vmatprep.subr.mxu0 0.0
    %5401 = vmatpush2.xpose.msra.mxu0 0.0
    %5402 = vmatprep.subr.mxu0 0.0
    %5403 = vmatpush2.xpose.msra.mxu0 0.0
    %5404 = vmatprep.subr.mxu0 0.0
    %5405 = vmatpush2.xpose.msra.mxu0 0.0
    %5406 = vmatprep.subr.mxu0 0.0
    %5407 = vmatpush2.xpose.msra.mxu0 0.0
    %5408 = vmatprep.subr.mxu0 0.0
    %5409 = vmatpush2.xpose.msra.mxu0 0.0
    %5410 = vmatprep.subr.mxu0 0.0
    %5411 = vmatpush2.xpose.msra.mxu0 0.0
    %5412 = vmatprep.subr.mxu0 0.0
    %5413 = vmatpush2.xpose.msra.mxu0 0.0
    %5414 = vmatprep.subr.mxu0 0.0
    %5415 = vmatpush2.xpose.msra.mxu0 0.0
    %5416 = vmatprep.mubr.f32.mxu0 0.0
    %5417 = vmatmul.mubr.f32.gmra.mxu0 %v5348
    %v5418 = vpop.f32.mrf.mxu0
    %v5419 = vadd.f32 %v295, %v5418
    %v5420 = vpop.f32.mrf.mxu0
    %5421 = vdwg.mxu0
    %v5422 = vsel %vm403, %v5419, -inf
    %5423 = vmax.xlane.f32.xlu0 %v5422
    %v5424 = vpop.xlane.xlu0 %5423
    %v5425 = vsub.f32 %v5419, %v5424
    %v5426 = vmul.f32 %v5425, 1.442695
    %v5427 = vpow.pop %v5426
    %v5428 = vsel %vm403, %v5427, 0.0
    %5429 = vadd.xlane.f32.xlu0 %v5428
    %v5430 = vpop.xlane.xlu0 %5429
    %v5431 = vrcp.pop %v5430
    %v5432 = vmul.f32 %v5427, %v5431
    %5433 = vrot.lane.b32.xlu0 %v4854, 48
    %v5434 = vpop.permute.xlu0 %5433
    %v5437 = vsel %vm403, %v5432, 0
    %5439 = vmatprep.subr.mxu0 0.0
    %5440 = vmatpush1.msra.mxu0 0.0
    %5441 = vmatprep.subr.mxu0 0.0
    %5442 = vmatpush1.msra.mxu0 0.0
    %5443 = vmatprep.subr.mxu0 0.0
    %5444 = vmatpush1.msra.mxu0 0.0
    %5445 = vmatprep.subr.mxu0 0.0
    %5446 = vmatpush1.msra.mxu0 0.0
    %5447 = vmatprep.subr.mxu0 0.0
    %5448 = vmatpush1.msra.mxu0 0.0
    %5449 = vmatprep.subr.mxu0 0.0
    %5450 = vmatpush1.msra.mxu0 0.0
    %5451 = vmatprep.subr.mxu0 0.0
    %5452 = vmatpush1.msra.mxu0 0.0
    %5453 = vmatprep.subr.mxu0 0.0
    %5454 = vmatpush1.msra.mxu0 0.0
    %5455 = vmatprep.subr.mxu0 0.0
    %5456 = vmatpush1.msra.mxu0 0.0
    %5457 = vmatprep.subr.mxu0 0.0
    %5458 = vmatpush1.msra.mxu0 0.0
    %5459 = vmatprep.subr.mxu0 0.0
    %5460 = vmatpush1.msra.mxu0 0.0
    %5461 = vmatprep.subr.mxu0 0.0
    %5462 = vmatpush1.msra.mxu0 0.0
    %5463 = vmatprep.subr.mxu0 0.0
    %5464 = vmatpush1.msra.mxu0 0.0
    %5465 = vmatprep.subr.mxu0 0.0
    %5466 = vmatpush1.msra.mxu0 0.0
    %5467 = vmatprep.subr.mxu0 0.0
    %5468 = vmatpush1.msra.mxu0 0.0
    %5469 = vmatprep.subr.mxu0 0.0
    %5470 = vmatpush1.msra.mxu0 %v5434
    %5471 = vmatprep.subr.mxu0 0.0
    %5472 = vmatpush2.msra.mxu0 0.0
    %5473 = vmatprep.subr.mxu0 0.0
    %5474 = vmatpush2.msra.mxu0 0.0
    %5475 = vmatprep.subr.mxu0 0.0
    %5476 = vmatpush2.msra.mxu0 0.0
    %5477 = vmatprep.subr.mxu0 0.0
    %5478 = vmatpush2.msra.mxu0 0.0
    %5479 = vmatprep.subr.mxu0 0.0
    %5480 = vmatpush2.msra.mxu0 0.0
    %5481 = vmatprep.subr.mxu0 0.0
    %5482 = vmatpush2.msra.mxu0 0.0
    %5483 = vmatprep.subr.mxu0 0.0
    %5484 = vmatpush2.msra.mxu0 0.0
    %5485 = vmatprep.subr.mxu0 0.0
    %5486 = vmatpush2.msra.mxu0 0.0
    %5487 = vmatprep.subr.mxu0 0.0
    %5488 = vmatpush2.msra.mxu0 0.0
    %5489 = vmatprep.subr.mxu0 0.0
    %5490 = vmatpush2.msra.mxu0 0.0
    %5491 = vmatprep.subr.mxu0 0.0
    %5492 = vmatpush2.msra.mxu0 0.0
    %5493 = vmatprep.subr.mxu0 0.0
    %5494 = vmatpush2.msra.mxu0 0.0
    %5495 = vmatprep.subr.mxu0 0.0
    %5496 = vmatpush2.msra.mxu0 0.0
    %5497 = vmatprep.subr.mxu0 0.0
    %5498 = vmatpush2.msra.mxu0 0.0
    %5499 = vmatprep.subr.mxu0 0.0
    %5500 = vmatpush2.msra.mxu0 0.0
    %5501 = vmatprep.subr.mxu0 0.0
    %5502 = vmatpush2.msra.mxu0 0.0
    %5503 = vmatprep.mubr.f32.mxu0 0.0
    %5504 = vmatmul.mubr.f32.gmra.mxu0 %v5437
    %v5505 = vpop.f32.mrf.mxu0
    %v5506 = vadd.f32 0.0, %v5505
    %v5507 = vpop.f32.mrf.mxu0
    %5508 = vdwg.mxu0
    %v5510 = vsel %vm403, %v5506, 0
    %5512 = vmatprep.subr.mxu0 0.0
    %5513 = vmatpush1.msra.mxu0 0.0
    %5514 = vmatprep.subr.mxu0 0.0
    %5515 = vmatpush1.msra.mxu0 0.0
    %5516 = vmatprep.subr.mxu0 0.0
    %5517 = vmatpush1.msra.mxu0 0.0
    %5518 = vmatprep.subr.mxu0 0.0
    %5519 = vmatpush1.msra.mxu0 0.0
    %5520 = vmatprep.subr.mxu0 0.0
    %5521 = vmatpush1.msra.mxu0 0.0
    %5522 = vmatprep.subr.mxu0 0.0
    %5523 = vmatpush1.msra.mxu0 0.0
    %5524 = vmatprep.subr.mxu0 0.0
    %5525 = vmatpush1.msra.mxu0 0.0
    %5526 = vmatprep.subr.mxu0 0.0
    %5527 = vmatpush1.msra.mxu0 0.0
    %5528 = vmatprep.subr.mxu0 0.0
    %5529 = vmatpush1.msra.mxu0 0.0
    %5530 = vmatprep.subr.mxu0 0.0
    %5531 = vmatpush1.msra.mxu0 0.0
    %5532 = vmatprep.subr.mxu0 0.0
    %5533 = vmatpush1.msra.mxu0 0.0
    %5534 = vmatprep.subr.mxu0 0.0
    %5535 = vmatpush1.msra.mxu0 0.0
    %5536 = vmatprep.subr.mxu0 0.0
    %5537 = vmatpush1.msra.mxu0 0.0
    %5538 = vmatprep.subr.mxu0 0.0
    %5539 = vmatpush1.msra.mxu0 0.0
    %5540 = vmatprep.subr.mxu0 0.0
    %5541 = vmatpush1.msra.mxu0 0.0
    %5542 = vmatprep.subr.mxu0 0.0
    %5543 = vmatpush1.msra.mxu0 %v4865
    %5544 = vmatprep.subr.mxu0 0.0
    %5545 = vmatpush2.msra.mxu0 0.0
    %5546 = vmatprep.subr.mxu0 0.0
    %5547 = vmatpush2.msra.mxu0 0.0
    %5548 = vmatprep.subr.mxu0 0.0
    %5549 = vmatpush2.msra.mxu0 0.0
    %5550 = vmatprep.subr.mxu0 0.0
    %5551 = vmatpush2.msra.mxu0 0.0
    %5552 = vmatprep.subr.mxu0 0.0
    %5553 = vmatpush2.msra.mxu0 0.0
    %5554 = vmatprep.subr.mxu0 0.0
    %5555 = vmatpush2.msra.mxu0 0.0
    %5556 = vmatprep.subr.mxu0 0.0
    %5557 = vmatpush2.msra.mxu0 0.0
    %5558 = vmatprep.subr.mxu0 0.0
    %5559 = vmatpush2.msra.mxu0 0.0
    %5560 = vmatprep.subr.mxu0 0.0
    %5561 = vmatpush2.msra.mxu0 0.0
    %5562 = vmatprep.subr.mxu0 0.0
    %5563 = vmatpush2.msra.mxu0 0.0
    %5564 = vmatprep.subr.mxu0 0.0
    %5565 = vmatpush2.msra.mxu0 0.0
    %5566 = vmatprep.subr.mxu0 0.0
    %5567 = vmatpush2.msra.mxu0 0.0
    %5568 = vmatprep.subr.mxu0 0.0
    %5569 = vmatpush2.msra.mxu0 0.0
    %5570 = vmatprep.subr.mxu0 0.0
    %5571 = vmatpush2.msra.mxu0 0.0
    %5572 = vmatprep.subr.mxu0 0.0
    %5573 = vmatpush2.msra.mxu0 0.0
    %5574 = vmatprep.subr.mxu0 0.0
    %5575 = vmatpush2.msra.mxu0 0.0
    %5576 = vmatprep.mubr.f32.mxu0 0.0
    %5577 = vmatmul.mubr.f32.gmra.mxu0 %v5510
    %v5578 = vpop.f32.mrf.mxu0
    %v5579 = vadd.f32 0.0, %v5578
    %v5580 = vpop.f32.mrf.mxu0
    %5581 = vdwg.mxu0
    %v5582 = vadd.f32 %v5341, %v5579
    %5583 = vrot.lane.b32.xlu0 %v4854, 104
    %v5584 = vpop.permute.xlu0 %5583
    %5585 = vrot.lane.b32.xlu0 %v4854, 72
    %v5586 = vpop.permute.xlu0 %5585
    %v5587 = vsel %vm403, %v5584, 0
    %v5589 = vsel %vm403, %v5586, 0
    %5591 = vmatprep.subr.mxu0 0.0
    %5592 = vmatpush1.xpose.msra.mxu0 0.0
    %5593 = vmatprep.subr.mxu0 0.0
    %5594 = vmatpush1.xpose.msra.mxu0 0.0
    %5595 = vmatprep.subr.mxu0 0.0
    %5596 = vmatpush1.xpose.msra.mxu0 0.0
    %5597 = vmatprep.subr.mxu0 0.0
    %5598 = vmatpush1.xpose.msra.mxu0 0.0
    %5599 = vmatprep.subr.mxu0 0.0
    %5600 = vmatpush1.xpose.msra.mxu0 0.0
    %5601 = vmatprep.subr.mxu0 0.0
    %5602 = vmatpush1.xpose.msra.mxu0 0.0
    %5603 = vmatprep.subr.mxu0 0.0
    %5604 = vmatpush1.xpose.msra.mxu0 0.0
    %5605 = vmatprep.subr.mxu0 0.0
    %5606 = vmatpush1.xpose.msra.mxu0 0.0
    %5607 = vmatprep.subr.mxu0 0.0
    %5608 = vmatpush1.xpose.msra.mxu0 0.0
    %5609 = vmatprep.subr.mxu0 0.0
    %5610 = vmatpush1.xpose.msra.mxu0 0.0
    %5611 = vmatprep.subr.mxu0 0.0
    %5612 = vmatpush1.xpose.msra.mxu0 0.0
    %5613 = vmatprep.subr.mxu0 0.0
    %5614 = vmatpush1.xpose.msra.mxu0 0.0
    %5615 = vmatprep.subr.mxu0 0.0
    %5616 = vmatpush1.xpose.msra.mxu0 0.0
    %5617 = vmatprep.subr.mxu0 0.0
    %5618 = vmatpush1.xpose.msra.mxu0 0.0
    %5619 = vmatprep.subr.mxu0 0.0
    %5620 = vmatpush1.xpose.msra.mxu0 0.0
    %5621 = vmatprep.subr.mxu0 0.0
    %5622 = vmatpush1.xpose.msra.mxu0 %v5589
    %5623 = vmatprep.subr.mxu0 0.0
    %5624 = vmatpush2.xpose.msra.mxu0 0.0
    %5625 = vmatprep.subr.mxu0 0.0
    %5626 = vmatpush2.xpose.msra.mxu0 0.0
    %5627 = vmatprep.subr.mxu0 0.0
    %5628 = vmatpush2.xpose.msra.mxu0 0.0
    %5629 = vmatprep.subr.mxu0 0.0
    %5630 = vmatpush2.xpose.msra.mxu0 0.0
    %5631 = vmatprep.subr.mxu0 0.0
    %5632 = vmatpush2.xpose.msra.mxu0 0.0
    %5633 = vmatprep.subr.mxu0 0.0
    %5634 = vmatpush2.xpose.msra.mxu0 0.0
    %5635 = vmatprep.subr.mxu0 0.0
    %5636 = vmatpush2.xpose.msra.mxu0 0.0
    %5637 = vmatprep.subr.mxu0 0.0
    %5638 = vmatpush2.xpose.msra.mxu0 0.0
    %5639 = vmatprep.subr.mxu0 0.0
    %5640 = vmatpush2.xpose.msra.mxu0 0.0
    %5641 = vmatprep.subr.mxu0 0.0
    %5642 = vmatpush2.xpose.msra.mxu0 0.0
    %5643 = vmatprep.subr.mxu0 0.0
    %5644 = vmatpush2.xpose.msra.mxu0 0.0
    %5645 = vmatprep.subr.mxu0 0.0
    %5646 = vmatpush2.xpose.msra.mxu0 0.0
    %5647 = vmatprep.subr.mxu0 0.0
    %5648 = vmatpush2.xpose.msra.mxu0 0.0
    %5649 = vmatprep.subr.mxu0 0.0
    %5650 = vmatpush2.xpose.msra.mxu0 0.0
    %5651 = vmatprep.subr.mxu0 0.0
    %5652 = vmatpush2.xpose.msra.mxu0 0.0
    %5653 = vmatprep.subr.mxu0 0.0
    %5654 = vmatpush2.xpose.msra.mxu0 0.0
    %5655 = vmatprep.mubr.f32.mxu0 0.0
    %5656 = vmatmul.mubr.f32.gmra.mxu0 %v5587
    %v5657 = vpop.f32.mrf.mxu0
    %v5658 = vadd.f32 %v295, %v5657
    %v5659 = vpop.f32.mrf.mxu0
    %5660 = vdwg.mxu0
    %v5661 = vsel %vm403, %v5658, -inf
    %5662 = vmax.xlane.f32.xlu0 %v5661
    %v5663 = vpop.xlane.xlu0 %5662
    %v5664 = vsub.f32 %v5658, %v5663
    %v5665 = vmul.f32 %v5664, 1.442695
    %v5666 = vpow.pop %v5665
    %v5667 = vsel %vm403, %v5666, 0.0
    %5668 = vadd.xlane.f32.xlu0 %v5667
    %v5669 = vpop.xlane.xlu0 %5668
    %v5670 = vrcp.pop %v5669
    %v5671 = vmul.f32 %v5666, %v5670
    %5672 = vrot.lane.b32.xlu0 %v4854, 40
    %v5673 = vpop.permute.xlu0 %5672
    %v5676 = vsel %vm403, %v5671, 0
    %5678 = vmatprep.subr.mxu0 0.0
    %5679 = vmatpush1.msra.mxu0 0.0
    %5680 = vmatprep.subr.mxu0 0.0
    %5681 = vmatpush1.msra.mxu0 0.0
    %5682 = vmatprep.subr.mxu0 0.0
    %5683 = vmatpush1.msra.mxu0 0.0
    %5684 = vmatprep.subr.mxu0 0.0
    %5685 = vmatpush1.msra.mxu0 0.0
    %5686 = vmatprep.subr.mxu0 0.0
    %5687 = vmatpush1.msra.mxu0 0.0
    %5688 = vmatprep.subr.mxu0 0.0
    %5689 = vmatpush1.msra.mxu0 0.0
    %5690 = vmatprep.subr.mxu0 0.0
    %5691 = vmatpush1.msra.mxu0 0.0
    %5692 = vmatprep.subr.mxu0 0.0
    %5693 = vmatpush1.msra.mxu0 0.0
    %5694 = vmatprep.subr.mxu0 0.0
    %5695 = vmatpush1.msra.mxu0 0.0
    %5696 = vmatprep.subr.mxu0 0.0
    %5697 = vmatpush1.msra.mxu0 0.0
    %5698 = vmatprep.subr.mxu0 0.0
    %5699 = vmatpush1.msra.mxu0 0.0
    %5700 = vmatprep.subr.mxu0 0.0
    %5701 = vmatpush1.msra.mxu0 0.0
    %5702 = vmatprep.subr.mxu0 0.0
    %5703 = vmatpush1.msra.mxu0 0.0
    %5704 = vmatprep.subr.mxu0 0.0
    %5705 = vmatpush1.msra.mxu0 0.0
    %5706 = vmatprep.subr.mxu0 0.0
    %5707 = vmatpush1.msra.mxu0 0.0
    %5708 = vmatprep.subr.mxu0 0.0
    %5709 = vmatpush1.msra.mxu0 %v5673
    %5710 = vmatprep.subr.mxu0 0.0
    %5711 = vmatpush2.msra.mxu0 0.0
    %5712 = vmatprep.subr.mxu0 0.0
    %5713 = vmatpush2.msra.mxu0 0.0
    %5714 = vmatprep.subr.mxu0 0.0
    %5715 = vmatpush2.msra.mxu0 0.0
    %5716 = vmatprep.subr.mxu0 0.0
    %5717 = vmatpush2.msra.mxu0 0.0
    %5718 = vmatprep.subr.mxu0 0.0
    %5719 = vmatpush2.msra.mxu0 0.0
    %5720 = vmatprep.subr.mxu0 0.0
    %5721 = vmatpush2.msra.mxu0 0.0
    %5722 = vmatprep.subr.mxu0 0.0
    %5723 = vmatpush2.msra.mxu0 0.0
    %5724 = vmatprep.subr.mxu0 0.0
    %5725 = vmatpush2.msra.mxu0 0.0
    %5726 = vmatprep.subr.mxu0 0.0
    %5727 = vmatpush2.msra.mxu0 0.0
    %5728 = vmatprep.subr.mxu0 0.0
    %5729 = vmatpush2.msra.mxu0 0.0
    %5730 = vmatprep.subr.mxu0 0.0
    %5731 = vmatpush2.msra.mxu0 0.0
    %5732 = vmatprep.subr.mxu0 0.0
    %5733 = vmatpush2.msra.mxu0 0.0
    %5734 = vmatprep.subr.mxu0 0.0
    %5735 = vmatpush2.msra.mxu0 0.0
    %5736 = vmatprep.subr.mxu0 0.0
    %5737 = vmatpush2.msra.mxu0 0.0
    %5738 = vmatprep.subr.mxu0 0.0
    %5739 = vmatpush2.msra.mxu0 0.0
    %5740 = vmatprep.subr.mxu0 0.0
    %5741 = vmatpush2.msra.mxu0 0.0
    %5742 = vmatprep.mubr.f32.mxu0 0.0
    %5743 = vmatmul.mubr.f32.gmra.mxu0 %v5676
    %v5744 = vpop.f32.mrf.mxu0
    %v5745 = vadd.f32 0.0, %v5744
    %v5746 = vpop.f32.mrf.mxu0
    %5747 = vdwg.mxu0
    %v5749 = vsel %vm403, %v5745, 0
    %5751 = vmatprep.subr.mxu0 0.0
    %5752 = vmatpush1.msra.mxu0 0.0
    %5753 = vmatprep.subr.mxu0 0.0
    %5754 = vmatpush1.msra.mxu0 0.0
    %5755 = vmatprep.subr.mxu0 0.0
    %5756 = vmatpush1.msra.mxu0 0.0
    %5757 = vmatprep.subr.mxu0 0.0
    %5758 = vmatpush1.msra.mxu0 0.0
    %5759 = vmatprep.subr.mxu0 0.0
    %5760 = vmatpush1.msra.mxu0 0.0
    %5761 = vmatprep.subr.mxu0 0.0
    %5762 = vmatpush1.msra.mxu0 0.0
    %5763 = vmatprep.subr.mxu0 0.0
    %5764 = vmatpush1.msra.mxu0 0.0
    %5765 = vmatprep.subr.mxu0 0.0
    %5766 = vmatpush1.msra.mxu0 0.0
    %5767 = vmatprep.subr.mxu0 0.0
    %5768 = vmatpush1.msra.mxu0 0.0
    %5769 = vmatprep.subr.mxu0 0.0
    %5770 = vmatpush1.msra.mxu0 0.0
    %5771 = vmatprep.subr.mxu0 0.0
    %5772 = vmatpush1.msra.mxu0 0.0
    %5773 = vmatprep.subr.mxu0 0.0
    %5774 = vmatpush1.msra.mxu0 0.0
    %5775 = vmatprep.subr.mxu0 0.0
    %5776 = vmatpush1.msra.mxu0 0.0
    %5777 = vmatprep.subr.mxu0 0.0
    %5778 = vmatpush1.msra.mxu0 0.0
    %5779 = vmatprep.subr.mxu0 0.0
    %5780 = vmatpush1.msra.mxu0 0.0
    %5781 = vmatprep.subr.mxu0 0.0
    %5782 = vmatpush1.msra.mxu0 %v4866
    %5783 = vmatprep.subr.mxu0 0.0
    %5784 = vmatpush2.msra.mxu0 0.0
    %5785 = vmatprep.subr.mxu0 0.0
    %5786 = vmatpush2.msra.mxu0 0.0
    %5787 = vmatprep.subr.mxu0 0.0
    %5788 = vmatpush2.msra.mxu0 0.0
    %5789 = vmatprep.subr.mxu0 0.0
    %5790 = vmatpush2.msra.mxu0 0.0
    %5791 = vmatprep.subr.mxu0 0.0
    %5792 = vmatpush2.msra.mxu0 0.0
    %5793 = vmatprep.subr.mxu0 0.0
    %5794 = vmatpush2.msra.mxu0 0.0
    %5795 = vmatprep.subr.mxu0 0.0
    %5796 = vmatpush2.msra.mxu0 0.0
    %5797 = vmatprep.subr.mxu0 0.0
    %5798 = vmatpush2.msra.mxu0 0.0
    %5799 = vmatprep.subr.mxu0 0.0
    %5800 = vmatpush2.msra.mxu0 0.0
    %5801 = vmatprep.subr.mxu0 0.0
    %5802 = vmatpush2.msra.mxu0 0.0
    %5803 = vmatprep.subr.mxu0 0.0
    %5804 = vmatpush2.msra.mxu0 0.0
    %5805 = vmatprep.subr.mxu0 0.0
    %5806 = vmatpush2.msra.mxu0 0.0
    %5807 = vmatprep.subr.mxu0 0.0
    %5808 = vmatpush2.msra.mxu0 0.0
    %5809 = vmatprep.subr.mxu0 0.0
    %5810 = vmatpush2.msra.mxu0 0.0
    %5811 = vmatprep.subr.mxu0 0.0
    %5812 = vmatpush2.msra.mxu0 0.0
    %5813 = vmatprep.subr.mxu0 0.0
    %5814 = vmatpush2.msra.mxu0 0.0
    %5815 = vmatprep.mubr.f32.mxu0 0.0
    %5816 = vmatmul.mubr.f32.gmra.mxu0 %v5749
    %v5817 = vpop.f32.mrf.mxu0
    %v5818 = vadd.f32 0.0, %v5817
    %v5819 = vpop.f32.mrf.mxu0
    %5820 = vdwg.mxu0
    %v5821 = vadd.f32 %v5582, %v5818
    %5823 = vrot.lane.b32.xlu0 %v4859, 96
    %v5824 = vpop.permute.xlu0 %5823
    %v5825 = vsel %vm403, %v4859, 0
    %v5827 = vsel %vm403, %v5824, 0
    %5829 = vmatprep.subr.mxu0 0.0
    %5830 = vmatpush1.xpose.msra.mxu0 0.0
    %5831 = vmatprep.subr.mxu0 0.0
    %5832 = vmatpush1.xpose.msra.mxu0 0.0
    %5833 = vmatprep.subr.mxu0 0.0
    %5834 = vmatpush1.xpose.msra.mxu0 0.0
    %5835 = vmatprep.subr.mxu0 0.0
    %5836 = vmatpush1.xpose.msra.mxu0 0.0
    %5837 = vmatprep.subr.mxu0 0.0
    %5838 = vmatpush1.xpose.msra.mxu0 0.0
    %5839 = vmatprep.subr.mxu0 0.0
    %5840 = vmatpush1.xpose.msra.mxu0 0.0
    %5841 = vmatprep.subr.mxu0 0.0
    %5842 = vmatpush1.xpose.msra.mxu0 0.0
    %5843 = vmatprep.subr.mxu0 0.0
    %5844 = vmatpush1.xpose.msra.mxu0 0.0
    %5845 = vmatprep.subr.mxu0 0.0
    %5846 = vmatpush1.xpose.msra.mxu0 0.0
    %5847 = vmatprep.subr.mxu0 0.0
    %5848 = vmatpush1.xpose.msra.mxu0 0.0
    %5849 = vmatprep.subr.mxu0 0.0
    %5850 = vmatpush1.xpose.msra.mxu0 0.0
    %5851 = vmatprep.subr.mxu0 0.0
    %5852 = vmatpush1.xpose.msra.mxu0 0.0
    %5853 = vmatprep.subr.mxu0 0.0
    %5854 = vmatpush1.xpose.msra.mxu0 0.0
    %5855 = vmatprep.subr.mxu0 0.0
    %5856 = vmatpush1.xpose.msra.mxu0 0.0
    %5857 = vmatprep.subr.mxu0 0.0
    %5858 = vmatpush1.xpose.msra.mxu0 0.0
    %5859 = vmatprep.subr.mxu0 0.0
    %5860 = vmatpush1.xpose.msra.mxu0 %v5827
    %5861 = vmatprep.subr.mxu0 0.0
    %5862 = vmatpush2.xpose.msra.mxu0 0.0
    %5863 = vmatprep.subr.mxu0 0.0
    %5864 = vmatpush2.xpose.msra.mxu0 0.0
    %5865 = vmatprep.subr.mxu0 0.0
    %5866 = vmatpush2.xpose.msra.mxu0 0.0
    %5867 = vmatprep.subr.mxu0 0.0
    %5868 = vmatpush2.xpose.msra.mxu0 0.0
    %5869 = vmatprep.subr.mxu0 0.0
    %5870 = vmatpush2.xpose.msra.mxu0 0.0
    %5871 = vmatprep.subr.mxu0 0.0
    %5872 = vmatpush2.xpose.msra.mxu0 0.0
    %5873 = vmatprep.subr.mxu0 0.0
    %5874 = vmatpush2.xpose.msra.mxu0 0.0
    %5875 = vmatprep.subr.mxu0 0.0
    %5876 = vmatpush2.xpose.msra.mxu0 0.0
    %5877 = vmatprep.subr.mxu0 0.0
    %5878 = vmatpush2.xpose.msra.mxu0 0.0
    %5879 = vmatprep.subr.mxu0 0.0
    %5880 = vmatpush2.xpose.msra.mxu0 0.0
    %5881 = vmatprep.subr.mxu0 0.0
    %5882 = vmatpush2.xpose.msra.mxu0 0.0
    %5883 = vmatprep.subr.mxu0 0.0
    %5884 = vmatpush2.xpose.msra.mxu0 0.0
    %5885 = vmatprep.subr.mxu0 0.0
    %5886 = vmatpush2.xpose.msra.mxu0 0.0
    %5887 = vmatprep.subr.mxu0 0.0
    %5888 = vmatpush2.xpose.msra.mxu0 0.0
    %5889 = vmatprep.subr.mxu0 0.0
    %5890 = vmatpush2.xpose.msra.mxu0 0.0
    %5891 = vmatprep.subr.mxu0 0.0
    %5892 = vmatpush2.xpose.msra.mxu0 0.0
    %5893 = vmatprep.mubr.f32.mxu0 0.0
    %5894 = vmatmul.mubr.f32.gmra.mxu0 %v5825
    %v5895 = vpop.f32.mrf.mxu0
    %v5896 = vadd.f32 %v300, %v5895
    %v5897 = vpop.f32.mrf.mxu0
    %5898 = vdwg.mxu0
    %v5899 = vsel %vm403, %v5896, -inf
    %5900 = vmax.xlane.f32.xlu0 %v5899
    %v5901 = vpop.xlane.xlu0 %5900
    %v5902 = vsub.f32 %v5896, %v5901
    %v5903 = vmul.f32 %v5902, 1.442695
    %v5904 = vpow.pop %v5903
    %v5905 = vsel %vm403, %v5904, 0.0
    %5906 = vadd.xlane.f32.xlu0 %v5905
    %v5907 = vpop.xlane.xlu0 %5906
    %v5908 = vrcp.pop %v5907
    %v5909 = vmul.f32 %v5904, %v5908
    %5910 = vrot.lane.b32.xlu0 %v4859, 64
    %v5911 = vpop.permute.xlu0 %5910
    %v5914 = vsel %vm403, %v5909, 0
    %5916 = vmatprep.subr.mxu0 0.0
    %5917 = vmatpush1.msra.mxu0 0.0
    %5918 = vmatprep.subr.mxu0 0.0
    %5919 = vmatpush1.msra.mxu0 0.0
    %5920 = vmatprep.subr.mxu0 0.0
    %5921 = vmatpush1.msra.mxu0 0.0
    %5922 = vmatprep.subr.mxu0 0.0
    %5923 = vmatpush1.msra.mxu0 0.0
    %5924 = vmatprep.subr.mxu0 0.0
    %5925 = vmatpush1.msra.mxu0 0.0
    %5926 = vmatprep.subr.mxu0 0.0
    %5927 = vmatpush1.msra.mxu0 0.0
    %5928 = vmatprep.subr.mxu0 0.0
    %5929 = vmatpush1.msra.mxu0 0.0
    %5930 = vmatprep.subr.mxu0 0.0
    %5931 = vmatpush1.msra.mxu0 0.0
    %5932 = vmatprep.subr.mxu0 0.0
    %5933 = vmatpush1.msra.mxu0 0.0
    %5934 = vmatprep.subr.mxu0 0.0
    %5935 = vmatpush1.msra.mxu0 0.0
    %5936 = vmatprep.subr.mxu0 0.0
    %5937 = vmatpush1.msra.mxu0 0.0
    %5938 = vmatprep.subr.mxu0 0.0
    %5939 = vmatpush1.msra.mxu0 0.0
    %5940 = vmatprep.subr.mxu0 0.0
    %5941 = vmatpush1.msra.mxu0 0.0
    %5942 = vmatprep.subr.mxu0 0.0
    %5943 = vmatpush1.msra.mxu0 0.0
    %5944 = vmatprep.subr.mxu0 0.0
    %5945 = vmatpush1.msra.mxu0 0.0
    %5946 = vmatprep.subr.mxu0 0.0
    %5947 = vmatpush1.msra.mxu0 %v5911
    %5948 = vmatprep.subr.mxu0 0.0
    %5949 = vmatpush2.msra.mxu0 0.0
    %5950 = vmatprep.subr.mxu0 0.0
    %5951 = vmatpush2.msra.mxu0 0.0
    %5952 = vmatprep.subr.mxu0 0.0
    %5953 = vmatpush2.msra.mxu0 0.0
    %5954 = vmatprep.subr.mxu0 0.0
    %5955 = vmatpush2.msra.mxu0 0.0
    %5956 = vmatprep.subr.mxu0 0.0
    %5957 = vmatpush2.msra.mxu0 0.0
    %5958 = vmatprep.subr.mxu0 0.0
    %5959 = vmatpush2.msra.mxu0 0.0
    %5960 = vmatprep.subr.mxu0 0.0
    %5961 = vmatpush2.msra.mxu0 0.0
    %5962 = vmatprep.subr.mxu0 0.0
    %5963 = vmatpush2.msra.mxu0 0.0
    %5964 = vmatprep.subr.mxu0 0.0
    %5965 = vmatpush2.msra.mxu0 0.0
    %5966 = vmatprep.subr.mxu0 0.0
    %5967 = vmatpush2.msra.mxu0 0.0
    %5968 = vmatprep.subr.mxu0 0.0
    %5969 = vmatpush2.msra.mxu0 0.0
    %5970 = vmatprep.subr.mxu0 0.0
    %5971 = vmatpush2.msra.mxu0 0.0
    %5972 = vmatprep.subr.mxu0 0.0
    %5973 = vmatpush2.msra.mxu0 0.0
    %5974 = vmatprep.subr.mxu0 0.0
    %5975 = vmatpush2.msra.mxu0 0.0
    %5976 = vmatprep.subr.mxu0 0.0
    %5977 = vmatpush2.msra.mxu0 0.0
    %5978 = vmatprep.subr.mxu0 0.0
    %5979 = vmatpush2.msra.mxu0 0.0
    %5980 = vmatprep.mubr.f32.mxu0 0.0
    %5981 = vmatmul.mubr.f32.gmra.mxu0 %v5914
    %v5982 = vpop.f32.mrf.mxu0
    %v5983 = vadd.f32 0.0, %v5982
    %v5984 = vpop.f32.mrf.mxu0
    %5985 = vdwg.mxu0
    %5986 = vrot.lane.b32.xlu0 %v4859, 120
    %v5987 = vpop.permute.xlu0 %5986
    %5988 = vrot.lane.b32.xlu0 %v4859, 88
    %v5989 = vpop.permute.xlu0 %5988
    %v5990 = vsel %vm403, %v5987, 0
    %v5992 = vsel %vm403, %v5989, 0
    %5994 = vmatprep.subr.mxu0 0.0
    %5995 = vmatpush1.xpose.msra.mxu0 0.0
    %5996 = vmatprep.subr.mxu0 0.0
    %5997 = vmatpush1.xpose.msra.mxu0 0.0
    %5998 = vmatprep.subr.mxu0 0.0
    %5999 = vmatpush1.xpose.msra.mxu0 0.0
    %6000 = vmatprep.subr.mxu0 0.0
    %6001 = vmatpush1.xpose.msra.mxu0 0.0
    %6002 = vmatprep.subr.mxu0 0.0
    %6003 = vmatpush1.xpose.msra.mxu0 0.0
    %6004 = vmatprep.subr.mxu0 0.0
    %6005 = vmatpush1.xpose.msra.mxu0 0.0
    %6006 = vmatprep.subr.mxu0 0.0
    %6007 = vmatpush1.xpose.msra.mxu0 0.0
    %6008 = vmatprep.subr.mxu0 0.0
    %6009 = vmatpush1.xpose.msra.mxu0 0.0
    %6010 = vmatprep.subr.mxu0 0.0
    %6011 = vmatpush1.xpose.msra.mxu0 0.0
    %6012 = vmatprep.subr.mxu0 0.0
    %6013 = vmatpush1.xpose.msra.mxu0 0.0
    %6014 = vmatprep.subr.mxu0 0.0
    %6015 = vmatpush1.xpose.msra.mxu0 0.0
    %6016 = vmatprep.subr.mxu0 0.0
    %6017 = vmatpush1.xpose.msra.mxu0 0.0
    %6018 = vmatprep.subr.mxu0 0.0
    %6019 = vmatpush1.xpose.msra.mxu0 0.0
    %6020 = vmatprep.subr.mxu0 0.0
    %6021 = vmatpush1.xpose.msra.mxu0 0.0
    %6022 = vmatprep.subr.mxu0 0.0
    %6023 = vmatpush1.xpose.msra.mxu0 0.0
    %6024 = vmatprep.subr.mxu0 0.0
    %6025 = vmatpush1.xpose.msra.mxu0 %v5992
    %6026 = vmatprep.subr.mxu0 0.0
    %6027 = vmatpush2.xpose.msra.mxu0 0.0
    %6028 = vmatprep.subr.mxu0 0.0
    %6029 = vmatpush2.xpose.msra.mxu0 0.0
    %6030 = vmatprep.subr.mxu0 0.0
    %6031 = vmatpush2.xpose.msra.mxu0 0.0
    %6032 = vmatprep.subr.mxu0 0.0
    %6033 = vmatpush2.xpose.msra.mxu0 0.0
    %6034 = vmatprep.subr.mxu0 0.0
    %6035 = vmatpush2.xpose.msra.mxu0 0.0
    %6036 = vmatprep.subr.mxu0 0.0
    %6037 = vmatpush2.xpose.msra.mxu0 0.0
    %6038 = vmatprep.subr.mxu0 0.0
    %6039 = vmatpush2.xpose.msra.mxu0 0.0
    %6040 = vmatprep.subr.mxu0 0.0
    %6041 = vmatpush2.xpose.msra.mxu0 0.0
    %6042 = vmatprep.subr.mxu0 0.0
    %6043 = vmatpush2.xpose.msra.mxu0 0.0
    %6044 = vmatprep.subr.mxu0 0.0
    %6045 = vmatpush2.xpose.msra.mxu0 0.0
    %6046 = vmatprep.subr.mxu0 0.0
    %6047 = vmatpush2.xpose.msra.mxu0 0.0
    %6048 = vmatprep.subr.mxu0 0.0
    %6049 = vmatpush2.xpose.msra.mxu0 0.0
    %6050 = vmatprep.subr.mxu0 0.0
    %6051 = vmatpush2.xpose.msra.mxu0 0.0
    %6052 = vmatprep.subr.mxu0 0.0
    %6053 = vmatpush2.xpose.msra.mxu0 0.0
    %6054 = vmatprep.subr.mxu0 0.0
    %6055 = vmatpush2.xpose.msra.mxu0 0.0
    %6056 = vmatprep.subr.mxu0 0.0
    %6057 = vmatpush2.xpose.msra.mxu0 0.0
    %6058 = vmatprep.mubr.f32.mxu0 0.0
    %6059 = vmatmul.mubr.f32.gmra.mxu0 %v5990
    %v6060 = vpop.f32.mrf.mxu0
    %v6061 = vadd.f32 %v300, %v6060
    %v6062 = vpop.f32.mrf.mxu0
    %6063 = vdwg.mxu0
    %v6064 = vsel %vm403, %v6061, -inf
    %6065 = vmax.xlane.f32.xlu0 %v6064
    %v6066 = vpop.xlane.xlu0 %6065
    %v6067 = vsub.f32 %v6061, %v6066
    %v6068 = vmul.f32 %v6067, 1.442695
    %v6069 = vpow.pop %v6068
    %v6070 = vsel %vm403, %v6069, 0.0
    %6071 = vadd.xlane.f32.xlu0 %v6070
    %v6072 = vpop.xlane.xlu0 %6071
    %v6073 = vrcp.pop %v6072
    %v6074 = vmul.f32 %v6069, %v6073
    %6075 = vrot.lane.b32.xlu0 %v4859, 56
    %v6076 = vpop.permute.xlu0 %6075
    %v6079 = vsel %vm403, %v6074, 0
    %6081 = vmatprep.subr.mxu0 0.0
    %6082 = vmatpush1.msra.mxu0 0.0
    %6083 = vmatprep.subr.mxu0 0.0
    %6084 = vmatpush1.msra.mxu0 0.0
    %6085 = vmatprep.subr.mxu0 0.0
    %6086 = vmatpush1.msra.mxu0 0.0
    %6087 = vmatprep.subr.mxu0 0.0
    %6088 = vmatpush1.msra.mxu0 0.0
    %6089 = vmatprep.subr.mxu0 0.0
    %6090 = vmatpush1.msra.mxu0 0.0
    %6091 = vmatprep.subr.mxu0 0.0
    %6092 = vmatpush1.msra.mxu0 0.0
    %6093 = vmatprep.subr.mxu0 0.0
    %6094 = vmatpush1.msra.mxu0 0.0
    %6095 = vmatprep.subr.mxu0 0.0
    %6096 = vmatpush1.msra.mxu0 0.0
    %6097 = vmatprep.subr.mxu0 0.0
    %6098 = vmatpush1.msra.mxu0 0.0
    %6099 = vmatprep.subr.mxu0 0.0
    %6100 = vmatpush1.msra.mxu0 0.0
    %6101 = vmatprep.subr.mxu0 0.0
    %6102 = vmatpush1.msra.mxu0 0.0
    %6103 = vmatprep.subr.mxu0 0.0
    %6104 = vmatpush1.msra.mxu0 0.0
    %6105 = vmatprep.subr.mxu0 0.0
    %6106 = vmatpush1.msra.mxu0 0.0
    %6107 = vmatprep.subr.mxu0 0.0
    %6108 = vmatpush1.msra.mxu0 0.0
    %6109 = vmatprep.subr.mxu0 0.0
    %6110 = vmatpush1.msra.mxu0 0.0
    %6111 = vmatprep.subr.mxu0 0.0
    %6112 = vmatpush1.msra.mxu0 %v6076
    %6113 = vmatprep.subr.mxu0 0.0
    %6114 = vmatpush2.msra.mxu0 0.0
    %6115 = vmatprep.subr.mxu0 0.0
    %6116 = vmatpush2.msra.mxu0 0.0
    %6117 = vmatprep.subr.mxu0 0.0
    %6118 = vmatpush2.msra.mxu0 0.0
    %6119 = vmatprep.subr.mxu0 0.0
    %6120 = vmatpush2.msra.mxu0 0.0
    %6121 = vmatprep.subr.mxu0 0.0
    %6122 = vmatpush2.msra.mxu0 0.0
    %6123 = vmatprep.subr.mxu0 0.0
    %6124 = vmatpush2.msra.mxu0 0.0
    %6125 = vmatprep.subr.mxu0 0.0
    %6126 = vmatpush2.msra.mxu0 0.0
    %6127 = vmatprep.subr.mxu0 0.0
    %6128 = vmatpush2.msra.mxu0 0.0
    %6129 = vmatprep.subr.mxu0 0.0
    %6130 = vmatpush2.msra.mxu0 0.0
    %6131 = vmatprep.subr.mxu0 0.0
    %6132 = vmatpush2.msra.mxu0 0.0
    %6133 = vmatprep.subr.mxu0 0.0
    %6134 = vmatpush2.msra.mxu0 0.0
    %6135 = vmatprep.subr.mxu0 0.0
    %6136 = vmatpush2.msra.mxu0 0.0
    %6137 = vmatprep.subr.mxu0 0.0
    %6138 = vmatpush2.msra.mxu0 0.0
    %6139 = vmatprep.subr.mxu0 0.0
    %6140 = vmatpush2.msra.mxu0 0.0
    %6141 = vmatprep.subr.mxu0 0.0
    %6142 = vmatpush2.msra.mxu0 0.0
    %6143 = vmatprep.subr.mxu0 0.0
    %6144 = vmatpush2.msra.mxu0 0.0
    %6145 = vmatprep.mubr.f32.mxu0 0.0
    %6146 = vmatmul.mubr.f32.gmra.mxu0 %v6079
    %v6147 = vpop.f32.mrf.mxu0
    %v6148 = vadd.f32 0.0, %v6147
    %v6149 = vpop.f32.mrf.mxu0
    %6150 = vdwg.mxu0
    %v6152 = vsel %vm403, %v6148, 0
    %6154 = vmatprep.subr.mxu0 0.0
    %6155 = vmatpush1.msra.mxu0 0.0
    %6156 = vmatprep.subr.mxu0 0.0
    %6157 = vmatpush1.msra.mxu0 0.0
    %6158 = vmatprep.subr.mxu0 0.0
    %6159 = vmatpush1.msra.mxu0 0.0
    %6160 = vmatprep.subr.mxu0 0.0
    %6161 = vmatpush1.msra.mxu0 0.0
    %6162 = vmatprep.subr.mxu0 0.0
    %6163 = vmatpush1.msra.mxu0 0.0
    %6164 = vmatprep.subr.mxu0 0.0
    %6165 = vmatpush1.msra.mxu0 0.0
    %6166 = vmatprep.subr.mxu0 0.0
    %6167 = vmatpush1.msra.mxu0 0.0
    %6168 = vmatprep.subr.mxu0 0.0
    %6169 = vmatpush1.msra.mxu0 0.0
    %6170 = vmatprep.subr.mxu0 0.0
    %6171 = vmatpush1.msra.mxu0 0.0
    %6172 = vmatprep.subr.mxu0 0.0
    %6173 = vmatpush1.msra.mxu0 0.0
    %6174 = vmatprep.subr.mxu0 0.0
    %6175 = vmatpush1.msra.mxu0 0.0
    %6176 = vmatprep.subr.mxu0 0.0
    %6177 = vmatpush1.msra.mxu0 0.0
    %6178 = vmatprep.subr.mxu0 0.0
    %6179 = vmatpush1.msra.mxu0 0.0
    %6180 = vmatprep.subr.mxu0 0.0
    %6181 = vmatpush1.msra.mxu0 0.0
    %6182 = vmatprep.subr.mxu0 0.0
    %6183 = vmatpush1.msra.mxu0 0.0
    %6184 = vmatprep.subr.mxu0 0.0
    %6185 = vmatpush1.msra.mxu0 %v4864
    %6186 = vmatprep.subr.mxu0 0.0
    %6187 = vmatpush2.msra.mxu0 0.0
    %6188 = vmatprep.subr.mxu0 0.0
    %6189 = vmatpush2.msra.mxu0 0.0
    %6190 = vmatprep.subr.mxu0 0.0
    %6191 = vmatpush2.msra.mxu0 0.0
    %6192 = vmatprep.subr.mxu0 0.0
    %6193 = vmatpush2.msra.mxu0 0.0
    %6194 = vmatprep.subr.mxu0 0.0
    %6195 = vmatpush2.msra.mxu0 0.0
    %6196 = vmatprep.subr.mxu0 0.0
    %6197 = vmatpush2.msra.mxu0 0.0
    %6198 = vmatprep.subr.mxu0 0.0
    %6199 = vmatpush2.msra.mxu0 0.0
    %6200 = vmatprep.subr.mxu0 0.0
    %6201 = vmatpush2.msra.mxu0 0.0
    %6202 = vmatprep.subr.mxu0 0.0
    %6203 = vmatpush2.msra.mxu0 0.0
    %6204 = vmatprep.subr.mxu0 0.0
    %6205 = vmatpush2.msra.mxu0 0.0
    %6206 = vmatprep.subr.mxu0 0.0
    %6207 = vmatpush2.msra.mxu0 0.0
    %6208 = vmatprep.subr.mxu0 0.0
    %6209 = vmatpush2.msra.mxu0 0.0
    %6210 = vmatprep.subr.mxu0 0.0
    %6211 = vmatpush2.msra.mxu0 0.0
    %6212 = vmatprep.subr.mxu0 0.0
    %6213 = vmatpush2.msra.mxu0 0.0
    %6214 = vmatprep.subr.mxu0 0.0
    %6215 = vmatpush2.msra.mxu0 0.0
    %6216 = vmatprep.subr.mxu0 0.0
    %6217 = vmatpush2.msra.mxu0 0.0
    %6218 = vmatprep.mubr.f32.mxu0 0.0
    %6219 = vmatmul.mubr.f32.gmra.mxu0 %v6152
    %v6220 = vpop.f32.mrf.mxu0
    %v6221 = vadd.f32 0.0, %v6220
    %v6222 = vpop.f32.mrf.mxu0
    %6223 = vdwg.mxu0
    %v6225 = vsel %vm403, %v5983, 0
    %6227 = vmatprep.subr.mxu0 0.0
    %6228 = vmatpush1.msra.mxu0 0.0
    %6229 = vmatprep.subr.mxu0 0.0
    %6230 = vmatpush1.msra.mxu0 0.0
    %6231 = vmatprep.subr.mxu0 0.0
    %6232 = vmatpush1.msra.mxu0 0.0
    %6233 = vmatprep.subr.mxu0 0.0
    %6234 = vmatpush1.msra.mxu0 0.0
    %6235 = vmatprep.subr.mxu0 0.0
    %6236 = vmatpush1.msra.mxu0 0.0
    %6237 = vmatprep.subr.mxu0 0.0
    %6238 = vmatpush1.msra.mxu0 0.0
    %6239 = vmatprep.subr.mxu0 0.0
    %6240 = vmatpush1.msra.mxu0 0.0
    %6241 = vmatprep.subr.mxu0 0.0
    %6242 = vmatpush1.msra.mxu0 0.0
    %6243 = vmatprep.subr.mxu0 0.0
    %6244 = vmatpush1.msra.mxu0 0.0
    %6245 = vmatprep.subr.mxu0 0.0
    %6246 = vmatpush1.msra.mxu0 0.0
    %6247 = vmatprep.subr.mxu0 0.0
    %6248 = vmatpush1.msra.mxu0 0.0
    %6249 = vmatprep.subr.mxu0 0.0
    %6250 = vmatpush1.msra.mxu0 0.0
    %6251 = vmatprep.subr.mxu0 0.0
    %6252 = vmatpush1.msra.mxu0 0.0
    %6253 = vmatprep.subr.mxu0 0.0
    %6254 = vmatpush1.msra.mxu0 0.0
    %6255 = vmatprep.subr.mxu0 0.0
    %6256 = vmatpush1.msra.mxu0 0.0
    %6257 = vmatprep.subr.mxu0 0.0
    %6258 = vmatpush1.msra.mxu0 %v4863
    %6259 = vmatprep.subr.mxu0 0.0
    %6260 = vmatpush2.msra.mxu0 0.0
    %6261 = vmatprep.subr.mxu0 0.0
    %6262 = vmatpush2.msra.mxu0 0.0
    %6263 = vmatprep.subr.mxu0 0.0
    %6264 = vmatpush2.msra.mxu0 0.0
    %6265 = vmatprep.subr.mxu0 0.0
    %6266 = vmatpush2.msra.mxu0 0.0
    %6267 = vmatprep.subr.mxu0 0.0
    %6268 = vmatpush2.msra.mxu0 0.0
    %6269 = vmatprep.subr.mxu0 0.0
    %6270 = vmatpush2.msra.mxu0 0.0
    %6271 = vmatprep.subr.mxu0 0.0
    %6272 = vmatpush2.msra.mxu0 0.0
    %6273 = vmatprep.subr.mxu0 0.0
    %6274 = vmatpush2.msra.mxu0 0.0
    %6275 = vmatprep.subr.mxu0 0.0
    %6276 = vmatpush2.msra.mxu0 0.0
    %6277 = vmatprep.subr.mxu0 0.0
    %6278 = vmatpush2.msra.mxu0 0.0
    %6279 = vmatprep.subr.mxu0 0.0
    %6280 = vmatpush2.msra.mxu0 0.0
    %6281 = vmatprep.subr.mxu0 0.0
    %6282 = vmatpush2.msra.mxu0 0.0
    %6283 = vmatprep.subr.mxu0 0.0
    %6284 = vmatpush2.msra.mxu0 0.0
    %6285 = vmatprep.subr.mxu0 0.0
    %6286 = vmatpush2.msra.mxu0 0.0
    %6287 = vmatprep.subr.mxu0 0.0
    %6288 = vmatpush2.msra.mxu0 0.0
    %6289 = vmatprep.subr.mxu0 0.0
    %6290 = vmatpush2.msra.mxu0 0.0
    %6291 = vmatprep.mubr.f32.mxu0 0.0
    %6292 = vmatmul.mubr.f32.gmra.mxu0 %v6225
    %v6293 = vpop.f32.mrf.mxu0
    %v6294 = vadd.f32 %v6221, %v6293
    %v6295 = vpop.f32.mrf.mxu0
    %6296 = vdwg.mxu0
    %6297 = vrot.lane.b32.xlu0 %v4859, 112
    %v6298 = vpop.permute.xlu0 %6297
    %6299 = vrot.lane.b32.xlu0 %v4859, 80
    %v6300 = vpop.permute.xlu0 %6299
    %v6301 = vsel %vm403, %v6298, 0
    %v6303 = vsel %vm403, %v6300, 0
    %6305 = vmatprep.subr.mxu0 0.0
    %6306 = vmatpush1.xpose.msra.mxu0 0.0
    %6307 = vmatprep.subr.mxu0 0.0
    %6308 = vmatpush1.xpose.msra.mxu0 0.0
    %6309 = vmatprep.subr.mxu0 0.0
    %6310 = vmatpush1.xpose.msra.mxu0 0.0
    %6311 = vmatprep.subr.mxu0 0.0
    %6312 = vmatpush1.xpose.msra.mxu0 0.0
    %6313 = vmatprep.subr.mxu0 0.0
    %6314 = vmatpush1.xpose.msra.mxu0 0.0
    %6315 = vmatprep.subr.mxu0 0.0
    %6316 = vmatpush1.xpose.msra.mxu0 0.0
    %6317 = vmatprep.subr.mxu0 0.0
    %6318 = vmatpush1.xpose.msra.mxu0 0.0
    %6319 = vmatprep.subr.mxu0 0.0
    %6320 = vmatpush1.xpose.msra.mxu0 0.0
    %6321 = vmatprep.subr.mxu0 0.0
    %6322 = vmatpush1.xpose.msra.mxu0 0.0
    %6323 = vmatprep.subr.mxu0 0.0
    %6324 = vmatpush1.xpose.msra.mxu0 0.0
    %6325 = vmatprep.subr.mxu0 0.0
    %6326 = vmatpush1.xpose.msra.mxu0 0.0
    %6327 = vmatprep.subr.mxu0 0.0
    %6328 = vmatpush1.xpose.msra.mxu0 0.0
    %6329 = vmatprep.subr.mxu0 0.0
    %6330 = vmatpush1.xpose.msra.mxu0 0.0
    %6331 = vmatprep.subr.mxu0 0.0
    %6332 = vmatpush1.xpose.msra.mxu0 0.0
    %6333 = vmatprep.subr.mxu0 0.0
    %6334 = vmatpush1.xpose.msra.mxu0 0.0
    %6335 = vmatprep.subr.mxu0 0.0
    %6336 = vmatpush1.xpose.msra.mxu0 %v6303
    %6337 = vmatprep.subr.mxu0 0.0
    %6338 = vmatpush2.xpose.msra.mxu0 0.0
    %6339 = vmatprep.subr.mxu0 0.0
    %6340 = vmatpush2.xpose.msra.mxu0 0.0
    %6341 = vmatprep.subr.mxu0 0.0
    %6342 = vmatpush2.xpose.msra.mxu0 0.0
    %6343 = vmatprep.subr.mxu0 0.0
    %6344 = vmatpush2.xpose.msra.mxu0 0.0
    %6345 = vmatprep.subr.mxu0 0.0
    %6346 = vmatpush2.xpose.msra.mxu0 0.0
    %6347 = vmatprep.subr.mxu0 0.0
    %6348 = vmatpush2.xpose.msra.mxu0 0.0
    %6349 = vmatprep.subr.mxu0 0.0
    %6350 = vmatpush2.xpose.msra.mxu0 0.0
    %6351 = vmatprep.subr.mxu0 0.0
    %6352 = vmatpush2.xpose.msra.mxu0 0.0
    %6353 = vmatprep.subr.mxu0 0.0
    %6354 = vmatpush2.xpose.msra.mxu0 0.0
    %6355 = vmatprep.subr.mxu0 0.0
    %6356 = vmatpush2.xpose.msra.mxu0 0.0
    %6357 = vmatprep.subr.mxu0 0.0
    %6358 = vmatpush2.xpose.msra.mxu0 0.0
    %6359 = vmatprep.subr.mxu0 0.0
    %6360 = vmatpush2.xpose.msra.mxu0 0.0
    %6361 = vmatprep.subr.mxu0 0.0
    %6362 = vmatpush2.xpose.msra.mxu0 0.0
    %6363 = vmatprep.subr.mxu0 0.0
    %6364 = vmatpush2.xpose.msra.mxu0 0.0
    %6365 = vmatprep.subr.mxu0 0.0
    %6366 = vmatpush2.xpose.msra.mxu0 0.0
    %6367 = vmatprep.subr.mxu0 0.0
    %6368 = vmatpush2.xpose.msra.mxu0 0.0
    %6369 = vmatprep.mubr.f32.mxu0 0.0
    %6370 = vmatmul.mubr.f32.gmra.mxu0 %v6301
    %v6371 = vpop.f32.mrf.mxu0
    %v6372 = vadd.f32 %v300, %v6371
    %v6373 = vpop.f32.mrf.mxu0
    %6374 = vdwg.mxu0
    %v6375 = vsel %vm403, %v6372, -inf
    %6376 = vmax.xlane.f32.xlu0 %v6375
    %v6377 = vpop.xlane.xlu0 %6376
    %v6378 = vsub.f32 %v6372, %v6377
    %v6379 = vmul.f32 %v6378, 1.442695
    %v6380 = vpow.pop %v6379
    %v6381 = vsel %vm403, %v6380, 0.0
    %6382 = vadd.xlane.f32.xlu0 %v6381
    %v6383 = vpop.xlane.xlu0 %6382
    %v6384 = vrcp.pop %v6383
    %v6385 = vmul.f32 %v6380, %v6384
    %6386 = vrot.lane.b32.xlu0 %v4859, 48
    %v6387 = vpop.permute.xlu0 %6386
    %v6390 = vsel %vm403, %v6385, 0
    %6392 = vmatprep.subr.mxu0 0.0
    %6393 = vmatpush1.msra.mxu0 0.0
    %6394 = vmatprep.subr.mxu0 0.0
    %6395 = vmatpush1.msra.mxu0 0.0
    %6396 = vmatprep.subr.mxu0 0.0
    %6397 = vmatpush1.msra.mxu0 0.0
    %6398 = vmatprep.subr.mxu0 0.0
    %6399 = vmatpush1.msra.mxu0 0.0
    %6400 = vmatprep.subr.mxu0 0.0
    %6401 = vmatpush1.msra.mxu0 0.0
    %6402 = vmatprep.subr.mxu0 0.0
    %6403 = vmatpush1.msra.mxu0 0.0
    %6404 = vmatprep.subr.mxu0 0.0
    %6405 = vmatpush1.msra.mxu0 0.0
    %6406 = vmatprep.subr.mxu0 0.0
    %6407 = vmatpush1.msra.mxu0 0.0
    %6408 = vmatprep.subr.mxu0 0.0
    %6409 = vmatpush1.msra.mxu0 0.0
    %6410 = vmatprep.subr.mxu0 0.0
    %6411 = vmatpush1.msra.mxu0 0.0
    %6412 = vmatprep.subr.mxu0 0.0
    %6413 = vmatpush1.msra.mxu0 0.0
    %6414 = vmatprep.subr.mxu0 0.0
    %6415 = vmatpush1.msra.mxu0 0.0
    %6416 = vmatprep.subr.mxu0 0.0
    %6417 = vmatpush1.msra.mxu0 0.0
    %6418 = vmatprep.subr.mxu0 0.0
    %6419 = vmatpush1.msra.mxu0 0.0
    %6420 = vmatprep.subr.mxu0 0.0
    %6421 = vmatpush1.msra.mxu0 0.0
    %6422 = vmatprep.subr.mxu0 0.0
    %6423 = vmatpush1.msra.mxu0 %v6387
    %6424 = vmatprep.subr.mxu0 0.0
    %6425 = vmatpush2.msra.mxu0 0.0
    %6426 = vmatprep.subr.mxu0 0.0
    %6427 = vmatpush2.msra.mxu0 0.0
    %6428 = vmatprep.subr.mxu0 0.0
    %6429 = vmatpush2.msra.mxu0 0.0
    %6430 = vmatprep.subr.mxu0 0.0
    %6431 = vmatpush2.msra.mxu0 0.0
    %6432 = vmatprep.subr.mxu0 0.0
    %6433 = vmatpush2.msra.mxu0 0.0
    %6434 = vmatprep.subr.mxu0 0.0
    %6435 = vmatpush2.msra.mxu0 0.0
    %6436 = vmatprep.subr.mxu0 0.0
    %6437 = vmatpush2.msra.mxu0 0.0
    %6438 = vmatprep.subr.mxu0 0.0
    %6439 = vmatpush2.msra.mxu0 0.0
    %6440 = vmatprep.subr.mxu0 0.0
    %6441 = vmatpush2.msra.mxu0 0.0
    %6442 = vmatprep.subr.mxu0 0.0
    %6443 = vmatpush2.msra.mxu0 0.0
    %6444 = vmatprep.subr.mxu0 0.0
    %6445 = vmatpush2.msra.mxu0 0.0
    %6446 = vmatprep.subr.mxu0 0.0
    %6447 = vmatpush2.msra.mxu0 0.0
    %6448 = vmatprep.subr.mxu0 0.0
    %6449 = vmatpush2.msra.mxu0 0.0
    %6450 = vmatprep.subr.mxu0 0.0
    %6451 = vmatpush2.msra.mxu0 0.0
    %6452 = vmatprep.subr.mxu0 0.0
    %6453 = vmatpush2.msra.mxu0 0.0
    %6454 = vmatprep.subr.mxu0 0.0
    %6455 = vmatpush2.msra.mxu0 0.0
    %6456 = vmatprep.mubr.f32.mxu0 0.0
    %6457 = vmatmul.mubr.f32.gmra.mxu0 %v6390
    %v6458 = vpop.f32.mrf.mxu0
    %v6459 = vadd.f32 0.0, %v6458
    %v6460 = vpop.f32.mrf.mxu0
    %6461 = vdwg.mxu0
    %v6463 = vsel %vm403, %v6459, 0
    %6465 = vmatprep.subr.mxu0 0.0
    %6466 = vmatpush1.msra.mxu0 0.0
    %6467 = vmatprep.subr.mxu0 0.0
    %6468 = vmatpush1.msra.mxu0 0.0
    %6469 = vmatprep.subr.mxu0 0.0
    %6470 = vmatpush1.msra.mxu0 0.0
    %6471 = vmatprep.subr.mxu0 0.0
    %6472 = vmatpush1.msra.mxu0 0.0
    %6473 = vmatprep.subr.mxu0 0.0
    %6474 = vmatpush1.msra.mxu0 0.0
    %6475 = vmatprep.subr.mxu0 0.0
    %6476 = vmatpush1.msra.mxu0 0.0
    %6477 = vmatprep.subr.mxu0 0.0
    %6478 = vmatpush1.msra.mxu0 0.0
    %6479 = vmatprep.subr.mxu0 0.0
    %6480 = vmatpush1.msra.mxu0 0.0
    %6481 = vmatprep.subr.mxu0 0.0
    %6482 = vmatpush1.msra.mxu0 0.0
    %6483 = vmatprep.subr.mxu0 0.0
    %6484 = vmatpush1.msra.mxu0 0.0
    %6485 = vmatprep.subr.mxu0 0.0
    %6486 = vmatpush1.msra.mxu0 0.0
    %6487 = vmatprep.subr.mxu0 0.0
    %6488 = vmatpush1.msra.mxu0 0.0
    %6489 = vmatprep.subr.mxu0 0.0
    %6490 = vmatpush1.msra.mxu0 0.0
    %6491 = vmatprep.subr.mxu0 0.0
    %6492 = vmatpush1.msra.mxu0 0.0
    %6493 = vmatprep.subr.mxu0 0.0
    %6494 = vmatpush1.msra.mxu0 0.0
    %6495 = vmatprep.subr.mxu0 0.0
    %6496 = vmatpush1.msra.mxu0 %v4865
    %6497 = vmatprep.subr.mxu0 0.0
    %6498 = vmatpush2.msra.mxu0 0.0
    %6499 = vmatprep.subr.mxu0 0.0
    %6500 = vmatpush2.msra.mxu0 0.0
    %6501 = vmatprep.subr.mxu0 0.0
    %6502 = vmatpush2.msra.mxu0 0.0
    %6503 = vmatprep.subr.mxu0 0.0
    %6504 = vmatpush2.msra.mxu0 0.0
    %6505 = vmatprep.subr.mxu0 0.0
    %6506 = vmatpush2.msra.mxu0 0.0
    %6507 = vmatprep.subr.mxu0 0.0
    %6508 = vmatpush2.msra.mxu0 0.0
    %6509 = vmatprep.subr.mxu0 0.0
    %6510 = vmatpush2.msra.mxu0 0.0
    %6511 = vmatprep.subr.mxu0 0.0
    %6512 = vmatpush2.msra.mxu0 0.0
    %6513 = vmatprep.subr.mxu0 0.0
    %6514 = vmatpush2.msra.mxu0 0.0
    %6515 = vmatprep.subr.mxu0 0.0
    %6516 = vmatpush2.msra.mxu0 0.0
    %6517 = vmatprep.subr.mxu0 0.0
    %6518 = vmatpush2.msra.mxu0 0.0
    %6519 = vmatprep.subr.mxu0 0.0
    %6520 = vmatpush2.msra.mxu0 0.0
    %6521 = vmatprep.subr.mxu0 0.0
    %6522 = vmatpush2.msra.mxu0 0.0
    %6523 = vmatprep.subr.mxu0 0.0
    %6524 = vmatpush2.msra.mxu0 0.0
    %6525 = vmatprep.subr.mxu0 0.0
    %6526 = vmatpush2.msra.mxu0 0.0
    %6527 = vmatprep.subr.mxu0 0.0
    %6528 = vmatpush2.msra.mxu0 0.0
    %6529 = vmatprep.mubr.f32.mxu0 0.0
    %6530 = vmatmul.mubr.f32.gmra.mxu0 %v6463
    %v6531 = vpop.f32.mrf.mxu0
    %v6532 = vadd.f32 0.0, %v6531
    %v6533 = vpop.f32.mrf.mxu0
    %6534 = vdwg.mxu0
    %v6535 = vadd.f32 %v6294, %v6532
    %6536 = vrot.lane.b32.xlu0 %v4859, 104
    %v6537 = vpop.permute.xlu0 %6536
    %6538 = vrot.lane.b32.xlu0 %v4859, 72
    %v6539 = vpop.permute.xlu0 %6538
    %v6540 = vsel %vm403, %v6537, 0
    %v6542 = vsel %vm403, %v6539, 0
    %6544 = vmatprep.subr.mxu0 0.0
    %6545 = vmatpush1.xpose.msra.mxu0 0.0
    %6546 = vmatprep.subr.mxu0 0.0
    %6547 = vmatpush1.xpose.msra.mxu0 0.0
    %6548 = vmatprep.subr.mxu0 0.0
    %6549 = vmatpush1.xpose.msra.mxu0 0.0
    %6550 = vmatprep.subr.mxu0 0.0
    %6551 = vmatpush1.xpose.msra.mxu0 0.0
    %6552 = vmatprep.subr.mxu0 0.0
    %6553 = vmatpush1.xpose.msra.mxu0 0.0
    %6554 = vmatprep.subr.mxu0 0.0
    %6555 = vmatpush1.xpose.msra.mxu0 0.0
    %6556 = vmatprep.subr.mxu0 0.0
    %6557 = vmatpush1.xpose.msra.mxu0 0.0
    %6558 = vmatprep.subr.mxu0 0.0
    %6559 = vmatpush1.xpose.msra.mxu0 0.0
    %6560 = vmatprep.subr.mxu0 0.0
    %6561 = vmatpush1.xpose.msra.mxu0 0.0
    %6562 = vmatprep.subr.mxu0 0.0
    %6563 = vmatpush1.xpose.msra.mxu0 0.0
    %6564 = vmatprep.subr.mxu0 0.0
    %6565 = vmatpush1.xpose.msra.mxu0 0.0
    %6566 = vmatprep.subr.mxu0 0.0
    %6567 = vmatpush1.xpose.msra.mxu0 0.0
    %6568 = vmatprep.subr.mxu0 0.0
    %6569 = vmatpush1.xpose.msra.mxu0 0.0
    %6570 = vmatprep.subr.mxu0 0.0
    %6571 = vmatpush1.xpose.msra.mxu0 0.0
    %6572 = vmatprep.subr.mxu0 0.0
    %6573 = vmatpush1.xpose.msra.mxu0 0.0
    %6574 = vmatprep.subr.mxu0 0.0
    %6575 = vmatpush1.xpose.msra.mxu0 %v6542
    %6576 = vmatprep.subr.mxu0 0.0
    %6577 = vmatpush2.xpose.msra.mxu0 0.0
    %6578 = vmatprep.subr.mxu0 0.0
    %6579 = vmatpush2.xpose.msra.mxu0 0.0
    %6580 = vmatprep.subr.mxu0 0.0
    %6581 = vmatpush2.xpose.msra.mxu0 0.0
    %6582 = vmatprep.subr.mxu0 0.0
    %6583 = vmatpush2.xpose.msra.mxu0 0.0
    %6584 = vmatprep.subr.mxu0 0.0
    %6585 = vmatpush2.xpose.msra.mxu0 0.0
    %6586 = vmatprep.subr.mxu0 0.0
    %6587 = vmatpush2.xpose.msra.mxu0 0.0
    %6588 = vmatprep.subr.mxu0 0.0
    %6589 = vmatpush2.xpose.msra.mxu0 0.0
    %6590 = vmatprep.subr.mxu0 0.0
    %6591 = vmatpush2.xpose.msra.mxu0 0.0
    %6592 = vmatprep.subr.mxu0 0.0
    %6593 = vmatpush2.xpose.msra.mxu0 0.0
    %6594 = vmatprep.subr.mxu0 0.0
    %6595 = vmatpush2.xpose.msra.mxu0 0.0
    %6596 = vmatprep.subr.mxu0 0.0
    %6597 = vmatpush2.xpose.msra.mxu0 0.0
    %6598 = vmatprep.subr.mxu0 0.0
    %6599 = vmatpush2.xpose.msra.mxu0 0.0
    %6600 = vmatprep.subr.mxu0 0.0
    %6601 = vmatpush2.xpose.msra.mxu0 0.0
    %6602 = vmatprep.subr.mxu0 0.0
    %6603 = vmatpush2.xpose.msra.mxu0 0.0
    %6604 = vmatprep.subr.mxu0 0.0
    %6605 = vmatpush2.xpose.msra.mxu0 0.0
    %6606 = vmatprep.subr.mxu0 0.0
    %6607 = vmatpush2.xpose.msra.mxu0 0.0
    %6608 = vmatprep.mubr.f32.mxu0 0.0
    %6609 = vmatmul.mubr.f32.gmra.mxu0 %v6540
    %v6610 = vpop.f32.mrf.mxu0
    %v6611 = vadd.f32 %v300, %v6610
    %v6612 = vpop.f32.mrf.mxu0
    %6613 = vdwg.mxu0
    %v6614 = vsel %vm403, %v6611, -inf
    %6615 = vmax.xlane.f32.xlu0 %v6614
    %v6616 = vpop.xlane.xlu0 %6615
    %v6617 = vsub.f32 %v6611, %v6616
    %v6618 = vmul.f32 %v6617, 1.442695
    %v6619 = vpow.pop %v6618
    %v6620 = vsel %vm403, %v6619, 0.0
    %6621 = vadd.xlane.f32.xlu0 %v6620
    %v6622 = vpop.xlane.xlu0 %6621
    %v6623 = vrcp.pop %v6622
    %v6624 = vmul.f32 %v6619, %v6623
    %6625 = vrot.lane.b32.xlu0 %v4859, 40
    %v6626 = vpop.permute.xlu0 %6625
    %v6629 = vsel %vm403, %v6624, 0
    %6631 = vmatprep.subr.mxu0 0.0
    %6632 = vmatpush1.msra.mxu0 0.0
    %6633 = vmatprep.subr.mxu0 0.0
    %6634 = vmatpush1.msra.mxu0 0.0
    %6635 = vmatprep.subr.mxu0 0.0
    %6636 = vmatpush1.msra.mxu0 0.0
    %6637 = vmatprep.subr.mxu0 0.0
    %6638 = vmatpush1.msra.mxu0 0.0
    %6639 = vmatprep.subr.mxu0 0.0
    %6640 = vmatpush1.msra.mxu0 0.0
    %6641 = vmatprep.subr.mxu0 0.0
    %6642 = vmatpush1.msra.mxu0 0.0
    %6643 = vmatprep.subr.mxu0 0.0
    %6644 = vmatpush1.msra.mxu0 0.0
    %6645 = vmatprep.subr.mxu0 0.0
    %6646 = vmatpush1.msra.mxu0 0.0
    %6647 = vmatprep.subr.mxu0 0.0
    %6648 = vmatpush1.msra.mxu0 0.0
    %6649 = vmatprep.subr.mxu0 0.0
    %6650 = vmatpush1.msra.mxu0 0.0
    %6651 = vmatprep.subr.mxu0 0.0
    %6652 = vmatpush1.msra.mxu0 0.0
    %6653 = vmatprep.subr.mxu0 0.0
    %6654 = vmatpush1.msra.mxu0 0.0
    %6655 = vmatprep.subr.mxu0 0.0
    %6656 = vmatpush1.msra.mxu0 0.0
    %6657 = vmatprep.subr.mxu0 0.0
    %6658 = vmatpush1.msra.mxu0 0.0
    %6659 = vmatprep.subr.mxu0 0.0
    %6660 = vmatpush1.msra.mxu0 0.0
    %6661 = vmatprep.subr.mxu0 0.0
    %6662 = vmatpush1.msra.mxu0 %v6626
    %6663 = vmatprep.subr.mxu0 0.0
    %6664 = vmatpush2.msra.mxu0 0.0
    %6665 = vmatprep.subr.mxu0 0.0
    %6666 = vmatpush2.msra.mxu0 0.0
    %6667 = vmatprep.subr.mxu0 0.0
    %6668 = vmatpush2.msra.mxu0 0.0
    %6669 = vmatprep.subr.mxu0 0.0
    %6670 = vmatpush2.msra.mxu0 0.0
    %6671 = vmatprep.subr.mxu0 0.0
    %6672 = vmatpush2.msra.mxu0 0.0
    %6673 = vmatprep.subr.mxu0 0.0
    %6674 = vmatpush2.msra.mxu0 0.0
    %6675 = vmatprep.subr.mxu0 0.0
    %6676 = vmatpush2.msra.mxu0 0.0
    %6677 = vmatprep.subr.mxu0 0.0
    %6678 = vmatpush2.msra.mxu0 0.0
    %6679 = vmatprep.subr.mxu0 0.0
    %6680 = vmatpush2.msra.mxu0 0.0
    %6681 = vmatprep.subr.mxu0 0.0
    %6682 = vmatpush2.msra.mxu0 0.0
    %6683 = vmatprep.subr.mxu0 0.0
    %6684 = vmatpush2.msra.mxu0 0.0
    %6685 = vmatprep.subr.mxu0 0.0
    %6686 = vmatpush2.msra.mxu0 0.0
    %6687 = vmatprep.subr.mxu0 0.0
    %6688 = vmatpush2.msra.mxu0 0.0
    %6689 = vmatprep.subr.mxu0 0.0
    %6690 = vmatpush2.msra.mxu0 0.0
    %6691 = vmatprep.subr.mxu0 0.0
    %6692 = vmatpush2.msra.mxu0 0.0
    %6693 = vmatprep.subr.mxu0 0.0
    %6694 = vmatpush2.msra.mxu0 0.0
    %6695 = vmatprep.mubr.f32.mxu0 0.0
    %6696 = vmatmul.mubr.f32.gmra.mxu0 %v6629
    %v6697 = vpop.f32.mrf.mxu0
    %v6698 = vadd.f32 0.0, %v6697
    %v6699 = vpop.f32.mrf.mxu0
    %6700 = vdwg.mxu0
    %v6702 = vsel %vm403, %v6698, 0
    %6704 = vmatprep.subr.mxu0 0.0
    %6705 = vmatpush1.msra.mxu0 0.0
    %6706 = vmatprep.subr.mxu0 0.0
    %6707 = vmatpush1.msra.mxu0 0.0
    %6708 = vmatprep.subr.mxu0 0.0
    %6709 = vmatpush1.msra.mxu0 0.0
    %6710 = vmatprep.subr.mxu0 0.0
    %6711 = vmatpush1.msra.mxu0 0.0
    %6712 = vmatprep.subr.mxu0 0.0
    %6713 = vmatpush1.msra.mxu0 0.0
    %6714 = vmatprep.subr.mxu0 0.0
    %6715 = vmatpush1.msra.mxu0 0.0
    %6716 = vmatprep.subr.mxu0 0.0
    %6717 = vmatpush1.msra.mxu0 0.0
    %6718 = vmatprep.subr.mxu0 0.0
    %6719 = vmatpush1.msra.mxu0 0.0
    %6720 = vmatprep.subr.mxu0 0.0
    %6721 = vmatpush1.msra.mxu0 0.0
    %6722 = vmatprep.subr.mxu0 0.0
    %6723 = vmatpush1.msra.mxu0 0.0
    %6724 = vmatprep.subr.mxu0 0.0
    %6725 = vmatpush1.msra.mxu0 0.0
    %6726 = vmatprep.subr.mxu0 0.0
    %6727 = vmatpush1.msra.mxu0 0.0
    %6728 = vmatprep.subr.mxu0 0.0
    %6729 = vmatpush1.msra.mxu0 0.0
    %6730 = vmatprep.subr.mxu0 0.0
    %6731 = vmatpush1.msra.mxu0 0.0
    %6732 = vmatprep.subr.mxu0 0.0
    %6733 = vmatpush1.msra.mxu0 0.0
    %6734 = vmatprep.subr.mxu0 0.0
    %6735 = vmatpush1.msra.mxu0 %v4866
    %6736 = vmatprep.subr.mxu0 0.0
    %6737 = vmatpush2.msra.mxu0 0.0
    %6738 = vmatprep.subr.mxu0 0.0
    %6739 = vmatpush2.msra.mxu0 0.0
    %6740 = vmatprep.subr.mxu0 0.0
    %6741 = vmatpush2.msra.mxu0 0.0
    %6742 = vmatprep.subr.mxu0 0.0
    %6743 = vmatpush2.msra.mxu0 0.0
    %6744 = vmatprep.subr.mxu0 0.0
    %6745 = vmatpush2.msra.mxu0 0.0
    %6746 = vmatprep.subr.mxu0 0.0
    %6747 = vmatpush2.msra.mxu0 0.0
    %6748 = vmatprep.subr.mxu0 0.0
    %6749 = vmatpush2.msra.mxu0 0.0
    %6750 = vmatprep.subr.mxu0 0.0
    %6751 = vmatpush2.msra.mxu0 0.0
    %6752 = vmatprep.subr.mxu0 0.0
    %6753 = vmatpush2.msra.mxu0 0.0
    %6754 = vmatprep.subr.mxu0 0.0
    %6755 = vmatpush2.msra.mxu0 0.0
    %6756 = vmatprep.subr.mxu0 0.0
    %6757 = vmatpush2.msra.mxu0 0.0
    %6758 = vmatprep.subr.mxu0 0.0
    %6759 = vmatpush2.msra.mxu0 0.0
    %6760 = vmatprep.subr.mxu0 0.0
    %6761 = vmatpush2.msra.mxu0 0.0
    %6762 = vmatprep.subr.mxu0 0.0
    %6763 = vmatpush2.msra.mxu0 0.0
    %6764 = vmatprep.subr.mxu0 0.0
    %6765 = vmatpush2.msra.mxu0 0.0
    %6766 = vmatprep.subr.mxu0 0.0
    %6767 = vmatpush2.msra.mxu0 0.0
    %6768 = vmatprep.mubr.f32.mxu0 0.0
    %6769 = vmatmul.mubr.f32.gmra.mxu0 %v6702
    %v6770 = vpop.f32.mrf.mxu0
    %v6771 = vadd.f32 0.0, %v6770
    %v6772 = vpop.f32.mrf.mxu0
    %6773 = vdwg.mxu0
    %v6774 = vadd.f32 %v6535, %v6771
    %v6776 = vlaneseq
    %v6777 = vshrl.u32 %v6776, 7
    %v6778 = vsub.s32 0, %v6777
    %v6779 = vrot.slane %v4868, %v6778
    %v6781 = vadd.f32 %v5821, %v6779
    %v6782 = vadd.f32 %v6774, %v6779
    %v6783 = vadd.f32 %v4766, %v6781
    %v6784 = vadd.f32 %v4767, %v6782
    %s6785 = scalar_lea.vmem %s25, 1
    %v6786 = vld [vmem:[%s6785] sm:$0x1]
    %s6787 = scalar_lea.vmem %s27, 1
    %v6788 = vld [vmem:[%s6787] sm:$0x1]
    %v6789 = vsel %vm241, %v6783, 0.0
    %6790 = vadd.xlane.f32.xlu0 %v6789
    %v6791 = vpop.xlane.xlu0 %6790
    %v6792 = vsel %vm241, %v6784, 0.0
    %6793 = vadd.xlane.f32.xlu0 %v6792
    %v6794 = vpop.xlane.xlu0 %6793
    %v6795 = vmul.f32 %v6791, %v248
    %v6796 = vmul.f32 %v6794, %v248
    %v6797 = vsub.f32 %v6783, %v6795
    %v6798 = vsub.f32 %v6784, %v6796
    %v6799 = vmul.f32 %v6797, %v6797
    %v6800 = vmul.f32 %v6798, %v6798
    %v6801 = vsel %vm241, %v6799, 0.0
    %6802 = vadd.xlane.f32.xlu0 %v6801
    %v6803 = vpop.xlane.xlu0 %6802
    %v6804 = vsel %vm241, %v6800, 0.0
    %6805 = vadd.xlane.f32.xlu0 %v6804
    %v6806 = vpop.xlane.xlu0 %6805
    %v6807 = vmul.f32 %v6803, %v248
    %v6808 = vmul.f32 %v6806, %v248
    %v6809 = vadd.f32 %v6807, 1e-05
    %v6810 = vadd.f32 %v6808, 1e-05
    %v6811 = vrsqrt.pop %v6809
    %v6812 = vrsqrt.pop %v6810
    %v6813 = vmul.f32 %v6797, %v6811
    %v6814 = vmul.f32 %v6798, %v6812
    %v6816 = vlaneseq
    %v6817 = vshrl.u32 %v6816, 7
    %v6818 = vsub.s32 0, %v6817
    %v6819 = vrot.slane %v6786, %v6818
    %v6821 = vmul.f32 %v6813, %v6819
    %v6822 = vmul.f32 %v6814, %v6819
    %v6824 = vlaneseq
    %v6825 = vshrl.u32 %v6824, 7
    %v6826 = vsub.s32 0, %v6825
    %v6827 = vrot.slane %v6788, %v6826
    %v6829 = vadd.f32 %v6821, %v6827
    %v6830 = vadd.f32 %v6822, %v6827
    %s6831 = scalar_lea.vmem %s29, 32
    %v6832 = vld [vmem:[%s6831] sm:$0xff]
    %v6833 = vld [vmem:[%s6831 + $0x8] sm:$0xff]
    %v6834 = vld [vmem:[%s6831 + $0x10] sm:$0xff]
    %v6835 = vld [vmem:[%s6831 + $0x18] sm:$0xff]
    %s6836 = scalar_lea.vmem %s31, 1
    %v6837 = vld [vmem:[%s6836] sm:$0x1]
    %v6839 = vlaneseq
    %v6840 = vshrl.u32 %v6839, 7
    %v6841 = vsub.s32 0, %v6840
    %v6842 = vrot.slane %v6837, %v6841
    %v6845 = vsel %vm241, %v6829, 0
    %v6848 = vsel %vm241, %v6830, 0
    %6850 = vmatprep.subr.mxu0 0.0
    %6851 = vmatpush1.msra.mxu0 0.0
    %6852 = vmatprep.subr.mxu0 0.0
    %6853 = vmatpush1.msra.mxu0 0.0
    %6854 = vmatprep.subr.mxu0 0.0
    %6855 = vmatpush1.msra.mxu0 0.0
    %6856 = vmatprep.subr.mxu0 0.0
    %6857 = vmatpush1.msra.mxu0 0.0
    %6858 = vmatprep.subr.mxu0 0.0
    %6859 = vmatpush1.msra.mxu0 0.0
    %6860 = vmatprep.subr.mxu0 0.0
    %6861 = vmatpush1.msra.mxu0 0.0
    %6862 = vmatprep.subr.mxu0 0.0
    %6863 = vmatpush1.msra.mxu0 0.0
    %6864 = vmatprep.subr.mxu0 0.0
    %6865 = vmatpush1.msra.mxu0 0.0
    %6866 = vmatprep.subr.mxu0 0.0
    %6867 = vmatpush1.msra.mxu0 0.0
    %6868 = vmatprep.subr.mxu0 0.0
    %6869 = vmatpush1.msra.mxu0 0.0
    %6870 = vmatprep.subr.mxu0 0.0
    %6871 = vmatpush1.msra.mxu0 0.0
    %6872 = vmatprep.subr.mxu0 0.0
    %6873 = vmatpush1.msra.mxu0 0.0
    %6874 = vmatprep.subr.mxu0 0.0
    %6875 = vmatpush1.msra.mxu0 %v6835
    %6876 = vmatprep.subr.mxu0 0.0
    %6877 = vmatpush1.msra.mxu0 %v6834
    %6878 = vmatprep.subr.mxu0 0.0
    %6879 = vmatpush1.msra.mxu0 %v6833
    %6880 = vmatprep.subr.mxu0 0.0
    %6881 = vmatpush1.msra.mxu0 %v6832
    %6882 = vmatprep.subr.mxu0 0.0
    %6883 = vmatpush2.msra.mxu0 0.0
    %6884 = vmatprep.subr.mxu0 0.0
    %6885 = vmatpush2.msra.mxu0 0.0
    %6886 = vmatprep.subr.mxu0 0.0
    %6887 = vmatpush2.msra.mxu0 0.0
    %6888 = vmatprep.subr.mxu0 0.0
    %6889 = vmatpush2.msra.mxu0 0.0
    %6890 = vmatprep.subr.mxu0 0.0
    %6891 = vmatpush2.msra.mxu0 0.0
    %6892 = vmatprep.subr.mxu0 0.0
    %6893 = vmatpush2.msra.mxu0 0.0
    %6894 = vmatprep.subr.mxu0 0.0
    %6895 = vmatpush2.msra.mxu0 0.0
    %6896 = vmatprep.subr.mxu0 0.0
    %6897 = vmatpush2.msra.mxu0 0.0
    %6898 = vmatprep.subr.mxu0 0.0
    %6899 = vmatpush2.msra.mxu0 0.0
    %6900 = vmatprep.subr.mxu0 0.0
    %6901 = vmatpush2.msra.mxu0 0.0
    %6902 = vmatprep.subr.mxu0 0.0
    %6903 = vmatpush2.msra.mxu0 0.0
    %6904 = vmatprep.subr.mxu0 0.0
    %6905 = vmatpush2.msra.mxu0 0.0
    %6906 = vmatprep.subr.mxu0 0.0
    %6907 = vmatpush2.msra.mxu0 0.0
    %6908 = vmatprep.subr.mxu0 0.0
    %6909 = vmatpush2.msra.mxu0 0.0
    %6910 = vmatprep.subr.mxu0 0.0
    %6911 = vmatpush2.msra.mxu0 0.0
    %6912 = vmatprep.subr.mxu0 0.0
    %6913 = vmatpush2.msra.mxu0 0.0
    %6914 = vmatprep.mubr.f32.mxu0 0.0
    %6915 = vmatmul.mubr.f32.gmra.mxu0 %v6845
    %v6916 = vpop.f32.mrf.mxu0
    %v6917 = vadd.f32 %v6842, %v6916
    %v6918 = vpop.f32.mrf.mxu0
    %6919 = vmatprep.mubr.f32.mxu0 0.0
    %6920 = vmatmul.mubr.f32.gmra.mxu0 %v6848
    %v6921 = vpop.f32.mrf.mxu0
    %v6922 = vadd.f32 %v6842, %v6921
    %v6923 = vpop.f32.mrf.mxu0
    %6924 = vdwg.mxu0
    %s6925 = scalar_lea.vmem %s33, 32
    %v6926 = vld [vmem:[%s6925] sm:$0xff]
    %v6927 = vld [vmem:[%s6925 + $0x8] sm:$0xff]
    %v6928 = vld [vmem:[%s6925 + $0x10] sm:$0xff]
    %v6929 = vld [vmem:[%s6925 + $0x18] sm:$0xff]
    %s6930 = scalar_lea.vmem %s35, 1
    %v6931 = vld [vmem:[%s6930] sm:$0x1]
    %v6933 = vlaneseq
    %v6934 = vshrl.u32 %v6933, 7
    %v6935 = vsub.s32 0, %v6934
    %v6936 = vrot.slane %v6931, %v6935
    %6938 = vmatprep.subr.mxu0 0.0
    %6939 = vmatpush1.msra.mxu0 0.0
    %6940 = vmatprep.subr.mxu0 0.0
    %6941 = vmatpush1.msra.mxu0 0.0
    %6942 = vmatprep.subr.mxu0 0.0
    %6943 = vmatpush1.msra.mxu0 0.0
    %6944 = vmatprep.subr.mxu0 0.0
    %6945 = vmatpush1.msra.mxu0 0.0
    %6946 = vmatprep.subr.mxu0 0.0
    %6947 = vmatpush1.msra.mxu0 0.0
    %6948 = vmatprep.subr.mxu0 0.0
    %6949 = vmatpush1.msra.mxu0 0.0
    %6950 = vmatprep.subr.mxu0 0.0
    %6951 = vmatpush1.msra.mxu0 0.0
    %6952 = vmatprep.subr.mxu0 0.0
    %6953 = vmatpush1.msra.mxu0 0.0
    %6954 = vmatprep.subr.mxu0 0.0
    %6955 = vmatpush1.msra.mxu0 0.0
    %6956 = vmatprep.subr.mxu0 0.0
    %6957 = vmatpush1.msra.mxu0 0.0
    %6958 = vmatprep.subr.mxu0 0.0
    %6959 = vmatpush1.msra.mxu0 0.0
    %6960 = vmatprep.subr.mxu0 0.0
    %6961 = vmatpush1.msra.mxu0 0.0
    %6962 = vmatprep.subr.mxu0 0.0
    %6963 = vmatpush1.msra.mxu0 %v6929
    %6964 = vmatprep.subr.mxu0 0.0
    %6965 = vmatpush1.msra.mxu0 %v6928
    %6966 = vmatprep.subr.mxu0 0.0
    %6967 = vmatpush1.msra.mxu0 %v6927
    %6968 = vmatprep.subr.mxu0 0.0
    %6969 = vmatpush1.msra.mxu0 %v6926
    %6970 = vmatprep.subr.mxu0 0.0
    %6971 = vmatpush2.msra.mxu0 0.0
    %6972 = vmatprep.subr.mxu0 0.0
    %6973 = vmatpush2.msra.mxu0 0.0
    %6974 = vmatprep.subr.mxu0 0.0
    %6975 = vmatpush2.msra.mxu0 0.0
    %6976 = vmatprep.subr.mxu0 0.0
    %6977 = vmatpush2.msra.mxu0 0.0
    %6978 = vmatprep.subr.mxu0 0.0
    %6979 = vmatpush2.msra.mxu0 0.0
    %6980 = vmatprep.subr.mxu0 0.0
    %6981 = vmatpush2.msra.mxu0 0.0
    %6982 = vmatprep.subr.mxu0 0.0
    %6983 = vmatpush2.msra.mxu0 0.0
    %6984 = vmatprep.subr.mxu0 0.0
    %6985 = vmatpush2.msra.mxu0 0.0
    %6986 = vmatprep.subr.mxu0 0.0
    %6987 = vmatpush2.msra.mxu0 0.0
    %6988 = vmatprep.subr.mxu0 0.0
    %6989 = vmatpush2.msra.mxu0 0.0
    %6990 = vmatprep.subr.mxu0 0.0
    %6991 = vmatpush2.msra.mxu0 0.0
    %6992 = vmatprep.subr.mxu0 0.0
    %6993 = vmatpush2.msra.mxu0 0.0
    %6994 = vmatprep.subr.mxu0 0.0
    %6995 = vmatpush2.msra.mxu0 0.0
    %6996 = vmatprep.subr.mxu0 0.0
    %6997 = vmatpush2.msra.mxu0 0.0
    %6998 = vmatprep.subr.mxu0 0.0
    %6999 = vmatpush2.msra.mxu0 0.0
    %7000 = vmatprep.subr.mxu0 0.0
    %7001 = vmatpush2.msra.mxu0 0.0
    %7002 = vmatprep.mubr.f32.mxu0 0.0
    %7003 = vmatmul.mubr.f32.gmra.mxu0 %v2465
    %v7004 = vpop.f32.mrf.mxu0
    %v7005 = vadd.f32 %v6936, %v7004
    %v7006 = vpop.f32.mrf.mxu0
    %7007 = vmatprep.mubr.f32.mxu0 0.0
    %7008 = vmatmul.mubr.f32.gmra.mxu0 %v2468
    %v7009 = vpop.f32.mrf.mxu0
    %v7010 = vadd.f32 %v6936, %v7009
    %v7011 = vpop.f32.mrf.mxu0
    %7012 = vdwg.mxu0
    %s7013 = scalar_lea.vmem %s37, 32
    %v7014 = vld [vmem:[%s7013] sm:$0xff]
    %v7015 = vld [vmem:[%s7013 + $0x8] sm:$0xff]
    %v7016 = vld [vmem:[%s7013 + $0x10] sm:$0xff]
    %v7017 = vld [vmem:[%s7013 + $0x18] sm:$0xff]
    %s7018 = scalar_lea.vmem %s39, 1
    %v7019 = vld [vmem:[%s7018] sm:$0x1]
    %v7021 = vsel %vm403, %v6917, 0
    %v7024 = vsel %vm403, %v7005, 0
    %7026 = vmatprep.subr.mxu0 0.0
    %7027 = vmatpush1.xpose.msra.mxu0 0.0
    %7028 = vmatprep.subr.mxu0 0.0
    %7029 = vmatpush1.xpose.msra.mxu0 0.0
    %7030 = vmatprep.subr.mxu0 0.0
    %7031 = vmatpush1.xpose.msra.mxu0 0.0
    %7032 = vmatprep.subr.mxu0 0.0
    %7033 = vmatpush1.xpose.msra.mxu0 0.0
    %7034 = vmatprep.subr.mxu0 0.0
    %7035 = vmatpush1.xpose.msra.mxu0 0.0
    %7036 = vmatprep.subr.mxu0 0.0
    %7037 = vmatpush1.xpose.msra.mxu0 0.0
    %7038 = vmatprep.subr.mxu0 0.0
    %7039 = vmatpush1.xpose.msra.mxu0 0.0
    %7040 = vmatprep.subr.mxu0 0.0
    %7041 = vmatpush1.xpose.msra.mxu0 0.0
    %7042 = vmatprep.subr.mxu0 0.0
    %7043 = vmatpush1.xpose.msra.mxu0 0.0
    %7044 = vmatprep.subr.mxu0 0.0
    %7045 = vmatpush1.xpose.msra.mxu0 0.0
    %7046 = vmatprep.subr.mxu0 0.0
    %7047 = vmatpush1.xpose.msra.mxu0 0.0
    %7048 = vmatprep.subr.mxu0 0.0
    %7049 = vmatpush1.xpose.msra.mxu0 0.0
    %7050 = vmatprep.subr.mxu0 0.0
    %7051 = vmatpush1.xpose.msra.mxu0 0.0
    %7052 = vmatprep.subr.mxu0 0.0
    %7053 = vmatpush1.xpose.msra.mxu0 0.0
    %7054 = vmatprep.subr.mxu0 0.0
    %7055 = vmatpush1.xpose.msra.mxu0 0.0
    %7056 = vmatprep.subr.mxu0 0.0
    %7057 = vmatpush1.xpose.msra.mxu0 %v7024
    %7058 = vmatprep.subr.mxu0 0.0
    %7059 = vmatpush2.xpose.msra.mxu0 0.0
    %7060 = vmatprep.subr.mxu0 0.0
    %7061 = vmatpush2.xpose.msra.mxu0 0.0
    %7062 = vmatprep.subr.mxu0 0.0
    %7063 = vmatpush2.xpose.msra.mxu0 0.0
    %7064 = vmatprep.subr.mxu0 0.0
    %7065 = vmatpush2.xpose.msra.mxu0 0.0
    %7066 = vmatprep.subr.mxu0 0.0
    %7067 = vmatpush2.xpose.msra.mxu0 0.0
    %7068 = vmatprep.subr.mxu0 0.0
    %7069 = vmatpush2.xpose.msra.mxu0 0.0
    %7070 = vmatprep.subr.mxu0 0.0
    %7071 = vmatpush2.xpose.msra.mxu0 0.0
    %7072 = vmatprep.subr.mxu0 0.0
    %7073 = vmatpush2.xpose.msra.mxu0 0.0
    %7074 = vmatprep.subr.mxu0 0.0
    %7075 = vmatpush2.xpose.msra.mxu0 0.0
    %7076 = vmatprep.subr.mxu0 0.0
    %7077 = vmatpush2.xpose.msra.mxu0 0.0
    %7078 = vmatprep.subr.mxu0 0.0
    %7079 = vmatpush2.xpose.msra.mxu0 0.0
    %7080 = vmatprep.subr.mxu0 0.0
    %7081 = vmatpush2.xpose.msra.mxu0 0.0
    %7082 = vmatprep.subr.mxu0 0.0
    %7083 = vmatpush2.xpose.msra.mxu0 0.0
    %7084 = vmatprep.subr.mxu0 0.0
    %7085 = vmatpush2.xpose.msra.mxu0 0.0
    %7086 = vmatprep.subr.mxu0 0.0
    %7087 = vmatpush2.xpose.msra.mxu0 0.0
    %7088 = vmatprep.subr.mxu0 0.0
    %7089 = vmatpush2.xpose.msra.mxu0 0.0
    %7090 = vmatprep.mubr.f32.mxu0 0.0
    %7091 = vmatmul.mubr.f32.gmra.mxu0 %v7021
    %v7092 = vpop.f32.mrf.mxu0
    %v7093 = vadd.f32 %v2553, %v7092
    %v7094 = vpop.f32.mrf.mxu0
    %7095 = vdwg.mxu0
    %v7096 = vsel %vm403, %v7093, -inf
    %7097 = vmax.xlane.f32.xlu0 %v7096
    %v7098 = vpop.xlane.xlu0 %7097
    %v7099 = vsub.f32 %v7093, %v7098
    %v7100 = vmul.f32 %v7099, 1.442695
    %v7101 = vpow.pop %v7100
    %v7102 = vsel %vm403, %v7101, 0.0
    %7103 = vadd.xlane.f32.xlu0 %v7102
    %v7104 = vpop.xlane.xlu0 %7103
    %v7105 = vrcp.pop %v7104
    %v7106 = vmul.f32 %v7101, %v7105
    %7107 = vrot.lane.b32.xlu0 %v7005, 96
    %v7108 = vpop.permute.xlu0 %7107
    %v7111 = vsel %vm403, %v7106, 0
    %7113 = vmatprep.subr.mxu0 0.0
    %7114 = vmatpush1.msra.mxu0 0.0
    %7115 = vmatprep.subr.mxu0 0.0
    %7116 = vmatpush1.msra.mxu0 0.0
    %7117 = vmatprep.subr.mxu0 0.0
    %7118 = vmatpush1.msra.mxu0 0.0
    %7119 = vmatprep.subr.mxu0 0.0
    %7120 = vmatpush1.msra.mxu0 0.0
    %7121 = vmatprep.subr.mxu0 0.0
    %7122 = vmatpush1.msra.mxu0 0.0
    %7123 = vmatprep.subr.mxu0 0.0
    %7124 = vmatpush1.msra.mxu0 0.0
    %7125 = vmatprep.subr.mxu0 0.0
    %7126 = vmatpush1.msra.mxu0 0.0
    %7127 = vmatprep.subr.mxu0 0.0
    %7128 = vmatpush1.msra.mxu0 0.0
    %7129 = vmatprep.subr.mxu0 0.0
    %7130 = vmatpush1.msra.mxu0 0.0
    %7131 = vmatprep.subr.mxu0 0.0
    %7132 = vmatpush1.msra.mxu0 0.0
    %7133 = vmatprep.subr.mxu0 0.0
    %7134 = vmatpush1.msra.mxu0 0.0
    %7135 = vmatprep.subr.mxu0 0.0
    %7136 = vmatpush1.msra.mxu0 0.0
    %7137 = vmatprep.subr.mxu0 0.0
    %7138 = vmatpush1.msra.mxu0 0.0
    %7139 = vmatprep.subr.mxu0 0.0
    %7140 = vmatpush1.msra.mxu0 0.0
    %7141 = vmatprep.subr.mxu0 0.0
    %7142 = vmatpush1.msra.mxu0 0.0
    %7143 = vmatprep.subr.mxu0 0.0
    %7144 = vmatpush1.msra.mxu0 %v7108
    %7145 = vmatprep.subr.mxu0 0.0
    %7146 = vmatpush2.msra.mxu0 0.0
    %7147 = vmatprep.subr.mxu0 0.0
    %7148 = vmatpush2.msra.mxu0 0.0
    %7149 = vmatprep.subr.mxu0 0.0
    %7150 = vmatpush2.msra.mxu0 0.0
    %7151 = vmatprep.subr.mxu0 0.0
    %7152 = vmatpush2.msra.mxu0 0.0
    %7153 = vmatprep.subr.mxu0 0.0
    %7154 = vmatpush2.msra.mxu0 0.0
    %7155 = vmatprep.subr.mxu0 0.0
    %7156 = vmatpush2.msra.mxu0 0.0
    %7157 = vmatprep.subr.mxu0 0.0
    %7158 = vmatpush2.msra.mxu0 0.0
    %7159 = vmatprep.subr.mxu0 0.0
    %7160 = vmatpush2.msra.mxu0 0.0
    %7161 = vmatprep.subr.mxu0 0.0
    %7162 = vmatpush2.msra.mxu0 0.0
    %7163 = vmatprep.subr.mxu0 0.0
    %7164 = vmatpush2.msra.mxu0 0.0
    %7165 = vmatprep.subr.mxu0 0.0
    %7166 = vmatpush2.msra.mxu0 0.0
    %7167 = vmatprep.subr.mxu0 0.0
    %7168 = vmatpush2.msra.mxu0 0.0
    %7169 = vmatprep.subr.mxu0 0.0
    %7170 = vmatpush2.msra.mxu0 0.0
    %7171 = vmatprep.subr.mxu0 0.0
    %7172 = vmatpush2.msra.mxu0 0.0
    %7173 = vmatprep.subr.mxu0 0.0
    %7174 = vmatpush2.msra.mxu0 0.0
    %7175 = vmatprep.subr.mxu0 0.0
    %7176 = vmatpush2.msra.mxu0 0.0
    %7177 = vmatprep.mubr.f32.mxu0 0.0
    %7178 = vmatmul.mubr.f32.gmra.mxu0 %v7111
    %v7179 = vpop.f32.mrf.mxu0
    %v7180 = vadd.f32 0.0, %v7179
    %v7181 = vpop.f32.mrf.mxu0
    %7182 = vdwg.mxu0
    %7183 = vrot.lane.b32.xlu0 %v6917, 120
    %v7184 = vpop.permute.xlu0 %7183
    %7185 = vrot.lane.b32.xlu0 %v7005, 120
    %v7186 = vpop.permute.xlu0 %7185
    %v7187 = vsel %vm403, %v7184, 0
    %v7189 = vsel %vm403, %v7186, 0
    %7191 = vmatprep.subr.mxu0 0.0
    %7192 = vmatpush1.xpose.msra.mxu0 0.0
    %7193 = vmatprep.subr.mxu0 0.0
    %7194 = vmatpush1.xpose.msra.mxu0 0.0
    %7195 = vmatprep.subr.mxu0 0.0
    %7196 = vmatpush1.xpose.msra.mxu0 0.0
    %7197 = vmatprep.subr.mxu0 0.0
    %7198 = vmatpush1.xpose.msra.mxu0 0.0
    %7199 = vmatprep.subr.mxu0 0.0
    %7200 = vmatpush1.xpose.msra.mxu0 0.0
    %7201 = vmatprep.subr.mxu0 0.0
    %7202 = vmatpush1.xpose.msra.mxu0 0.0
    %7203 = vmatprep.subr.mxu0 0.0
    %7204 = vmatpush1.xpose.msra.mxu0 0.0
    %7205 = vmatprep.subr.mxu0 0.0
    %7206 = vmatpush1.xpose.msra.mxu0 0.0
    %7207 = vmatprep.subr.mxu0 0.0
    %7208 = vmatpush1.xpose.msra.mxu0 0.0
    %7209 = vmatprep.subr.mxu0 0.0
    %7210 = vmatpush1.xpose.msra.mxu0 0.0
    %7211 = vmatprep.subr.mxu0 0.0
    %7212 = vmatpush1.xpose.msra.mxu0 0.0
    %7213 = vmatprep.subr.mxu0 0.0
    %7214 = vmatpush1.xpose.msra.mxu0 0.0
    %7215 = vmatprep.subr.mxu0 0.0
    %7216 = vmatpush1.xpose.msra.mxu0 0.0
    %7217 = vmatprep.subr.mxu0 0.0
    %7218 = vmatpush1.xpose.msra.mxu0 0.0
    %7219 = vmatprep.subr.mxu0 0.0
    %7220 = vmatpush1.xpose.msra.mxu0 0.0
    %7221 = vmatprep.subr.mxu0 0.0
    %7222 = vmatpush1.xpose.msra.mxu0 %v7189
    %7223 = vmatprep.subr.mxu0 0.0
    %7224 = vmatpush2.xpose.msra.mxu0 0.0
    %7225 = vmatprep.subr.mxu0 0.0
    %7226 = vmatpush2.xpose.msra.mxu0 0.0
    %7227 = vmatprep.subr.mxu0 0.0
    %7228 = vmatpush2.xpose.msra.mxu0 0.0
    %7229 = vmatprep.subr.mxu0 0.0
    %7230 = vmatpush2.xpose.msra.mxu0 0.0
    %7231 = vmatprep.subr.mxu0 0.0
    %7232 = vmatpush2.xpose.msra.mxu0 0.0
    %7233 = vmatprep.subr.mxu0 0.0
    %7234 = vmatpush2.xpose.msra.mxu0 0.0
    %7235 = vmatprep.subr.mxu0 0.0
    %7236 = vmatpush2.xpose.msra.mxu0 0.0
    %7237 = vmatprep.subr.mxu0 0.0
    %7238 = vmatpush2.xpose.msra.mxu0 0.0
    %7239 = vmatprep.subr.mxu0 0.0
    %7240 = vmatpush2.xpose.msra.mxu0 0.0
    %7241 = vmatprep.subr.mxu0 0.0
    %7242 = vmatpush2.xpose.msra.mxu0 0.0
    %7243 = vmatprep.subr.mxu0 0.0
    %7244 = vmatpush2.xpose.msra.mxu0 0.0
    %7245 = vmatprep.subr.mxu0 0.0
    %7246 = vmatpush2.xpose.msra.mxu0 0.0
    %7247 = vmatprep.subr.mxu0 0.0
    %7248 = vmatpush2.xpose.msra.mxu0 0.0
    %7249 = vmatprep.subr.mxu0 0.0
    %7250 = vmatpush2.xpose.msra.mxu0 0.0
    %7251 = vmatprep.subr.mxu0 0.0
    %7252 = vmatpush2.xpose.msra.mxu0 0.0
    %7253 = vmatprep.subr.mxu0 0.0
    %7254 = vmatpush2.xpose.msra.mxu0 0.0
    %7255 = vmatprep.mubr.f32.mxu0 0.0
    %7256 = vmatmul.mubr.f32.gmra.mxu0 %v7187
    %v7257 = vpop.f32.mrf.mxu0
    %v7258 = vadd.f32 %v2553, %v7257
    %v7259 = vpop.f32.mrf.mxu0
    %7260 = vdwg.mxu0
    %v7261 = vsel %vm403, %v7258, -inf
    %7262 = vmax.xlane.f32.xlu0 %v7261
    %v7263 = vpop.xlane.xlu0 %7262
    %v7264 = vsub.f32 %v7258, %v7263
    %v7265 = vmul.f32 %v7264, 1.442695
    %v7266 = vpow.pop %v7265
    %v7267 = vsel %vm403, %v7266, 0.0
    %7268 = vadd.xlane.f32.xlu0 %v7267
    %v7269 = vpop.xlane.xlu0 %7268
    %v7270 = vrcp.pop %v7269
    %v7271 = vmul.f32 %v7266, %v7270
    %7272 = vrot.lane.b32.xlu0 %v7005, 88
    %v7273 = vpop.permute.xlu0 %7272
    %v7276 = vsel %vm403, %v7271, 0
    %7278 = vmatprep.subr.mxu0 0.0
    %7279 = vmatpush1.msra.mxu0 0.0
    %7280 = vmatprep.subr.mxu0 0.0
    %7281 = vmatpush1.msra.mxu0 0.0
    %7282 = vmatprep.subr.mxu0 0.0
    %7283 = vmatpush1.msra.mxu0 0.0
    %7284 = vmatprep.subr.mxu0 0.0
    %7285 = vmatpush1.msra.mxu0 0.0
    %7286 = vmatprep.subr.mxu0 0.0
    %7287 = vmatpush1.msra.mxu0 0.0
    %7288 = vmatprep.subr.mxu0 0.0
    %7289 = vmatpush1.msra.mxu0 0.0
    %7290 = vmatprep.subr.mxu0 0.0
    %7291 = vmatpush1.msra.mxu0 0.0
    %7292 = vmatprep.subr.mxu0 0.0
    %7293 = vmatpush1.msra.mxu0 0.0
    %7294 = vmatprep.subr.mxu0 0.0
    %7295 = vmatpush1.msra.mxu0 0.0
    %7296 = vmatprep.subr.mxu0 0.0
    %7297 = vmatpush1.msra.mxu0 0.0
    %7298 = vmatprep.subr.mxu0 0.0
    %7299 = vmatpush1.msra.mxu0 0.0
    %7300 = vmatprep.subr.mxu0 0.0
    %7301 = vmatpush1.msra.mxu0 0.0
    %7302 = vmatprep.subr.mxu0 0.0
    %7303 = vmatpush1.msra.mxu0 0.0
    %7304 = vmatprep.subr.mxu0 0.0
    %7305 = vmatpush1.msra.mxu0 0.0
    %7306 = vmatprep.subr.mxu0 0.0
    %7307 = vmatpush1.msra.mxu0 0.0
    %7308 = vmatprep.subr.mxu0 0.0
    %7309 = vmatpush1.msra.mxu0 %v7273
    %7310 = vmatprep.subr.mxu0 0.0
    %7311 = vmatpush2.msra.mxu0 0.0
    %7312 = vmatprep.subr.mxu0 0.0
    %7313 = vmatpush2.msra.mxu0 0.0
    %7314 = vmatprep.subr.mxu0 0.0
    %7315 = vmatpush2.msra.mxu0 0.0
    %7316 = vmatprep.subr.mxu0 0.0
    %7317 = vmatpush2.msra.mxu0 0.0
    %7318 = vmatprep.subr.mxu0 0.0
    %7319 = vmatpush2.msra.mxu0 0.0
    %7320 = vmatprep.subr.mxu0 0.0
    %7321 = vmatpush2.msra.mxu0 0.0
    %7322 = vmatprep.subr.mxu0 0.0
    %7323 = vmatpush2.msra.mxu0 0.0
    %7324 = vmatprep.subr.mxu0 0.0
    %7325 = vmatpush2.msra.mxu0 0.0
    %7326 = vmatprep.subr.mxu0 0.0
    %7327 = vmatpush2.msra.mxu0 0.0
    %7328 = vmatprep.subr.mxu0 0.0
    %7329 = vmatpush2.msra.mxu0 0.0
    %7330 = vmatprep.subr.mxu0 0.0
    %7331 = vmatpush2.msra.mxu0 0.0
    %7332 = vmatprep.subr.mxu0 0.0
    %7333 = vmatpush2.msra.mxu0 0.0
    %7334 = vmatprep.subr.mxu0 0.0
    %7335 = vmatpush2.msra.mxu0 0.0
    %7336 = vmatprep.subr.mxu0 0.0
    %7337 = vmatpush2.msra.mxu0 0.0
    %7338 = vmatprep.subr.mxu0 0.0
    %7339 = vmatpush2.msra.mxu0 0.0
    %7340 = vmatprep.subr.mxu0 0.0
    %7341 = vmatpush2.msra.mxu0 0.0
    %7342 = vmatprep.mubr.f32.mxu0 0.0
    %7343 = vmatmul.mubr.f32.gmra.mxu0 %v7276
    %v7344 = vpop.f32.mrf.mxu0
    %v7345 = vadd.f32 0.0, %v7344
    %v7346 = vpop.f32.mrf.mxu0
    %7347 = vdwg.mxu0
    %v7349 = vsel %vm403, %v7345, 0
    %7351 = vmatprep.subr.mxu0 0.0
    %7352 = vmatpush1.msra.mxu0 0.0
    %7353 = vmatprep.subr.mxu0 0.0
    %7354 = vmatpush1.msra.mxu0 0.0
    %7355 = vmatprep.subr.mxu0 0.0
    %7356 = vmatpush1.msra.mxu0 0.0
    %7357 = vmatprep.subr.mxu0 0.0
    %7358 = vmatpush1.msra.mxu0 0.0
    %7359 = vmatprep.subr.mxu0 0.0
    %7360 = vmatpush1.msra.mxu0 0.0
    %7361 = vmatprep.subr.mxu0 0.0
    %7362 = vmatpush1.msra.mxu0 0.0
    %7363 = vmatprep.subr.mxu0 0.0
    %7364 = vmatpush1.msra.mxu0 0.0
    %7365 = vmatprep.subr.mxu0 0.0
    %7366 = vmatpush1.msra.mxu0 0.0
    %7367 = vmatprep.subr.mxu0 0.0
    %7368 = vmatpush1.msra.mxu0 0.0
    %7369 = vmatprep.subr.mxu0 0.0
    %7370 = vmatpush1.msra.mxu0 0.0
    %7371 = vmatprep.subr.mxu0 0.0
    %7372 = vmatpush1.msra.mxu0 0.0
    %7373 = vmatprep.subr.mxu0 0.0
    %7374 = vmatpush1.msra.mxu0 0.0
    %7375 = vmatprep.subr.mxu0 0.0
    %7376 = vmatpush1.msra.mxu0 0.0
    %7377 = vmatprep.subr.mxu0 0.0
    %7378 = vmatpush1.msra.mxu0 0.0
    %7379 = vmatprep.subr.mxu0 0.0
    %7380 = vmatpush1.msra.mxu0 0.0
    %7381 = vmatprep.subr.mxu0 0.0
    %7382 = vmatpush1.msra.mxu0 %v7015
    %7383 = vmatprep.subr.mxu0 0.0
    %7384 = vmatpush2.msra.mxu0 0.0
    %7385 = vmatprep.subr.mxu0 0.0
    %7386 = vmatpush2.msra.mxu0 0.0
    %7387 = vmatprep.subr.mxu0 0.0
    %7388 = vmatpush2.msra.mxu0 0.0
    %7389 = vmatprep.subr.mxu0 0.0
    %7390 = vmatpush2.msra.mxu0 0.0
    %7391 = vmatprep.subr.mxu0 0.0
    %7392 = vmatpush2.msra.mxu0 0.0
    %7393 = vmatprep.subr.mxu0 0.0
    %7394 = vmatpush2.msra.mxu0 0.0
    %7395 = vmatprep.subr.mxu0 0.0
    %7396 = vmatpush2.msra.mxu0 0.0
    %7397 = vmatprep.subr.mxu0 0.0
    %7398 = vmatpush2.msra.mxu0 0.0
    %7399 = vmatprep.subr.mxu0 0.0
    %7400 = vmatpush2.msra.mxu0 0.0
    %7401 = vmatprep.subr.mxu0 0.0
    %7402 = vmatpush2.msra.mxu0 0.0
    %7403 = vmatprep.subr.mxu0 0.0
    %7404 = vmatpush2.msra.mxu0 0.0
    %7405 = vmatprep.subr.mxu0 0.0
    %7406 = vmatpush2.msra.mxu0 0.0
    %7407 = vmatprep.subr.mxu0 0.0
    %7408 = vmatpush2.msra.mxu0 0.0
    %7409 = vmatprep.subr.mxu0 0.0
    %7410 = vmatpush2.msra.mxu0 0.0
    %7411 = vmatprep.subr.mxu0 0.0
    %7412 = vmatpush2.msra.mxu0 0.0
    %7413 = vmatprep.subr.mxu0 0.0
    %7414 = vmatpush2.msra.mxu0 0.0
    %7415 = vmatprep.mubr.f32.mxu0 0.0
    %7416 = vmatmul.mubr.f32.gmra.mxu0 %v7349
    %v7417 = vpop.f32.mrf.mxu0
    %v7418 = vadd.f32 0.0, %v7417
    %v7419 = vpop.f32.mrf.mxu0
    %7420 = vdwg.mxu0
    %v7422 = vsel %vm403, %v7180, 0
    %7424 = vmatprep.subr.mxu0 0.0
    %7425 = vmatpush1.msra.mxu0 0.0
    %7426 = vmatprep.subr.mxu0 0.0
    %7427 = vmatpush1.msra.mxu0 0.0
    %7428 = vmatprep.subr.mxu0 0.0
    %7429 = vmatpush1.msra.mxu0 0.0
    %7430 = vmatprep.subr.mxu0 0.0
    %7431 = vmatpush1.msra.mxu0 0.0
    %7432 = vmatprep.subr.mxu0 0.0
    %7433 = vmatpush1.msra.mxu0 0.0
    %7434 = vmatprep.subr.mxu0 0.0
    %7435 = vmatpush1.msra.mxu0 0.0
    %7436 = vmatprep.subr.mxu0 0.0
    %7437 = vmatpush1.msra.mxu0 0.0
    %7438 = vmatprep.subr.mxu0 0.0
    %7439 = vmatpush1.msra.mxu0 0.0
    %7440 = vmatprep.subr.mxu0 0.0
    %7441 = vmatpush1.msra.mxu0 0.0
    %7442 = vmatprep.subr.mxu0 0.0
    %7443 = vmatpush1.msra.mxu0 0.0
    %7444 = vmatprep.subr.mxu0 0.0
    %7445 = vmatpush1.msra.mxu0 0.0
    %7446 = vmatprep.subr.mxu0 0.0
    %7447 = vmatpush1.msra.mxu0 0.0
    %7448 = vmatprep.subr.mxu0 0.0
    %7449 = vmatpush1.msra.mxu0 0.0
    %7450 = vmatprep.subr.mxu0 0.0
    %7451 = vmatpush1.msra.mxu0 0.0
    %7452 = vmatprep.subr.mxu0 0.0
    %7453 = vmatpush1.msra.mxu0 0.0
    %7454 = vmatprep.subr.mxu0 0.0
    %7455 = vmatpush1.msra.mxu0 %v7014
    %7456 = vmatprep.subr.mxu0 0.0
    %7457 = vmatpush2.msra.mxu0 0.0
    %7458 = vmatprep.subr.mxu0 0.0
    %7459 = vmatpush2.msra.mxu0 0.0
    %7460 = vmatprep.subr.mxu0 0.0
    %7461 = vmatpush2.msra.mxu0 0.0
    %7462 = vmatprep.subr.mxu0 0.0
    %7463 = vmatpush2.msra.mxu0 0.0
    %7464 = vmatprep.subr.mxu0 0.0
    %7465 = vmatpush2.msra.mxu0 0.0
    %7466 = vmatprep.subr.mxu0 0.0
    %7467 = vmatpush2.msra.mxu0 0.0
    %7468 = vmatprep.subr.mxu0 0.0
    %7469 = vmatpush2.msra.mxu0 0.0
    %7470 = vmatprep.subr.mxu0 0.0
    %7471 = vmatpush2.msra.mxu0 0.0
    %7472 = vmatprep.subr.mxu0 0.0
    %7473 = vmatpush2.msra.mxu0 0.0
    %7474 = vmatprep.subr.mxu0 0.0
    %7475 = vmatpush2.msra.mxu0 0.0
    %7476 = vmatprep.subr.mxu0 0.0
    %7477 = vmatpush2.msra.mxu0 0.0
    %7478 = vmatprep.subr.mxu0 0.0
    %7479 = vmatpush2.msra.mxu0 0.0
    %7480 = vmatprep.subr.mxu0 0.0
    %7481 = vmatpush2.msra.mxu0 0.0
    %7482 = vmatprep.subr.mxu0 0.0
    %7483 = vmatpush2.msra.mxu0 0.0
    %7484 = vmatprep.subr.mxu0 0.0
    %7485 = vmatpush2.msra.mxu0 0.0
    %7486 = vmatprep.subr.mxu0 0.0
    %7487 = vmatpush2.msra.mxu0 0.0
    %7488 = vmatprep.mubr.f32.mxu0 0.0
    %7489 = vmatmul.mubr.f32.gmra.mxu0 %v7422
    %v7490 = vpop.f32.mrf.mxu0
    %v7491 = vadd.f32 %v7418, %v7490
    %v7492 = vpop.f32.mrf.mxu0
    %7493 = vdwg.mxu0
    %7494 = vrot.lane.b32.xlu0 %v6917, 112
    %v7495 = vpop.permute.xlu0 %7494
    %7496 = vrot.lane.b32.xlu0 %v7005, 112
    %v7497 = vpop.permute.xlu0 %7496
    %v7498 = vsel %vm403, %v7495, 0
    %v7500 = vsel %vm403, %v7497, 0
    %7502 = vmatprep.subr.mxu0 0.0
    %7503 = vmatpush1.xpose.msra.mxu0 0.0
    %7504 = vmatprep.subr.mxu0 0.0
    %7505 = vmatpush1.xpose.msra.mxu0 0.0
    %7506 = vmatprep.subr.mxu0 0.0
    %7507 = vmatpush1.xpose.msra.mxu0 0.0
    %7508 = vmatprep.subr.mxu0 0.0
    %7509 = vmatpush1.xpose.msra.mxu0 0.0
    %7510 = vmatprep.subr.mxu0 0.0
    %7511 = vmatpush1.xpose.msra.mxu0 0.0
    %7512 = vmatprep.subr.mxu0 0.0
    %7513 = vmatpush1.xpose.msra.mxu0 0.0
    %7514 = vmatprep.subr.mxu0 0.0
    %7515 = vmatpush1.xpose.msra.mxu0 0.0
    %7516 = vmatprep.subr.mxu0 0.0
    %7517 = vmatpush1.xpose.msra.mxu0 0.0
    %7518 = vmatprep.subr.mxu0 0.0
    %7519 = vmatpush1.xpose.msra.mxu0 0.0
    %7520 = vmatprep.subr.mxu0 0.0
    %7521 = vmatpush1.xpose.msra.mxu0 0.0
    %7522 = vmatprep.subr.mxu0 0.0
    %7523 = vmatpush1.xpose.msra.mxu0 0.0
    %7524 = vmatprep.subr.mxu0 0.0
    %7525 = vmatpush1.xpose.msra.mxu0 0.0
    %7526 = vmatprep.subr.mxu0 0.0
    %7527 = vmatpush1.xpose.msra.mxu0 0.0
    %7528 = vmatprep.subr.mxu0 0.0
    %7529 = vmatpush1.xpose.msra.mxu0 0.0
    %7530 = vmatprep.subr.mxu0 0.0
    %7531 = vmatpush1.xpose.msra.mxu0 0.0
    %7532 = vmatprep.subr.mxu0 0.0
    %7533 = vmatpush1.xpose.msra.mxu0 %v7500
    %7534 = vmatprep.subr.mxu0 0.0
    %7535 = vmatpush2.xpose.msra.mxu0 0.0
    %7536 = vmatprep.subr.mxu0 0.0
    %7537 = vmatpush2.xpose.msra.mxu0 0.0
    %7538 = vmatprep.subr.mxu0 0.0
    %7539 = vmatpush2.xpose.msra.mxu0 0.0
    %7540 = vmatprep.subr.mxu0 0.0
    %7541 = vmatpush2.xpose.msra.mxu0 0.0
    %7542 = vmatprep.subr.mxu0 0.0
    %7543 = vmatpush2.xpose.msra.mxu0 0.0
    %7544 = vmatprep.subr.mxu0 0.0
    %7545 = vmatpush2.xpose.msra.mxu0 0.0
    %7546 = vmatprep.subr.mxu0 0.0
    %7547 = vmatpush2.xpose.msra.mxu0 0.0
    %7548 = vmatprep.subr.mxu0 0.0
    %7549 = vmatpush2.xpose.msra.mxu0 0.0
    %7550 = vmatprep.subr.mxu0 0.0
    %7551 = vmatpush2.xpose.msra.mxu0 0.0
    %7552 = vmatprep.subr.mxu0 0.0
    %7553 = vmatpush2.xpose.msra.mxu0 0.0
    %7554 = vmatprep.subr.mxu0 0.0
    %7555 = vmatpush2.xpose.msra.mxu0 0.0
    %7556 = vmatprep.subr.mxu0 0.0
    %7557 = vmatpush2.xpose.msra.mxu0 0.0
    %7558 = vmatprep.subr.mxu0 0.0
    %7559 = vmatpush2.xpose.msra.mxu0 0.0
    %7560 = vmatprep.subr.mxu0 0.0
    %7561 = vmatpush2.xpose.msra.mxu0 0.0
    %7562 = vmatprep.subr.mxu0 0.0
    %7563 = vmatpush2.xpose.msra.mxu0 0.0
    %7564 = vmatprep.subr.mxu0 0.0
    %7565 = vmatpush2.xpose.msra.mxu0 0.0
    %7566 = vmatprep.mubr.f32.mxu0 0.0
    %7567 = vmatmul.mubr.f32.gmra.mxu0 %v7498
    %v7568 = vpop.f32.mrf.mxu0
    %v7569 = vadd.f32 %v2553, %v7568
    %v7570 = vpop.f32.mrf.mxu0
    %7571 = vdwg.mxu0
    %v7572 = vsel %vm403, %v7569, -inf
    %7573 = vmax.xlane.f32.xlu0 %v7572
    %v7574 = vpop.xlane.xlu0 %7573
    %v7575 = vsub.f32 %v7569, %v7574
    %v7576 = vmul.f32 %v7575, 1.442695
    %v7577 = vpow.pop %v7576
    %v7578 = vsel %vm403, %v7577, 0.0
    %7579 = vadd.xlane.f32.xlu0 %v7578
    %v7580 = vpop.xlane.xlu0 %7579
    %v7581 = vrcp.pop %v7580
    %v7582 = vmul.f32 %v7577, %v7581
    %7583 = vrot.lane.b32.xlu0 %v7005, 80
    %v7584 = vpop.permute.xlu0 %7583
    %v7587 = vsel %vm403, %v7582, 0
    %7589 = vmatprep.subr.mxu0 0.0
    %7590 = vmatpush1.msra.mxu0 0.0
    %7591 = vmatprep.subr.mxu0 0.0
    %7592 = vmatpush1.msra.mxu0 0.0
    %7593 = vmatprep.subr.mxu0 0.0
    %7594 = vmatpush1.msra.mxu0 0.0
    %7595 = vmatprep.subr.mxu0 0.0
    %7596 = vmatpush1.msra.mxu0 0.0
    %7597 = vmatprep.subr.mxu0 0.0
    %7598 = vmatpush1.msra.mxu0 0.0
    %7599 = vmatprep.subr.mxu0 0.0
    %7600 = vmatpush1.msra.mxu0 0.0
    %7601 = vmatprep.subr.mxu0 0.0
    %7602 = vmatpush1.msra.mxu0 0.0
    %7603 = vmatprep.subr.mxu0 0.0
    %7604 = vmatpush1.msra.mxu0 0.0
    %7605 = vmatprep.subr.mxu0 0.0
    %7606 = vmatpush1.msra.mxu0 0.0
    %7607 = vmatprep.subr.mxu0 0.0
    %7608 = vmatpush1.msra.mxu0 0.0
    %7609 = vmatprep.subr.mxu0 0.0
    %7610 = vmatpush1.msra.mxu0 0.0
    %7611 = vmatprep.subr.mxu0 0.0
    %7612 = vmatpush1.msra.mxu0 0.0
    %7613 = vmatprep.subr.mxu0 0.0
    %7614 = vmatpush1.msra.mxu0 0.0
    %7615 = vmatprep.subr.mxu0 0.0
    %7616 = vmatpush1.msra.mxu0 0.0
    %7617 = vmatprep.subr.mxu0 0.0
    %7618 = vmatpush1.msra.mxu0 0.0
    %7619 = vmatprep.subr.mxu0 0.0
    %7620 = vmatpush1.msra.mxu0 %v7584
    %7621 = vmatprep.subr.mxu0 0.0
    %7622 = vmatpush2.msra.mxu0 0.0
    %7623 = vmatprep.subr.mxu0 0.0
    %7624 = vmatpush2.msra.mxu0 0.0
    %7625 = vmatprep.subr.mxu0 0.0
    %7626 = vmatpush2.msra.mxu0 0.0
    %7627 = vmatprep.subr.mxu0 0.0
    %7628 = vmatpush2.msra.mxu0 0.0
    %7629 = vmatprep.subr.mxu0 0.0
    %7630 = vmatpush2.msra.mxu0 0.0
    %7631 = vmatprep.subr.mxu0 0.0
    %7632 = vmatpush2.msra.mxu0 0.0
    %7633 = vmatprep.subr.mxu0 0.0
    %7634 = vmatpush2.msra.mxu0 0.0
    %7635 = vmatprep.subr.mxu0 0.0
    %7636 = vmatpush2.msra.mxu0 0.0
    %7637 = vmatprep.subr.mxu0 0.0
    %7638 = vmatpush2.msra.mxu0 0.0
    %7639 = vmatprep.subr.mxu0 0.0
    %7640 = vmatpush2.msra.mxu0 0.0
    %7641 = vmatprep.subr.mxu0 0.0
    %7642 = vmatpush2.msra.mxu0 0.0
    %7643 = vmatprep.subr.mxu0 0.0
    %7644 = vmatpush2.msra.mxu0 0.0
    %7645 = vmatprep.subr.mxu0 0.0
    %7646 = vmatpush2.msra.mxu0 0.0
    %7647 = vmatprep.subr.mxu0 0.0
    %7648 = vmatpush2.msra.mxu0 0.0
    %7649 = vmatprep.subr.mxu0 0.0
    %7650 = vmatpush2.msra.mxu0 0.0
    %7651 = vmatprep.subr.mxu0 0.0
    %7652 = vmatpush2.msra.mxu0 0.0
    %7653 = vmatprep.mubr.f32.mxu0 0.0
    %7654 = vmatmul.mubr.f32.gmra.mxu0 %v7587
    %v7655 = vpop.f32.mrf.mxu0
    %v7656 = vadd.f32 0.0, %v7655
    %v7657 = vpop.f32.mrf.mxu0
    %7658 = vdwg.mxu0
    %v7660 = vsel %vm403, %v7656, 0
    %7662 = vmatprep.subr.mxu0 0.0
    %7663 = vmatpush1.msra.mxu0 0.0
    %7664 = vmatprep.subr.mxu0 0.0
    %7665 = vmatpush1.msra.mxu0 0.0
    %7666 = vmatprep.subr.mxu0 0.0
    %7667 = vmatpush1.msra.mxu0 0.0
    %7668 = vmatprep.subr.mxu0 0.0
    %7669 = vmatpush1.msra.mxu0 0.0
    %7670 = vmatprep.subr.mxu0 0.0
    %7671 = vmatpush1.msra.mxu0 0.0
    %7672 = vmatprep.subr.mxu0 0.0
    %7673 = vmatpush1.msra.mxu0 0.0
    %7674 = vmatprep.subr.mxu0 0.0
    %7675 = vmatpush1.msra.mxu0 0.0
    %7676 = vmatprep.subr.mxu0 0.0
    %7677 = vmatpush1.msra.mxu0 0.0
    %7678 = vmatprep.subr.mxu0 0.0
    %7679 = vmatpush1.msra.mxu0 0.0
    %7680 = vmatprep.subr.mxu0 0.0
    %7681 = vmatpush1.msra.mxu0 0.0
    %7682 = vmatprep.subr.mxu0 0.0
    %7683 = vmatpush1.msra.mxu0 0.0
    %7684 = vmatprep.subr.mxu0 0.0
    %7685 = vmatpush1.msra.mxu0 0.0
    %7686 = vmatprep.subr.mxu0 0.0
    %7687 = vmatpush1.msra.mxu0 0.0
    %7688 = vmatprep.subr.mxu0 0.0
    %7689 = vmatpush1.msra.mxu0 0.0
    %7690 = vmatprep.subr.mxu0 0.0
    %7691 = vmatpush1.msra.mxu0 0.0
    %7692 = vmatprep.subr.mxu0 0.0
    %7693 = vmatpush1.msra.mxu0 %v7016
    %7694 = vmatprep.subr.mxu0 0.0
    %7695 = vmatpush2.msra.mxu0 0.0
    %7696 = vmatprep.subr.mxu0 0.0
    %7697 = vmatpush2.msra.mxu0 0.0
    %7698 = vmatprep.subr.mxu0 0.0
    %7699 = vmatpush2.msra.mxu0 0.0
    %7700 = vmatprep.subr.mxu0 0.0
    %7701 = vmatpush2.msra.mxu0 0.0
    %7702 = vmatprep.subr.mxu0 0.0
    %7703 = vmatpush2.msra.mxu0 0.0
    %7704 = vmatprep.subr.mxu0 0.0
    %7705 = vmatpush2.msra.mxu0 0.0
    %7706 = vmatprep.subr.mxu0 0.0
    %7707 = vmatpush2.msra.mxu0 0.0
    %7708 = vmatprep.subr.mxu0 0.0
    %7709 = vmatpush2.msra.mxu0 0.0
    %7710 = vmatprep.subr.mxu0 0.0
    %7711 = vmatpush2.msra.mxu0 0.0
    %7712 = vmatprep.subr.mxu0 0.0
    %7713 = vmatpush2.msra.mxu0 0.0
    %7714 = vmatprep.subr.mxu0 0.0
    %7715 = vmatpush2.msra.mxu0 0.0
    %7716 = vmatprep.subr.mxu0 0.0
    %7717 = vmatpush2.msra.mxu0 0.0
    %7718 = vmatprep.subr.mxu0 0.0
    %7719 = vmatpush2.msra.mxu0 0.0
    %7720 = vmatprep.subr.mxu0 0.0
    %7721 = vmatpush2.msra.mxu0 0.0
    %7722 = vmatprep.subr.mxu0 0.0
    %7723 = vmatpush2.msra.mxu0 0.0
    %7724 = vmatprep.subr.mxu0 0.0
    %7725 = vmatpush2.msra.mxu0 0.0
    %7726 = vmatprep.mubr.f32.mxu0 0.0
    %7727 = vmatmul.mubr.f32.gmra.mxu0 %v7660
    %v7728 = vpop.f32.mrf.mxu0
    %v7729 = vadd.f32 0.0, %v7728
    %v7730 = vpop.f32.mrf.mxu0
    %7731 = vdwg.mxu0
    %v7732 = vadd.f32 %v7491, %v7729
    %7733 = vrot.lane.b32.xlu0 %v6917, 104
    %v7734 = vpop.permute.xlu0 %7733
    %7735 = vrot.lane.b32.xlu0 %v7005, 104
    %v7736 = vpop.permute.xlu0 %7735
    %v7737 = vsel %vm403, %v7734, 0
    %v7739 = vsel %vm403, %v7736, 0
    %7741 = vmatprep.subr.mxu0 0.0
    %7742 = vmatpush1.xpose.msra.mxu0 0.0
    %7743 = vmatprep.subr.mxu0 0.0
    %7744 = vmatpush1.xpose.msra.mxu0 0.0
    %7745 = vmatprep.subr.mxu0 0.0
    %7746 = vmatpush1.xpose.msra.mxu0 0.0
    %7747 = vmatprep.subr.mxu0 0.0
    %7748 = vmatpush1.xpose.msra.mxu0 0.0
    %7749 = vmatprep.subr.mxu0 0.0
    %7750 = vmatpush1.xpose.msra.mxu0 0.0
    %7751 = vmatprep.subr.mxu0 0.0
    %7752 = vmatpush1.xpose.msra.mxu0 0.0
    %7753 = vmatprep.subr.mxu0 0.0
    %7754 = vmatpush1.xpose.msra.mxu0 0.0
    %7755 = vmatprep.subr.mxu0 0.0
    %7756 = vmatpush1.xpose.msra.mxu0 0.0
    %7757 = vmatprep.subr.mxu0 0.0
    %7758 = vmatpush1.xpose.msra.mxu0 0.0
    %7759 = vmatprep.subr.mxu0 0.0
    %7760 = vmatpush1.xpose.msra.mxu0 0.0
    %7761 = vmatprep.subr.mxu0 0.0
    %7762 = vmatpush1.xpose.msra.mxu0 0.0
    %7763 = vmatprep.subr.mxu0 0.0
    %7764 = vmatpush1.xpose.msra.mxu0 0.0
    %7765 = vmatprep.subr.mxu0 0.0
    %7766 = vmatpush1.xpose.msra.mxu0 0.0
    %7767 = vmatprep.subr.mxu0 0.0
    %7768 = vmatpush1.xpose.msra.mxu0 0.0
    %7769 = vmatprep.subr.mxu0 0.0
    %7770 = vmatpush1.xpose.msra.mxu0 0.0
    %7771 = vmatprep.subr.mxu0 0.0
    %7772 = vmatpush1.xpose.msra.mxu0 %v7739
    %7773 = vmatprep.subr.mxu0 0.0
    %7774 = vmatpush2.xpose.msra.mxu0 0.0
    %7775 = vmatprep.subr.mxu0 0.0
    %7776 = vmatpush2.xpose.msra.mxu0 0.0
    %7777 = vmatprep.subr.mxu0 0.0
    %7778 = vmatpush2.xpose.msra.mxu0 0.0
    %7779 = vmatprep.subr.mxu0 0.0
    %7780 = vmatpush2.xpose.msra.mxu0 0.0
    %7781 = vmatprep.subr.mxu0 0.0
    %7782 = vmatpush2.xpose.msra.mxu0 0.0
    %7783 = vmatprep.subr.mxu0 0.0
    %7784 = vmatpush2.xpose.msra.mxu0 0.0
    %7785 = vmatprep.subr.mxu0 0.0
    %7786 = vmatpush2.xpose.msra.mxu0 0.0
    %7787 = vmatprep.subr.mxu0 0.0
    %7788 = vmatpush2.xpose.msra.mxu0 0.0
    %7789 = vmatprep.subr.mxu0 0.0
    %7790 = vmatpush2.xpose.msra.mxu0 0.0
    %7791 = vmatprep.subr.mxu0 0.0
    %7792 = vmatpush2.xpose.msra.mxu0 0.0
    %7793 = vmatprep.subr.mxu0 0.0
    %7794 = vmatpush2.xpose.msra.mxu0 0.0
    %7795 = vmatprep.subr.mxu0 0.0
    %7796 = vmatpush2.xpose.msra.mxu0 0.0
    %7797 = vmatprep.subr.mxu0 0.0
    %7798 = vmatpush2.xpose.msra.mxu0 0.0
    %7799 = vmatprep.subr.mxu0 0.0
    %7800 = vmatpush2.xpose.msra.mxu0 0.0
    %7801 = vmatprep.subr.mxu0 0.0
    %7802 = vmatpush2.xpose.msra.mxu0 0.0
    %7803 = vmatprep.subr.mxu0 0.0
    %7804 = vmatpush2.xpose.msra.mxu0 0.0
    %7805 = vmatprep.mubr.f32.mxu0 0.0
    %7806 = vmatmul.mubr.f32.gmra.mxu0 %v7737
    %v7807 = vpop.f32.mrf.mxu0
    %v7808 = vadd.f32 %v2553, %v7807
    %v7809 = vpop.f32.mrf.mxu0
    %7810 = vdwg.mxu0
    %v7811 = vsel %vm403, %v7808, -inf
    %7812 = vmax.xlane.f32.xlu0 %v7811
    %v7813 = vpop.xlane.xlu0 %7812
    %v7814 = vsub.f32 %v7808, %v7813
    %v7815 = vmul.f32 %v7814, 1.442695
    %v7816 = vpow.pop %v7815
    %v7817 = vsel %vm403, %v7816, 0.0
    %7818 = vadd.xlane.f32.xlu0 %v7817
    %v7819 = vpop.xlane.xlu0 %7818
    %v7820 = vrcp.pop %v7819
    %v7821 = vmul.f32 %v7816, %v7820
    %7822 = vrot.lane.b32.xlu0 %v7005, 72
    %v7823 = vpop.permute.xlu0 %7822
    %v7826 = vsel %vm403, %v7821, 0
    %7828 = vmatprep.subr.mxu0 0.0
    %7829 = vmatpush1.msra.mxu0 0.0
    %7830 = vmatprep.subr.mxu0 0.0
    %7831 = vmatpush1.msra.mxu0 0.0
    %7832 = vmatprep.subr.mxu0 0.0
    %7833 = vmatpush1.msra.mxu0 0.0
    %7834 = vmatprep.subr.mxu0 0.0
    %7835 = vmatpush1.msra.mxu0 0.0
    %7836 = vmatprep.subr.mxu0 0.0
    %7837 = vmatpush1.msra.mxu0 0.0
    %7838 = vmatprep.subr.mxu0 0.0
    %7839 = vmatpush1.msra.mxu0 0.0
    %7840 = vmatprep.subr.mxu0 0.0
    %7841 = vmatpush1.msra.mxu0 0.0
    %7842 = vmatprep.subr.mxu0 0.0
    %7843 = vmatpush1.msra.mxu0 0.0
    %7844 = vmatprep.subr.mxu0 0.0
    %7845 = vmatpush1.msra.mxu0 0.0
    %7846 = vmatprep.subr.mxu0 0.0
    %7847 = vmatpush1.msra.mxu0 0.0
    %7848 = vmatprep.subr.mxu0 0.0
    %7849 = vmatpush1.msra.mxu0 0.0
    %7850 = vmatprep.subr.mxu0 0.0
    %7851 = vmatpush1.msra.mxu0 0.0
    %7852 = vmatprep.subr.mxu0 0.0
    %7853 = vmatpush1.msra.mxu0 0.0
    %7854 = vmatprep.subr.mxu0 0.0
    %7855 = vmatpush1.msra.mxu0 0.0
    %7856 = vmatprep.subr.mxu0 0.0
    %7857 = vmatpush1.msra.mxu0 0.0
    %7858 = vmatprep.subr.mxu0 0.0
    %7859 = vmatpush1.msra.mxu0 %v7823
    %7860 = vmatprep.subr.mxu0 0.0
    %7861 = vmatpush2.msra.mxu0 0.0
    %7862 = vmatprep.subr.mxu0 0.0
    %7863 = vmatpush2.msra.mxu0 0.0
    %7864 = vmatprep.subr.mxu0 0.0
    %7865 = vmatpush2.msra.mxu0 0.0
    %7866 = vmatprep.subr.mxu0 0.0
    %7867 = vmatpush2.msra.mxu0 0.0
    %7868 = vmatprep.subr.mxu0 0.0
    %7869 = vmatpush2.msra.mxu0 0.0
    %7870 = vmatprep.subr.mxu0 0.0
    %7871 = vmatpush2.msra.mxu0 0.0
    %7872 = vmatprep.subr.mxu0 0.0
    %7873 = vmatpush2.msra.mxu0 0.0
    %7874 = vmatprep.subr.mxu0 0.0
    %7875 = vmatpush2.msra.mxu0 0.0
    %7876 = vmatprep.subr.mxu0 0.0
    %7877 = vmatpush2.msra.mxu0 0.0
    %7878 = vmatprep.subr.mxu0 0.0
    %7879 = vmatpush2.msra.mxu0 0.0
    %7880 = vmatprep.subr.mxu0 0.0
    %7881 = vmatpush2.msra.mxu0 0.0
    %7882 = vmatprep.subr.mxu0 0.0
    %7883 = vmatpush2.msra.mxu0 0.0
    %7884 = vmatprep.subr.mxu0 0.0
    %7885 = vmatpush2.msra.mxu0 0.0
    %7886 = vmatprep.subr.mxu0 0.0
    %7887 = vmatpush2.msra.mxu0 0.0
    %7888 = vmatprep.subr.mxu0 0.0
    %7889 = vmatpush2.msra.mxu0 0.0
    %7890 = vmatprep.subr.mxu0 0.0
    %7891 = vmatpush2.msra.mxu0 0.0
    %7892 = vmatprep.mubr.f32.mxu0 0.0
    %7893 = vmatmul.mubr.f32.gmra.mxu0 %v7826
    %v7894 = vpop.f32.mrf.mxu0
    %v7895 = vadd.f32 0.0, %v7894
    %v7896 = vpop.f32.mrf.mxu0
    %7897 = vdwg.mxu0
    %v7899 = vsel %vm403, %v7895, 0
    %7901 = vmatprep.subr.mxu0 0.0
    %7902 = vmatpush1.msra.mxu0 0.0
    %7903 = vmatprep.subr.mxu0 0.0
    %7904 = vmatpush1.msra.mxu0 0.0
    %7905 = vmatprep.subr.mxu0 0.0
    %7906 = vmatpush1.msra.mxu0 0.0
    %7907 = vmatprep.subr.mxu0 0.0
    %7908 = vmatpush1.msra.mxu0 0.0
    %7909 = vmatprep.subr.mxu0 0.0
    %7910 = vmatpush1.msra.mxu0 0.0
    %7911 = vmatprep.subr.mxu0 0.0
    %7912 = vmatpush1.msra.mxu0 0.0
    %7913 = vmatprep.subr.mxu0 0.0
    %7914 = vmatpush1.msra.mxu0 0.0
    %7915 = vmatprep.subr.mxu0 0.0
    %7916 = vmatpush1.msra.mxu0 0.0
    %7917 = vmatprep.subr.mxu0 0.0
    %7918 = vmatpush1.msra.mxu0 0.0
    %7919 = vmatprep.subr.mxu0 0.0
    %7920 = vmatpush1.msra.mxu0 0.0
    %7921 = vmatprep.subr.mxu0 0.0
    %7922 = vmatpush1.msra.mxu0 0.0
    %7923 = vmatprep.subr.mxu0 0.0
    %7924 = vmatpush1.msra.mxu0 0.0
    %7925 = vmatprep.subr.mxu0 0.0
    %7926 = vmatpush1.msra.mxu0 0.0
    %7927 = vmatprep.subr.mxu0 0.0
    %7928 = vmatpush1.msra.mxu0 0.0
    %7929 = vmatprep.subr.mxu0 0.0
    %7930 = vmatpush1.msra.mxu0 0.0
    %7931 = vmatprep.subr.mxu0 0.0
    %7932 = vmatpush1.msra.mxu0 %v7017
    %7933 = vmatprep.subr.mxu0 0.0
    %7934 = vmatpush2.msra.mxu0 0.0
    %7935 = vmatprep.subr.mxu0 0.0
    %7936 = vmatpush2.msra.mxu0 0.0
    %7937 = vmatprep.subr.mxu0 0.0
    %7938 = vmatpush2.msra.mxu0 0.0
    %7939 = vmatprep.subr.mxu0 0.0
    %7940 = vmatpush2.msra.mxu0 0.0
    %7941 = vmatprep.subr.mxu0 0.0
    %7942 = vmatpush2.msra.mxu0 0.0
    %7943 = vmatprep.subr.mxu0 0.0
    %7944 = vmatpush2.msra.mxu0 0.0
    %7945 = vmatprep.subr.mxu0 0.0
    %7946 = vmatpush2.msra.mxu0 0.0
    %7947 = vmatprep.subr.mxu0 0.0
    %7948 = vmatpush2.msra.mxu0 0.0
    %7949 = vmatprep.subr.mxu0 0.0
    %7950 = vmatpush2.msra.mxu0 0.0
    %7951 = vmatprep.subr.mxu0 0.0
    %7952 = vmatpush2.msra.mxu0 0.0
    %7953 = vmatprep.subr.mxu0 0.0
    %7954 = vmatpush2.msra.mxu0 0.0
    %7955 = vmatprep.subr.mxu0 0.0
    %7956 = vmatpush2.msra.mxu0 0.0
    %7957 = vmatprep.subr.mxu0 0.0
    %7958 = vmatpush2.msra.mxu0 0.0
    %7959 = vmatprep.subr.mxu0 0.0
    %7960 = vmatpush2.msra.mxu0 0.0
    %7961 = vmatprep.subr.mxu0 0.0
    %7962 = vmatpush2.msra.mxu0 0.0
    %7963 = vmatprep.subr.mxu0 0.0
    %7964 = vmatpush2.msra.mxu0 0.0
    %7965 = vmatprep.mubr.f32.mxu0 0.0
    %7966 = vmatmul.mubr.f32.gmra.mxu0 %v7899
    %v7967 = vpop.f32.mrf.mxu0
    %v7968 = vadd.f32 0.0, %v7967
    %v7969 = vpop.f32.mrf.mxu0
    %7970 = vdwg.mxu0
    %v7971 = vadd.f32 %v7732, %v7968
    %v7973 = vsel %vm403, %v6922, 0
    %v7976 = vsel %vm403, %v7010, 0
    %7978 = vmatprep.subr.mxu0 0.0
    %7979 = vmatpush1.xpose.msra.mxu0 0.0
    %7980 = vmatprep.subr.mxu0 0.0
    %7981 = vmatpush1.xpose.msra.mxu0 0.0
    %7982 = vmatprep.subr.mxu0 0.0
    %7983 = vmatpush1.xpose.msra.mxu0 0.0
    %7984 = vmatprep.subr.mxu0 0.0
    %7985 = vmatpush1.xpose.msra.mxu0 0.0
    %7986 = vmatprep.subr.mxu0 0.0
    %7987 = vmatpush1.xpose.msra.mxu0 0.0
    %7988 = vmatprep.subr.mxu0 0.0
    %7989 = vmatpush1.xpose.msra.mxu0 0.0
    %7990 = vmatprep.subr.mxu0 0.0
    %7991 = vmatpush1.xpose.msra.mxu0 0.0
    %7992 = vmatprep.subr.mxu0 0.0
    %7993 = vmatpush1.xpose.msra.mxu0 0.0
    %7994 = vmatprep.subr.mxu0 0.0
    %7995 = vmatpush1.xpose.msra.mxu0 0.0
    %7996 = vmatprep.subr.mxu0 0.0
    %7997 = vmatpush1.xpose.msra.mxu0 0.0
    %7998 = vmatprep.subr.mxu0 0.0
    %7999 = vmatpush1.xpose.msra.mxu0 0.0
    %8000 = vmatprep.subr.mxu0 0.0
    %8001 = vmatpush1.xpose.msra.mxu0 0.0
    %8002 = vmatprep.subr.mxu0 0.0
    %8003 = vmatpush1.xpose.msra.mxu0 0.0
    %8004 = vmatprep.subr.mxu0 0.0
    %8005 = vmatpush1.xpose.msra.mxu0 0.0
    %8006 = vmatprep.subr.mxu0 0.0
    %8007 = vmatpush1.xpose.msra.mxu0 0.0
    %8008 = vmatprep.subr.mxu0 0.0
    %8009 = vmatpush1.xpose.msra.mxu0 %v7976
    %8010 = vmatprep.subr.mxu0 0.0
    %8011 = vmatpush2.xpose.msra.mxu0 0.0
    %8012 = vmatprep.subr.mxu0 0.0
    %8013 = vmatpush2.xpose.msra.mxu0 0.0
    %8014 = vmatprep.subr.mxu0 0.0
    %8015 = vmatpush2.xpose.msra.mxu0 0.0
    %8016 = vmatprep.subr.mxu0 0.0
    %8017 = vmatpush2.xpose.msra.mxu0 0.0
    %8018 = vmatprep.subr.mxu0 0.0
    %8019 = vmatpush2.xpose.msra.mxu0 0.0
    %8020 = vmatprep.subr.mxu0 0.0
    %8021 = vmatpush2.xpose.msra.mxu0 0.0
    %8022 = vmatprep.subr.mxu0 0.0
    %8023 = vmatpush2.xpose.msra.mxu0 0.0
    %8024 = vmatprep.subr.mxu0 0.0
    %8025 = vmatpush2.xpose.msra.mxu0 0.0
    %8026 = vmatprep.subr.mxu0 0.0
    %8027 = vmatpush2.xpose.msra.mxu0 0.0
    %8028 = vmatprep.subr.mxu0 0.0
    %8029 = vmatpush2.xpose.msra.mxu0 0.0
    %8030 = vmatprep.subr.mxu0 0.0
    %8031 = vmatpush2.xpose.msra.mxu0 0.0
    %8032 = vmatprep.subr.mxu0 0.0
    %8033 = vmatpush2.xpose.msra.mxu0 0.0
    %8034 = vmatprep.subr.mxu0 0.0
    %8035 = vmatpush2.xpose.msra.mxu0 0.0
    %8036 = vmatprep.subr.mxu0 0.0
    %8037 = vmatpush2.xpose.msra.mxu0 0.0
    %8038 = vmatprep.subr.mxu0 0.0
    %8039 = vmatpush2.xpose.msra.mxu0 0.0
    %8040 = vmatprep.subr.mxu0 0.0
    %8041 = vmatpush2.xpose.msra.mxu0 0.0
    %8042 = vmatprep.mubr.f32.mxu0 0.0
    %8043 = vmatmul.mubr.f32.gmra.mxu0 %v7973
    %v8044 = vpop.f32.mrf.mxu0
    %v8045 = vadd.f32 %v3509, %v8044
    %v8046 = vpop.f32.mrf.mxu0
    %8047 = vdwg.mxu0
    %v8048 = vsel %vm403, %v8045, -inf
    %8049 = vmax.xlane.f32.xlu0 %v8048
    %v8050 = vpop.xlane.xlu0 %8049
    %v8051 = vsub.f32 %v8045, %v8050
    %v8052 = vmul.f32 %v8051, 1.442695
    %v8053 = vpow.pop %v8052
    %v8054 = vsel %vm403, %v8053, 0.0
    %8055 = vadd.xlane.f32.xlu0 %v8054
    %v8056 = vpop.xlane.xlu0 %8055
    %v8057 = vrcp.pop %v8056
    %v8058 = vmul.f32 %v8053, %v8057
    %8059 = vrot.lane.b32.xlu0 %v7010, 96
    %v8060 = vpop.permute.xlu0 %8059
    %v8063 = vsel %vm403, %v8058, 0
    %8065 = vmatprep.subr.mxu0 0.0
    %8066 = vmatpush1.msra.mxu0 0.0
    %8067 = vmatprep.subr.mxu0 0.0
    %8068 = vmatpush1.msra.mxu0 0.0
    %8069 = vmatprep.subr.mxu0 0.0
    %8070 = vmatpush1.msra.mxu0 0.0
    %8071 = vmatprep.subr.mxu0 0.0
    %8072 = vmatpush1.msra.mxu0 0.0
    %8073 = vmatprep.subr.mxu0 0.0
    %8074 = vmatpush1.msra.mxu0 0.0
    %8075 = vmatprep.subr.mxu0 0.0
    %8076 = vmatpush1.msra.mxu0 0.0
    %8077 = vmatprep.subr.mxu0 0.0
    %8078 = vmatpush1.msra.mxu0 0.0
    %8079 = vmatprep.subr.mxu0 0.0
    %8080 = vmatpush1.msra.mxu0 0.0
    %8081 = vmatprep.subr.mxu0 0.0
    %8082 = vmatpush1.msra.mxu0 0.0
    %8083 = vmatprep.subr.mxu0 0.0
    %8084 = vmatpush1.msra.mxu0 0.0
    %8085 = vmatprep.subr.mxu0 0.0
    %8086 = vmatpush1.msra.mxu0 0.0
    %8087 = vmatprep.subr.mxu0 0.0
    %8088 = vmatpush1.msra.mxu0 0.0
    %8089 = vmatprep.subr.mxu0 0.0
    %8090 = vmatpush1.msra.mxu0 0.0
    %8091 = vmatprep.subr.mxu0 0.0
    %8092 = vmatpush1.msra.mxu0 0.0
    %8093 = vmatprep.subr.mxu0 0.0
    %8094 = vmatpush1.msra.mxu0 0.0
    %8095 = vmatprep.subr.mxu0 0.0
    %8096 = vmatpush1.msra.mxu0 %v8060
    %8097 = vmatprep.subr.mxu0 0.0
    %8098 = vmatpush2.msra.mxu0 0.0
    %8099 = vmatprep.subr.mxu0 0.0
    %8100 = vmatpush2.msra.mxu0 0.0
    %8101 = vmatprep.subr.mxu0 0.0
    %8102 = vmatpush2.msra.mxu0 0.0
    %8103 = vmatprep.subr.mxu0 0.0
    %8104 = vmatpush2.msra.mxu0 0.0
    %8105 = vmatprep.subr.mxu0 0.0
    %8106 = vmatpush2.msra.mxu0 0.0
    %8107 = vmatprep.subr.mxu0 0.0
    %8108 = vmatpush2.msra.mxu0 0.0
    %8109 = vmatprep.subr.mxu0 0.0
    %8110 = vmatpush2.msra.mxu0 0.0
    %8111 = vmatprep.subr.mxu0 0.0
    %8112 = vmatpush2.msra.mxu0 0.0
    %8113 = vmatprep.subr.mxu0 0.0
    %8114 = vmatpush2.msra.mxu0 0.0
    %8115 = vmatprep.subr.mxu0 0.0
    %8116 = vmatpush2.msra.mxu0 0.0
    %8117 = vmatprep.subr.mxu0 0.0
    %8118 = vmatpush2.msra.mxu0 0.0
    %8119 = vmatprep.subr.mxu0 0.0
    %8120 = vmatpush2.msra.mxu0 0.0
    %8121 = vmatprep.subr.mxu0 0.0
    %8122 = vmatpush2.msra.mxu0 0.0
    %8123 = vmatprep.subr.mxu0 0.0
    %8124 = vmatpush2.msra.mxu0 0.0
    %8125 = vmatprep.subr.mxu0 0.0
    %8126 = vmatpush2.msra.mxu0 0.0
    %8127 = vmatprep.subr.mxu0 0.0
    %8128 = vmatpush2.msra.mxu0 0.0
    %8129 = vmatprep.mubr.f32.mxu0 0.0
    %8130 = vmatmul.mubr.f32.gmra.mxu0 %v8063
    %v8131 = vpop.f32.mrf.mxu0
    %v8132 = vadd.f32 0.0, %v8131
    %v8133 = vpop.f32.mrf.mxu0
    %8134 = vdwg.mxu0
    %8135 = vrot.lane.b32.xlu0 %v6922, 120
    %v8136 = vpop.permute.xlu0 %8135
    %8137 = vrot.lane.b32.xlu0 %v7010, 120
    %v8138 = vpop.permute.xlu0 %8137
    %v8139 = vsel %vm403, %v8136, 0
    %v8141 = vsel %vm403, %v8138, 0
    %8143 = vmatprep.subr.mxu0 0.0
    %8144 = vmatpush1.xpose.msra.mxu0 0.0
    %8145 = vmatprep.subr.mxu0 0.0
    %8146 = vmatpush1.xpose.msra.mxu0 0.0
    %8147 = vmatprep.subr.mxu0 0.0
    %8148 = vmatpush1.xpose.msra.mxu0 0.0
    %8149 = vmatprep.subr.mxu0 0.0
    %8150 = vmatpush1.xpose.msra.mxu0 0.0
    %8151 = vmatprep.subr.mxu0 0.0
    %8152 = vmatpush1.xpose.msra.mxu0 0.0
    %8153 = vmatprep.subr.mxu0 0.0
    %8154 = vmatpush1.xpose.msra.mxu0 0.0
    %8155 = vmatprep.subr.mxu0 0.0
    %8156 = vmatpush1.xpose.msra.mxu0 0.0
    %8157 = vmatprep.subr.mxu0 0.0
    %8158 = vmatpush1.xpose.msra.mxu0 0.0
    %8159 = vmatprep.subr.mxu0 0.0
    %8160 = vmatpush1.xpose.msra.mxu0 0.0
    %8161 = vmatprep.subr.mxu0 0.0
    %8162 = vmatpush1.xpose.msra.mxu0 0.0
    %8163 = vmatprep.subr.mxu0 0.0
    %8164 = vmatpush1.xpose.msra.mxu0 0.0
    %8165 = vmatprep.subr.mxu0 0.0
    %8166 = vmatpush1.xpose.msra.mxu0 0.0
    %8167 = vmatprep.subr.mxu0 0.0
    %8168 = vmatpush1.xpose.msra.mxu0 0.0
    %8169 = vmatprep.subr.mxu0 0.0
    %8170 = vmatpush1.xpose.msra.mxu0 0.0
    %8171 = vmatprep.subr.mxu0 0.0
    %8172 = vmatpush1.xpose.msra.mxu0 0.0
    %8173 = vmatprep.subr.mxu0 0.0
    %8174 = vmatpush1.xpose.msra.mxu0 %v8141
    %8175 = vmatprep.subr.mxu0 0.0
    %8176 = vmatpush2.xpose.msra.mxu0 0.0
    %8177 = vmatprep.subr.mxu0 0.0
    %8178 = vmatpush2.xpose.msra.mxu0 0.0
    %8179 = vmatprep.subr.mxu0 0.0
    %8180 = vmatpush2.xpose.msra.mxu0 0.0
    %8181 = vmatprep.subr.mxu0 0.0
    %8182 = vmatpush2.xpose.msra.mxu0 0.0
    %8183 = vmatprep.subr.mxu0 0.0
    %8184 = vmatpush2.xpose.msra.mxu0 0.0
    %8185 = vmatprep.subr.mxu0 0.0
    %8186 = vmatpush2.xpose.msra.mxu0 0.0
    %8187 = vmatprep.subr.mxu0 0.0
    %8188 = vmatpush2.xpose.msra.mxu0 0.0
    %8189 = vmatprep.subr.mxu0 0.0
    %8190 = vmatpush2.xpose.msra.mxu0 0.0
    %8191 = vmatprep.subr.mxu0 0.0
    %8192 = vmatpush2.xpose.msra.mxu0 0.0
    %8193 = vmatprep.subr.mxu0 0.0
    %8194 = vmatpush2.xpose.msra.mxu0 0.0
    %8195 = vmatprep.subr.mxu0 0.0
    %8196 = vmatpush2.xpose.msra.mxu0 0.0
    %8197 = vmatprep.subr.mxu0 0.0
    %8198 = vmatpush2.xpose.msra.mxu0 0.0
    %8199 = vmatprep.subr.mxu0 0.0
    %8200 = vmatpush2.xpose.msra.mxu0 0.0
    %8201 = vmatprep.subr.mxu0 0.0
    %8202 = vmatpush2.xpose.msra.mxu0 0.0
    %8203 = vmatprep.subr.mxu0 0.0
    %8204 = vmatpush2.xpose.msra.mxu0 0.0
    %8205 = vmatprep.subr.mxu0 0.0
    %8206 = vmatpush2.xpose.msra.mxu0 0.0
    %8207 = vmatprep.mubr.f32.mxu0 0.0
    %8208 = vmatmul.mubr.f32.gmra.mxu0 %v8139
    %v8209 = vpop.f32.mrf.mxu0
    %v8210 = vadd.f32 %v3509, %v8209
    %v8211 = vpop.f32.mrf.mxu0
    %8212 = vdwg.mxu0
    %v8213 = vsel %vm403, %v8210, -inf
    %8214 = vmax.xlane.f32.xlu0 %v8213
    %v8215 = vpop.xlane.xlu0 %8214
    %v8216 = vsub.f32 %v8210, %v8215
    %v8217 = vmul.f32 %v8216, 1.442695
    %v8218 = vpow.pop %v8217
    %v8219 = vsel %vm403, %v8218, 0.0
    %8220 = vadd.xlane.f32.xlu0 %v8219
    %v8221 = vpop.xlane.xlu0 %8220
    %v8222 = vrcp.pop %v8221
    %v8223 = vmul.f32 %v8218, %v8222
    %8224 = vrot.lane.b32.xlu0 %v7010, 88
    %v8225 = vpop.permute.xlu0 %8224
    %v8228 = vsel %vm403, %v8223, 0
    %8230 = vmatprep.subr.mxu0 0.0
    %8231 = vmatpush1.msra.mxu0 0.0
    %8232 = vmatprep.subr.mxu0 0.0
    %8233 = vmatpush1.msra.mxu0 0.0
    %8234 = vmatprep.subr.mxu0 0.0
    %8235 = vmatpush1.msra.mxu0 0.0
    %8236 = vmatprep.subr.mxu0 0.0
    %8237 = vmatpush1.msra.mxu0 0.0
    %8238 = vmatprep.subr.mxu0 0.0
    %8239 = vmatpush1.msra.mxu0 0.0
    %8240 = vmatprep.subr.mxu0 0.0
    %8241 = vmatpush1.msra.mxu0 0.0
    %8242 = vmatprep.subr.mxu0 0.0
    %8243 = vmatpush1.msra.mxu0 0.0
    %8244 = vmatprep.subr.mxu0 0.0
    %8245 = vmatpush1.msra.mxu0 0.0
    %8246 = vmatprep.subr.mxu0 0.0
    %8247 = vmatpush1.msra.mxu0 0.0
    %8248 = vmatprep.subr.mxu0 0.0
    %8249 = vmatpush1.msra.mxu0 0.0
    %8250 = vmatprep.subr.mxu0 0.0
    %8251 = vmatpush1.msra.mxu0 0.0
    %8252 = vmatprep.subr.mxu0 0.0
    %8253 = vmatpush1.msra.mxu0 0.0
    %8254 = vmatprep.subr.mxu0 0.0
    %8255 = vmatpush1.msra.mxu0 0.0
    %8256 = vmatprep.subr.mxu0 0.0
    %8257 = vmatpush1.msra.mxu0 0.0
    %8258 = vmatprep.subr.mxu0 0.0
    %8259 = vmatpush1.msra.mxu0 0.0
    %8260 = vmatprep.subr.mxu0 0.0
    %8261 = vmatpush1.msra.mxu0 %v8225
    %8262 = vmatprep.subr.mxu0 0.0
    %8263 = vmatpush2.msra.mxu0 0.0
    %8264 = vmatprep.subr.mxu0 0.0
    %8265 = vmatpush2.msra.mxu0 0.0
    %8266 = vmatprep.subr.mxu0 0.0
    %8267 = vmatpush2.msra.mxu0 0.0
    %8268 = vmatprep.subr.mxu0 0.0
    %8269 = vmatpush2.msra.mxu0 0.0
    %8270 = vmatprep.subr.mxu0 0.0
    %8271 = vmatpush2.msra.mxu0 0.0
    %8272 = vmatprep.subr.mxu0 0.0
    %8273 = vmatpush2.msra.mxu0 0.0
    %8274 = vmatprep.subr.mxu0 0.0
    %8275 = vmatpush2.msra.mxu0 0.0
    %8276 = vmatprep.subr.mxu0 0.0
    %8277 = vmatpush2.msra.mxu0 0.0
    %8278 = vmatprep.subr.mxu0 0.0
    %8279 = vmatpush2.msra.mxu0 0.0
    %8280 = vmatprep.subr.mxu0 0.0
    %8281 = vmatpush2.msra.mxu0 0.0
    %8282 = vmatprep.subr.mxu0 0.0
    %8283 = vmatpush2.msra.mxu0 0.0
    %8284 = vmatprep.subr.mxu0 0.0
    %8285 = vmatpush2.msra.mxu0 0.0
    %8286 = vmatprep.subr.mxu0 0.0
    %8287 = vmatpush2.msra.mxu0 0.0
    %8288 = vmatprep.subr.mxu0 0.0
    %8289 = vmatpush2.msra.mxu0 0.0
    %8290 = vmatprep.subr.mxu0 0.0
    %8291 = vmatpush2.msra.mxu0 0.0
    %8292 = vmatprep.subr.mxu0 0.0
    %8293 = vmatpush2.msra.mxu0 0.0
    %8294 = vmatprep.mubr.f32.mxu0 0.0
    %8295 = vmatmul.mubr.f32.gmra.mxu0 %v8228
    %v8296 = vpop.f32.mrf.mxu0
    %v8297 = vadd.f32 0.0, %v8296
    %v8298 = vpop.f32.mrf.mxu0
    %8299 = vdwg.mxu0
    %v8301 = vsel %vm403, %v8297, 0
    %8303 = vmatprep.subr.mxu0 0.0
    %8304 = vmatpush1.msra.mxu0 0.0
    %8305 = vmatprep.subr.mxu0 0.0
    %8306 = vmatpush1.msra.mxu0 0.0
    %8307 = vmatprep.subr.mxu0 0.0
    %8308 = vmatpush1.msra.mxu0 0.0
    %8309 = vmatprep.subr.mxu0 0.0
    %8310 = vmatpush1.msra.mxu0 0.0
    %8311 = vmatprep.subr.mxu0 0.0
    %8312 = vmatpush1.msra.mxu0 0.0
    %8313 = vmatprep.subr.mxu0 0.0
    %8314 = vmatpush1.msra.mxu0 0.0
    %8315 = vmatprep.subr.mxu0 0.0
    %8316 = vmatpush1.msra.mxu0 0.0
    %8317 = vmatprep.subr.mxu0 0.0
    %8318 = vmatpush1.msra.mxu0 0.0
    %8319 = vmatprep.subr.mxu0 0.0
    %8320 = vmatpush1.msra.mxu0 0.0
    %8321 = vmatprep.subr.mxu0 0.0
    %8322 = vmatpush1.msra.mxu0 0.0
    %8323 = vmatprep.subr.mxu0 0.0
    %8324 = vmatpush1.msra.mxu0 0.0
    %8325 = vmatprep.subr.mxu0 0.0
    %8326 = vmatpush1.msra.mxu0 0.0
    %8327 = vmatprep.subr.mxu0 0.0
    %8328 = vmatpush1.msra.mxu0 0.0
    %8329 = vmatprep.subr.mxu0 0.0
    %8330 = vmatpush1.msra.mxu0 0.0
    %8331 = vmatprep.subr.mxu0 0.0
    %8332 = vmatpush1.msra.mxu0 0.0
    %8333 = vmatprep.subr.mxu0 0.0
    %8334 = vmatpush1.msra.mxu0 %v7015
    %8335 = vmatprep.subr.mxu0 0.0
    %8336 = vmatpush2.msra.mxu0 0.0
    %8337 = vmatprep.subr.mxu0 0.0
    %8338 = vmatpush2.msra.mxu0 0.0
    %8339 = vmatprep.subr.mxu0 0.0
    %8340 = vmatpush2.msra.mxu0 0.0
    %8341 = vmatprep.subr.mxu0 0.0
    %8342 = vmatpush2.msra.mxu0 0.0
    %8343 = vmatprep.subr.mxu0 0.0
    %8344 = vmatpush2.msra.mxu0 0.0
    %8345 = vmatprep.subr.mxu0 0.0
    %8346 = vmatpush2.msra.mxu0 0.0
    %8347 = vmatprep.subr.mxu0 0.0
    %8348 = vmatpush2.msra.mxu0 0.0
    %8349 = vmatprep.subr.mxu0 0.0
    %8350 = vmatpush2.msra.mxu0 0.0
    %8351 = vmatprep.subr.mxu0 0.0
    %8352 = vmatpush2.msra.mxu0 0.0
    %8353 = vmatprep.subr.mxu0 0.0
    %8354 = vmatpush2.msra.mxu0 0.0
    %8355 = vmatprep.subr.mxu0 0.0
    %8356 = vmatpush2.msra.mxu0 0.0
    %8357 = vmatprep.subr.mxu0 0.0
    %8358 = vmatpush2.msra.mxu0 0.0
    %8359 = vmatprep.subr.mxu0 0.0
    %8360 = vmatpush2.msra.mxu0 0.0
    %8361 = vmatprep.subr.mxu0 0.0
    %8362 = vmatpush2.msra.mxu0 0.0
    %8363 = vmatprep.subr.mxu0 0.0
    %8364 = vmatpush2.msra.mxu0 0.0
    %8365 = vmatprep.subr.mxu0 0.0
    %8366 = vmatpush2.msra.mxu0 0.0
    %8367 = vmatprep.mubr.f32.mxu0 0.0
    %8368 = vmatmul.mubr.f32.gmra.mxu0 %v8301
    %v8369 = vpop.f32.mrf.mxu0
    %v8370 = vadd.f32 0.0, %v8369
    %v8371 = vpop.f32.mrf.mxu0
    %8372 = vdwg.mxu0
    %v8374 = vsel %vm403, %v8132, 0
    %8376 = vmatprep.subr.mxu0 0.0
    %8377 = vmatpush1.msra.mxu0 0.0
    %8378 = vmatprep.subr.mxu0 0.0
    %8379 = vmatpush1.msra.mxu0 0.0
    %8380 = vmatprep.subr.mxu0 0.0
    %8381 = vmatpush1.msra.mxu0 0.0
    %8382 = vmatprep.subr.mxu0 0.0
    %8383 = vmatpush1.msra.mxu0 0.0
    %8384 = vmatprep.subr.mxu0 0.0
    %8385 = vmatpush1.msra.mxu0 0.0
    %8386 = vmatprep.subr.mxu0 0.0
    %8387 = vmatpush1.msra.mxu0 0.0
    %8388 = vmatprep.subr.mxu0 0.0
    %8389 = vmatpush1.msra.mxu0 0.0
    %8390 = vmatprep.subr.mxu0 0.0
    %8391 = vmatpush1.msra.mxu0 0.0
    %8392 = vmatprep.subr.mxu0 0.0
    %8393 = vmatpush1.msra.mxu0 0.0
    %8394 = vmatprep.subr.mxu0 0.0
    %8395 = vmatpush1.msra.mxu0 0.0
    %8396 = vmatprep.subr.mxu0 0.0
    %8397 = vmatpush1.msra.mxu0 0.0
    %8398 = vmatprep.subr.mxu0 0.0
    %8399 = vmatpush1.msra.mxu0 0.0
    %8400 = vmatprep.subr.mxu0 0.0
    %8401 = vmatpush1.msra.mxu0 0.0
    %8402 = vmatprep.subr.mxu0 0.0
    %8403 = vmatpush1.msra.mxu0 0.0
    %8404 = vmatprep.subr.mxu0 0.0
    %8405 = vmatpush1.msra.mxu0 0.0
    %8406 = vmatprep.subr.mxu0 0.0
    %8407 = vmatpush1.msra.mxu0 %v7014
    %8408 = vmatprep.subr.mxu0 0.0
    %8409 = vmatpush2.msra.mxu0 0.0
    %8410 = vmatprep.subr.mxu0 0.0
    %8411 = vmatpush2.msra.mxu0 0.0
    %8412 = vmatprep.subr.mxu0 0.0
    %8413 = vmatpush2.msra.mxu0 0.0
    %8414 = vmatprep.subr.mxu0 0.0
    %8415 = vmatpush2.msra.mxu0 0.0
    %8416 = vmatprep.subr.mxu0 0.0
    %8417 = vmatpush2.msra.mxu0 0.0
    %8418 = vmatprep.subr.mxu0 0.0
    %8419 = vmatpush2.msra.mxu0 0.0
    %8420 = vmatprep.subr.mxu0 0.0
    %8421 = vmatpush2.msra.mxu0 0.0
    %8422 = vmatprep.subr.mxu0 0.0
    %8423 = vmatpush2.msra.mxu0 0.0
    %8424 = vmatprep.subr.mxu0 0.0
    %8425 = vmatpush2.msra.mxu0 0.0
    %8426 = vmatprep.subr.mxu0 0.0
    %8427 = vmatpush2.msra.mxu0 0.0
    %8428 = vmatprep.subr.mxu0 0.0
    %8429 = vmatpush2.msra.mxu0 0.0
    %8430 = vmatprep.subr.mxu0 0.0
    %8431 = vmatpush2.msra.mxu0 0.0
    %8432 = vmatprep.subr.mxu0 0.0
    %8433 = vmatpush2.msra.mxu0 0.0
    %8434 = vmatprep.subr.mxu0 0.0
    %8435 = vmatpush2.msra.mxu0 0.0
    %8436 = vmatprep.subr.mxu0 0.0
    %8437 = vmatpush2.msra.mxu0 0.0
    %8438 = vmatprep.subr.mxu0 0.0
    %8439 = vmatpush2.msra.mxu0 0.0
    %8440 = vmatprep.mubr.f32.mxu0 0.0
    %8441 = vmatmul.mubr.f32.gmra.mxu0 %v8374
    %v8442 = vpop.f32.mrf.mxu0
    %v8443 = vadd.f32 %v8370, %v8442
    %v8444 = vpop.f32.mrf.mxu0
    %8445 = vdwg.mxu0
    %8446 = vrot.lane.b32.xlu0 %v6922, 112
    %v8447 = vpop.permute.xlu0 %8446
    %8448 = vrot.lane.b32.xlu0 %v7010, 112
    %v8449 = vpop.permute.xlu0 %8448
    %v8450 = vsel %vm403, %v8447, 0
    %v8452 = vsel %vm403, %v8449, 0
    %8454 = vmatprep.subr.mxu0 0.0
    %8455 = vmatpush1.xpose.msra.mxu0 0.0
    %8456 = vmatprep.subr.mxu0 0.0
    %8457 = vmatpush1.xpose.msra.mxu0 0.0
    %8458 = vmatprep.subr.mxu0 0.0
    %8459 = vmatpush1.xpose.msra.mxu0 0.0
    %8460 = vmatprep.subr.mxu0 0.0
    %8461 = vmatpush1.xpose.msra.mxu0 0.0
    %8462 = vmatprep.subr.mxu0 0.0
    %8463 = vmatpush1.xpose.msra.mxu0 0.0
    %8464 = vmatprep.subr.mxu0 0.0
    %8465 = vmatpush1.xpose.msra.mxu0 0.0
    %8466 = vmatprep.subr.mxu0 0.0
    %8467 = vmatpush1.xpose.msra.mxu0 0.0
    %8468 = vmatprep.subr.mxu0 0.0
    %8469 = vmatpush1.xpose.msra.mxu0 0.0
    %8470 = vmatprep.subr.mxu0 0.0
    %8471 = vmatpush1.xpose.msra.mxu0 0.0
    %8472 = vmatprep.subr.mxu0 0.0
    %8473 = vmatpush1.xpose.msra.mxu0 0.0
    %8474 = vmatprep.subr.mxu0 0.0
    %8475 = vmatpush1.xpose.msra.mxu0 0.0
    %8476 = vmatprep.subr.mxu0 0.0
    %8477 = vmatpush1.xpose.msra.mxu0 0.0
    %8478 = vmatprep.subr.mxu0 0.0
    %8479 = vmatpush1.xpose.msra.mxu0 0.0
    %8480 = vmatprep.subr.mxu0 0.0
    %8481 = vmatpush1.xpose.msra.mxu0 0.0
    %8482 = vmatprep.subr.mxu0 0.0
    %8483 = vmatpush1.xpose.msra.mxu0 0.0
    %8484 = vmatprep.subr.mxu0 0.0
    %8485 = vmatpush1.xpose.msra.mxu0 %v8452
    %8486 = vmatprep.subr.mxu0 0.0
    %8487 = vmatpush2.xpose.msra.mxu0 0.0
    %8488 = vmatprep.subr.mxu0 0.0
    %8489 = vmatpush2.xpose.msra.mxu0 0.0
    %8490 = vmatprep.subr.mxu0 0.0
    %8491 = vmatpush2.xpose.msra.mxu0 0.0
    %8492 = vmatprep.subr.mxu0 0.0
    %8493 = vmatpush2.xpose.msra.mxu0 0.0
    %8494 = vmatprep.subr.mxu0 0.0
    %8495 = vmatpush2.xpose.msra.mxu0 0.0
    %8496 = vmatprep.subr.mxu0 0.0
    %8497 = vmatpush2.xpose.msra.mxu0 0.0
    %8498 = vmatprep.subr.mxu0 0.0
    %8499 = vmatpush2.xpose.msra.mxu0 0.0
    %8500 = vmatprep.subr.mxu0 0.0
    %8501 = vmatpush2.xpose.msra.mxu0 0.0
    %8502 = vmatprep.subr.mxu0 0.0
    %8503 = vmatpush2.xpose.msra.mxu0 0.0
    %8504 = vmatprep.subr.mxu0 0.0
    %8505 = vmatpush2.xpose.msra.mxu0 0.0
    %8506 = vmatprep.subr.mxu0 0.0
    %8507 = vmatpush2.xpose.msra.mxu0 0.0
    %8508 = vmatprep.subr.mxu0 0.0
    %8509 = vmatpush2.xpose.msra.mxu0 0.0
    %8510 = vmatprep.subr.mxu0 0.0
    %8511 = vmatpush2.xpose.msra.mxu0 0.0
    %8512 = vmatprep.subr.mxu0 0.0
    %8513 = vmatpush2.xpose.msra.mxu0 0.0
    %8514 = vmatprep.subr.mxu0 0.0
    %8515 = vmatpush2.xpose.msra.mxu0 0.0
    %8516 = vmatprep.subr.mxu0 0.0
    %8517 = vmatpush2.xpose.msra.mxu0 0.0
    %8518 = vmatprep.mubr.f32.mxu0 0.0
    %8519 = vmatmul.mubr.f32.gmra.mxu0 %v8450
    %v8520 = vpop.f32.mrf.mxu0
    %v8521 = vadd.f32 %v3509, %v8520
    %v8522 = vpop.f32.mrf.mxu0
    %8523 = vdwg.mxu0
    %v8524 = vsel %vm403, %v8521, -inf
    %8525 = vmax.xlane.f32.xlu0 %v8524
    %v8526 = vpop.xlane.xlu0 %8525
    %v8527 = vsub.f32 %v8521, %v8526
    %v8528 = vmul.f32 %v8527, 1.442695
    %v8529 = vpow.pop %v8528
    %v8530 = vsel %vm403, %v8529, 0.0
    %8531 = vadd.xlane.f32.xlu0 %v8530
    %v8532 = vpop.xlane.xlu0 %8531
    %v8533 = vrcp.pop %v8532
    %v8534 = vmul.f32 %v8529, %v8533
    %8535 = vrot.lane.b32.xlu0 %v7010, 80
    %v8536 = vpop.permute.xlu0 %8535
    %v8539 = vsel %vm403, %v8534, 0
    %8541 = vmatprep.subr.mxu0 0.0
    %8542 = vmatpush1.msra.mxu0 0.0
    %8543 = vmatprep.subr.mxu0 0.0
    %8544 = vmatpush1.msra.mxu0 0.0
    %8545 = vmatprep.subr.mxu0 0.0
    %8546 = vmatpush1.msra.mxu0 0.0
    %8547 = vmatprep.subr.mxu0 0.0
    %8548 = vmatpush1.msra.mxu0 0.0
    %8549 = vmatprep.subr.mxu0 0.0
    %8550 = vmatpush1.msra.mxu0 0.0
    %8551 = vmatprep.subr.mxu0 0.0
    %8552 = vmatpush1.msra.mxu0 0.0
    %8553 = vmatprep.subr.mxu0 0.0
    %8554 = vmatpush1.msra.mxu0 0.0
    %8555 = vmatprep.subr.mxu0 0.0
    %8556 = vmatpush1.msra.mxu0 0.0
    %8557 = vmatprep.subr.mxu0 0.0
    %8558 = vmatpush1.msra.mxu0 0.0
    %8559 = vmatprep.subr.mxu0 0.0
    %8560 = vmatpush1.msra.mxu0 0.0
    %8561 = vmatprep.subr.mxu0 0.0
    %8562 = vmatpush1.msra.mxu0 0.0
    %8563 = vmatprep.subr.mxu0 0.0
    %8564 = vmatpush1.msra.mxu0 0.0
    %8565 = vmatprep.subr.mxu0 0.0
    %8566 = vmatpush1.msra.mxu0 0.0
    %8567 = vmatprep.subr.mxu0 0.0
    %8568 = vmatpush1.msra.mxu0 0.0
    %8569 = vmatprep.subr.mxu0 0.0
    %8570 = vmatpush1.msra.mxu0 0.0
    %8571 = vmatprep.subr.mxu0 0.0
    %8572 = vmatpush1.msra.mxu0 %v8536
    %8573 = vmatprep.subr.mxu0 0.0
    %8574 = vmatpush2.msra.mxu0 0.0
    %8575 = vmatprep.subr.mxu0 0.0
    %8576 = vmatpush2.msra.mxu0 0.0
    %8577 = vmatprep.subr.mxu0 0.0
    %8578 = vmatpush2.msra.mxu0 0.0
    %8579 = vmatprep.subr.mxu0 0.0
    %8580 = vmatpush2.msra.mxu0 0.0
    %8581 = vmatprep.subr.mxu0 0.0
    %8582 = vmatpush2.msra.mxu0 0.0
    %8583 = vmatprep.subr.mxu0 0.0
    %8584 = vmatpush2.msra.mxu0 0.0
    %8585 = vmatprep.subr.mxu0 0.0
    %8586 = vmatpush2.msra.mxu0 0.0
    %8587 = vmatprep.subr.mxu0 0.0
    %8588 = vmatpush2.msra.mxu0 0.0
    %8589 = vmatprep.subr.mxu0 0.0
    %8590 = vmatpush2.msra.mxu0 0.0
    %8591 = vmatprep.subr.mxu0 0.0
    %8592 = vmatpush2.msra.mxu0 0.0
    %8593 = vmatprep.subr.mxu0 0.0
    %8594 = vmatpush2.msra.mxu0 0.0
    %8595 = vmatprep.subr.mxu0 0.0
    %8596 = vmatpush2.msra.mxu0 0.0
    %8597 = vmatprep.subr.mxu0 0.0
    %8598 = vmatpush2.msra.mxu0 0.0
    %8599 = vmatprep.subr.mxu0 0.0
    %8600 = vmatpush2.msra.mxu0 0.0
    %8601 = vmatprep.subr.mxu0 0.0
    %8602 = vmatpush2.msra.mxu0 0.0
    %8603 = vmatprep.subr.mxu0 0.0
    %8604 = vmatpush2.msra.mxu0 0.0
    %8605 = vmatprep.mubr.f32.mxu0 0.0
    %8606 = vmatmul.mubr.f32.gmra.mxu0 %v8539
    %v8607 = vpop.f32.mrf.mxu0
    %v8608 = vadd.f32 0.0, %v8607
    %v8609 = vpop.f32.mrf.mxu0
    %8610 = vdwg.mxu0
    %v8612 = vsel %vm403, %v8608, 0
    %8614 = vmatprep.subr.mxu0 0.0
    %8615 = vmatpush1.msra.mxu0 0.0
    %8616 = vmatprep.subr.mxu0 0.0
    %8617 = vmatpush1.msra.mxu0 0.0
    %8618 = vmatprep.subr.mxu0 0.0
    %8619 = vmatpush1.msra.mxu0 0.0
    %8620 = vmatprep.subr.mxu0 0.0
    %8621 = vmatpush1.msra.mxu0 0.0
    %8622 = vmatprep.subr.mxu0 0.0
    %8623 = vmatpush1.msra.mxu0 0.0
    %8624 = vmatprep.subr.mxu0 0.0
    %8625 = vmatpush1.msra.mxu0 0.0
    %8626 = vmatprep.subr.mxu0 0.0
    %8627 = vmatpush1.msra.mxu0 0.0
    %8628 = vmatprep.subr.mxu0 0.0
    %8629 = vmatpush1.msra.mxu0 0.0
    %8630 = vmatprep.subr.mxu0 0.0
    %8631 = vmatpush1.msra.mxu0 0.0
    %8632 = vmatprep.subr.mxu0 0.0
    %8633 = vmatpush1.msra.mxu0 0.0
    %8634 = vmatprep.subr.mxu0 0.0
    %8635 = vmatpush1.msra.mxu0 0.0
    %8636 = vmatprep.subr.mxu0 0.0
    %8637 = vmatpush1.msra.mxu0 0.0
    %8638 = vmatprep.subr.mxu0 0.0
    %8639 = vmatpush1.msra.mxu0 0.0
    %8640 = vmatprep.subr.mxu0 0.0
    %8641 = vmatpush1.msra.mxu0 0.0
    %8642 = vmatprep.subr.mxu0 0.0
    %8643 = vmatpush1.msra.mxu0 0.0
    %8644 = vmatprep.subr.mxu0 0.0
    %8645 = vmatpush1.msra.mxu0 %v7016
    %8646 = vmatprep.subr.mxu0 0.0
    %8647 = vmatpush2.msra.mxu0 0.0
    %8648 = vmatprep.subr.mxu0 0.0
    %8649 = vmatpush2.msra.mxu0 0.0
    %8650 = vmatprep.subr.mxu0 0.0
    %8651 = vmatpush2.msra.mxu0 0.0
    %8652 = vmatprep.subr.mxu0 0.0
    %8653 = vmatpush2.msra.mxu0 0.0
    %8654 = vmatprep.subr.mxu0 0.0
    %8655 = vmatpush2.msra.mxu0 0.0
    %8656 = vmatprep.subr.mxu0 0.0
    %8657 = vmatpush2.msra.mxu0 0.0
    %8658 = vmatprep.subr.mxu0 0.0
    %8659 = vmatpush2.msra.mxu0 0.0
    %8660 = vmatprep.subr.mxu0 0.0
    %8661 = vmatpush2.msra.mxu0 0.0
    %8662 = vmatprep.subr.mxu0 0.0
    %8663 = vmatpush2.msra.mxu0 0.0
    %8664 = vmatprep.subr.mxu0 0.0
    %8665 = vmatpush2.msra.mxu0 0.0
    %8666 = vmatprep.subr.mxu0 0.0
    %8667 = vmatpush2.msra.mxu0 0.0
    %8668 = vmatprep.subr.mxu0 0.0
    %8669 = vmatpush2.msra.mxu0 0.0
    %8670 = vmatprep.subr.mxu0 0.0
    %8671 = vmatpush2.msra.mxu0 0.0
    %8672 = vmatprep.subr.mxu0 0.0
    %8673 = vmatpush2.msra.mxu0 0.0
    %8674 = vmatprep.subr.mxu0 0.0
    %8675 = vmatpush2.msra.mxu0 0.0
    %8676 = vmatprep.subr.mxu0 0.0
    %8677 = vmatpush2.msra.mxu0 0.0
    %8678 = vmatprep.mubr.f32.mxu0 0.0
    %8679 = vmatmul.mubr.f32.gmra.mxu0 %v8612
    %v8680 = vpop.f32.mrf.mxu0
    %v8681 = vadd.f32 0.0, %v8680
    %v8682 = vpop.f32.mrf.mxu0
    %8683 = vdwg.mxu0
    %v8684 = vadd.f32 %v8443, %v8681
    %8685 = vrot.lane.b32.xlu0 %v6922, 104
    %v8686 = vpop.permute.xlu0 %8685
    %8687 = vrot.lane.b32.xlu0 %v7010, 104
    %v8688 = vpop.permute.xlu0 %8687
    %v8689 = vsel %vm403, %v8686, 0
    %v8691 = vsel %vm403, %v8688, 0
    %8693 = vmatprep.subr.mxu0 0.0
    %8694 = vmatpush1.xpose.msra.mxu0 0.0
    %8695 = vmatprep.subr.mxu0 0.0
    %8696 = vmatpush1.xpose.msra.mxu0 0.0
    %8697 = vmatprep.subr.mxu0 0.0
    %8698 = vmatpush1.xpose.msra.mxu0 0.0
    %8699 = vmatprep.subr.mxu0 0.0
    %8700 = vmatpush1.xpose.msra.mxu0 0.0
    %8701 = vmatprep.subr.mxu0 0.0
    %8702 = vmatpush1.xpose.msra.mxu0 0.0
    %8703 = vmatprep.subr.mxu0 0.0
    %8704 = vmatpush1.xpose.msra.mxu0 0.0
    %8705 = vmatprep.subr.mxu0 0.0
    %8706 = vmatpush1.xpose.msra.mxu0 0.0
    %8707 = vmatprep.subr.mxu0 0.0
    %8708 = vmatpush1.xpose.msra.mxu0 0.0
    %8709 = vmatprep.subr.mxu0 0.0
    %8710 = vmatpush1.xpose.msra.mxu0 0.0
    %8711 = vmatprep.subr.mxu0 0.0
    %8712 = vmatpush1.xpose.msra.mxu0 0.0
    %8713 = vmatprep.subr.mxu0 0.0
    %8714 = vmatpush1.xpose.msra.mxu0 0.0
    %8715 = vmatprep.subr.mxu0 0.0
    %8716 = vmatpush1.xpose.msra.mxu0 0.0
    %8717 = vmatprep.subr.mxu0 0.0
    %8718 = vmatpush1.xpose.msra.mxu0 0.0
    %8719 = vmatprep.subr.mxu0 0.0
    %8720 = vmatpush1.xpose.msra.mxu0 0.0
    %8721 = vmatprep.subr.mxu0 0.0
    %8722 = vmatpush1.xpose.msra.mxu0 0.0
    %8723 = vmatprep.subr.mxu0 0.0
    %8724 = vmatpush1.xpose.msra.mxu0 %v8691
    %8725 = vmatprep.subr.mxu0 0.0
    %8726 = vmatpush2.xpose.msra.mxu0 0.0
    %8727 = vmatprep.subr.mxu0 0.0
    %8728 = vmatpush2.xpose.msra.mxu0 0.0
    %8729 = vmatprep.subr.mxu0 0.0
    %8730 = vmatpush2.xpose.msra.mxu0 0.0
    %8731 = vmatprep.subr.mxu0 0.0
    %8732 = vmatpush2.xpose.msra.mxu0 0.0
    %8733 = vmatprep.subr.mxu0 0.0
    %8734 = vmatpush2.xpose.msra.mxu0 0.0
    %8735 = vmatprep.subr.mxu0 0.0
    %8736 = vmatpush2.xpose.msra.mxu0 0.0
    %8737 = vmatprep.subr.mxu0 0.0
    %8738 = vmatpush2.xpose.msra.mxu0 0.0
    %8739 = vmatprep.subr.mxu0 0.0
    %8740 = vmatpush2.xpose.msra.mxu0 0.0
    %8741 = vmatprep.subr.mxu0 0.0
    %8742 = vmatpush2.xpose.msra.mxu0 0.0
    %8743 = vmatprep.subr.mxu0 0.0
    %8744 = vmatpush2.xpose.msra.mxu0 0.0
    %8745 = vmatprep.subr.mxu0 0.0
    %8746 = vmatpush2.xpose.msra.mxu0 0.0
    %8747 = vmatprep.subr.mxu0 0.0
    %8748 = vmatpush2.xpose.msra.mxu0 0.0
    %8749 = vmatprep.subr.mxu0 0.0
    %8750 = vmatpush2.xpose.msra.mxu0 0.0
    %8751 = vmatprep.subr.mxu0 0.0
    %8752 = vmatpush2.xpose.msra.mxu0 0.0
    %8753 = vmatprep.subr.mxu0 0.0
    %8754 = vmatpush2.xpose.msra.mxu0 0.0
    %8755 = vmatprep.subr.mxu0 0.0
    %8756 = vmatpush2.xpose.msra.mxu0 0.0
    %8757 = vmatprep.mubr.f32.mxu0 0.0
    %8758 = vmatmul.mubr.f32.gmra.mxu0 %v8689
    %v8759 = vpop.f32.mrf.mxu0
    %v8760 = vadd.f32 %v3509, %v8759
    %v8761 = vpop.f32.mrf.mxu0
    %8762 = vdwg.mxu0
    %v8763 = vsel %vm403, %v8760, -inf
    %8764 = vmax.xlane.f32.xlu0 %v8763
    %v8765 = vpop.xlane.xlu0 %8764
    %v8766 = vsub.f32 %v8760, %v8765
    %v8767 = vmul.f32 %v8766, 1.442695
    %v8768 = vpow.pop %v8767
    %v8769 = vsel %vm403, %v8768, 0.0
    %8770 = vadd.xlane.f32.xlu0 %v8769
    %v8771 = vpop.xlane.xlu0 %8770
    %v8772 = vrcp.pop %v8771
    %v8773 = vmul.f32 %v8768, %v8772
    %8774 = vrot.lane.b32.xlu0 %v7010, 72
    %v8775 = vpop.permute.xlu0 %8774
    %v8778 = vsel %vm403, %v8773, 0
    %8780 = vmatprep.subr.mxu0 0.0
    %8781 = vmatpush1.msra.mxu0 0.0
    %8782 = vmatprep.subr.mxu0 0.0
    %8783 = vmatpush1.msra.mxu0 0.0
    %8784 = vmatprep.subr.mxu0 0.0
    %8785 = vmatpush1.msra.mxu0 0.0
    %8786 = vmatprep.subr.mxu0 0.0
    %8787 = vmatpush1.msra.mxu0 0.0
    %8788 = vmatprep.subr.mxu0 0.0
    %8789 = vmatpush1.msra.mxu0 0.0
    %8790 = vmatprep.subr.mxu0 0.0
    %8791 = vmatpush1.msra.mxu0 0.0
    %8792 = vmatprep.subr.mxu0 0.0
    %8793 = vmatpush1.msra.mxu0 0.0
    %8794 = vmatprep.subr.mxu0 0.0
    %8795 = vmatpush1.msra.mxu0 0.0
    %8796 = vmatprep.subr.mxu0 0.0
    %8797 = vmatpush1.msra.mxu0 0.0
    %8798 = vmatprep.subr.mxu0 0.0
    %8799 = vmatpush1.msra.mxu0 0.0
    %8800 = vmatprep.subr.mxu0 0.0
    %8801 = vmatpush1.msra.mxu0 0.0
    %8802 = vmatprep.subr.mxu0 0.0
    %8803 = vmatpush1.msra.mxu0 0.0
    %8804 = vmatprep.subr.mxu0 0.0
    %8805 = vmatpush1.msra.mxu0 0.0
    %8806 = vmatprep.subr.mxu0 0.0
    %8807 = vmatpush1.msra.mxu0 0.0
    %8808 = vmatprep.subr.mxu0 0.0
    %8809 = vmatpush1.msra.mxu0 0.0
    %8810 = vmatprep.subr.mxu0 0.0
    %8811 = vmatpush1.msra.mxu0 %v8775
    %8812 = vmatprep.subr.mxu0 0.0
    %8813 = vmatpush2.msra.mxu0 0.0
    %8814 = vmatprep.subr.mxu0 0.0
    %8815 = vmatpush2.msra.mxu0 0.0
    %8816 = vmatprep.subr.mxu0 0.0
    %8817 = vmatpush2.msra.mxu0 0.0
    %8818 = vmatprep.subr.mxu0 0.0
    %8819 = vmatpush2.msra.mxu0 0.0
    %8820 = vmatprep.subr.mxu0 0.0
    %8821 = vmatpush2.msra.mxu0 0.0
    %8822 = vmatprep.subr.mxu0 0.0
    %8823 = vmatpush2.msra.mxu0 0.0
    %8824 = vmatprep.subr.mxu0 0.0
    %8825 = vmatpush2.msra.mxu0 0.0
    %8826 = vmatprep.subr.mxu0 0.0
    %8827 = vmatpush2.msra.mxu0 0.0
    %8828 = vmatprep.subr.mxu0 0.0
    %8829 = vmatpush2.msra.mxu0 0.0
    %8830 = vmatprep.subr.mxu0 0.0
    %8831 = vmatpush2.msra.mxu0 0.0
    %8832 = vmatprep.subr.mxu0 0.0
    %8833 = vmatpush2.msra.mxu0 0.0
    %8834 = vmatprep.subr.mxu0 0.0
    %8835 = vmatpush2.msra.mxu0 0.0
    %8836 = vmatprep.subr.mxu0 0.0
    %8837 = vmatpush2.msra.mxu0 0.0
    %8838 = vmatprep.subr.mxu0 0.0
    %8839 = vmatpush2.msra.mxu0 0.0
    %8840 = vmatprep.subr.mxu0 0.0
    %8841 = vmatpush2.msra.mxu0 0.0
    %8842 = vmatprep.subr.mxu0 0.0
    %8843 = vmatpush2.msra.mxu0 0.0
    %8844 = vmatprep.mubr.f32.mxu0 0.0
    %8845 = vmatmul.mubr.f32.gmra.mxu0 %v8778
    %v8846 = vpop.f32.mrf.mxu0
    %v8847 = vadd.f32 0.0, %v8846
    %v8848 = vpop.f32.mrf.mxu0
    %8849 = vdwg.mxu0
    %v8851 = vsel %vm403, %v8847, 0
    %8853 = vmatprep.subr.mxu0 0.0
    %8854 = vmatpush1.msra.mxu0 0.0
    %8855 = vmatprep.subr.mxu0 0.0
    %8856 = vmatpush1.msra.mxu0 0.0
    %8857 = vmatprep.subr.mxu0 0.0
    %8858 = vmatpush1.msra.mxu0 0.0
    %8859 = vmatprep.subr.mxu0 0.0
    %8860 = vmatpush1.msra.mxu0 0.0
    %8861 = vmatprep.subr.mxu0 0.0
    %8862 = vmatpush1.msra.mxu0 0.0
    %8863 = vmatprep.subr.mxu0 0.0
    %8864 = vmatpush1.msra.mxu0 0.0
    %8865 = vmatprep.subr.mxu0 0.0
    %8866 = vmatpush1.msra.mxu0 0.0
    %8867 = vmatprep.subr.mxu0 0.0
    %8868 = vmatpush1.msra.mxu0 0.0
    %8869 = vmatprep.subr.mxu0 0.0
    %8870 = vmatpush1.msra.mxu0 0.0
    %8871 = vmatprep.subr.mxu0 0.0
    %8872 = vmatpush1.msra.mxu0 0.0
    %8873 = vmatprep.subr.mxu0 0.0
    %8874 = vmatpush1.msra.mxu0 0.0
    %8875 = vmatprep.subr.mxu0 0.0
    %8876 = vmatpush1.msra.mxu0 0.0
    %8877 = vmatprep.subr.mxu0 0.0
    %8878 = vmatpush1.msra.mxu0 0.0
    %8879 = vmatprep.subr.mxu0 0.0
    %8880 = vmatpush1.msra.mxu0 0.0
    %8881 = vmatprep.subr.mxu0 0.0
    %8882 = vmatpush1.msra.mxu0 0.0
    %8883 = vmatprep.subr.mxu0 0.0
    %8884 = vmatpush1.msra.mxu0 %v7017
    %8885 = vmatprep.subr.mxu0 0.0
    %8886 = vmatpush2.msra.mxu0 0.0
    %8887 = vmatprep.subr.mxu0 0.0
    %8888 = vmatpush2.msra.mxu0 0.0
    %8889 = vmatprep.subr.mxu0 0.0
    %8890 = vmatpush2.msra.mxu0 0.0
    %8891 = vmatprep.subr.mxu0 0.0
    %8892 = vmatpush2.msra.mxu0 0.0
    %8893 = vmatprep.subr.mxu0 0.0
    %8894 = vmatpush2.msra.mxu0 0.0
    %8895 = vmatprep.subr.mxu0 0.0
    %8896 = vmatpush2.msra.mxu0 0.0
    %8897 = vmatprep.subr.mxu0 0.0
    %8898 = vmatpush2.msra.mxu0 0.0
    %8899 = vmatprep.subr.mxu0 0.0
    %8900 = vmatpush2.msra.mxu0 0.0
    %8901 = vmatprep.subr.mxu0 0.0
    %8902 = vmatpush2.msra.mxu0 0.0
    %8903 = vmatprep.subr.mxu0 0.0
    %8904 = vmatpush2.msra.mxu0 0.0
    %8905 = vmatprep.subr.mxu0 0.0
    %8906 = vmatpush2.msra.mxu0 0.0
    %8907 = vmatprep.subr.mxu0 0.0
    %8908 = vmatpush2.msra.mxu0 0.0
    %8909 = vmatprep.subr.mxu0 0.0
    %8910 = vmatpush2.msra.mxu0 0.0
    %8911 = vmatprep.subr.mxu0 0.0
    %8912 = vmatpush2.msra.mxu0 0.0
    %8913 = vmatprep.subr.mxu0 0.0
    %8914 = vmatpush2.msra.mxu0 0.0
    %8915 = vmatprep.subr.mxu0 0.0
    %8916 = vmatpush2.msra.mxu0 0.0
    %8917 = vmatprep.mubr.f32.mxu0 0.0
    %8918 = vmatmul.mubr.f32.gmra.mxu0 %v8851
    %v8919 = vpop.f32.mrf.mxu0
    %v8920 = vadd.f32 0.0, %v8919
    %v8921 = vpop.f32.mrf.mxu0
    %8922 = vdwg.mxu0
    %v8923 = vadd.f32 %v8684, %v8920
    %v8925 = vlaneseq
    %v8926 = vshrl.u32 %v8925, 7
    %v8927 = vsub.s32 0, %v8926
    %v8928 = vrot.slane %v7019, %v8927
    %v8930 = vadd.f32 %v7971, %v8928
    %v8931 = vadd.f32 %v8923, %v8928
    %v8932 = vadd.f32 %v6829, %v8930
    %v8933 = vadd.f32 %v6830, %v8931
    %s8934 = scalar_lea.vmem %s41, 1
    %v8935 = vld [vmem:[%s8934] sm:$0x1]
    %s8936 = scalar_lea.vmem %s43, 1
    %v8937 = vld [vmem:[%s8936] sm:$0x1]
    %v8938 = vsel %vm241, %v8932, 0.0
    %8939 = vadd.xlane.f32.xlu0 %v8938
    %v8940 = vpop.xlane.xlu0 %8939
    %v8941 = vsel %vm241, %v8933, 0.0
    %8942 = vadd.xlane.f32.xlu0 %v8941
    %v8943 = vpop.xlane.xlu0 %8942
    %v8944 = vmul.f32 %v8940, %v248
    %v8945 = vmul.f32 %v8943, %v248
    %v8946 = vsub.f32 %v8932, %v8944
    %v8947 = vsub.f32 %v8933, %v8945
    %v8948 = vmul.f32 %v8946, %v8946
    %v8949 = vmul.f32 %v8947, %v8947
    %v8950 = vsel %vm241, %v8948, 0.0
    %8951 = vadd.xlane.f32.xlu0 %v8950
    %v8952 = vpop.xlane.xlu0 %8951
    %v8953 = vsel %vm241, %v8949, 0.0
    %8954 = vadd.xlane.f32.xlu0 %v8953
    %v8955 = vpop.xlane.xlu0 %8954
    %v8956 = vmul.f32 %v8952, %v248
    %v8957 = vmul.f32 %v8955, %v248
    %v8958 = vadd.f32 %v8956, 1e-05
    %v8959 = vadd.f32 %v8957, 1e-05
    %v8960 = vrsqrt.pop %v8958
    %v8961 = vrsqrt.pop %v8959
    %v8962 = vmul.f32 %v8946, %v8960
    %v8963 = vmul.f32 %v8947, %v8961
    %v8965 = vlaneseq
    %v8966 = vshrl.u32 %v8965, 7
    %v8967 = vsub.s32 0, %v8966
    %v8968 = vrot.slane %v8935, %v8967
    %v8970 = vmul.f32 %v8962, %v8968
    %v8971 = vmul.f32 %v8963, %v8968
    %v8973 = vlaneseq
    %v8974 = vshrl.u32 %v8973, 7
    %v8975 = vsub.s32 0, %v8974
    %v8976 = vrot.slane %v8937, %v8975
    %v8978 = vadd.f32 %v8970, %v8976
    %v8979 = vadd.f32 %v8971, %v8976
    %s8980 = scalar_lea.vmem %s45, 32
    %v8981 = vld [vmem:[%s8980] sm:$0xff]
    %v8982 = vld [vmem:[%s8980 + $0x8] sm:$0xff]
    %v8983 = vld [vmem:[%s8980 + $0x10] sm:$0xff]
    %v8984 = vld [vmem:[%s8980 + $0x18] sm:$0xff]
    %s8985 = scalar_lea.vmem %s47, 1
    %v8986 = vld [vmem:[%s8985] sm:$0x1]
    %v8988 = vlaneseq
    %v8989 = vshrl.u32 %v8988, 7
    %v8990 = vsub.s32 0, %v8989
    %v8991 = vrot.slane %v8986, %v8990
    %v8994 = vsel %vm241, %v8978, 0
    %v8997 = vsel %vm241, %v8979, 0
    %8999 = vmatprep.subr.mxu0 0.0
    %9000 = vmatpush1.msra.mxu0 0.0
    %9001 = vmatprep.subr.mxu0 0.0
    %9002 = vmatpush1.msra.mxu0 0.0
    %9003 = vmatprep.subr.mxu0 0.0
    %9004 = vmatpush1.msra.mxu0 0.0
    %9005 = vmatprep.subr.mxu0 0.0
    %9006 = vmatpush1.msra.mxu0 0.0
    %9007 = vmatprep.subr.mxu0 0.0
    %9008 = vmatpush1.msra.mxu0 0.0
    %9009 = vmatprep.subr.mxu0 0.0
    %9010 = vmatpush1.msra.mxu0 0.0
    %9011 = vmatprep.subr.mxu0 0.0
    %9012 = vmatpush1.msra.mxu0 0.0
    %9013 = vmatprep.subr.mxu0 0.0
    %9014 = vmatpush1.msra.mxu0 0.0
    %9015 = vmatprep.subr.mxu0 0.0
    %9016 = vmatpush1.msra.mxu0 0.0
    %9017 = vmatprep.subr.mxu0 0.0
    %9018 = vmatpush1.msra.mxu0 0.0
    %9019 = vmatprep.subr.mxu0 0.0
    %9020 = vmatpush1.msra.mxu0 0.0
    %9021 = vmatprep.subr.mxu0 0.0
    %9022 = vmatpush1.msra.mxu0 0.0
    %9023 = vmatprep.subr.mxu0 0.0
    %9024 = vmatpush1.msra.mxu0 %v8984
    %9025 = vmatprep.subr.mxu0 0.0
    %9026 = vmatpush1.msra.mxu0 %v8983
    %9027 = vmatprep.subr.mxu0 0.0
    %9028 = vmatpush1.msra.mxu0 %v8982
    %9029 = vmatprep.subr.mxu0 0.0
    %9030 = vmatpush1.msra.mxu0 %v8981
    %9031 = vmatprep.subr.mxu0 0.0
    %9032 = vmatpush2.msra.mxu0 0.0
    %9033 = vmatprep.subr.mxu0 0.0
    %9034 = vmatpush2.msra.mxu0 0.0
    %9035 = vmatprep.subr.mxu0 0.0
    %9036 = vmatpush2.msra.mxu0 0.0
    %9037 = vmatprep.subr.mxu0 0.0
    %9038 = vmatpush2.msra.mxu0 0.0
    %9039 = vmatprep.subr.mxu0 0.0
    %9040 = vmatpush2.msra.mxu0 0.0
    %9041 = vmatprep.subr.mxu0 0.0
    %9042 = vmatpush2.msra.mxu0 0.0
    %9043 = vmatprep.subr.mxu0 0.0
    %9044 = vmatpush2.msra.mxu0 0.0
    %9045 = vmatprep.subr.mxu0 0.0
    %9046 = vmatpush2.msra.mxu0 0.0
    %9047 = vmatprep.subr.mxu0 0.0
    %9048 = vmatpush2.msra.mxu0 0.0
    %9049 = vmatprep.subr.mxu0 0.0
    %9050 = vmatpush2.msra.mxu0 0.0
    %9051 = vmatprep.subr.mxu0 0.0
    %9052 = vmatpush2.msra.mxu0 0.0
    %9053 = vmatprep.subr.mxu0 0.0
    %9054 = vmatpush2.msra.mxu0 0.0
    %9055 = vmatprep.subr.mxu0 0.0
    %9056 = vmatpush2.msra.mxu0 0.0
    %9057 = vmatprep.subr.mxu0 0.0
    %9058 = vmatpush2.msra.mxu0 0.0
    %9059 = vmatprep.subr.mxu0 0.0
    %9060 = vmatpush2.msra.mxu0 0.0
    %9061 = vmatprep.subr.mxu0 0.0
    %9062 = vmatpush2.msra.mxu0 0.0
    %9063 = vmatprep.mubr.f32.mxu0 0.0
    %9064 = vmatmul.mubr.f32.gmra.mxu0 %v8994
    %v9065 = vpop.f32.mrf.mxu0
    %v9066 = vadd.f32 %v8991, %v9065
    %v9067 = vpop.f32.mrf.mxu0
    %9068 = vmatprep.mubr.f32.mxu0 0.0
    %9069 = vmatmul.mubr.f32.gmra.mxu0 %v8997
    %v9070 = vpop.f32.mrf.mxu0
    %v9071 = vadd.f32 %v8991, %v9070
    %v9072 = vpop.f32.mrf.mxu0
    %9073 = vdwg.mxu0
    %v9074 = vmul.f32 %v9066, %v9066
    %v9075 = vmul.f32 %v9071, %v9071
    %v9076 = vmul.f32 %v9066, %v9074
    %v9077 = vmul.f32 %v9071, %v9075
    %v9078 = vmul.f32 %v9076, 0.044715
    %v9079 = vmul.f32 %v9077, 0.044715
    %v9080 = vadd.f32 %v9066, %v9078
    %v9081 = vadd.f32 %v9071, %v9079
    %v9082 = vmul.f32 %v9080, 0.7978846
    %v9083 = vmul.f32 %v9081, 0.7978846
    %v9084 = vtanh.pop %v9082
    %v9085 = vtanh.pop %v9083
    %v9086 = vadd.f32 %v9084, 1.0
    %v9087 = vadd.f32 %v9085, 1.0
    %v9088 = vmul.f32 %v9086, 0.5
    %v9089 = vmul.f32 %v9087, 0.5
    %v9090 = vmul.f32 %v9066, %v9088
    %v9091 = vmul.f32 %v9071, %v9089
    %s9092 = scalar_lea.vmem %s49, 64
    %v9093 = vld [vmem:[%s9092] sm:$0xff]
    %v9094 = vld [vmem:[%s9092 + $0x8] sm:$0xff]
    %v9095 = vld [vmem:[%s9092 + $0x10] sm:$0xff]
    %v9096 = vld [vmem:[%s9092 + $0x18] sm:$0xff]
    %v9097 = vld [vmem:[%s9092 + $0x20] sm:$0xff]
    %v9098 = vld [vmem:[%s9092 + $0x28] sm:$0xff]
    %v9099 = vld [vmem:[%s9092 + $0x30] sm:$0xff]
    %v9100 = vld [vmem:[%s9092 + $0x38] sm:$0xff]
    %s9101 = scalar_lea.vmem %s51, 1
    %v9102 = vld [vmem:[%s9101] sm:$0x1]
    %v9104 = vlaneseq
    %v9105 = vshrl.u32 %v9104, 7
    %v9106 = vsub.s32 0, %v9105
    %v9107 = vrot.slane %v9102, %v9106
    %v9110 = vsel %vm157, %v9090, 0
    %v9113 = vsel %vm157, %v9091, 0
    %9115 = vmatprep.subr.mxu0 0.0
    %9116 = vmatpush1.msra.mxu0 0.0
    %9117 = vmatprep.subr.mxu0 0.0
    %9118 = vmatpush1.msra.mxu0 0.0
    %9119 = vmatprep.subr.mxu0 0.0
    %9120 = vmatpush1.msra.mxu0 0.0
    %9121 = vmatprep.subr.mxu0 0.0
    %9122 = vmatpush1.msra.mxu0 0.0
    %9123 = vmatprep.subr.mxu0 0.0
    %9124 = vmatpush1.msra.mxu0 0.0
    %9125 = vmatprep.subr.mxu0 0.0
    %9126 = vmatpush1.msra.mxu0 0.0
    %9127 = vmatprep.subr.mxu0 0.0
    %9128 = vmatpush1.msra.mxu0 0.0
    %9129 = vmatprep.subr.mxu0 0.0
    %9130 = vmatpush1.msra.mxu0 0.0
    %9131 = vmatprep.subr.mxu0 0.0
    %9132 = vmatpush1.msra.mxu0 %v9100
    %9133 = vmatprep.subr.mxu0 0.0
    %9134 = vmatpush1.msra.mxu0 %v9099
    %9135 = vmatprep.subr.mxu0 0.0
    %9136 = vmatpush1.msra.mxu0 %v9098
    %9137 = vmatprep.subr.mxu0 0.0
    %9138 = vmatpush1.msra.mxu0 %v9097
    %9139 = vmatprep.subr.mxu0 0.0
    %9140 = vmatpush1.msra.mxu0 %v9096
    %9141 = vmatprep.subr.mxu0 0.0
    %9142 = vmatpush1.msra.mxu0 %v9095
    %9143 = vmatprep.subr.mxu0 0.0
    %9144 = vmatpush1.msra.mxu0 %v9094
    %9145 = vmatprep.subr.mxu0 0.0
    %9146 = vmatpush1.msra.mxu0 %v9093
    %9147 = vmatprep.subr.mxu0 0.0
    %9148 = vmatpush2.msra.mxu0 0.0
    %9149 = vmatprep.subr.mxu0 0.0
    %9150 = vmatpush2.msra.mxu0 0.0
    %9151 = vmatprep.subr.mxu0 0.0
    %9152 = vmatpush2.msra.mxu0 0.0
    %9153 = vmatprep.subr.mxu0 0.0
    %9154 = vmatpush2.msra.mxu0 0.0
    %9155 = vmatprep.subr.mxu0 0.0
    %9156 = vmatpush2.msra.mxu0 0.0
    %9157 = vmatprep.subr.mxu0 0.0
    %9158 = vmatpush2.msra.mxu0 0.0
    %9159 = vmatprep.subr.mxu0 0.0
    %9160 = vmatpush2.msra.mxu0 0.0
    %9161 = vmatprep.subr.mxu0 0.0
    %9162 = vmatpush2.msra.mxu0 0.0
    %9163 = vmatprep.subr.mxu0 0.0
    %9164 = vmatpush2.msra.mxu0 0.0
    %9165 = vmatprep.subr.mxu0 0.0
    %9166 = vmatpush2.msra.mxu0 0.0
    %9167 = vmatprep.subr.mxu0 0.0
    %9168 = vmatpush2.msra.mxu0 0.0
    %9169 = vmatprep.subr.mxu0 0.0
    %9170 = vmatpush2.msra.mxu0 0.0
    %9171 = vmatprep.subr.mxu0 0.0
    %9172 = vmatpush2.msra.mxu0 0.0
    %9173 = vmatprep.subr.mxu0 0.0
    %9174 = vmatpush2.msra.mxu0 0.0
    %9175 = vmatprep.subr.mxu0 0.0
    %9176 = vmatpush2.msra.mxu0 0.0
    %9177 = vmatprep.subr.mxu0 0.0
    %9178 = vmatpush2.msra.mxu0 0.0
    %9179 = vmatprep.mubr.f32.mxu0 0.0
    %9180 = vmatmul.mubr.f32.gmra.mxu0 %v9110
    %v9181 = vpop.f32.mrf.mxu0
    %v9182 = vadd.f32 %v9107, %v9181
    %v9183 = vpop.f32.mrf.mxu0
    %9184 = vmatprep.mubr.f32.mxu0 0.0
    %9185 = vmatmul.mubr.f32.gmra.mxu0 %v9113
    %v9186 = vpop.f32.mrf.mxu0
    %v9187 = vadd.f32 %v9107, %v9186
    %v9188 = vpop.f32.mrf.mxu0
    %9189 = vdwg.mxu0
    %v9190 = vadd.f32 %v8978, %v9182
    %v9191 = vadd.f32 %v8979, %v9187
    %s9192 = scalar_lea.vmem %s53, 1
    %v9193 = vld [vmem:[%s9192] sm:$0x1]
    %s9194 = scalar_lea.vmem %s55, 1
    %v9195 = vld [vmem:[%s9194] sm:$0x1]
    %v9196 = vsel %vm241, %v9190, 0.0
    %9197 = vadd.xlane.f32.xlu0 %v9196
    %v9198 = vpop.xlane.xlu0 %9197
    %v9199 = vsel %vm241, %v9191, 0.0
    %9200 = vadd.xlane.f32.xlu0 %v9199
    %v9201 = vpop.xlane.xlu0 %9200
    %v9202 = vmul.f32 %v9198, %v248
    %v9203 = vmul.f32 %v9201, %v248
    %v9204 = vsub.f32 %v9190, %v9202
    %v9205 = vsub.f32 %v9191, %v9203
    %v9206 = vmul.f32 %v9204, %v9204
    %v9207 = vmul.f32 %v9205, %v9205
    %v9208 = vsel %vm241, %v9206, 0.0
    %9209 = vadd.xlane.f32.xlu0 %v9208
    %v9210 = vpop.xlane.xlu0 %9209
    %v9211 = vsel %vm241, %v9207, 0.0
    %9212 = vadd.xlane.f32.xlu0 %v9211
    %v9213 = vpop.xlane.xlu0 %9212
    %v9214 = vmul.f32 %v9210, %v248
    %v9215 = vmul.f32 %v9213, %v248
    %v9216 = vadd.f32 %v9214, 1e-05
    %v9217 = vadd.f32 %v9215, 1e-05
    %v9218 = vrsqrt.pop %v9216
    %v9219 = vrsqrt.pop %v9217
    %v9220 = vmul.f32 %v9204, %v9218
    %v9221 = vmul.f32 %v9205, %v9219
    %v9223 = vlaneseq
    %v9224 = vshrl.u32 %v9223, 7
    %v9225 = vsub.s32 0, %v9224
    %v9226 = vrot.slane %v9193, %v9225
    %v9228 = vmul.f32 %v9220, %v9226
    %v9229 = vmul.f32 %v9221, %v9226
    %v9231 = vlaneseq
    %v9232 = vshrl.u32 %v9231, 7
    %v9233 = vsub.s32 0, %v9232
    %v9234 = vrot.slane %v9195, %v9233
    %v9236 = vadd.f32 %v9228, %v9234
    %v9237 = vadd.f32 %v9229, %v9234
    %9238 = vst.msk [vmem:[#allocation4] sm:$0xff] %vm241, %v9236
    %9239 = vst.msk [vmem:[#allocation4 + $0x8] sm:$0xff] %vm241, %v9237
    %v9240 = vld [vmem:[%s57] sm:$0xff]
    %v9241 = vld [vmem:[%s57 + $0x8] sm:$0xff]
    %v9242 = vld [vmem:[%s57 + $0x10] sm:$0xff]
    %v9243 = vld [vmem:[%s57 + $0x18] sm:$0xff]
    %v9244 = vld [vmem:[%s59] sm:$0x1]
    %v9246 = vlaneseq
    %v9247 = vshrl.u32 %v9246, 7
    %v9248 = vsub.s32 0, %v9247
    %v9249 = vrot.slane %v9244, %v9248
    %v9252 = vsel %vm241, %v9236, 0
    %v9255 = vsel %vm241, %v9237, 0
    %9257 = vmatprep.subr.mxu0 0.0
    %9258 = vmatpush1.msra.mxu0 0.0
    %9259 = vmatprep.subr.mxu0 0.0
    %9260 = vmatpush1.msra.mxu0 0.0
    %9261 = vmatprep.subr.mxu0 0.0
    %9262 = vmatpush1.msra.mxu0 0.0
    %9263 = vmatprep.subr.mxu0 0.0
    %9264 = vmatpush1.msra.mxu0 0.0
    %9265 = vmatprep.subr.mxu0 0.0
    %9266 = vmatpush1.msra.mxu0 0.0
    %9267 = vmatprep.subr.mxu0 0.0
    %9268 = vmatpush1.msra.mxu0 0.0
    %9269 = vmatprep.subr.mxu0 0.0
    %9270 = vmatpush1.msra.mxu0 0.0
    %9271 = vmatprep.subr.mxu0 0.0
    %9272 = vmatpush1.msra.mxu0 0.0
    %9273 = vmatprep.subr.mxu0 0.0
    %9274 = vmatpush1.msra.mxu0 0.0
    %9275 = vmatprep.subr.mxu0 0.0
    %9276 = vmatpush1.msra.mxu0 0.0
    %9277 = vmatprep.subr.mxu0 0.0
    %9278 = vmatpush1.msra.mxu0 0.0
    %9279 = vmatprep.subr.mxu0 0.0
    %9280 = vmatpush1.msra.mxu0 0.0
    %9281 = vmatprep.subr.mxu0 0.0
    %9282 = vmatpush1.msra.mxu0 %v9243
    %9283 = vmatprep.subr.mxu0 0.0
    %9284 = vmatpush1.msra.mxu0 %v9242
    %9285 = vmatprep.subr.mxu0 0.0
    %9286 = vmatpush1.msra.mxu0 %v9241
    %9287 = vmatprep.subr.mxu0 0.0
    %9288 = vmatpush1.msra.mxu0 %v9240
    %9289 = vmatprep.subr.mxu0 0.0
    %9290 = vmatpush2.msra.mxu0 0.0
    %9291 = vmatprep.subr.mxu0 0.0
    %9292 = vmatpush2.msra.mxu0 0.0
    %9293 = vmatprep.subr.mxu0 0.0
    %9294 = vmatpush2.msra.mxu0 0.0
    %9295 = vmatprep.subr.mxu0 0.0
    %9296 = vmatpush2.msra.mxu0 0.0
    %9297 = vmatprep.subr.mxu0 0.0
    %9298 = vmatpush2.msra.mxu0 0.0
    %9299 = vmatprep.subr.mxu0 0.0
    %9300 = vmatpush2.msra.mxu0 0.0
    %9301 = vmatprep.subr.mxu0 0.0
    %9302 = vmatpush2.msra.mxu0 0.0
    %9303 = vmatprep.subr.mxu0 0.0
    %9304 = vmatpush2.msra.mxu0 0.0
    %9305 = vmatprep.subr.mxu0 0.0
    %9306 = vmatpush2.msra.mxu0 0.0
    %9307 = vmatprep.subr.mxu0 0.0
    %9308 = vmatpush2.msra.mxu0 0.0
    %9309 = vmatprep.subr.mxu0 0.0
    %9310 = vmatpush2.msra.mxu0 0.0
    %9311 = vmatprep.subr.mxu0 0.0
    %9312 = vmatpush2.msra.mxu0 0.0
    %9313 = vmatprep.subr.mxu0 0.0
    %9314 = vmatpush2.msra.mxu0 0.0
    %9315 = vmatprep.subr.mxu0 0.0
    %9316 = vmatpush2.msra.mxu0 0.0
    %9317 = vmatprep.subr.mxu0 0.0
    %9318 = vmatpush2.msra.mxu0 0.0
    %9319 = vmatprep.subr.mxu0 0.0
    %9320 = vmatpush2.msra.mxu0 0.0
    %9321 = vmatprep.mubr.f32.mxu0 0.0
    %9322 = vmatmul.mubr.f32.gmra.mxu0 %v9252
    %v9323 = vpop.f32.mrf.mxu0
    %v9324 = vadd.f32 %v9249, %v9323
    %v9325 = vpop.f32.mrf.mxu0
    %9326 = vmatprep.mubr.f32.mxu0 0.0
    %9327 = vmatmul.mubr.f32.gmra.mxu0 %v9255
    %v9328 = vpop.f32.mrf.mxu0
    %v9329 = vadd.f32 %v9249, %v9328
    %v9330 = vpop.f32.mrf.mxu0
    %9331 = vdwg.mxu0
    %9332 = vst.msk [vmem:[#allocation2] sm:$0xff] %vm157, %v9324
    %9333 = vst.msk [vmem:[#allocation2 + $0x8] sm:$0xff] %vm157, %v9329
    // Predicated region
    $region122: #{decoder_forward.1} parent=1 // pred_check
      _
    $region123: #{decoder_forward.1} parent=1 // pred_check_branch
      %9335 = sbr.rel (0) target = $region125
    $region124: #{decoder_forward.1} parent=1 // pred_region
      %s9337 = ssub.s32 256, 256
      %9338 = vsyncadd [#allocation3], %s9337
      %s9339 = sshll.u32 [#allocation2], 4
      %s9340 = int_to_ptr.vmem [resolvable:$true] %s9339
      %9345 = dma.vmem_to_hbm [thread:$0]  %s9340, 256, %s61, [#allocation3], 128, 128, 8
    $region125: #{decoder_forward.1} parent=1 // pred_fallthru
      _
    // Predicated region
    $region126: #{decoder_forward.1} parent=1 // pred_check
      _
    $region127: #{decoder_forward.1} parent=1 // pred_check_branch
      %9347 = sbr.rel (0) target = $region129
    $region128: #{decoder_forward.1} parent=1 // pred_region
      %s9349 = ssub.s32 256, 256
      %9350 = vsyncadd [#allocation5], %s9349
      %s9351 = sshll.u32 [#allocation4], 4
      %s9352 = int_to_ptr.vmem [resolvable:$true] %s9351
      %9357 = dma.vmem_to_hbm [thread:$0]  %s9352, 256, %s63, [#allocation5], 128, 128, 8
    $region129: #{decoder_forward.1} parent=1 // pred_fallthru
      _
    // Predicated region
    $region130: #{decoder_forward.1} parent=1 // pred_check
      _
    $region131: #{decoder_forward.1} parent=1 // pred_check_branch
      %9359 = sbr.rel (0) target = $region133
    $region132: #{decoder_forward.1} parent=1 // pred_region
      %9360 = dma.done [#allocation3], 256
    $region133: #{decoder_forward.1} parent=1 // pred_fallthru
      _
    // Predicated region
    $region134: #{decoder_forward.1} parent=1 // pred_check
      _
    $region135: #{decoder_forward.1} parent=1 // pred_check_branch
      %9362 = sbr.rel (0) target = $region137
    $region136: #{decoder_forward.1} parent=1 // pred_region
      %9363 = dma.done [#allocation5], 256
    $region137: #{decoder_forward.1} parent=1 // pred_fallthru
      _
    %9364 = vsyncpa [#allocation3], 1
    %9365 = vsyncpa [#allocation5], 1

</llo_original>
